<compile_context>
chip_gen: v6e
topology: v6e:2x2x1
jax: 0.10.0
libtpu: 0.0.40
codegen_flags: <defaults>
</compile_context>

<pallas_src>
import functools

import numpy as np
import jax
import jax.numpy as jnp
from jax.experimental import pallas as pl
from jax.experimental.pallas import tpu as pltpu


# ----------------------------------------------------------------------------
# Host-side matrix builders (run ONCE at init; nothing below runs in-kernel)
# ----------------------------------------------------------------------------
def _interp_matrix_1d(n_in):
    """(2*n_in, n_in) bilinear 2x matrix, align_corners=True (UpsamplingBilinear2d)."""
    n_out = 2 * n_in
    m = np.zeros((n_out, n_in), np.float32)
    if n_in == 1:
        m[:, 0] = 1.0
        return m
    for i in range(n_out):
        c = i * (n_in - 1) / (n_out - 1)
        i0 = min(int(np.floor(c)), n_in - 2)
        f = c - i0
        m[i, i0] += 1.0 - f
        m[i, i0 + 1] += f
    return m


def _upsample_matrix_t(src_hw):
    """(Hs*Ws, 4*Hs*Ws): right-multiply a channel-first flat (C, Hs*Ws) to upsample."""
    hs, ws = src_hw
    r = _interp_matrix_1d(hs)                      # (2hs, hs)
    c = _interp_matrix_1d(ws)                      # (2ws, ws)
    m = np.einsum('ph,qw->pqhw', r, c).reshape(4 * hs * ws, hs * ws)
    return np.ascontiguousarray(m.T)               # (Hs*Ws, Hout*Wout)


def _crop_matrix(src_hw, dst_hw):
    """(Hs*Ws, Hd*Wd) 0/1 center-crop selector (right-multiply)."""
    hs, ws = src_hw
    hd, wd = dst_hw
    dy, dx = (hs - hd) // 2, (ws - wd) // 2
    k = np.zeros((hs * ws, hd * wd), np.float32)
    for h in range(hd):
        for w in range(wd):
            k[(h + dy) * ws + (w + dx), h * wd + w] = 1.0
    return k


def _shift_matrices(hw):
    """9 x (H*W, H*W) 0/1 matrices: tap t=kh*3+kw of a zero-padded 3x3 window."""
    h, w = hw
    mats = []
    for kh in range(3):
        for kw in range(3):
            dh, dw = kh - 1, kw - 1
            s = np.zeros((h * w, h * w), np.float32)
            for oh in range(h):
                for ow in range(w):
                    ih, iw = oh + dh, ow + dw
                    if 0 <= ih < h and 0 <= iw < w:
                        s[ih * w + iw, oh * w + ow] = 1.0
            mats.append(s)
    return mats


def _tap_mats(src_hw, conv_hw, *, crop_to=None, upsample=False):
    """(9, Qsrc, Qout): fold [optional center-crop] -> [optional bilinear-2x]
    -> zero-padded 3x3 shift into one right-multiply matrix per tap."""
    pre = None
    cur = src_hw
    if crop_to is not None and crop_to != cur:
        pre = _crop_matrix(cur, crop_to)
        cur = crop_to
    if upsample:
        up = _upsample_matrix_t(cur)
        pre = up if pre is None else pre @ up
        cur = (2 * cur[0], 2 * cur[1])
    assert cur == conv_hw, (cur, conv_hw)
    shifts = _shift_matrices(conv_hw)
    mats = [s if pre is None else pre @ s for s in shifts]
    return np.stack(mats, axis=0)


def _pack_w_taps(w_oihw, lo, hi):
    """PyTorch (Cout, Cin, 3, 3)[:, lo:hi] -> (9*Cout, Csrc) bf16, rows grouped
    by tap t = kh*3+kw (matching _shift_matrices / _tap_mats tap order)."""
    w = np.asarray(w_oihw)[:, lo:hi, :, :]
    cout, csrc = w.shape[0], w.shape[1]
    w = np.transpose(w, (2, 3, 0, 1)).reshape(9 * cout, csrc)
    return jnp.asarray(w, dtype=jnp.bfloat16)


# ----------------------------------------------------------------------------
# Parameter init: PyTorch layout, replicating Decoder.__init__ channel logic
# ----------------------------------------------------------------------------
def init_decoder_params(key, in_channels, hook_channels, encoder_channels,
                        n_filters, depth, n_convs, hook_to_index):
    params = {}
    nf = n_filters * 2 * depth
    ic = in_channels
    for d in reversed(range(depth)):
        if d == hook_to_index:
            ic += hook_channels
        key, k1, k2 = jax.random.split(key, 3)
        params[f'upsample{d}'] = {
            'w': 0.1 * jax.random.normal(k1, (nf, ic, 3, 3), jnp.float32),
            'b': 0.1 * jax.random.normal(k2, (nf,), jnp.float32),
        }
        cin = nf + encoder_channels[d]
        cb = []
        for _ in range(n_convs):
            key, k1, k2 = jax.random.split(key, 3)
            cb.append({'w': 0.1 * jax.random.normal(k1, (nf, cin, 3, 3), jnp.float32),
                       'b': 0.1 * jax.random.normal(k2, (nf,), jnp.float32)})
            cin = nf
        params[f'convblock{d}'] = cb
        ic = nf
        nf //= 2
    return params


# ----------------------------------------------------------------------------
# Build the fused decoder: plan (static), deduped consts, kernel and wrapper
# ----------------------------------------------------------------------------
def make_decoder(params, *, depth, hook_from_index, hook_to_index,
                 x_shape, residual_shapes, hook_shape=None):
    levels = list(reversed(range(depth)))
    has_hook = hook_shape is not None
    emit_hook = (hook_from_index is not None) and (0 < hook_from_index < depth)

    consts = []
    tap_cache = {}

    def add_const(a):
        consts.append(a)
        return len(consts) - 1

    def tap_idx(src_hw, conv_hw, crop_to, upsample):
        if crop_to is not None and crop_to == src_hw:
            crop_to = None                       # identity crop -> share slab
        key = (src_hw, conv_hw, crop_to, upsample)
        if key not in tap_cache:
            m = _tap_mats(src_hw, conv_hw, crop_to=crop_to, upsample=upsample)
            tap_cache[key] = add_const(jnp.asarray(m, dtype=jnp.bfloat16))
        return tap_cache[key]

    # batched-input slots: [x, hook?, residual[d] for d in levels]
    slots = {'x': 0}
    nxt = 1
    if has_hook:
        slots['hook'] = nxt
        nxt += 1
    for d in levels:
        slots[('res', d)] = nxt
        nxt += 1
    num_batched = nxt

    plan = []
    cur_hw = tuple(int(s) for s in x_shape[2:])
    cur_c = int(x_shape[1])
    out_meta = hook_meta = None

    for d in levels:
        # ---- UpSample: (hook concat ->) bilinear 2x -> conv3x3 -> LeakyReLU --
        w = np.asarray(params[f'upsample{d}']['w'])
        b = np.asarray(params[f'upsample{d}']['b'])
        cout, cin_total = int(w.shape[0]), int(w.shape[1])
        conv_hw = (2 * cur_hw[0], 2 * cur_hw[1])
        srcs = [{'kind': 'act',
                 'w_idx': add_const(_pack_w_taps(w, 0, cur_c)),
                 't_idx': tap_idx(cur_hw, conv_hw, None, True),
                 'csrc': cur_c, 'q_src': cur_hw[0] * cur_hw[1]}]
        used_c = cur_c
        if has_hook and d == hook_to_index:
            hk_hw = tuple(int(s) for s in hook_shape[2:])
            hk_c = int(hook_shape[1])
            # NOTE: PyTorch center_crop uses x.shape[-1]; equal to (H,W) crop
            # for the square inputs the module is used with.
            srcs.append({'kind': 'input', 'slot': slots['hook'],
                         'w_idx': add_const(_pack_w_taps(w, cur_c, cur_c + hk_c)),
                         't_idx': tap_idx(hk_hw, conv_hw, cur_hw, True),
                         'csrc': hk_c, 'q_src': hk_hw[0] * hk_hw[1]})
            used_c += hk_c
        assert used_c == cin_total, (used_c, cin_total)
        plan.append({'cout': cout, 'q_out': conv_hw[0] * conv_hw[1],
                     'bias_idx': add_const(jnp.asarray(b.reshape(-1, 1), jnp.float32)),
                     'sources': srcs, 'store_main': False, 'store_hook': False})
        cur_hw, cur_c = conv_hw, cout

        # ---- ConvBlock (batch_norm=False): skip concat folded into conv 0 ----
        cb = params[f'convblock{d}']
        for j, layer in enumerate(cb):
            w = np.asarray(layer['w'])
            b = np.asarray(layer['b'])
            cout, cin_total = int(w.shape[0]), int(w.shape[1])
            srcs = [{'kind': 'act',
                     'w_idx': add_const(_pack_w_taps(w, 0, cur_c)),
                     't_idx': tap_idx(cur_hw, cur_hw, None, False),
                     'csrc': cur_c, 'q_src': cur_hw[0] * cur_hw[1]}]
            used_c = cur_c
            if j == 0:
                r_hw = tuple(int(s) for s in residual_shapes[d][2:])
                r_c = int(residual_shapes[d][1])
                srcs.append({'kind': 'input', 'slot': slots[('res', d)],
                             'w_idx': add_const(_pack_w_taps(w, cur_c, cur_c + r_c)),
                             't_idx': tap_idx(r_hw, cur_hw, cur_hw, False),
                             'csrc': r_c, 'q_src': r_hw[0] * r_hw[1]})
                used_c += r_c
            assert used_c == cin_total, (used_c, cin_total)
            is_final = (d == levels[-1]) and (j == len(cb) - 1)
            store_hook = emit_hook and (d == hook_from_index) and (j == len(cb) - 1)
            plan.append({'cout': cout, 'q_out': cur_hw[0] * cur_hw[1],
                         'bias_idx': add_const(jnp.asarray(b.reshape(-1, 1), jnp.float32)),
                         'sources': srcs, 'store_main': is_final,
                         'store_hook': store_hook})
            cur_c = cout
            if is_final:
                out_meta = (cout, cur_hw[0], cur_hw[1])
            if store_hook:
                hook_meta = (cout, cur_hw[0], cur_hw[1])

    n_const = len(consts)

    # static matmul-flop count (per batch element) for the scheduler hint
    flops_per_item = 0
    for conv in plan:
        for s in conv['sources']:
            flops_per_item += 2 * 9 * conv['cout'] * s['csrc'] * s['q_src']
            flops_per_item += 2 * 9 * conv['cout'] * s['q_src'] * conv['q_out']

    # ------------------------------------------------------------------------
    # Fused kernel: whole decoder for one batch element per grid step.
    # ------------------------------------------------------------------------
    def kernel(*refs):
        bat = refs[:num_batched]
        cons = refs[num_batched:num_batched + n_const]
        out_ref = refs[num_batched + n_const]
        hook_ref = refs[num_batched + n_const + 1] if emit_hook else None

        act = bat[0][0].astype(jnp.bfloat16)                     # (C0, H0*W0)
        for conv in plan:
            cout = conv['cout']
            acc = None
            for s in conv['sources']:
                xs = act if s['kind'] == 'act' else bat[s['slot']][0].astype(jnp.bfloat16)
                # all 9 taps' channel mixes in one matmul: (9*Cout,Csrc)@(Csrc,Qsrc)
                y = jnp.dot(cons[s['w_idx']][...], xs,
                            preferred_element_type=jnp.float32).astype(jnp.bfloat16)
                t_ref = cons[s['t_idx']]                         # (9, Qsrc, Qout)
                for t in range(9):
                    part = jnp.dot(y[t * cout:(t + 1) * cout, :], t_ref[t],
                                   preferred_element_type=jnp.float32)
                    acc = part if acc is None else acc + part
            acc = acc + cons[conv['bias_idx']][...]              # (Cout, 1) fp32
            acc = jnp.maximum(acc, 0.01 * acc)                   # LeakyReLU(0.01)
            if conv['store_hook']:
                hook_ref[0] = acc.astype(hook_ref.dtype)         # lane-dense store
            if conv['store_main']:
                out_ref[0] = acc.astype(out_ref.dtype)           # lane-dense store
            else:
                act = acc.astype(jnp.bfloat16)

    # ------------------------------------------------------------------------
    def _bmap(ndim):
        trail = (0,) * (ndim - 1)
        return lambda n: (n,) + trail

    def _cmap(ndim):
        full = (0,) * ndim
        return lambda n: full

    def forward(const_arrs, x, residuals, hook_in=None):
        n = x.shape[0]
        # channel-first flattening is a free (contiguous) reshape on NCHW inputs
        batched = [x.reshape(n, x.shape[1], -1)]
        if has_hook:
            batched.append(hook_in.reshape(n, hook_in.shape[1], -1))
        for d in levels:
            r = residuals[d]
            batched.append(r.reshape(n, r.shape[1], -1))

        inputs = batched + list(const_arrs)
        in_specs = ([pl.BlockSpec((1,) + a.shape[1:], _bmap(a.ndim)) for a in batched]
                    + [pl.BlockSpec(a.shape, _cmap(a.ndim)) for a in const_arrs])

        cf, hf, wf = out_meta
        main_shape = jax.ShapeDtypeStruct((n, cf, hf * wf), x.dtype)
        main_spec = pl.BlockSpec((1, cf, hf * wf), _bmap(3))
        if emit_hook:
            ch, hh, wh = hook_meta
            out_shape = (main_shape, jax.ShapeDtypeStruct((n, ch, hh * wh), x.dtype))
            out_specs = (main_spec, pl.BlockSpec((1, ch, hh * wh), _bmap(3)))
        else:
            out_shape, out_specs = main_shape, main_spec

        bytes_accessed = sum(int(np.prod(a.shape)) * a.dtype.itemsize for a in inputs)
        bytes_accessed += n * cf * hf * wf * x.dtype.itemsize
        if emit_hook:
            bytes_accessed += n * hook_meta[0] * hook_meta[1] * hook_meta[2] * x.dtype.itemsize

        result = pl.pallas_call(
            kernel,
            out_shape=out_shape,
            grid=(n,),
            in_specs=in_specs,
            out_specs=out_specs,
            compiler_params=pltpu.CompilerParams(
                dimension_semantics=("parallel",)),
            cost_estimate=pl.CostEstimate(flops=n * flops_per_item,
                                          transcendentals=0,
                                          bytes_accessed=bytes_accessed),
        )(*inputs)

        if emit_hook:
            out_flat, hook_flat = result
            hook_out = hook_flat.reshape(n, hook_meta[0], hook_meta[1], hook_meta[2])
        else:
            out_flat = result
        out = out_flat.reshape(n, cf, hf, wf)        # already NCHW: free reshape
        if not emit_hook:
            hook_out = out
        return out, hook_out

    return forward, consts


# ----------------------------------------------------------------------------
# Pure-JAX fp32 reference (mirrors the PyTorch Decoder forward) for validation
# ----------------------------------------------------------------------------
def _reference_forward(params, x, residuals, hook_in, *, depth,
                       hook_from_index, hook_to_index):
    hi = jax.lax.Precision.HIGHEST

    def center_crop(a, th, tw):
        h, w = a.shape[2], a.shape[3]
        dy, dx = (h - th) // 2, (w - tw) // 2
        return a[:, :, dy:dy + th, dx:dx + tw]

    def conv3x3(a, w, b):
        o = jax.lax.conv_general_dilated(a, w, (1, 1), ((1, 1), (1, 1)),
                                         dimension_numbers=('NCHW', 'OIHW', 'NCHW'),
                                         precision=hi)
        return o + b.reshape(1, -1, 1, 1)

    def lrelu(a):
        return jnp.where(a >= 0, a, 0.01 * a)

    def up2x(a):
        _, _, h, w = a.shape
        r = jnp.asarray(_interp_matrix_1d(h))
        c = jnp.asarray(_interp_matrix_1d(w))
        return jnp.einsum('ph,nchw,qw->ncpq', r, a, c, precision=hi)

    out = x
    hook_out = None
    for d in reversed(range(depth)):
        if hook_in is not None and d == hook_to_index:
            hk = center_crop(hook_in, out.shape[2], out.shape[3])
            out = jnp.concatenate([out, hk], axis=1)
        up = params[f'upsample{d}']
        out = lrelu(conv3x3(up2x(out), up['w'], up['b']))
        res = center_crop(residuals[d], out.shape[2], out.shape[3])
        out = jnp.concatenate([out, res], axis=1)
        for layer in params[f'convblock{d}']:
            out = lrelu(conv3x3(out, layer['w'], layer['b']))
        if hook_from_index is not None and d == hook_from_index:
            hook_out = out
    if hook_out is None:
        hook_out = out
    return out, hook_out


# ----------------------------------------------------------------------------
if __name__ == "__main__":
    # Decoder config (matches the PyTorch module instance)
    depth = 2
    n_convs = 2
    in_channels = 8
    hook_channels = 4
    encoder_channels = {0: 8, 1: 8}
    n_filters = 4            # internal n_filters = 4 * 2 * depth = 16
    hook_from_index = 0
    hook_to_index = 1

    key = jax.random.PRNGKey(0)
    key, kp, kx, kh, kr1, kr0 = jax.random.split(key, 6)

    params = init_decoder_params(kp, in_channels, hook_channels, encoder_channels,
                                 n_filters, depth, n_convs, hook_to_index)

    N = 2
    x = jax.random.normal(kx, (N, in_channels, 4, 4), jnp.float32)        # NCHW
    hook_in = jax.random.normal(kh, (N, hook_channels, 6, 6), jnp.float32)
    residuals = {
        1: jax.random.normal(kr1, (N, encoder_channels[1], 10, 10), jnp.float32),
        0: jax.random.normal(kr0, (N, encoder_channels[0], 16, 16), jnp.float32),
    }

    forward, consts = make_decoder(
        params, depth=depth, hook_from_index=hook_from_index,
        hook_to_index=hook_to_index, x_shape=x.shape,
        residual_shapes={d: residuals[d].shape for d in residuals},
        hook_shape=hook_in.shape)

    fwd = jax.jit(forward)
    out, hook_out = fwd(consts, x, residuals, hook_in)
    jax.block_until_ready((out, hook_out))

    assert out.shape == (N, 8, 16, 16), out.shape
    assert hook_out.shape == (N, 8, 16, 16), hook_out.shape

    # Loose numeric check vs. fp32 reference (kernel matmul operands are bf16).
    ref_out, ref_hook = _reference_forward(params, x, residuals, hook_in,
                                           depth=depth,
                                           hook_from_index=hook_from_index,
                                           hook_to_index=hook_to_index)

    def _rel(a, b):
        a = a.astype(jnp.float32)
        b = b.astype(jnp.float32)
        return float(jnp.linalg.norm(a - b) / (jnp.linalg.norm(b) + 1e-12))

    assert _rel(out, ref_out) < 8e-2, _rel(out, ref_out)
    assert _rel(hook_out, ref_hook) < 8e-2, _rel(hook_out, ref_hook)
    print("KERNEL_OK")
</pallas_src>

<mosaic_0001>
module attributes {stable_mosaic.version = 11 : i64} {
  func.func @kernel(%arg0: i32, %arg1: memref<1x8x16xf32, #tpu.memory_space<vmem>>, %arg2: memref<1x4x36xf32, #tpu.memory_space<vmem>>, %arg3: memref<1x8x100xf32, #tpu.memory_space<vmem>>, %arg4: memref<1x8x256xf32, #tpu.memory_space<vmem>>, %arg5: memref<144x8xbf16, #tpu.memory_space<vmem>>, %arg6: memref<9x16x64xbf16, #tpu.memory_space<vmem>>, %arg7: memref<144x4xbf16, #tpu.memory_space<vmem>>, %arg8: memref<9x36x64xbf16, #tpu.memory_space<vmem>>, %arg9: memref<16x1xf32, #tpu.memory_space<vmem>>, %arg10: memref<144x16xbf16, #tpu.memory_space<vmem>>, %arg11: memref<9x64x64xbf16, #tpu.memory_space<vmem>>, %arg12: memref<144x8xbf16, #tpu.memory_space<vmem>>, %arg13: memref<9x100x64xbf16, #tpu.memory_space<vmem>>, %arg14: memref<16x1xf32, #tpu.memory_space<vmem>>, %arg15: memref<144x16xbf16, #tpu.memory_space<vmem>>, %arg16: memref<16x1xf32, #tpu.memory_space<vmem>>, %arg17: memref<72x16xbf16, #tpu.memory_space<vmem>>, %arg18: memref<9x64x256xbf16, #tpu.memory_space<vmem>>, %arg19: memref<8x1xf32, #tpu.memory_space<vmem>>, %arg20: memref<72x8xbf16, #tpu.memory_space<vmem>>, %arg21: memref<9x256x256xbf16, #tpu.memory_space<vmem>>, %arg22: memref<72x8xbf16, #tpu.memory_space<vmem>>, %arg23: memref<8x1xf32, #tpu.memory_space<vmem>>, %arg24: memref<72x8xbf16, #tpu.memory_space<vmem>>, %arg25: memref<8x1xf32, #tpu.memory_space<vmem>>, %arg26: memref<1x8x256xf32, #tpu.memory_space<vmem>>) attributes {dimension_semantics = [#tpu.dimension_semantics<parallel>], iteration_bounds = array<i64: 2>, scalar_prefetch = 0 : i64, scratch_operands = 0 : i64, tpu.core_type = #tpu.core_type<tc>, window_params = [{transform_indices = @transform_0, window_bounds = array<i64: 1, 8, 16>}, {transform_indices = @transform_1, window_bounds = array<i64: 1, 4, 36>}, {transform_indices = @transform_2, window_bounds = array<i64: 1, 8, 100>}, {transform_indices = @transform_3, window_bounds = array<i64: 1, 8, 256>}, {pipeline_mode = #tpu.pipeline_mode<synchronous>, transform_indices = @transform_4, window_bounds = array<i64: 144, 8>}, {pipeline_mode = #tpu.pipeline_mode<synchronous>, transform_indices = @transform_5, window_bounds = array<i64: 9, 16, 64>}, {pipeline_mode = #tpu.pipeline_mode<synchronous>, transform_indices = @transform_6, window_bounds = array<i64: 144, 4>}, {pipeline_mode = #tpu.pipeline_mode<synchronous>, transform_indices = @transform_7, window_bounds = array<i64: 9, 36, 64>}, {pipeline_mode = #tpu.pipeline_mode<synchronous>, transform_indices = @transform_8, window_bounds = array<i64: 16, 1>}, {pipeline_mode = #tpu.pipeline_mode<synchronous>, transform_indices = @transform_9, window_bounds = array<i64: 144, 16>}, {pipeline_mode = #tpu.pipeline_mode<synchronous>, transform_indices = @transform_10, window_bounds = array<i64: 9, 64, 64>}, {pipeline_mode = #tpu.pipeline_mode<synchronous>, transform_indices = @transform_11, window_bounds = array<i64: 144, 8>}, {pipeline_mode = #tpu.pipeline_mode<synchronous>, transform_indices = @transform_12, window_bounds = array<i64: 9, 100, 64>}, {pipeline_mode = #tpu.pipeline_mode<synchronous>, transform_indices = @transform_13, window_bounds = array<i64: 16, 1>}, {pipeline_mode = #tpu.pipeline_mode<synchronous>, transform_indices = @transform_14, window_bounds = array<i64: 144, 16>}, {pipeline_mode = #tpu.pipeline_mode<synchronous>, transform_indices = @transform_15, window_bounds = array<i64: 16, 1>}, {pipeline_mode = #tpu.pipeline_mode<synchronous>, transform_indices = @transform_16, window_bounds = array<i64: 72, 16>}, {pipeline_mode = #tpu.pipeline_mode<synchronous>, transform_indices = @transform_17, window_bounds = array<i64: 9, 64, 256>}, {pipeline_mode = #tpu.pipeline_mode<synchronous>, transform_indices = @transform_18, window_bounds = array<i64: 8, 1>}, {pipeline_mode = #tpu.pipeline_mode<synchronous>, transform_indices = @transform_19, window_bounds = array<i64: 72, 8>}, {pipeline_mode = #tpu.pipeline_mode<synchronous>, transform_indices = @transform_20, window_bounds = array<i64: 9, 256, 256>}, {pipeline_mode = #tpu.pipeline_mode<synchronous>, transform_indices = @transform_21, window_bounds = array<i64: 72, 8>}, {pipeline_mode = #tpu.pipeline_mode<synchronous>, transform_indices = @transform_22, window_bounds = array<i64: 8, 1>}, {pipeline_mode = #tpu.pipeline_mode<synchronous>, transform_indices = @transform_23, window_bounds = array<i64: 72, 8>}, {pipeline_mode = #tpu.pipeline_mode<synchronous>, transform_indices = @transform_24, window_bounds = array<i64: 8, 1>}, {transform_indices = @transform_25, window_bounds = array<i64: 1, 8, 256>}]} {
    %c0 = arith.constant 0 : index
    %c0_0 = arith.constant 0 : index
    %c0_1 = arith.constant 0 : index
    %0 = vector.load %arg1[%c0, %c0_0, %c0_1] : memref<1x8x16xf32, #tpu.memory_space<vmem>>, vector<1x8x16xf32>
    %1 = vector.shape_cast %0 : vector<1x8x16xf32> to vector<8x16xf32>
    %2 = arith.truncf %1 : vector<8x16xf32> to vector<8x16xbf16>
    %c0_2 = arith.constant 0 : index
    %c0_3 = arith.constant 0 : index
    %3 = vector.load %arg5[%c0_2, %c0_3] : memref<144x8xbf16, #tpu.memory_space<vmem>>, vector<144x8xbf16>
    %cst = arith.constant dense<0.000000e+00> : vector<144x16xf32>
    %4 = tpu.matmul %3, %2, %cst {dimension_numbers = #tpu.dot_dimension_numbers<[1], [0], [0], [1], [0, 0, 1, 1], [], []>} : vector<144x8xbf16>, vector<8x16xbf16>, vector<144x16xf32> -> vector<144x16xf32>
    %5 = arith.truncf %4 : vector<144x16xf32> to vector<144x16xbf16>
    %6 = vector.extract_strided_slice %5 {offsets = [0, 0], sizes = [16, 16], strides = [1, 1]} : vector<144x16xbf16> to vector<16x16xbf16>
    %c0_4 = arith.constant 0 : index
    %c0_5 = arith.constant 0 : index
    %c0_6 = arith.constant 0 : index
    %7 = vector.load %arg6[%c0_4, %c0_5, %c0_6] : memref<9x16x64xbf16, #tpu.memory_space<vmem>>, vector<1x16x64xbf16>
    %8 = vector.shape_cast %7 : vector<1x16x64xbf16> to vector<16x64xbf16>
    %cst_7 = arith.constant dense<0.000000e+00> : vector<16x64xf32>
    %9 = tpu.matmul %6, %8, %cst_7 {dimension_numbers = #tpu.dot_dimension_numbers<[1], [0], [0], [1], [0, 0, 1, 1], [], []>} : vector<16x16xbf16>, vector<16x64xbf16>, vector<16x64xf32> -> vector<16x64xf32>
    %10 = vector.extract_strided_slice %5 {offsets = [16, 0], sizes = [16, 16], strides = [1, 1]} : vector<144x16xbf16> to vector<16x16xbf16>
    %c1 = arith.constant 1 : index
    %c0_8 = arith.constant 0 : index
    %c0_9 = arith.constant 0 : index
    %11 = vector.load %arg6[%c1, %c0_8, %c0_9] : memref<9x16x64xbf16, #tpu.memory_space<vmem>>, vector<1x16x64xbf16>
    %12 = vector.shape_cast %11 : vector<1x16x64xbf16> to vector<16x64xbf16>
    %cst_10 = arith.constant dense<0.000000e+00> : vector<16x64xf32>
    %13 = tpu.matmul %10, %12, %cst_10 {dimension_numbers = #tpu.dot_dimension_numbers<[1], [0], [0], [1], [0, 0, 1, 1], [], []>} : vector<16x16xbf16>, vector<16x64xbf16>, vector<16x64xf32> -> vector<16x64xf32>
    %14 = arith.addf %9, %13 : vector<16x64xf32>
    %15 = vector.extract_strided_slice %5 {offsets = [32, 0], sizes = [16, 16], strides = [1, 1]} : vector<144x16xbf16> to vector<16x16xbf16>
    %c2 = arith.constant 2 : index
    %c0_11 = arith.constant 0 : index
    %c0_12 = arith.constant 0 : index
    %16 = vector.load %arg6[%c2, %c0_11, %c0_12] : memref<9x16x64xbf16, #tpu.memory_space<vmem>>, vector<1x16x64xbf16>
    %17 = vector.shape_cast %16 : vector<1x16x64xbf16> to vector<16x64xbf16>
    %cst_13 = arith.constant dense<0.000000e+00> : vector<16x64xf32>
    %18 = tpu.matmul %15, %17, %cst_13 {dimension_numbers = #tpu.dot_dimension_numbers<[1], [0], [0], [1], [0, 0, 1, 1], [], []>} : vector<16x16xbf16>, vector<16x64xbf16>, vector<16x64xf32> -> vector<16x64xf32>
    %19 = arith.addf %14, %18 : vector<16x64xf32>
    %20 = vector.extract_strided_slice %5 {offsets = [48, 0], sizes = [16, 16], strides = [1, 1]} : vector<144x16xbf16> to vector<16x16xbf16>
    %c3 = arith.constant 3 : index
    %c0_14 = arith.constant 0 : index
    %c0_15 = arith.constant 0 : index
    %21 = vector.load %arg6[%c3, %c0_14, %c0_15] : memref<9x16x64xbf16, #tpu.memory_space<vmem>>, vector<1x16x64xbf16>
    %22 = vector.shape_cast %21 : vector<1x16x64xbf16> to vector<16x64xbf16>
    %cst_16 = arith.constant dense<0.000000e+00> : vector<16x64xf32>
    %23 = tpu.matmul %20, %22, %cst_16 {dimension_numbers = #tpu.dot_dimension_numbers<[1], [0], [0], [1], [0, 0, 1, 1], [], []>} : vector<16x16xbf16>, vector<16x64xbf16>, vector<16x64xf32> -> vector<16x64xf32>
    %24 = arith.addf %19, %23 : vector<16x64xf32>
    %25 = vector.extract_strided_slice %5 {offsets = [64, 0], sizes = [16, 16], strides = [1, 1]} : vector<144x16xbf16> to vector<16x16xbf16>
    %c4 = arith.constant 4 : index
    %c0_17 = arith.constant 0 : index
    %c0_18 = arith.constant 0 : index
    %26 = vector.load %arg6[%c4, %c0_17, %c0_18] : memref<9x16x64xbf16, #tpu.memory_space<vmem>>, vector<1x16x64xbf16>
    %27 = vector.shape_cast %26 : vector<1x16x64xbf16> to vector<16x64xbf16>
    %cst_19 = arith.constant dense<0.000000e+00> : vector<16x64xf32>
    %28 = tpu.matmul %25, %27, %cst_19 {dimension_numbers = #tpu.dot_dimension_numbers<[1], [0], [0], [1], [0, 0, 1, 1], [], []>} : vector<16x16xbf16>, vector<16x64xbf16>, vector<16x64xf32> -> vector<16x64xf32>
    %29 = arith.addf %24, %28 : vector<16x64xf32>
    %30 = vector.extract_strided_slice %5 {offsets = [80, 0], sizes = [16, 16], strides = [1, 1]} : vector<144x16xbf16> to vector<16x16xbf16>
    %c5 = arith.constant 5 : index
    %c0_20 = arith.constant 0 : index
    %c0_21 = arith.constant 0 : index
    %31 = vector.load %arg6[%c5, %c0_20, %c0_21] : memref<9x16x64xbf16, #tpu.memory_space<vmem>>, vector<1x16x64xbf16>
    %32 = vector.shape_cast %31 : vector<1x16x64xbf16> to vector<16x64xbf16>
    %cst_22 = arith.constant dense<0.000000e+00> : vector<16x64xf32>
    %33 = tpu.matmul %30, %32, %cst_22 {dimension_numbers = #tpu.dot_dimension_numbers<[1], [0], [0], [1], [0, 0, 1, 1], [], []>} : vector<16x16xbf16>, vector<16x64xbf16>, vector<16x64xf32> -> vector<16x64xf32>
    %34 = arith.addf %29, %33 : vector<16x64xf32>
    %35 = vector.extract_strided_slice %5 {offsets = [96, 0], sizes = [16, 16], strides = [1, 1]} : vector<144x16xbf16> to vector<16x16xbf16>
    %c6 = arith.constant 6 : index
    %c0_23 = arith.constant 0 : index
    %c0_24 = arith.constant 0 : index
    %36 = vector.load %arg6[%c6, %c0_23, %c0_24] : memref<9x16x64xbf16, #tpu.memory_space<vmem>>, vector<1x16x64xbf16>
    %37 = vector.shape_cast %36 : vector<1x16x64xbf16> to vector<16x64xbf16>
    %cst_25 = arith.constant dense<0.000000e+00> : vector<16x64xf32>
    %38 = tpu.matmul %35, %37, %cst_25 {dimension_numbers = #tpu.dot_dimension_numbers<[1], [0], [0], [1], [0, 0, 1, 1], [], []>} : vector<16x16xbf16>, vector<16x64xbf16>, vector<16x64xf32> -> vector<16x64xf32>
    %39 = arith.addf %34, %38 : vector<16x64xf32>
    %40 = vector.extract_strided_slice %5 {offsets = [112, 0], sizes = [16, 16], strides = [1, 1]} : vector<144x16xbf16> to vector<16x16xbf16>
    %c7 = arith.constant 7 : index
    %c0_26 = arith.constant 0 : index
    %c0_27 = arith.constant 0 : index
    %41 = vector.load %arg6[%c7, %c0_26, %c0_27] : memref<9x16x64xbf16, #tpu.memory_space<vmem>>, vector<1x16x64xbf16>
    %42 = vector.shape_cast %41 : vector<1x16x64xbf16> to vector<16x64xbf16>
    %cst_28 = arith.constant dense<0.000000e+00> : vector<16x64xf32>
    %43 = tpu.matmul %40, %42, %cst_28 {dimension_numbers = #tpu.dot_dimension_numbers<[1], [0], [0], [1], [0, 0, 1, 1], [], []>} : vector<16x16xbf16>, vector<16x64xbf16>, vector<16x64xf32> -> vector<16x64xf32>
    %44 = arith.addf %39, %43 : vector<16x64xf32>
    %45 = vector.extract_strided_slice %5 {offsets = [128, 0], sizes = [16, 16], strides = [1, 1]} : vector<144x16xbf16> to vector<16x16xbf16>
    %c8 = arith.constant 8 : index
    %c0_29 = arith.constant 0 : index
    %c0_30 = arith.constant 0 : index
    %46 = vector.load %arg6[%c8, %c0_29, %c0_30] : memref<9x16x64xbf16, #tpu.memory_space<vmem>>, vector<1x16x64xbf16>
    %47 = vector.shape_cast %46 : vector<1x16x64xbf16> to vector<16x64xbf16>
    %cst_31 = arith.constant dense<0.000000e+00> : vector<16x64xf32>
    %48 = tpu.matmul %45, %47, %cst_31 {dimension_numbers = #tpu.dot_dimension_numbers<[1], [0], [0], [1], [0, 0, 1, 1], [], []>} : vector<16x16xbf16>, vector<16x64xbf16>, vector<16x64xf32> -> vector<16x64xf32>
    %49 = arith.addf %44, %48 : vector<16x64xf32>
    %c0_32 = arith.constant 0 : index
    %c0_33 = arith.constant 0 : index
    %c0_34 = arith.constant 0 : index
    %50 = vector.load %arg2[%c0_32, %c0_33, %c0_34] : memref<1x4x36xf32, #tpu.memory_space<vmem>>, vector<1x4x36xf32>
    %51 = vector.shape_cast %50 : vector<1x4x36xf32> to vector<4x36xf32>
    %52 = arith.truncf %51 : vector<4x36xf32> to vector<4x36xbf16>
    %c0_35 = arith.constant 0 : index
    %c0_36 = arith.constant 0 : index
    %53 = vector.load %arg7[%c0_35, %c0_36] : memref<144x4xbf16, #tpu.memory_space<vmem>>, vector<144x4xbf16>
    %cst_37 = arith.constant dense<0.000000e+00> : vector<144x36xf32>
    %54 = tpu.matmul %53, %52, %cst_37 {dimension_numbers = #tpu.dot_dimension_numbers<[1], [0], [0], [1], [0, 0, 1, 1], [], []>} : vector<144x4xbf16>, vector<4x36xbf16>, vector<144x36xf32> -> vector<144x36xf32>
    %55 = arith.truncf %54 : vector<144x36xf32> to vector<144x36xbf16>
    %56 = vector.extract_strided_slice %55 {offsets = [0, 0], sizes = [16, 36], strides = [1, 1]} : vector<144x36xbf16> to vector<16x36xbf16>
    %c0_38 = arith.constant 0 : index
    %c0_39 = arith.constant 0 : index
    %c0_40 = arith.constant 0 : index
    %57 = vector.load %arg8[%c0_38, %c0_39, %c0_40] : memref<9x36x64xbf16, #tpu.memory_space<vmem>>, vector<1x36x64xbf16>
    %58 = vector.shape_cast %57 : vector<1x36x64xbf16> to vector<36x64xbf16>
    %cst_41 = arith.constant dense<0.000000e+00> : vector<16x64xf32>
    %59 = tpu.matmul %56, %58, %cst_41 {dimension_numbers = #tpu.dot_dimension_numbers<[1], [0], [0], [1], [0, 0, 1, 1], [], []>} : vector<16x36xbf16>, vector<36x64xbf16>, vector<16x64xf32> -> vector<16x64xf32>
    %60 = arith.addf %49, %59 : vector<16x64xf32>
    %61 = vector.extract_strided_slice %55 {offsets = [16, 0], sizes = [16, 36], strides = [1, 1]} : vector<144x36xbf16> to vector<16x36xbf16>
    %c1_42 = arith.constant 1 : index
    %c0_43 = arith.constant 0 : index
    %c0_44 = arith.constant 0 : index
    %62 = vector.load %arg8[%c1_42, %c0_43, %c0_44] : memref<9x36x64xbf16, #tpu.memory_space<vmem>>, vector<1x36x64xbf16>
    %63 = vector.shape_cast %62 : vector<1x36x64xbf16> to vector<36x64xbf16>
    %cst_45 = arith.constant dense<0.000000e+00> : vector<16x64xf32>
    %64 = tpu.matmul %61, %63, %cst_45 {dimension_numbers = #tpu.dot_dimension_numbers<[1], [0], [0], [1], [0, 0, 1, 1], [], []>} : vector<16x36xbf16>, vector<36x64xbf16>, vector<16x64xf32> -> vector<16x64xf32>
    %65 = arith.addf %60, %64 : vector<16x64xf32>
    %66 = vector.extract_strided_slice %55 {offsets = [32, 0], sizes = [16, 36], strides = [1, 1]} : vector<144x36xbf16> to vector<16x36xbf16>
    %c2_46 = arith.constant 2 : index
    %c0_47 = arith.constant 0 : index
    %c0_48 = arith.constant 0 : index
    %67 = vector.load %arg8[%c2_46, %c0_47, %c0_48] : memref<9x36x64xbf16, #tpu.memory_space<vmem>>, vector<1x36x64xbf16>
    %68 = vector.shape_cast %67 : vector<1x36x64xbf16> to vector<36x64xbf16>
    %cst_49 = arith.constant dense<0.000000e+00> : vector<16x64xf32>
    %69 = tpu.matmul %66, %68, %cst_49 {dimension_numbers = #tpu.dot_dimension_numbers<[1], [0], [0], [1], [0, 0, 1, 1], [], []>} : vector<16x36xbf16>, vector<36x64xbf16>, vector<16x64xf32> -> vector<16x64xf32>
    %70 = arith.addf %65, %69 : vector<16x64xf32>
    %71 = vector.extract_strided_slice %55 {offsets = [48, 0], sizes = [16, 36], strides = [1, 1]} : vector<144x36xbf16> to vector<16x36xbf16>
    %c3_50 = arith.constant 3 : index
    %c0_51 = arith.constant 0 : index
    %c0_52 = arith.constant 0 : index
    %72 = vector.load %arg8[%c3_50, %c0_51, %c0_52] : memref<9x36x64xbf16, #tpu.memory_space<vmem>>, vector<1x36x64xbf16>
    %73 = vector.shape_cast %72 : vector<1x36x64xbf16> to vector<36x64xbf16>
    %cst_53 = arith.constant dense<0.000000e+00> : vector<16x64xf32>
    %74 = tpu.matmul %71, %73, %cst_53 {dimension_numbers = #tpu.dot_dimension_numbers<[1], [0], [0], [1], [0, 0, 1, 1], [], []>} : vector<16x36xbf16>, vector<36x64xbf16>, vector<16x64xf32> -> vector<16x64xf32>
    %75 = arith.addf %70, %74 : vector<16x64xf32>
    %76 = vector.extract_strided_slice %55 {offsets = [64, 0], sizes = [16, 36], strides = [1, 1]} : vector<144x36xbf16> to vector<16x36xbf16>
    %c4_54 = arith.constant 4 : index
    %c0_55 = arith.constant 0 : index
    %c0_56 = arith.constant 0 : index
    %77 = vector.load %arg8[%c4_54, %c0_55, %c0_56] : memref<9x36x64xbf16, #tpu.memory_space<vmem>>, vector<1x36x64xbf16>
    %78 = vector.shape_cast %77 : vector<1x36x64xbf16> to vector<36x64xbf16>
    %cst_57 = arith.constant dense<0.000000e+00> : vector<16x64xf32>
    %79 = tpu.matmul %76, %78, %cst_57 {dimension_numbers = #tpu.dot_dimension_numbers<[1], [0], [0], [1], [0, 0, 1, 1], [], []>} : vector<16x36xbf16>, vector<36x64xbf16>, vector<16x64xf32> -> vector<16x64xf32>
    %80 = arith.addf %75, %79 : vector<16x64xf32>
    %81 = vector.extract_strided_slice %55 {offsets = [80, 0], sizes = [16, 36], strides = [1, 1]} : vector<144x36xbf16> to vector<16x36xbf16>
    %c5_58 = arith.constant 5 : index
    %c0_59 = arith.constant 0 : index
    %c0_60 = arith.constant 0 : index
    %82 = vector.load %arg8[%c5_58, %c0_59, %c0_60] : memref<9x36x64xbf16, #tpu.memory_space<vmem>>, vector<1x36x64xbf16>
    %83 = vector.shape_cast %82 : vector<1x36x64xbf16> to vector<36x64xbf16>
    %cst_61 = arith.constant dense<0.000000e+00> : vector<16x64xf32>
    %84 = tpu.matmul %81, %83, %cst_61 {dimension_numbers = #tpu.dot_dimension_numbers<[1], [0], [0], [1], [0, 0, 1, 1], [], []>} : vector<16x36xbf16>, vector<36x64xbf16>, vector<16x64xf32> -> vector<16x64xf32>
    %85 = arith.addf %80, %84 : vector<16x64xf32>
    %86 = vector.extract_strided_slice %55 {offsets = [96, 0], sizes = [16, 36], strides = [1, 1]} : vector<144x36xbf16> to vector<16x36xbf16>
    %c6_62 = arith.constant 6 : index
    %c0_63 = arith.constant 0 : index
    %c0_64 = arith.constant 0 : index
    %87 = vector.load %arg8[%c6_62, %c0_63, %c0_64] : memref<9x36x64xbf16, #tpu.memory_space<vmem>>, vector<1x36x64xbf16>
    %88 = vector.shape_cast %87 : vector<1x36x64xbf16> to vector<36x64xbf16>
    %cst_65 = arith.constant dense<0.000000e+00> : vector<16x64xf32>
    %89 = tpu.matmul %86, %88, %cst_65 {dimension_numbers = #tpu.dot_dimension_numbers<[1], [0], [0], [1], [0, 0, 1, 1], [], []>} : vector<16x36xbf16>, vector<36x64xbf16>, vector<16x64xf32> -> vector<16x64xf32>
    %90 = arith.addf %85, %89 : vector<16x64xf32>
    %91 = vector.extract_strided_slice %55 {offsets = [112, 0], sizes = [16, 36], strides = [1, 1]} : vector<144x36xbf16> to vector<16x36xbf16>
    %c7_66 = arith.constant 7 : index
    %c0_67 = arith.constant 0 : index
    %c0_68 = arith.constant 0 : index
    %92 = vector.load %arg8[%c7_66, %c0_67, %c0_68] : memref<9x36x64xbf16, #tpu.memory_space<vmem>>, vector<1x36x64xbf16>
    %93 = vector.shape_cast %92 : vector<1x36x64xbf16> to vector<36x64xbf16>
    %cst_69 = arith.constant dense<0.000000e+00> : vector<16x64xf32>
    %94 = tpu.matmul %91, %93, %cst_69 {dimension_numbers = #tpu.dot_dimension_numbers<[1], [0], [0], [1], [0, 0, 1, 1], [], []>} : vector<16x36xbf16>, vector<36x64xbf16>, vector<16x64xf32> -> vector<16x64xf32>
    %95 = arith.addf %90, %94 : vector<16x64xf32>
    %96 = vector.extract_strided_slice %55 {offsets = [128, 0], sizes = [16, 36], strides = [1, 1]} : vector<144x36xbf16> to vector<16x36xbf16>
    %c8_70 = arith.constant 8 : index
    %c0_71 = arith.constant 0 : index
    %c0_72 = arith.constant 0 : index
    %97 = vector.load %arg8[%c8_70, %c0_71, %c0_72] : memref<9x36x64xbf16, #tpu.memory_space<vmem>>, vector<1x36x64xbf16>
    %98 = vector.shape_cast %97 : vector<1x36x64xbf16> to vector<36x64xbf16>
    %cst_73 = arith.constant dense<0.000000e+00> : vector<16x64xf32>
    %99 = tpu.matmul %96, %98, %cst_73 {dimension_numbers = #tpu.dot_dimension_numbers<[1], [0], [0], [1], [0, 0, 1, 1], [], []>} : vector<16x36xbf16>, vector<36x64xbf16>, vector<16x64xf32> -> vector<16x64xf32>
    %100 = arith.addf %95, %99 : vector<16x64xf32>
    %c0_74 = arith.constant 0 : index
    %c0_75 = arith.constant 0 : index
    %101 = vector.load %arg9[%c0_74, %c0_75] : memref<16x1xf32, #tpu.memory_space<vmem>>, vector<16x1xf32>
    %102 = vector.broadcast %101 : vector<16x1xf32> to vector<16x64xf32>
    %103 = arith.addf %100, %102 : vector<16x64xf32>
    %cst_76 = arith.constant 0.00999999977 : f32
    %104 = vector.broadcast %cst_76 : f32 to vector<16x64xf32>
    %105 = arith.mulf %104, %103 : vector<16x64xf32>
    %106 = arith.maximumf %103, %105 : vector<16x64xf32>
    %107 = arith.truncf %106 : vector<16x64xf32> to vector<16x64xbf16>
    %c0_77 = arith.constant 0 : index
    %c0_78 = arith.constant 0 : index
    %108 = vector.load %arg10[%c0_77, %c0_78] : memref<144x16xbf16, #tpu.memory_space<vmem>>, vector<144x16xbf16>
    %cst_79 = arith.constant dense<0.000000e+00> : vector<144x64xf32>
    %109 = tpu.matmul %108, %107, %cst_79 {dimension_numbers = #tpu.dot_dimension_numbers<[1], [0], [0], [1], [0, 0, 1, 1], [], []>} : vector<144x16xbf16>, vector<16x64xbf16>, vector<144x64xf32> -> vector<144x64xf32>
    %110 = arith.truncf %109 : vector<144x64xf32> to vector<144x64xbf16>
    %111 = vector.extract_strided_slice %110 {offsets = [0, 0], sizes = [16, 64], strides = [1, 1]} : vector<144x64xbf16> to vector<16x64xbf16>
    %c0_80 = arith.constant 0 : index
    %c0_81 = arith.constant 0 : index
    %c0_82 = arith.constant 0 : index
    %112 = vector.load %arg11[%c0_80, %c0_81, %c0_82] : memref<9x64x64xbf16, #tpu.memory_space<vmem>>, vector<1x64x64xbf16>
    %113 = vector.shape_cast %112 : vector<1x64x64xbf16> to vector<64x64xbf16>
    %cst_83 = arith.constant dense<0.000000e+00> : vector<16x64xf32>
    %114 = tpu.matmul %111, %113, %cst_83 {dimension_numbers = #tpu.dot_dimension_numbers<[1], [0], [0], [1], [0, 0, 1, 1], [], []>} : vector<16x64xbf16>, vector<64x64xbf16>, vector<16x64xf32> -> vector<16x64xf32>
    %115 = vector.extract_strided_slice %110 {offsets = [16, 0], sizes = [16, 64], strides = [1, 1]} : vector<144x64xbf16> to vector<16x64xbf16>
    %c1_84 = arith.constant 1 : index
    %c0_85 = arith.constant 0 : index
    %c0_86 = arith.constant 0 : index
    %116 = vector.load %arg11[%c1_84, %c0_85, %c0_86] : memref<9x64x64xbf16, #tpu.memory_space<vmem>>, vector<1x64x64xbf16>
    %117 = vector.shape_cast %116 : vector<1x64x64xbf16> to vector<64x64xbf16>
    %cst_87 = arith.constant dense<0.000000e+00> : vector<16x64xf32>
    %118 = tpu.matmul %115, %117, %cst_87 {dimension_numbers = #tpu.dot_dimension_numbers<[1], [0], [0], [1], [0, 0, 1, 1], [], []>} : vector<16x64xbf16>, vector<64x64xbf16>, vector<16x64xf32> -> vector<16x64xf32>
    %119 = arith.addf %114, %118 : vector<16x64xf32>
    %120 = vector.extract_strided_slice %110 {offsets = [32, 0], sizes = [16, 64], strides = [1, 1]} : vector<144x64xbf16> to vector<16x64xbf16>
    %c2_88 = arith.constant 2 : index
    %c0_89 = arith.constant 0 : index
    %c0_90 = arith.constant 0 : index
    %121 = vector.load %arg11[%c2_88, %c0_89, %c0_90] : memref<9x64x64xbf16, #tpu.memory_space<vmem>>, vector<1x64x64xbf16>
    %122 = vector.shape_cast %121 : vector<1x64x64xbf16> to vector<64x64xbf16>
    %cst_91 = arith.constant dense<0.000000e+00> : vector<16x64xf32>
    %123 = tpu.matmul %120, %122, %cst_91 {dimension_numbers = #tpu.dot_dimension_numbers<[1], [0], [0], [1], [0, 0, 1, 1], [], []>} : vector<16x64xbf16>, vector<64x64xbf16>, vector<16x64xf32> -> vector<16x64xf32>
    %124 = arith.addf %119, %123 : vector<16x64xf32>
    %125 = vector.extract_strided_slice %110 {offsets = [48, 0], sizes = [16, 64], strides = [1, 1]} : vector<144x64xbf16> to vector<16x64xbf16>
    %c3_92 = arith.constant 3 : index
    %c0_93 = arith.constant 0 : index
    %c0_94 = arith.constant 0 : index
    %126 = vector.load %arg11[%c3_92, %c0_93, %c0_94] : memref<9x64x64xbf16, #tpu.memory_space<vmem>>, vector<1x64x64xbf16>
    %127 = vector.shape_cast %126 : vector<1x64x64xbf16> to vector<64x64xbf16>
    %cst_95 = arith.constant dense<0.000000e+00> : vector<16x64xf32>
    %128 = tpu.matmul %125, %127, %cst_95 {dimension_numbers = #tpu.dot_dimension_numbers<[1], [0], [0], [1], [0, 0, 1, 1], [], []>} : vector<16x64xbf16>, vector<64x64xbf16>, vector<16x64xf32> -> vector<16x64xf32>
    %129 = arith.addf %124, %128 : vector<16x64xf32>
    %130 = vector.extract_strided_slice %110 {offsets = [64, 0], sizes = [16, 64], strides = [1, 1]} : vector<144x64xbf16> to vector<16x64xbf16>
    %c4_96 = arith.constant 4 : index
    %c0_97 = arith.constant 0 : index
    %c0_98 = arith.constant 0 : index
    %131 = vector.load %arg11[%c4_96, %c0_97, %c0_98] : memref<9x64x64xbf16, #tpu.memory_space<vmem>>, vector<1x64x64xbf16>
    %132 = vector.shape_cast %131 : vector<1x64x64xbf16> to vector<64x64xbf16>
    %cst_99 = arith.constant dense<0.000000e+00> : vector<16x64xf32>
    %133 = tpu.matmul %130, %132, %cst_99 {dimension_numbers = #tpu.dot_dimension_numbers<[1], [0], [0], [1], [0, 0, 1, 1], [], []>} : vector<16x64xbf16>, vector<64x64xbf16>, vector<16x64xf32> -> vector<16x64xf32>
    %134 = arith.addf %129, %133 : vector<16x64xf32>
    %135 = vector.extract_strided_slice %110 {offsets = [80, 0], sizes = [16, 64], strides = [1, 1]} : vector<144x64xbf16> to vector<16x64xbf16>
    %c5_100 = arith.constant 5 : index
    %c0_101 = arith.constant 0 : index
    %c0_102 = arith.constant 0 : index
    %136 = vector.load %arg11[%c5_100, %c0_101, %c0_102] : memref<9x64x64xbf16, #tpu.memory_space<vmem>>, vector<1x64x64xbf16>
    %137 = vector.shape_cast %136 : vector<1x64x64xbf16> to vector<64x64xbf16>
    %cst_103 = arith.constant dense<0.000000e+00> : vector<16x64xf32>
    %138 = tpu.matmul %135, %137, %cst_103 {dimension_numbers = #tpu.dot_dimension_numbers<[1], [0], [0], [1], [0, 0, 1, 1], [], []>} : vector<16x64xbf16>, vector<64x64xbf16>, vector<16x64xf32> -> vector<16x64xf32>
    %139 = arith.addf %134, %138 : vector<16x64xf32>
    %140 = vector.extract_strided_slice %110 {offsets = [96, 0], sizes = [16, 64], strides = [1, 1]} : vector<144x64xbf16> to vector<16x64xbf16>
    %c6_104 = arith.constant 6 : index
    %c0_105 = arith.constant 0 : index
    %c0_106 = arith.constant 0 : index
    %141 = vector.load %arg11[%c6_104, %c0_105, %c0_106] : memref<9x64x64xbf16, #tpu.memory_space<vmem>>, vector<1x64x64xbf16>
    %142 = vector.shape_cast %141 : vector<1x64x64xbf16> to vector<64x64xbf16>
    %cst_107 = arith.constant dense<0.000000e+00> : vector<16x64xf32>
    %143 = tpu.matmul %140, %142, %cst_107 {dimension_numbers = #tpu.dot_dimension_numbers<[1], [0], [0], [1], [0, 0, 1, 1], [], []>} : vector<16x64xbf16>, vector<64x64xbf16>, vector<16x64xf32> -> vector<16x64xf32>
    %144 = arith.addf %139, %143 : vector<16x64xf32>
    %145 = vector.extract_strided_slice %110 {offsets = [112, 0], sizes = [16, 64], strides = [1, 1]} : vector<144x64xbf16> to vector<16x64xbf16>
    %c7_108 = arith.constant 7 : index
    %c0_109 = arith.constant 0 : index
    %c0_110 = arith.constant 0 : index
    %146 = vector.load %arg11[%c7_108, %c0_109, %c0_110] : memref<9x64x64xbf16, #tpu.memory_space<vmem>>, vector<1x64x64xbf16>
    %147 = vector.shape_cast %146 : vector<1x64x64xbf16> to vector<64x64xbf16>
    %cst_111 = arith.constant dense<0.000000e+00> : vector<16x64xf32>
    %148 = tpu.matmul %145, %147, %cst_111 {dimension_numbers = #tpu.dot_dimension_numbers<[1], [0], [0], [1], [0, 0, 1, 1], [], []>} : vector<16x64xbf16>, vector<64x64xbf16>, vector<16x64xf32> -> vector<16x64xf32>
    %149 = arith.addf %144, %148 : vector<16x64xf32>
    %150 = vector.extract_strided_slice %110 {offsets = [128, 0], sizes = [16, 64], strides = [1, 1]} : vector<144x64xbf16> to vector<16x64xbf16>
    %c8_112 = arith.constant 8 : index
    %c0_113 = arith.constant 0 : index
    %c0_114 = arith.constant 0 : index
    %151 = vector.load %arg11[%c8_112, %c0_113, %c0_114] : memref<9x64x64xbf16, #tpu.memory_space<vmem>>, vector<1x64x64xbf16>
    %152 = vector.shape_cast %151 : vector<1x64x64xbf16> to vector<64x64xbf16>
    %cst_115 = arith.constant dense<0.000000e+00> : vector<16x64xf32>
    %153 = tpu.matmul %150, %152, %cst_115 {dimension_numbers = #tpu.dot_dimension_numbers<[1], [0], [0], [1], [0, 0, 1, 1], [], []>} : vector<16x64xbf16>, vector<64x64xbf16>, vector<16x64xf32> -> vector<16x64xf32>
    %154 = arith.addf %149, %153 : vector<16x64xf32>
    %c0_116 = arith.constant 0 : index
    %c0_117 = arith.constant 0 : index
    %c0_118 = arith.constant 0 : index
    %155 = vector.load %arg3[%c0_116, %c0_117, %c0_118] : memref<1x8x100xf32, #tpu.memory_space<vmem>>, vector<1x8x100xf32>
    %156 = vector.shape_cast %155 : vector<1x8x100xf32> to vector<8x100xf32>
    %157 = arith.truncf %156 : vector<8x100xf32> to vector<8x100xbf16>
    %c0_119 = arith.constant 0 : index
    %c0_120 = arith.constant 0 : index
    %158 = vector.load %arg12[%c0_119, %c0_120] : memref<144x8xbf16, #tpu.memory_space<vmem>>, vector<144x8xbf16>
    %cst_121 = arith.constant dense<0.000000e+00> : vector<144x100xf32>
    %159 = tpu.matmul %158, %157, %cst_121 {dimension_numbers = #tpu.dot_dimension_numbers<[1], [0], [0], [1], [0, 0, 1, 1], [], []>} : vector<144x8xbf16>, vector<8x100xbf16>, vector<144x100xf32> -> vector<144x100xf32>
    %160 = arith.truncf %159 : vector<144x100xf32> to vector<144x100xbf16>
    %161 = vector.extract_strided_slice %160 {offsets = [0, 0], sizes = [16, 100], strides = [1, 1]} : vector<144x100xbf16> to vector<16x100xbf16>
    %c0_122 = arith.constant 0 : index
    %c0_123 = arith.constant 0 : index
    %c0_124 = arith.constant 0 : index
    %162 = vector.load %arg13[%c0_122, %c0_123, %c0_124] : memref<9x100x64xbf16, #tpu.memory_space<vmem>>, vector<1x100x64xbf16>
    %163 = vector.shape_cast %162 : vector<1x100x64xbf16> to vector<100x64xbf16>
    %cst_125 = arith.constant dense<0.000000e+00> : vector<16x64xf32>
    %164 = tpu.matmul %161, %163, %cst_125 {dimension_numbers = #tpu.dot_dimension_numbers<[1], [0], [0], [1], [0, 0, 1, 1], [], []>} : vector<16x100xbf16>, vector<100x64xbf16>, vector<16x64xf32> -> vector<16x64xf32>
    %165 = arith.addf %154, %164 : vector<16x64xf32>
    %166 = vector.extract_strided_slice %160 {offsets = [16, 0], sizes = [16, 100], strides = [1, 1]} : vector<144x100xbf16> to vector<16x100xbf16>
    %c1_126 = arith.constant 1 : index
    %c0_127 = arith.constant 0 : index
    %c0_128 = arith.constant 0 : index
    %167 = vector.load %arg13[%c1_126, %c0_127, %c0_128] : memref<9x100x64xbf16, #tpu.memory_space<vmem>>, vector<1x100x64xbf16>
    %168 = vector.shape_cast %167 : vector<1x100x64xbf16> to vector<100x64xbf16>
    %cst_129 = arith.constant dense<0.000000e+00> : vector<16x64xf32>
    %169 = tpu.matmul %166, %168, %cst_129 {dimension_numbers = #tpu.dot_dimension_numbers<[1], [0], [0], [1], [0, 0, 1, 1], [], []>} : vector<16x100xbf16>, vector<100x64xbf16>, vector<16x64xf32> -> vector<16x64xf32>
    %170 = arith.addf %165, %169 : vector<16x64xf32>
    %171 = vector.extract_strided_slice %160 {offsets = [32, 0], sizes = [16, 100], strides = [1, 1]} : vector<144x100xbf16> to vector<16x100xbf16>
    %c2_130 = arith.constant 2 : index
    %c0_131 = arith.constant 0 : index
    %c0_132 = arith.constant 0 : index
    %172 = vector.load %arg13[%c2_130, %c0_131, %c0_132] : memref<9x100x64xbf16, #tpu.memory_space<vmem>>, vector<1x100x64xbf16>
    %173 = vector.shape_cast %172 : vector<1x100x64xbf16> to vector<100x64xbf16>
    %cst_133 = arith.constant dense<0.000000e+00> : vector<16x64xf32>
    %174 = tpu.matmul %171, %173, %cst_133 {dimension_numbers = #tpu.dot_dimension_numbers<[1], [0], [0], [1], [0, 0, 1, 1], [], []>} : vector<16x100xbf16>, vector<100x64xbf16>, vector<16x64xf32> -> vector<16x64xf32>
    %175 = arith.addf %170, %174 : vector<16x64xf32>
    %176 = vector.extract_strided_slice %160 {offsets = [48, 0], sizes = [16, 100], strides = [1, 1]} : vector<144x100xbf16> to vector<16x100xbf16>
    %c3_134 = arith.constant 3 : index
    %c0_135 = arith.constant 0 : index
    %c0_136 = arith.constant 0 : index
    %177 = vector.load %arg13[%c3_134, %c0_135, %c0_136] : memref<9x100x64xbf16, #tpu.memory_space<vmem>>, vector<1x100x64xbf16>
    %178 = vector.shape_cast %177 : vector<1x100x64xbf16> to vector<100x64xbf16>
    %cst_137 = arith.constant dense<0.000000e+00> : vector<16x64xf32>
    %179 = tpu.matmul %176, %178, %cst_137 {dimension_numbers = #tpu.dot_dimension_numbers<[1], [0], [0], [1], [0, 0, 1, 1], [], []>} : vector<16x100xbf16>, vector<100x64xbf16>, vector<16x64xf32> -> vector<16x64xf32>
    %180 = arith.addf %175, %179 : vector<16x64xf32>
    %181 = vector.extract_strided_slice %160 {offsets = [64, 0], sizes = [16, 100], strides = [1, 1]} : vector<144x100xbf16> to vector<16x100xbf16>
    %c4_138 = arith.constant 4 : index
    %c0_139 = arith.constant 0 : index
    %c0_140 = arith.constant 0 : index
    %182 = vector.load %arg13[%c4_138, %c0_139, %c0_140] : memref<9x100x64xbf16, #tpu.memory_space<vmem>>, vector<1x100x64xbf16>
    %183 = vector.shape_cast %182 : vector<1x100x64xbf16> to vector<100x64xbf16>
    %cst_141 = arith.constant dense<0.000000e+00> : vector<16x64xf32>
    %184 = tpu.matmul %181, %183, %cst_141 {dimension_numbers = #tpu.dot_dimension_numbers<[1], [0], [0], [1], [0, 0, 1, 1], [], []>} : vector<16x100xbf16>, vector<100x64xbf16>, vector<16x64xf32> -> vector<16x64xf32>
    %185 = arith.addf %180, %184 : vector<16x64xf32>
    %186 = vector.extract_strided_slice %160 {offsets = [80, 0], sizes = [16, 100], strides = [1, 1]} : vector<144x100xbf16> to vector<16x100xbf16>
    %c5_142 = arith.constant 5 : index
    %c0_143 = arith.constant 0 : index
    %c0_144 = arith.constant 0 : index
    %187 = vector.load %arg13[%c5_142, %c0_143, %c0_144] : memref<9x100x64xbf16, #tpu.memory_space<vmem>>, vector<1x100x64xbf16>
    %188 = vector.shape_cast %187 : vector<1x100x64xbf16> to vector<100x64xbf16>
    %cst_145 = arith.constant dense<0.000000e+00> : vector<16x64xf32>
    %189 = tpu.matmul %186, %188, %cst_145 {dimension_numbers = #tpu.dot_dimension_numbers<[1], [0], [0], [1], [0, 0, 1, 1], [], []>} : vector<16x100xbf16>, vector<100x64xbf16>, vector<16x64xf32> -> vector<16x64xf32>
    %190 = arith.addf %185, %189 : vector<16x64xf32>
    %191 = vector.extract_strided_slice %160 {offsets = [96, 0], sizes = [16, 100], strides = [1, 1]} : vector<144x100xbf16> to vector<16x100xbf16>
    %c6_146 = arith.constant 6 : index
    %c0_147 = arith.constant 0 : index
    %c0_148 = arith.constant 0 : index
    %192 = vector.load %arg13[%c6_146, %c0_147, %c0_148] : memref<9x100x64xbf16, #tpu.memory_space<vmem>>, vector<1x100x64xbf16>
    %193 = vector.shape_cast %192 : vector<1x100x64xbf16> to vector<100x64xbf16>
    %cst_149 = arith.constant dense<0.000000e+00> : vector<16x64xf32>
    %194 = tpu.matmul %191, %193, %cst_149 {dimension_numbers = #tpu.dot_dimension_numbers<[1], [0], [0], [1], [0, 0, 1, 1], [], []>} : vector<16x100xbf16>, vector<100x64xbf16>, vector<16x64xf32> -> vector<16x64xf32>
    %195 = arith.addf %190, %194 : vector<16x64xf32>
    %196 = vector.extract_strided_slice %160 {offsets = [112, 0], sizes = [16, 100], strides = [1, 1]} : vector<144x100xbf16> to vector<16x100xbf16>
    %c7_150 = arith.constant 7 : index
    %c0_151 = arith.constant 0 : index
    %c0_152 = arith.constant 0 : index
    %197 = vector.load %arg13[%c7_150, %c0_151, %c0_152] : memref<9x100x64xbf16, #tpu.memory_space<vmem>>, vector<1x100x64xbf16>
    %198 = vector.shape_cast %197 : vector<1x100x64xbf16> to vector<100x64xbf16>
    %cst_153 = arith.constant dense<0.000000e+00> : vector<16x64xf32>
    %199 = tpu.matmul %196, %198, %cst_153 {dimension_numbers = #tpu.dot_dimension_numbers<[1], [0], [0], [1], [0, 0, 1, 1], [], []>} : vector<16x100xbf16>, vector<100x64xbf16>, vector<16x64xf32> -> vector<16x64xf32>
    %200 = arith.addf %195, %199 : vector<16x64xf32>
    %201 = vector.extract_strided_slice %160 {offsets = [128, 0], sizes = [16, 100], strides = [1, 1]} : vector<144x100xbf16> to vector<16x100xbf16>
    %c8_154 = arith.constant 8 : index
    %c0_155 = arith.constant 0 : index
    %c0_156 = arith.constant 0 : index
    %202 = vector.load %arg13[%c8_154, %c0_155, %c0_156] : memref<9x100x64xbf16, #tpu.memory_space<vmem>>, vector<1x100x64xbf16>
    %203 = vector.shape_cast %202 : vector<1x100x64xbf16> to vector<100x64xbf16>
    %cst_157 = arith.constant dense<0.000000e+00> : vector<16x64xf32>
    %204 = tpu.matmul %201, %203, %cst_157 {dimension_numbers = #tpu.dot_dimension_numbers<[1], [0], [0], [1], [0, 0, 1, 1], [], []>} : vector<16x100xbf16>, vector<100x64xbf16>, vector<16x64xf32> -> vector<16x64xf32>
    %205 = arith.addf %200, %204 : vector<16x64xf32>
    %c0_158 = arith.constant 0 : index
    %c0_159 = arith.constant 0 : index
    %206 = vector.load %arg14[%c0_158, %c0_159] : memref<16x1xf32, #tpu.memory_space<vmem>>, vector<16x1xf32>
    %207 = vector.broadcast %206 : vector<16x1xf32> to vector<16x64xf32>
    %208 = arith.addf %205, %207 : vector<16x64xf32>
    %cst_160 = arith.constant 0.00999999977 : f32
    %209 = vector.broadcast %cst_160 : f32 to vector<16x64xf32>
    %210 = arith.mulf %209, %208 : vector<16x64xf32>
    %211 = arith.maximumf %208, %210 : vector<16x64xf32>
    %212 = arith.truncf %211 : vector<16x64xf32> to vector<16x64xbf16>
    %c0_161 = arith.constant 0 : index
    %c0_162 = arith.constant 0 : index
    %213 = vector.load %arg15[%c0_161, %c0_162] : memref<144x16xbf16, #tpu.memory_space<vmem>>, vector<144x16xbf16>
    %cst_163 = arith.constant dense<0.000000e+00> : vector<144x64xf32>
    %214 = tpu.matmul %213, %212, %cst_163 {dimension_numbers = #tpu.dot_dimension_numbers<[1], [0], [0], [1], [0, 0, 1, 1], [], []>} : vector<144x16xbf16>, vector<16x64xbf16>, vector<144x64xf32> -> vector<144x64xf32>
    %215 = arith.truncf %214 : vector<144x64xf32> to vector<144x64xbf16>
    %216 = vector.extract_strided_slice %215 {offsets = [0, 0], sizes = [16, 64], strides = [1, 1]} : vector<144x64xbf16> to vector<16x64xbf16>
    %c0_164 = arith.constant 0 : index
    %c0_165 = arith.constant 0 : index
    %c0_166 = arith.constant 0 : index
    %217 = vector.load %arg11[%c0_164, %c0_165, %c0_166] : memref<9x64x64xbf16, #tpu.memory_space<vmem>>, vector<1x64x64xbf16>
    %218 = vector.shape_cast %217 : vector<1x64x64xbf16> to vector<64x64xbf16>
    %cst_167 = arith.constant dense<0.000000e+00> : vector<16x64xf32>
    %219 = tpu.matmul %216, %218, %cst_167 {dimension_numbers = #tpu.dot_dimension_numbers<[1], [0], [0], [1], [0, 0, 1, 1], [], []>} : vector<16x64xbf16>, vector<64x64xbf16>, vector<16x64xf32> -> vector<16x64xf32>
    %220 = vector.extract_strided_slice %215 {offsets = [16, 0], sizes = [16, 64], strides = [1, 1]} : vector<144x64xbf16> to vector<16x64xbf16>
    %c1_168 = arith.constant 1 : index
    %c0_169 = arith.constant 0 : index
    %c0_170 = arith.constant 0 : index
    %221 = vector.load %arg11[%c1_168, %c0_169, %c0_170] : memref<9x64x64xbf16, #tpu.memory_space<vmem>>, vector<1x64x64xbf16>
    %222 = vector.shape_cast %221 : vector<1x64x64xbf16> to vector<64x64xbf16>
    %cst_171 = arith.constant dense<0.000000e+00> : vector<16x64xf32>
    %223 = tpu.matmul %220, %222, %cst_171 {dimension_numbers = #tpu.dot_dimension_numbers<[1], [0], [0], [1], [0, 0, 1, 1], [], []>} : vector<16x64xbf16>, vector<64x64xbf16>, vector<16x64xf32> -> vector<16x64xf32>
    %224 = arith.addf %219, %223 : vector<16x64xf32>
    %225 = vector.extract_strided_slice %215 {offsets = [32, 0], sizes = [16, 64], strides = [1, 1]} : vector<144x64xbf16> to vector<16x64xbf16>
    %c2_172 = arith.constant 2 : index
    %c0_173 = arith.constant 0 : index
    %c0_174 = arith.constant 0 : index
    %226 = vector.load %arg11[%c2_172, %c0_173, %c0_174] : memref<9x64x64xbf16, #tpu.memory_space<vmem>>, vector<1x64x64xbf16>
    %227 = vector.shape_cast %226 : vector<1x64x64xbf16> to vector<64x64xbf16>
    %cst_175 = arith.constant dense<0.000000e+00> : vector<16x64xf32>
    %228 = tpu.matmul %225, %227, %cst_175 {dimension_numbers = #tpu.dot_dimension_numbers<[1], [0], [0], [1], [0, 0, 1, 1], [], []>} : vector<16x64xbf16>, vector<64x64xbf16>, vector<16x64xf32> -> vector<16x64xf32>
    %229 = arith.addf %224, %228 : vector<16x64xf32>
    %230 = vector.extract_strided_slice %215 {offsets = [48, 0], sizes = [16, 64], strides = [1, 1]} : vector<144x64xbf16> to vector<16x64xbf16>
    %c3_176 = arith.constant 3 : index
    %c0_177 = arith.constant 0 : index
    %c0_178 = arith.constant 0 : index
    %231 = vector.load %arg11[%c3_176, %c0_177, %c0_178] : memref<9x64x64xbf16, #tpu.memory_space<vmem>>, vector<1x64x64xbf16>
    %232 = vector.shape_cast %231 : vector<1x64x64xbf16> to vector<64x64xbf16>
    %cst_179 = arith.constant dense<0.000000e+00> : vector<16x64xf32>
    %233 = tpu.matmul %230, %232, %cst_179 {dimension_numbers = #tpu.dot_dimension_numbers<[1], [0], [0], [1], [0, 0, 1, 1], [], []>} : vector<16x64xbf16>, vector<64x64xbf16>, vector<16x64xf32> -> vector<16x64xf32>
    %234 = arith.addf %229, %233 : vector<16x64xf32>
    %235 = vector.extract_strided_slice %215 {offsets = [64, 0], sizes = [16, 64], strides = [1, 1]} : vector<144x64xbf16> to vector<16x64xbf16>
    %c4_180 = arith.constant 4 : index
    %c0_181 = arith.constant 0 : index
    %c0_182 = arith.constant 0 : index
    %236 = vector.load %arg11[%c4_180, %c0_181, %c0_182] : memref<9x64x64xbf16, #tpu.memory_space<vmem>>, vector<1x64x64xbf16>
    %237 = vector.shape_cast %236 : vector<1x64x64xbf16> to vector<64x64xbf16>
    %cst_183 = arith.constant dense<0.000000e+00> : vector<16x64xf32>
    %238 = tpu.matmul %235, %237, %cst_183 {dimension_numbers = #tpu.dot_dimension_numbers<[1], [0], [0], [1], [0, 0, 1, 1], [], []>} : vector<16x64xbf16>, vector<64x64xbf16>, vector<16x64xf32> -> vector<16x64xf32>
    %239 = arith.addf %234, %238 : vector<16x64xf32>
    %240 = vector.extract_strided_slice %215 {offsets = [80, 0], sizes = [16, 64], strides = [1, 1]} : vector<144x64xbf16> to vector<16x64xbf16>
    %c5_184 = arith.constant 5 : index
    %c0_185 = arith.constant 0 : index
    %c0_186 = arith.constant 0 : index
    %241 = vector.load %arg11[%c5_184, %c0_185, %c0_186] : memref<9x64x64xbf16, #tpu.memory_space<vmem>>, vector<1x64x64xbf16>
    %242 = vector.shape_cast %241 : vector<1x64x64xbf16> to vector<64x64xbf16>
    %cst_187 = arith.constant dense<0.000000e+00> : vector<16x64xf32>
    %243 = tpu.matmul %240, %242, %cst_187 {dimension_numbers = #tpu.dot_dimension_numbers<[1], [0], [0], [1], [0, 0, 1, 1], [], []>} : vector<16x64xbf16>, vector<64x64xbf16>, vector<16x64xf32> -> vector<16x64xf32>
    %244 = arith.addf %239, %243 : vector<16x64xf32>
    %245 = vector.extract_strided_slice %215 {offsets = [96, 0], sizes = [16, 64], strides = [1, 1]} : vector<144x64xbf16> to vector<16x64xbf16>
    %c6_188 = arith.constant 6 : index
    %c0_189 = arith.constant 0 : index
    %c0_190 = arith.constant 0 : index
    %246 = vector.load %arg11[%c6_188, %c0_189, %c0_190] : memref<9x64x64xbf16, #tpu.memory_space<vmem>>, vector<1x64x64xbf16>
    %247 = vector.shape_cast %246 : vector<1x64x64xbf16> to vector<64x64xbf16>
    %cst_191 = arith.constant dense<0.000000e+00> : vector<16x64xf32>
    %248 = tpu.matmul %245, %247, %cst_191 {dimension_numbers = #tpu.dot_dimension_numbers<[1], [0], [0], [1], [0, 0, 1, 1], [], []>} : vector<16x64xbf16>, vector<64x64xbf16>, vector<16x64xf32> -> vector<16x64xf32>
    %249 = arith.addf %244, %248 : vector<16x64xf32>
    %250 = vector.extract_strided_slice %215 {offsets = [112, 0], sizes = [16, 64], strides = [1, 1]} : vector<144x64xbf16> to vector<16x64xbf16>
    %c7_192 = arith.constant 7 : index
    %c0_193 = arith.constant 0 : index
    %c0_194 = arith.constant 0 : index
    %251 = vector.load %arg11[%c7_192, %c0_193, %c0_194] : memref<9x64x64xbf16, #tpu.memory_space<vmem>>, vector<1x64x64xbf16>
    %252 = vector.shape_cast %251 : vector<1x64x64xbf16> to vector<64x64xbf16>
    %cst_195 = arith.constant dense<0.000000e+00> : vector<16x64xf32>
    %253 = tpu.matmul %250, %252, %cst_195 {dimension_numbers = #tpu.dot_dimension_numbers<[1], [0], [0], [1], [0, 0, 1, 1], [], []>} : vector<16x64xbf16>, vector<64x64xbf16>, vector<16x64xf32> -> vector<16x64xf32>
    %254 = arith.addf %249, %253 : vector<16x64xf32>
    %255 = vector.extract_strided_slice %215 {offsets = [128, 0], sizes = [16, 64], strides = [1, 1]} : vector<144x64xbf16> to vector<16x64xbf16>
    %c8_196 = arith.constant 8 : index
    %c0_197 = arith.constant 0 : index
    %c0_198 = arith.constant 0 : index
    %256 = vector.load %arg11[%c8_196, %c0_197, %c0_198] : memref<9x64x64xbf16, #tpu.memory_space<vmem>>, vector<1x64x64xbf16>
    %257 = vector.shape_cast %256 : vector<1x64x64xbf16> to vector<64x64xbf16>
    %cst_199 = arith.constant dense<0.000000e+00> : vector<16x64xf32>
    %258 = tpu.matmul %255, %257, %cst_199 {dimension_numbers = #tpu.dot_dimension_numbers<[1], [0], [0], [1], [0, 0, 1, 1], [], []>} : vector<16x64xbf16>, vector<64x64xbf16>, vector<16x64xf32> -> vector<16x64xf32>
    %259 = arith.addf %254, %258 : vector<16x64xf32>
    %c0_200 = arith.constant 0 : index
    %c0_201 = arith.constant 0 : index
    %260 = vector.load %arg16[%c0_200, %c0_201] : memref<16x1xf32, #tpu.memory_space<vmem>>, vector<16x1xf32>
    %261 = vector.broadcast %260 : vector<16x1xf32> to vector<16x64xf32>
    %262 = arith.addf %259, %261 : vector<16x64xf32>
    %cst_202 = arith.constant 0.00999999977 : f32
    %263 = vector.broadcast %cst_202 : f32 to vector<16x64xf32>
    %264 = arith.mulf %263, %262 : vector<16x64xf32>
    %265 = arith.maximumf %262, %264 : vector<16x64xf32>
    %266 = arith.truncf %265 : vector<16x64xf32> to vector<16x64xbf16>
    %c0_203 = arith.constant 0 : index
    %c0_204 = arith.constant 0 : index
    %267 = vector.load %arg17[%c0_203, %c0_204] : memref<72x16xbf16, #tpu.memory_space<vmem>>, vector<72x16xbf16>
    %cst_205 = arith.constant dense<0.000000e+00> : vector<72x64xf32>
    %268 = tpu.matmul %267, %266, %cst_205 {dimension_numbers = #tpu.dot_dimension_numbers<[1], [0], [0], [1], [0, 0, 1, 1], [], []>} : vector<72x16xbf16>, vector<16x64xbf16>, vector<72x64xf32> -> vector<72x64xf32>
    %269 = arith.truncf %268 : vector<72x64xf32> to vector<72x64xbf16>
    %270 = vector.extract_strided_slice %269 {offsets = [0, 0], sizes = [8, 64], strides = [1, 1]} : vector<72x64xbf16> to vector<8x64xbf16>
    %c0_206 = arith.constant 0 : index
    %c0_207 = arith.constant 0 : index
    %c0_208 = arith.constant 0 : index
    %271 = vector.load %arg18[%c0_206, %c0_207, %c0_208] : memref<9x64x256xbf16, #tpu.memory_space<vmem>>, vector<1x64x256xbf16>
    %272 = vector.shape_cast %271 : vector<1x64x256xbf16> to vector<64x256xbf16>
    %cst_209 = arith.constant dense<0.000000e+00> : vector<8x256xf32>
    %273 = tpu.matmul %270, %272, %cst_209 {dimension_numbers = #tpu.dot_dimension_numbers<[1], [0], [0], [1], [0, 0, 1, 1], [], []>} : vector<8x64xbf16>, vector<64x256xbf16>, vector<8x256xf32> -> vector<8x256xf32>
    %274 = vector.extract_strided_slice %269 {offsets = [8, 0], sizes = [8, 64], strides = [1, 1]} : vector<72x64xbf16> to vector<8x64xbf16>
    %c1_210 = arith.constant 1 : index
    %c0_211 = arith.constant 0 : index
    %c0_212 = arith.constant 0 : index
    %275 = vector.load %arg18[%c1_210, %c0_211, %c0_212] : memref<9x64x256xbf16, #tpu.memory_space<vmem>>, vector<1x64x256xbf16>
    %276 = vector.shape_cast %275 : vector<1x64x256xbf16> to vector<64x256xbf16>
    %cst_213 = arith.constant dense<0.000000e+00> : vector<8x256xf32>
    %277 = tpu.matmul %274, %276, %cst_213 {dimension_numbers = #tpu.dot_dimension_numbers<[1], [0], [0], [1], [0, 0, 1, 1], [], []>} : vector<8x64xbf16>, vector<64x256xbf16>, vector<8x256xf32> -> vector<8x256xf32>
    %278 = arith.addf %273, %277 : vector<8x256xf32>
    %279 = vector.extract_strided_slice %269 {offsets = [16, 0], sizes = [8, 64], strides = [1, 1]} : vector<72x64xbf16> to vector<8x64xbf16>
    %c2_214 = arith.constant 2 : index
    %c0_215 = arith.constant 0 : index
    %c0_216 = arith.constant 0 : index
    %280 = vector.load %arg18[%c2_214, %c0_215, %c0_216] : memref<9x64x256xbf16, #tpu.memory_space<vmem>>, vector<1x64x256xbf16>
    %281 = vector.shape_cast %280 : vector<1x64x256xbf16> to vector<64x256xbf16>
    %cst_217 = arith.constant dense<0.000000e+00> : vector<8x256xf32>
    %282 = tpu.matmul %279, %281, %cst_217 {dimension_numbers = #tpu.dot_dimension_numbers<[1], [0], [0], [1], [0, 0, 1, 1], [], []>} : vector<8x64xbf16>, vector<64x256xbf16>, vector<8x256xf32> -> vector<8x256xf32>
    %283 = arith.addf %278, %282 : vector<8x256xf32>
    %284 = vector.extract_strided_slice %269 {offsets = [24, 0], sizes = [8, 64], strides = [1, 1]} : vector<72x64xbf16> to vector<8x64xbf16>
    %c3_218 = arith.constant 3 : index
    %c0_219 = arith.constant 0 : index
    %c0_220 = arith.constant 0 : index
    %285 = vector.load %arg18[%c3_218, %c0_219, %c0_220] : memref<9x64x256xbf16, #tpu.memory_space<vmem>>, vector<1x64x256xbf16>
    %286 = vector.shape_cast %285 : vector<1x64x256xbf16> to vector<64x256xbf16>
    %cst_221 = arith.constant dense<0.000000e+00> : vector<8x256xf32>
    %287 = tpu.matmul %284, %286, %cst_221 {dimension_numbers = #tpu.dot_dimension_numbers<[1], [0], [0], [1], [0, 0, 1, 1], [], []>} : vector<8x64xbf16>, vector<64x256xbf16>, vector<8x256xf32> -> vector<8x256xf32>
    %288 = arith.addf %283, %287 : vector<8x256xf32>
    %289 = vector.extract_strided_slice %269 {offsets = [32, 0], sizes = [8, 64], strides = [1, 1]} : vector<72x64xbf16> to vector<8x64xbf16>
    %c4_222 = arith.constant 4 : index
    %c0_223 = arith.constant 0 : index
    %c0_224 = arith.constant 0 : index
    %290 = vector.load %arg18[%c4_222, %c0_223, %c0_224] : memref<9x64x256xbf16, #tpu.memory_space<vmem>>, vector<1x64x256xbf16>
    %291 = vector.shape_cast %290 : vector<1x64x256xbf16> to vector<64x256xbf16>
    %cst_225 = arith.constant dense<0.000000e+00> : vector<8x256xf32>
    %292 = tpu.matmul %289, %291, %cst_225 {dimension_numbers = #tpu.dot_dimension_numbers<[1], [0], [0], [1], [0, 0, 1, 1], [], []>} : vector<8x64xbf16>, vector<64x256xbf16>, vector<8x256xf32> -> vector<8x256xf32>
    %293 = arith.addf %288, %292 : vector<8x256xf32>
    %294 = vector.extract_strided_slice %269 {offsets = [40, 0], sizes = [8, 64], strides = [1, 1]} : vector<72x64xbf16> to vector<8x64xbf16>
    %c5_226 = arith.constant 5 : index
    %c0_227 = arith.constant 0 : index
    %c0_228 = arith.constant 0 : index
    %295 = vector.load %arg18[%c5_226, %c0_227, %c0_228] : memref<9x64x256xbf16, #tpu.memory_space<vmem>>, vector<1x64x256xbf16>
    %296 = vector.shape_cast %295 : vector<1x64x256xbf16> to vector<64x256xbf16>
    %cst_229 = arith.constant dense<0.000000e+00> : vector<8x256xf32>
    %297 = tpu.matmul %294, %296, %cst_229 {dimension_numbers = #tpu.dot_dimension_numbers<[1], [0], [0], [1], [0, 0, 1, 1], [], []>} : vector<8x64xbf16>, vector<64x256xbf16>, vector<8x256xf32> -> vector<8x256xf32>
    %298 = arith.addf %293, %297 : vector<8x256xf32>
    %299 = vector.extract_strided_slice %269 {offsets = [48, 0], sizes = [8, 64], strides = [1, 1]} : vector<72x64xbf16> to vector<8x64xbf16>
    %c6_230 = arith.constant 6 : index
    %c0_231 = arith.constant 0 : index
    %c0_232 = arith.constant 0 : index
    %300 = vector.load %arg18[%c6_230, %c0_231, %c0_232] : memref<9x64x256xbf16, #tpu.memory_space<vmem>>, vector<1x64x256xbf16>
    %301 = vector.shape_cast %300 : vector<1x64x256xbf16> to vector<64x256xbf16>
    %cst_233 = arith.constant dense<0.000000e+00> : vector<8x256xf32>
    %302 = tpu.matmul %299, %301, %cst_233 {dimension_numbers = #tpu.dot_dimension_numbers<[1], [0], [0], [1], [0, 0, 1, 1], [], []>} : vector<8x64xbf16>, vector<64x256xbf16>, vector<8x256xf32> -> vector<8x256xf32>
    %303 = arith.addf %298, %302 : vector<8x256xf32>
    %304 = vector.extract_strided_slice %269 {offsets = [56, 0], sizes = [8, 64], strides = [1, 1]} : vector<72x64xbf16> to vector<8x64xbf16>
    %c7_234 = arith.constant 7 : index
    %c0_235 = arith.constant 0 : index
    %c0_236 = arith.constant 0 : index
    %305 = vector.load %arg18[%c7_234, %c0_235, %c0_236] : memref<9x64x256xbf16, #tpu.memory_space<vmem>>, vector<1x64x256xbf16>
    %306 = vector.shape_cast %305 : vector<1x64x256xbf16> to vector<64x256xbf16>
    %cst_237 = arith.constant dense<0.000000e+00> : vector<8x256xf32>
    %307 = tpu.matmul %304, %306, %cst_237 {dimension_numbers = #tpu.dot_dimension_numbers<[1], [0], [0], [1], [0, 0, 1, 1], [], []>} : vector<8x64xbf16>, vector<64x256xbf16>, vector<8x256xf32> -> vector<8x256xf32>
    %308 = arith.addf %303, %307 : vector<8x256xf32>
    %309 = vector.extract_strided_slice %269 {offsets = [64, 0], sizes = [8, 64], strides = [1, 1]} : vector<72x64xbf16> to vector<8x64xbf16>
    %c8_238 = arith.constant 8 : index
    %c0_239 = arith.constant 0 : index
    %c0_240 = arith.constant 0 : index
    %310 = vector.load %arg18[%c8_238, %c0_239, %c0_240] : memref<9x64x256xbf16, #tpu.memory_space<vmem>>, vector<1x64x256xbf16>
    %311 = vector.shape_cast %310 : vector<1x64x256xbf16> to vector<64x256xbf16>
    %cst_241 = arith.constant dense<0.000000e+00> : vector<8x256xf32>
    %312 = tpu.matmul %309, %311, %cst_241 {dimension_numbers = #tpu.dot_dimension_numbers<[1], [0], [0], [1], [0, 0, 1, 1], [], []>} : vector<8x64xbf16>, vector<64x256xbf16>, vector<8x256xf32> -> vector<8x256xf32>
    %313 = arith.addf %308, %312 : vector<8x256xf32>
    %c0_242 = arith.constant 0 : index
    %c0_243 = arith.constant 0 : index
    %314 = vector.load %arg19[%c0_242, %c0_243] : memref<8x1xf32, #tpu.memory_space<vmem>>, vector<8x1xf32>
    %315 = vector.broadcast %314 : vector<8x1xf32> to vector<8x256xf32>
    %316 = arith.addf %313, %315 : vector<8x256xf32>
    %cst_244 = arith.constant 0.00999999977 : f32
    %317 = vector.broadcast %cst_244 : f32 to vector<8x256xf32>
    %318 = arith.mulf %317, %316 : vector<8x256xf32>
    %319 = arith.maximumf %316, %318 : vector<8x256xf32>
    %320 = arith.truncf %319 : vector<8x256xf32> to vector<8x256xbf16>
    %c0_245 = arith.constant 0 : index
    %c0_246 = arith.constant 0 : index
    %321 = vector.load %arg20[%c0_245, %c0_246] : memref<72x8xbf16, #tpu.memory_space<vmem>>, vector<72x8xbf16>
    %cst_247 = arith.constant dense<0.000000e+00> : vector<72x256xf32>
    %322 = tpu.matmul %321, %320, %cst_247 {dimension_numbers = #tpu.dot_dimension_numbers<[1], [0], [0], [1], [0, 0, 1, 1], [], []>} : vector<72x8xbf16>, vector<8x256xbf16>, vector<72x256xf32> -> vector<72x256xf32>
    %323 = arith.truncf %322 : vector<72x256xf32> to vector<72x256xbf16>
    %324 = vector.extract_strided_slice %323 {offsets = [0, 0], sizes = [8, 256], strides = [1, 1]} : vector<72x256xbf16> to vector<8x256xbf16>
    %c0_248 = arith.constant 0 : index
    %c0_249 = arith.constant 0 : index
    %c0_250 = arith.constant 0 : index
    %325 = vector.load %arg21[%c0_248, %c0_249, %c0_250] : memref<9x256x256xbf16, #tpu.memory_space<vmem>>, vector<1x256x256xbf16>
    %326 = vector.shape_cast %325 : vector<1x256x256xbf16> to vector<256x256xbf16>
    %cst_251 = arith.constant dense<0.000000e+00> : vector<8x256xf32>
    %327 = tpu.matmul %324, %326, %cst_251 {dimension_numbers = #tpu.dot_dimension_numbers<[1], [0], [0], [1], [0, 0, 1, 1], [], []>} : vector<8x256xbf16>, vector<256x256xbf16>, vector<8x256xf32> -> vector<8x256xf32>
    %328 = vector.extract_strided_slice %323 {offsets = [8, 0], sizes = [8, 256], strides = [1, 1]} : vector<72x256xbf16> to vector<8x256xbf16>
    %c1_252 = arith.constant 1 : index
    %c0_253 = arith.constant 0 : index
    %c0_254 = arith.constant 0 : index
    %329 = vector.load %arg21[%c1_252, %c0_253, %c0_254] : memref<9x256x256xbf16, #tpu.memory_space<vmem>>, vector<1x256x256xbf16>
    %330 = vector.shape_cast %329 : vector<1x256x256xbf16> to vector<256x256xbf16>
    %cst_255 = arith.constant dense<0.000000e+00> : vector<8x256xf32>
    %331 = tpu.matmul %328, %330, %cst_255 {dimension_numbers = #tpu.dot_dimension_numbers<[1], [0], [0], [1], [0, 0, 1, 1], [], []>} : vector<8x256xbf16>, vector<256x256xbf16>, vector<8x256xf32> -> vector<8x256xf32>
    %332 = arith.addf %327, %331 : vector<8x256xf32>
    %333 = vector.extract_strided_slice %323 {offsets = [16, 0], sizes = [8, 256], strides = [1, 1]} : vector<72x256xbf16> to vector<8x256xbf16>
    %c2_256 = arith.constant 2 : index
    %c0_257 = arith.constant 0 : index
    %c0_258 = arith.constant 0 : index
    %334 = vector.load %arg21[%c2_256, %c0_257, %c0_258] : memref<9x256x256xbf16, #tpu.memory_space<vmem>>, vector<1x256x256xbf16>
    %335 = vector.shape_cast %334 : vector<1x256x256xbf16> to vector<256x256xbf16>
    %cst_259 = arith.constant dense<0.000000e+00> : vector<8x256xf32>
    %336 = tpu.matmul %333, %335, %cst_259 {dimension_numbers = #tpu.dot_dimension_numbers<[1], [0], [0], [1], [0, 0, 1, 1], [], []>} : vector<8x256xbf16>, vector<256x256xbf16>, vector<8x256xf32> -> vector<8x256xf32>
    %337 = arith.addf %332, %336 : vector<8x256xf32>
    %338 = vector.extract_strided_slice %323 {offsets = [24, 0], sizes = [8, 256], strides = [1, 1]} : vector<72x256xbf16> to vector<8x256xbf16>
    %c3_260 = arith.constant 3 : index
    %c0_261 = arith.constant 0 : index
    %c0_262 = arith.constant 0 : index
    %339 = vector.load %arg21[%c3_260, %c0_261, %c0_262] : memref<9x256x256xbf16, #tpu.memory_space<vmem>>, vector<1x256x256xbf16>
    %340 = vector.shape_cast %339 : vector<1x256x256xbf16> to vector<256x256xbf16>
    %cst_263 = arith.constant dense<0.000000e+00> : vector<8x256xf32>
    %341 = tpu.matmul %338, %340, %cst_263 {dimension_numbers = #tpu.dot_dimension_numbers<[1], [0], [0], [1], [0, 0, 1, 1], [], []>} : vector<8x256xbf16>, vector<256x256xbf16>, vector<8x256xf32> -> vector<8x256xf32>
    %342 = arith.addf %337, %341 : vector<8x256xf32>
    %343 = vector.extract_strided_slice %323 {offsets = [32, 0], sizes = [8, 256], strides = [1, 1]} : vector<72x256xbf16> to vector<8x256xbf16>
    %c4_264 = arith.constant 4 : index
    %c0_265 = arith.constant 0 : index
    %c0_266 = arith.constant 0 : index
    %344 = vector.load %arg21[%c4_264, %c0_265, %c0_266] : memref<9x256x256xbf16, #tpu.memory_space<vmem>>, vector<1x256x256xbf16>
    %345 = vector.shape_cast %344 : vector<1x256x256xbf16> to vector<256x256xbf16>
    %cst_267 = arith.constant dense<0.000000e+00> : vector<8x256xf32>
    %346 = tpu.matmul %343, %345, %cst_267 {dimension_numbers = #tpu.dot_dimension_numbers<[1], [0], [0], [1], [0, 0, 1, 1], [], []>} : vector<8x256xbf16>, vector<256x256xbf16>, vector<8x256xf32> -> vector<8x256xf32>
    %347 = arith.addf %342, %346 : vector<8x256xf32>
    %348 = vector.extract_strided_slice %323 {offsets = [40, 0], sizes = [8, 256], strides = [1, 1]} : vector<72x256xbf16> to vector<8x256xbf16>
    %c5_268 = arith.constant 5 : index
    %c0_269 = arith.constant 0 : index
    %c0_270 = arith.constant 0 : index
    %349 = vector.load %arg21[%c5_268, %c0_269, %c0_270] : memref<9x256x256xbf16, #tpu.memory_space<vmem>>, vector<1x256x256xbf16>
    %350 = vector.shape_cast %349 : vector<1x256x256xbf16> to vector<256x256xbf16>
    %cst_271 = arith.constant dense<0.000000e+00> : vector<8x256xf32>
    %351 = tpu.matmul %348, %350, %cst_271 {dimension_numbers = #tpu.dot_dimension_numbers<[1], [0], [0], [1], [0, 0, 1, 1], [], []>} : vector<8x256xbf16>, vector<256x256xbf16>, vector<8x256xf32> -> vector<8x256xf32>
    %352 = arith.addf %347, %351 : vector<8x256xf32>
    %353 = vector.extract_strided_slice %323 {offsets = [48, 0], sizes = [8, 256], strides = [1, 1]} : vector<72x256xbf16> to vector<8x256xbf16>
    %c6_272 = arith.constant 6 : index
    %c0_273 = arith.constant 0 : index
    %c0_274 = arith.constant 0 : index
    %354 = vector.load %arg21[%c6_272, %c0_273, %c0_274] : memref<9x256x256xbf16, #tpu.memory_space<vmem>>, vector<1x256x256xbf16>
    %355 = vector.shape_cast %354 : vector<1x256x256xbf16> to vector<256x256xbf16>
    %cst_275 = arith.constant dense<0.000000e+00> : vector<8x256xf32>
    %356 = tpu.matmul %353, %355, %cst_275 {dimension_numbers = #tpu.dot_dimension_numbers<[1], [0], [0], [1], [0, 0, 1, 1], [], []>} : vector<8x256xbf16>, vector<256x256xbf16>, vector<8x256xf32> -> vector<8x256xf32>
    %357 = arith.addf %352, %356 : vector<8x256xf32>
    %358 = vector.extract_strided_slice %323 {offsets = [56, 0], sizes = [8, 256], strides = [1, 1]} : vector<72x256xbf16> to vector<8x256xbf16>
    %c7_276 = arith.constant 7 : index
    %c0_277 = arith.constant 0 : index
    %c0_278 = arith.constant 0 : index
    %359 = vector.load %arg21[%c7_276, %c0_277, %c0_278] : memref<9x256x256xbf16, #tpu.memory_space<vmem>>, vector<1x256x256xbf16>
    %360 = vector.shape_cast %359 : vector<1x256x256xbf16> to vector<256x256xbf16>
    %cst_279 = arith.constant dense<0.000000e+00> : vector<8x256xf32>
    %361 = tpu.matmul %358, %360, %cst_279 {dimension_numbers = #tpu.dot_dimension_numbers<[1], [0], [0], [1], [0, 0, 1, 1], [], []>} : vector<8x256xbf16>, vector<256x256xbf16>, vector<8x256xf32> -> vector<8x256xf32>
    %362 = arith.addf %357, %361 : vector<8x256xf32>
    %363 = vector.extract_strided_slice %323 {offsets = [64, 0], sizes = [8, 256], strides = [1, 1]} : vector<72x256xbf16> to vector<8x256xbf16>
    %c8_280 = arith.constant 8 : index
    %c0_281 = arith.constant 0 : index
    %c0_282 = arith.constant 0 : index
    %364 = vector.load %arg21[%c8_280, %c0_281, %c0_282] : memref<9x256x256xbf16, #tpu.memory_space<vmem>>, vector<1x256x256xbf16>
    %365 = vector.shape_cast %364 : vector<1x256x256xbf16> to vector<256x256xbf16>
    %cst_283 = arith.constant dense<0.000000e+00> : vector<8x256xf32>
    %366 = tpu.matmul %363, %365, %cst_283 {dimension_numbers = #tpu.dot_dimension_numbers<[1], [0], [0], [1], [0, 0, 1, 1], [], []>} : vector<8x256xbf16>, vector<256x256xbf16>, vector<8x256xf32> -> vector<8x256xf32>
    %367 = arith.addf %362, %366 : vector<8x256xf32>
    %c0_284 = arith.constant 0 : index
    %c0_285 = arith.constant 0 : index
    %c0_286 = arith.constant 0 : index
    %368 = vector.load %arg4[%c0_284, %c0_285, %c0_286] : memref<1x8x256xf32, #tpu.memory_space<vmem>>, vector<1x8x256xf32>
    %369 = vector.shape_cast %368 : vector<1x8x256xf32> to vector<8x256xf32>
    %370 = arith.truncf %369 : vector<8x256xf32> to vector<8x256xbf16>
    %c0_287 = arith.constant 0 : index
    %c0_288 = arith.constant 0 : index
    %371 = vector.load %arg22[%c0_287, %c0_288] : memref<72x8xbf16, #tpu.memory_space<vmem>>, vector<72x8xbf16>
    %cst_289 = arith.constant dense<0.000000e+00> : vector<72x256xf32>
    %372 = tpu.matmul %371, %370, %cst_289 {dimension_numbers = #tpu.dot_dimension_numbers<[1], [0], [0], [1], [0, 0, 1, 1], [], []>} : vector<72x8xbf16>, vector<8x256xbf16>, vector<72x256xf32> -> vector<72x256xf32>
    %373 = arith.truncf %372 : vector<72x256xf32> to vector<72x256xbf16>
    %374 = vector.extract_strided_slice %373 {offsets = [0, 0], sizes = [8, 256], strides = [1, 1]} : vector<72x256xbf16> to vector<8x256xbf16>
    %c0_290 = arith.constant 0 : index
    %c0_291 = arith.constant 0 : index
    %c0_292 = arith.constant 0 : index
    %375 = vector.load %arg21[%c0_290, %c0_291, %c0_292] : memref<9x256x256xbf16, #tpu.memory_space<vmem>>, vector<1x256x256xbf16>
    %376 = vector.shape_cast %375 : vector<1x256x256xbf16> to vector<256x256xbf16>
    %cst_293 = arith.constant dense<0.000000e+00> : vector<8x256xf32>
    %377 = tpu.matmul %374, %376, %cst_293 {dimension_numbers = #tpu.dot_dimension_numbers<[1], [0], [0], [1], [0, 0, 1, 1], [], []>} : vector<8x256xbf16>, vector<256x256xbf16>, vector<8x256xf32> -> vector<8x256xf32>
    %378 = arith.addf %367, %377 : vector<8x256xf32>
    %379 = vector.extract_strided_slice %373 {offsets = [8, 0], sizes = [8, 256], strides = [1, 1]} : vector<72x256xbf16> to vector<8x256xbf16>
    %c1_294 = arith.constant 1 : index
    %c0_295 = arith.constant 0 : index
    %c0_296 = arith.constant 0 : index
    %380 = vector.load %arg21[%c1_294, %c0_295, %c0_296] : memref<9x256x256xbf16, #tpu.memory_space<vmem>>, vector<1x256x256xbf16>
    %381 = vector.shape_cast %380 : vector<1x256x256xbf16> to vector<256x256xbf16>
    %cst_297 = arith.constant dense<0.000000e+00> : vector<8x256xf32>
    %382 = tpu.matmul %379, %381, %cst_297 {dimension_numbers = #tpu.dot_dimension_numbers<[1], [0], [0], [1], [0, 0, 1, 1], [], []>} : vector<8x256xbf16>, vector<256x256xbf16>, vector<8x256xf32> -> vector<8x256xf32>
    %383 = arith.addf %378, %382 : vector<8x256xf32>
    %384 = vector.extract_strided_slice %373 {offsets = [16, 0], sizes = [8, 256], strides = [1, 1]} : vector<72x256xbf16> to vector<8x256xbf16>
    %c2_298 = arith.constant 2 : index
    %c0_299 = arith.constant 0 : index
    %c0_300 = arith.constant 0 : index
    %385 = vector.load %arg21[%c2_298, %c0_299, %c0_300] : memref<9x256x256xbf16, #tpu.memory_space<vmem>>, vector<1x256x256xbf16>
    %386 = vector.shape_cast %385 : vector<1x256x256xbf16> to vector<256x256xbf16>
    %cst_301 = arith.constant dense<0.000000e+00> : vector<8x256xf32>
    %387 = tpu.matmul %384, %386, %cst_301 {dimension_numbers = #tpu.dot_dimension_numbers<[1], [0], [0], [1], [0, 0, 1, 1], [], []>} : vector<8x256xbf16>, vector<256x256xbf16>, vector<8x256xf32> -> vector<8x256xf32>
    %388 = arith.addf %383, %387 : vector<8x256xf32>
    %389 = vector.extract_strided_slice %373 {offsets = [24, 0], sizes = [8, 256], strides = [1, 1]} : vector<72x256xbf16> to vector<8x256xbf16>
    %c3_302 = arith.constant 3 : index
    %c0_303 = arith.constant 0 : index
    %c0_304 = arith.constant 0 : index
    %390 = vector.load %arg21[%c3_302, %c0_303, %c0_304] : memref<9x256x256xbf16, #tpu.memory_space<vmem>>, vector<1x256x256xbf16>
    %391 = vector.shape_cast %390 : vector<1x256x256xbf16> to vector<256x256xbf16>
    %cst_305 = arith.constant dense<0.000000e+00> : vector<8x256xf32>
    %392 = tpu.matmul %389, %391, %cst_305 {dimension_numbers = #tpu.dot_dimension_numbers<[1], [0], [0], [1], [0, 0, 1, 1], [], []>} : vector<8x256xbf16>, vector<256x256xbf16>, vector<8x256xf32> -> vector<8x256xf32>
    %393 = arith.addf %388, %392 : vector<8x256xf32>
    %394 = vector.extract_strided_slice %373 {offsets = [32, 0], sizes = [8, 256], strides = [1, 1]} : vector<72x256xbf16> to vector<8x256xbf16>
    %c4_306 = arith.constant 4 : index
    %c0_307 = arith.constant 0 : index
    %c0_308 = arith.constant 0 : index
    %395 = vector.load %arg21[%c4_306, %c0_307, %c0_308] : memref<9x256x256xbf16, #tpu.memory_space<vmem>>, vector<1x256x256xbf16>
    %396 = vector.shape_cast %395 : vector<1x256x256xbf16> to vector<256x256xbf16>
    %cst_309 = arith.constant dense<0.000000e+00> : vector<8x256xf32>
    %397 = tpu.matmul %394, %396, %cst_309 {dimension_numbers = #tpu.dot_dimension_numbers<[1], [0], [0], [1], [0, 0, 1, 1], [], []>} : vector<8x256xbf16>, vector<256x256xbf16>, vector<8x256xf32> -> vector<8x256xf32>
    %398 = arith.addf %393, %397 : vector<8x256xf32>
    %399 = vector.extract_strided_slice %373 {offsets = [40, 0], sizes = [8, 256], strides = [1, 1]} : vector<72x256xbf16> to vector<8x256xbf16>
    %c5_310 = arith.constant 5 : index
    %c0_311 = arith.constant 0 : index
    %c0_312 = arith.constant 0 : index
    %400 = vector.load %arg21[%c5_310, %c0_311, %c0_312] : memref<9x256x256xbf16, #tpu.memory_space<vmem>>, vector<1x256x256xbf16>
    %401 = vector.shape_cast %400 : vector<1x256x256xbf16> to vector<256x256xbf16>
    %cst_313 = arith.constant dense<0.000000e+00> : vector<8x256xf32>
    %402 = tpu.matmul %399, %401, %cst_313 {dimension_numbers = #tpu.dot_dimension_numbers<[1], [0], [0], [1], [0, 0, 1, 1], [], []>} : vector<8x256xbf16>, vector<256x256xbf16>, vector<8x256xf32> -> vector<8x256xf32>
    %403 = arith.addf %398, %402 : vector<8x256xf32>
    %404 = vector.extract_strided_slice %373 {offsets = [48, 0], sizes = [8, 256], strides = [1, 1]} : vector<72x256xbf16> to vector<8x256xbf16>
    %c6_314 = arith.constant 6 : index
    %c0_315 = arith.constant 0 : index
    %c0_316 = arith.constant 0 : index
    %405 = vector.load %arg21[%c6_314, %c0_315, %c0_316] : memref<9x256x256xbf16, #tpu.memory_space<vmem>>, vector<1x256x256xbf16>
    %406 = vector.shape_cast %405 : vector<1x256x256xbf16> to vector<256x256xbf16>
    %cst_317 = arith.constant dense<0.000000e+00> : vector<8x256xf32>
    %407 = tpu.matmul %404, %406, %cst_317 {dimension_numbers = #tpu.dot_dimension_numbers<[1], [0], [0], [1], [0, 0, 1, 1], [], []>} : vector<8x256xbf16>, vector<256x256xbf16>, vector<8x256xf32> -> vector<8x256xf32>
    %408 = arith.addf %403, %407 : vector<8x256xf32>
    %409 = vector.extract_strided_slice %373 {offsets = [56, 0], sizes = [8, 256], strides = [1, 1]} : vector<72x256xbf16> to vector<8x256xbf16>
    %c7_318 = arith.constant 7 : index
    %c0_319 = arith.constant 0 : index
    %c0_320 = arith.constant 0 : index
    %410 = vector.load %arg21[%c7_318, %c0_319, %c0_320] : memref<9x256x256xbf16, #tpu.memory_space<vmem>>, vector<1x256x256xbf16>
    %411 = vector.shape_cast %410 : vector<1x256x256xbf16> to vector<256x256xbf16>
    %cst_321 = arith.constant dense<0.000000e+00> : vector<8x256xf32>
    %412 = tpu.matmul %409, %411, %cst_321 {dimension_numbers = #tpu.dot_dimension_numbers<[1], [0], [0], [1], [0, 0, 1, 1], [], []>} : vector<8x256xbf16>, vector<256x256xbf16>, vector<8x256xf32> -> vector<8x256xf32>
    %413 = arith.addf %408, %412 : vector<8x256xf32>
    %414 = vector.extract_strided_slice %373 {offsets = [64, 0], sizes = [8, 256], strides = [1, 1]} : vector<72x256xbf16> to vector<8x256xbf16>
    %c8_322 = arith.constant 8 : index
    %c0_323 = arith.constant 0 : index
    %c0_324 = arith.constant 0 : index
    %415 = vector.load %arg21[%c8_322, %c0_323, %c0_324] : memref<9x256x256xbf16, #tpu.memory_space<vmem>>, vector<1x256x256xbf16>
    %416 = vector.shape_cast %415 : vector<1x256x256xbf16> to vector<256x256xbf16>
    %cst_325 = arith.constant dense<0.000000e+00> : vector<8x256xf32>
    %417 = tpu.matmul %414, %416, %cst_325 {dimension_numbers = #tpu.dot_dimension_numbers<[1], [0], [0], [1], [0, 0, 1, 1], [], []>} : vector<8x256xbf16>, vector<256x256xbf16>, vector<8x256xf32> -> vector<8x256xf32>
    %418 = arith.addf %413, %417 : vector<8x256xf32>
    %c0_326 = arith.constant 0 : index
    %c0_327 = arith.constant 0 : index
    %419 = vector.load %arg23[%c0_326, %c0_327] : memref<8x1xf32, #tpu.memory_space<vmem>>, vector<8x1xf32>
    %420 = vector.broadcast %419 : vector<8x1xf32> to vector<8x256xf32>
    %421 = arith.addf %418, %420 : vector<8x256xf32>
    %cst_328 = arith.constant 0.00999999977 : f32
    %422 = vector.broadcast %cst_328 : f32 to vector<8x256xf32>
    %423 = arith.mulf %422, %421 : vector<8x256xf32>
    %424 = arith.maximumf %421, %423 : vector<8x256xf32>
    %425 = arith.truncf %424 : vector<8x256xf32> to vector<8x256xbf16>
    %c0_329 = arith.constant 0 : index
    %c0_330 = arith.constant 0 : index
    %426 = vector.load %arg24[%c0_329, %c0_330] : memref<72x8xbf16, #tpu.memory_space<vmem>>, vector<72x8xbf16>
    %cst_331 = arith.constant dense<0.000000e+00> : vector<72x256xf32>
    %427 = tpu.matmul %426, %425, %cst_331 {dimension_numbers = #tpu.dot_dimension_numbers<[1], [0], [0], [1], [0, 0, 1, 1], [], []>} : vector<72x8xbf16>, vector<8x256xbf16>, vector<72x256xf32> -> vector<72x256xf32>
    %428 = arith.truncf %427 : vector<72x256xf32> to vector<72x256xbf16>
    %429 = vector.extract_strided_slice %428 {offsets = [0, 0], sizes = [8, 256], strides = [1, 1]} : vector<72x256xbf16> to vector<8x256xbf16>
    %c0_332 = arith.constant 0 : index
    %c0_333 = arith.constant 0 : index
    %c0_334 = arith.constant 0 : index
    %430 = vector.load %arg21[%c0_332, %c0_333, %c0_334] : memref<9x256x256xbf16, #tpu.memory_space<vmem>>, vector<1x256x256xbf16>
    %431 = vector.shape_cast %430 : vector<1x256x256xbf16> to vector<256x256xbf16>
    %cst_335 = arith.constant dense<0.000000e+00> : vector<8x256xf32>
    %432 = tpu.matmul %429, %431, %cst_335 {dimension_numbers = #tpu.dot_dimension_numbers<[1], [0], [0], [1], [0, 0, 1, 1], [], []>} : vector<8x256xbf16>, vector<256x256xbf16>, vector<8x256xf32> -> vector<8x256xf32>
    %433 = vector.extract_strided_slice %428 {offsets = [8, 0], sizes = [8, 256], strides = [1, 1]} : vector<72x256xbf16> to vector<8x256xbf16>
    %c1_336 = arith.constant 1 : index
    %c0_337 = arith.constant 0 : index
    %c0_338 = arith.constant 0 : index
    %434 = vector.load %arg21[%c1_336, %c0_337, %c0_338] : memref<9x256x256xbf16, #tpu.memory_space<vmem>>, vector<1x256x256xbf16>
    %435 = vector.shape_cast %434 : vector<1x256x256xbf16> to vector<256x256xbf16>
    %cst_339 = arith.constant dense<0.000000e+00> : vector<8x256xf32>
    %436 = tpu.matmul %433, %435, %cst_339 {dimension_numbers = #tpu.dot_dimension_numbers<[1], [0], [0], [1], [0, 0, 1, 1], [], []>} : vector<8x256xbf16>, vector<256x256xbf16>, vector<8x256xf32> -> vector<8x256xf32>
    %437 = arith.addf %432, %436 : vector<8x256xf32>
    %438 = vector.extract_strided_slice %428 {offsets = [16, 0], sizes = [8, 256], strides = [1, 1]} : vector<72x256xbf16> to vector<8x256xbf16>
    %c2_340 = arith.constant 2 : index
    %c0_341 = arith.constant 0 : index
    %c0_342 = arith.constant 0 : index
    %439 = vector.load %arg21[%c2_340, %c0_341, %c0_342] : memref<9x256x256xbf16, #tpu.memory_space<vmem>>, vector<1x256x256xbf16>
    %440 = vector.shape_cast %439 : vector<1x256x256xbf16> to vector<256x256xbf16>
    %cst_343 = arith.constant dense<0.000000e+00> : vector<8x256xf32>
    %441 = tpu.matmul %438, %440, %cst_343 {dimension_numbers = #tpu.dot_dimension_numbers<[1], [0], [0], [1], [0, 0, 1, 1], [], []>} : vector<8x256xbf16>, vector<256x256xbf16>, vector<8x256xf32> -> vector<8x256xf32>
    %442 = arith.addf %437, %441 : vector<8x256xf32>
    %443 = vector.extract_strided_slice %428 {offsets = [24, 0], sizes = [8, 256], strides = [1, 1]} : vector<72x256xbf16> to vector<8x256xbf16>
    %c3_344 = arith.constant 3 : index
    %c0_345 = arith.constant 0 : index
    %c0_346 = arith.constant 0 : index
    %444 = vector.load %arg21[%c3_344, %c0_345, %c0_346] : memref<9x256x256xbf16, #tpu.memory_space<vmem>>, vector<1x256x256xbf16>
    %445 = vector.shape_cast %444 : vector<1x256x256xbf16> to vector<256x256xbf16>
    %cst_347 = arith.constant dense<0.000000e+00> : vector<8x256xf32>
    %446 = tpu.matmul %443, %445, %cst_347 {dimension_numbers = #tpu.dot_dimension_numbers<[1], [0], [0], [1], [0, 0, 1, 1], [], []>} : vector<8x256xbf16>, vector<256x256xbf16>, vector<8x256xf32> -> vector<8x256xf32>
    %447 = arith.addf %442, %446 : vector<8x256xf32>
    %448 = vector.extract_strided_slice %428 {offsets = [32, 0], sizes = [8, 256], strides = [1, 1]} : vector<72x256xbf16> to vector<8x256xbf16>
    %c4_348 = arith.constant 4 : index
    %c0_349 = arith.constant 0 : index
    %c0_350 = arith.constant 0 : index
    %449 = vector.load %arg21[%c4_348, %c0_349, %c0_350] : memref<9x256x256xbf16, #tpu.memory_space<vmem>>, vector<1x256x256xbf16>
    %450 = vector.shape_cast %449 : vector<1x256x256xbf16> to vector<256x256xbf16>
    %cst_351 = arith.constant dense<0.000000e+00> : vector<8x256xf32>
    %451 = tpu.matmul %448, %450, %cst_351 {dimension_numbers = #tpu.dot_dimension_numbers<[1], [0], [0], [1], [0, 0, 1, 1], [], []>} : vector<8x256xbf16>, vector<256x256xbf16>, vector<8x256xf32> -> vector<8x256xf32>
    %452 = arith.addf %447, %451 : vector<8x256xf32>
    %453 = vector.extract_strided_slice %428 {offsets = [40, 0], sizes = [8, 256], strides = [1, 1]} : vector<72x256xbf16> to vector<8x256xbf16>
    %c5_352 = arith.constant 5 : index
    %c0_353 = arith.constant 0 : index
    %c0_354 = arith.constant 0 : index
    %454 = vector.load %arg21[%c5_352, %c0_353, %c0_354] : memref<9x256x256xbf16, #tpu.memory_space<vmem>>, vector<1x256x256xbf16>
    %455 = vector.shape_cast %454 : vector<1x256x256xbf16> to vector<256x256xbf16>
    %cst_355 = arith.constant dense<0.000000e+00> : vector<8x256xf32>
    %456 = tpu.matmul %453, %455, %cst_355 {dimension_numbers = #tpu.dot_dimension_numbers<[1], [0], [0], [1], [0, 0, 1, 1], [], []>} : vector<8x256xbf16>, vector<256x256xbf16>, vector<8x256xf32> -> vector<8x256xf32>
    %457 = arith.addf %452, %456 : vector<8x256xf32>
    %458 = vector.extract_strided_slice %428 {offsets = [48, 0], sizes = [8, 256], strides = [1, 1]} : vector<72x256xbf16> to vector<8x256xbf16>
    %c6_356 = arith.constant 6 : index
    %c0_357 = arith.constant 0 : index
    %c0_358 = arith.constant 0 : index
    %459 = vector.load %arg21[%c6_356, %c0_357, %c0_358] : memref<9x256x256xbf16, #tpu.memory_space<vmem>>, vector<1x256x256xbf16>
    %460 = vector.shape_cast %459 : vector<1x256x256xbf16> to vector<256x256xbf16>
    %cst_359 = arith.constant dense<0.000000e+00> : vector<8x256xf32>
    %461 = tpu.matmul %458, %460, %cst_359 {dimension_numbers = #tpu.dot_dimension_numbers<[1], [0], [0], [1], [0, 0, 1, 1], [], []>} : vector<8x256xbf16>, vector<256x256xbf16>, vector<8x256xf32> -> vector<8x256xf32>
    %462 = arith.addf %457, %461 : vector<8x256xf32>
    %463 = vector.extract_strided_slice %428 {offsets = [56, 0], sizes = [8, 256], strides = [1, 1]} : vector<72x256xbf16> to vector<8x256xbf16>
    %c7_360 = arith.constant 7 : index
    %c0_361 = arith.constant 0 : index
    %c0_362 = arith.constant 0 : index
    %464 = vector.load %arg21[%c7_360, %c0_361, %c0_362] : memref<9x256x256xbf16, #tpu.memory_space<vmem>>, vector<1x256x256xbf16>
    %465 = vector.shape_cast %464 : vector<1x256x256xbf16> to vector<256x256xbf16>
    %cst_363 = arith.constant dense<0.000000e+00> : vector<8x256xf32>
    %466 = tpu.matmul %463, %465, %cst_363 {dimension_numbers = #tpu.dot_dimension_numbers<[1], [0], [0], [1], [0, 0, 1, 1], [], []>} : vector<8x256xbf16>, vector<256x256xbf16>, vector<8x256xf32> -> vector<8x256xf32>
    %467 = arith.addf %462, %466 : vector<8x256xf32>
    %468 = vector.extract_strided_slice %428 {offsets = [64, 0], sizes = [8, 256], strides = [1, 1]} : vector<72x256xbf16> to vector<8x256xbf16>
    %c8_364 = arith.constant 8 : index
    %c0_365 = arith.constant 0 : index
    %c0_366 = arith.constant 0 : index
    %469 = vector.load %arg21[%c8_364, %c0_365, %c0_366] : memref<9x256x256xbf16, #tpu.memory_space<vmem>>, vector<1x256x256xbf16>
    %470 = vector.shape_cast %469 : vector<1x256x256xbf16> to vector<256x256xbf16>
    %cst_367 = arith.constant dense<0.000000e+00> : vector<8x256xf32>
    %471 = tpu.matmul %468, %470, %cst_367 {dimension_numbers = #tpu.dot_dimension_numbers<[1], [0], [0], [1], [0, 0, 1, 1], [], []>} : vector<8x256xbf16>, vector<256x256xbf16>, vector<8x256xf32> -> vector<8x256xf32>
    %472 = arith.addf %467, %471 : vector<8x256xf32>
    %c0_368 = arith.constant 0 : index
    %c0_369 = arith.constant 0 : index
    %473 = vector.load %arg25[%c0_368, %c0_369] : memref<8x1xf32, #tpu.memory_space<vmem>>, vector<8x1xf32>
    %474 = vector.broadcast %473 : vector<8x1xf32> to vector<8x256xf32>
    %475 = arith.addf %472, %474 : vector<8x256xf32>
    %cst_370 = arith.constant 0.00999999977 : f32
    %476 = vector.broadcast %cst_370 : f32 to vector<8x256xf32>
    %477 = arith.mulf %476, %475 : vector<8x256xf32>
    %478 = arith.maximumf %475, %477 : vector<8x256xf32>
    %c0_371 = arith.constant 0 : index
    %c0_372 = arith.constant 0 : index
    %c0_373 = arith.constant 0 : index
    %479 = vector.load %arg26[%c0_371, %c0_372, %c0_373] : memref<1x8x256xf32, #tpu.memory_space<vmem>>, vector<1x8x256xf32>
    %480 = vector.shape_cast %479 : vector<1x8x256xf32> to vector<8x256xf32>
    %481 = vector.shape_cast %478 : vector<8x256xf32> to vector<1x8x256xf32>
    tpu.vector_store %arg26[%c0_371, %c0_372, %c0_373], %481 {strides = array<i32>} : memref<1x8x256xf32, #tpu.memory_space<vmem>>, vector<1x8x256xf32>,
    return
  }
  func.func @transform_0(%arg0: i32) -> (i32, i32, i32) {
    %c0_i32 = arith.constant 0 : i32
    %c0_i32_0 = arith.constant 0 : i32
    %c0_i32_1 = arith.constant 0 : i32
    return %arg0, %c0_i32, %c0_i32_0 : i32, i32, i32
  }
  func.func @transform_1(%arg0: i32) -> (i32, i32, i32) {
    %c0_i32 = arith.constant 0 : i32
    %c0_i32_0 = arith.constant 0 : i32
    %c0_i32_1 = arith.constant 0 : i32
    return %arg0, %c0_i32, %c0_i32_0 : i32, i32, i32
  }
  func.func @transform_2(%arg0: i32) -> (i32, i32, i32) {
    %c0_i32 = arith.constant 0 : i32
    %c0_i32_0 = arith.constant 0 : i32
    %c0_i32_1 = arith.constant 0 : i32
    return %arg0, %c0_i32, %c0_i32_0 : i32, i32, i32
  }
  func.func @transform_3(%arg0: i32) -> (i32, i32, i32) {
    %c0_i32 = arith.constant 0 : i32
    %c0_i32_0 = arith.constant 0 : i32
    %c0_i32_1 = arith.constant 0 : i32
    return %arg0, %c0_i32, %c0_i32_0 : i32, i32, i32
  }
  func.func @transform_4(%arg0: i32) -> (i32, i32) {
    %c0_i32 = arith.constant 0 : i32
    %c0_i32_0 = arith.constant 0 : i32
    %c0_i32_1 = arith.constant 0 : i32
    return %c0_i32, %c0_i32_0 : i32, i32
  }
  func.func @transform_5(%arg0: i32) -> (i32, i32, i32) {
    %c0_i32 = arith.constant 0 : i32
    %c0_i32_0 = arith.constant 0 : i32
    %c0_i32_1 = arith.constant 0 : i32
    %c0_i32_2 = arith.constant 0 : i32
    return %c0_i32, %c0_i32_0, %c0_i32_1 : i32, i32, i32
  }
  func.func @transform_6(%arg0: i32) -> (i32, i32) {
    %c0_i32 = arith.constant 0 : i32
    %c0_i32_0 = arith.constant 0 : i32
    %c0_i32_1 = arith.constant 0 : i32
    return %c0_i32, %c0_i32_0 : i32, i32
  }
  func.func @transform_7(%arg0: i32) -> (i32, i32, i32) {
    %c0_i32 = arith.constant 0 : i32
    %c0_i32_0 = arith.constant 0 : i32
    %c0_i32_1 = arith.constant 0 : i32
    %c0_i32_2 = arith.constant 0 : i32
    return %c0_i32, %c0_i32_0, %c0_i32_1 : i32, i32, i32
  }
  func.func @transform_8(%arg0: i32) -> (i32, i32) {
    %c0_i32 = arith.constant 0 : i32
    %c0_i32_0 = arith.constant 0 : i32
    %c0_i32_1 = arith.constant 0 : i32
    return %c0_i32, %c0_i32_0 : i32, i32
  }
  func.func @transform_9(%arg0: i32) -> (i32, i32) {
    %c0_i32 = arith.constant 0 : i32
    %c0_i32_0 = arith.constant 0 : i32
    %c0_i32_1 = arith.constant 0 : i32
    return %c0_i32, %c0_i32_0 : i32, i32
  }
  func.func @transform_10(%arg0: i32) -> (i32, i32, i32) {
    %c0_i32 = arith.constant 0 : i32
    %c0_i32_0 = arith.constant 0 : i32
    %c0_i32_1 = arith.constant 0 : i32
    %c0_i32_2 = arith.constant 0 : i32
    return %c0_i32, %c0_i32_0, %c0_i32_1 : i32, i32, i32
  }
  func.func @transform_11(%arg0: i32) -> (i32, i32) {
    %c0_i32 = arith.constant 0 : i32
    %c0_i32_0 = arith.constant 0 : i32
    %c0_i32_1 = arith.constant 0 : i32
    return %c0_i32, %c0_i32_0 : i32, i32
  }
  func.func @transform_12(%arg0: i32) -> (i32, i32, i32) {
    %c0_i32 = arith.constant 0 : i32
    %c0_i32_0 = arith.constant 0 : i32
    %c0_i32_1 = arith.constant 0 : i32
    %c0_i32_2 = arith.constant 0 : i32
    return %c0_i32, %c0_i32_0, %c0_i32_1 : i32, i32, i32
  }
  func.func @transform_13(%arg0: i32) -> (i32, i32) {
    %c0_i32 = arith.constant 0 : i32
    %c0_i32_0 = arith.constant 0 : i32
    %c0_i32_1 = arith.constant 0 : i32
    return %c0_i32, %c0_i32_0 : i32, i32
  }
  func.func @transform_14(%arg0: i32) -> (i32, i32) {
    %c0_i32 = arith.constant 0 : i32
    %c0_i32_0 = arith.constant 0 : i32
    %c0_i32_1 = arith.constant 0 : i32
    return %c0_i32, %c0_i32_0 : i32, i32
  }
  func.func @transform_15(%arg0: i32) -> (i32, i32) {
    %c0_i32 = arith.constant 0 : i32
    %c0_i32_0 = arith.constant 0 : i32
    %c0_i32_1 = arith.constant 0 : i32
    return %c0_i32, %c0_i32_0 : i32, i32
  }
  func.func @transform_16(%arg0: i32) -> (i32, i32) {
    %c0_i32 = arith.constant 0 : i32
    %c0_i32_0 = arith.constant 0 : i32
    %c0_i32_1 = arith.constant 0 : i32
    return %c0_i32, %c0_i32_0 : i32, i32
  }
  func.func @transform_17(%arg0: i32) -> (i32, i32, i32) {
    %c0_i32 = arith.constant 0 : i32
    %c0_i32_0 = arith.constant 0 : i32
    %c0_i32_1 = arith.constant 0 : i32
    %c0_i32_2 = arith.constant 0 : i32
    return %c0_i32, %c0_i32_0, %c0_i32_1 : i32, i32, i32
  }
  func.func @transform_18(%arg0: i32) -> (i32, i32) {
    %c0_i32 = arith.constant 0 : i32
    %c0_i32_0 = arith.constant 0 : i32
    %c0_i32_1 = arith.constant 0 : i32
    return %c0_i32, %c0_i32_0 : i32, i32
  }
  func.func @transform_19(%arg0: i32) -> (i32, i32) {
    %c0_i32 = arith.constant 0 : i32
    %c0_i32_0 = arith.constant 0 : i32
    %c0_i32_1 = arith.constant 0 : i32
    return %c0_i32, %c0_i32_0 : i32, i32
  }
  func.func @transform_20(%arg0: i32) -> (i32, i32, i32) {
    %c0_i32 = arith.constant 0 : i32
    %c0_i32_0 = arith.constant 0 : i32
    %c0_i32_1 = arith.constant 0 : i32
    %c0_i32_2 = arith.constant 0 : i32
    return %c0_i32, %c0_i32_0, %c0_i32_1 : i32, i32, i32
  }
  func.func @transform_21(%arg0: i32) -> (i32, i32) {
    %c0_i32 = arith.constant 0 : i32
    %c0_i32_0 = arith.constant 0 : i32
    %c0_i32_1 = arith.constant 0 : i32
    return %c0_i32, %c0_i32_0 : i32, i32
  }
  func.func @transform_22(%arg0: i32) -> (i32, i32) {
    %c0_i32 = arith.constant 0 : i32
    %c0_i32_0 = arith.constant 0 : i32
    %c0_i32_1 = arith.constant 0 : i32
    return %c0_i32, %c0_i32_0 : i32, i32
  }
  func.func @transform_23(%arg0: i32) -> (i32, i32) {
    %c0_i32 = arith.constant 0 : i32
    %c0_i32_0 = arith.constant 0 : i32
    %c0_i32_1 = arith.constant 0 : i32
    return %c0_i32, %c0_i32_0 : i32, i32
  }
  func.func @transform_24(%arg0: i32) -> (i32, i32) {
    %c0_i32 = arith.constant 0 : i32
    %c0_i32_0 = arith.constant 0 : i32
    %c0_i32_1 = arith.constant 0 : i32
    return %c0_i32, %c0_i32_0 : i32, i32
  }
  func.func @transform_25(%arg0: i32) -> (i32, i32, i32) {
    %c0_i32 = arith.constant 0 : i32
    %c0_i32_0 = arith.constant 0 : i32
    %c0_i32_1 = arith.constant 0 : i32
    return %arg0, %c0_i32, %c0_i32_0 : i32, i32, i32
  }
}

</mosaic_0001>

<llo_original>
// kernel: forward.1
$region0: #{forward.1}
  #allocation0 [shape = 'u32[]', space=smem, size = 0x4, offset = 0x4, fixed_abs, tag = 'smem constant byte address 0x4 - core index']
  #allocation1 [shape = 'u32[144,128]{1,0:T(1,128)}', space=vmem, size = 0x12000, scoped, tag = 'internal scratch']
  %s0 = inlined_call_operand.vmem [shape: f32[2,8,16], index: 0, kind: input, shape index: {}]
  %s1 = inlined_call_operand.vmem [shape: f32[2,4,36], index: 1, kind: input, shape index: {}]
  %s2 = inlined_call_operand.vmem [shape: f32[2,8,100], index: 2, kind: input, shape index: {}]
  %s3 = inlined_call_operand.vmem [shape: f32[2,8,256], index: 3, kind: input, shape index: {}]
  %s4 = inlined_call_operand.vmem [shape: bf16[144,8], index: 4, kind: input, shape index: {}]
  %s5 = inlined_call_operand.hbm [shape: bf16[9,16,64], index: 5, kind: input, shape index: {}]
  %s6 = inlined_call_operand.vmem [shape: bf16[144,4], index: 6, kind: input, shape index: {}]
  %s7 = inlined_call_operand.hbm [shape: bf16[9,36,64], index: 7, kind: input, shape index: {}]
  %s8 = inlined_call_operand.vmem [shape: f32[16,1], index: 8, kind: input, shape index: {}]
  %s9 = inlined_call_operand.vmem [shape: bf16[144,16], index: 9, kind: input, shape index: {}]
  %s10 = inlined_call_operand.vmem [shape: bf16[9,64,64], index: 10, kind: input, shape index: {}]
  %s11 = inlined_call_operand.vmem [shape: bf16[144,8], index: 11, kind: input, shape index: {}]
  %s12 = inlined_call_operand.vmem [shape: bf16[9,100,64], index: 12, kind: input, shape index: {}]
  %s13 = inlined_call_operand.vmem [shape: f32[16,1], index: 13, kind: input, shape index: {}]
  %s14 = inlined_call_operand.vmem [shape: bf16[144,16], index: 14, kind: input, shape index: {}]
  %s15 = inlined_call_operand.vmem [shape: f32[16,1], index: 15, kind: input, shape index: {}]
  %s16 = inlined_call_operand.vmem [shape: bf16[72,16], index: 16, kind: input, shape index: {}]
  %s17 = inlined_call_operand.hbm [shape: bf16[9,64,256], index: 17, kind: input, shape index: {}]
  %s18 = inlined_call_operand.vmem [shape: f32[8,1], index: 18, kind: input, shape index: {}]
  %s19 = inlined_call_operand.vmem [shape: bf16[72,8], index: 19, kind: input, shape index: {}]
  %s20 = inlined_call_operand.vmem [shape: bf16[9,256,256], index: 20, kind: input, shape index: {}]
  %s21 = inlined_call_operand.vmem [shape: bf16[72,8], index: 21, kind: input, shape index: {}]
  %s22 = inlined_call_operand.vmem [shape: f32[8,1], index: 22, kind: input, shape index: {}]
  %s23 = inlined_call_operand.vmem [shape: bf16[72,8], index: 23, kind: input, shape index: {}]
  %s24 = inlined_call_operand.vmem [shape: f32[8,1], index: 24, kind: input, shape index: {}]
  %s25 = inlined_call_operand.vmem [shape: f32[2,8,256], index: 25, kind: output, shape index: {}]
  %s26 = sld [smem:[#allocation0]]
  $region145: #{forward.1} parent=0
    _
  %s28 = ssub.s32 1, %s26
  %s29 = scalar_select 0, %s28, %s26
  $region1: #{forward.1} parent=0
    #allocation2 [shape = 'u8[36864]{0}', space=vmem, size = 0x9000, scoped, tag = 'input window, operand 5, single buffered']
    #allocation3 [shape = 's32[2]{0}', space=sflag, size = 0x8, scoped, tag = 'scoped memory for forward.1']
    #allocation4 [shape = 'u8[92160]{0}', space=vmem, size = 0x16800, scoped, tag = 'input window, operand 7, single buffered']
    #allocation5 [shape = 's32[1]{0}', space=sflag, size = 0x4, scoped, tag = 'scoped memory for forward.1']
    #allocation6 [shape = 'u8[294912]{0}', space=vmem, size = 0x48000, scoped, tag = 'input window, operand 17, single buffered']
    %30 = vsyncpa [#allocation3], 0
    %31 = vsyncpa [#allocation5], 0
    loop: start=0, step=1, limit=4
    $region2: #{forward.1} parent=1 // loop_pre_header
      _
    $region3: #{forward.1} parent=1 // loop_header
      %s33 = sphi 0, %s37
      %p34 = scmp.ge.s32.totalorder %s33, 4
      %s43 = sphi 0, %s45
      %s46 = sphi 0, %s43
      %s47 = sphi 0, %s46
      %s63 = sphi 0, %s47
      %s69 = sphi 0, %s71
      %s72 = sphi 0, %s69
      %s73 = sphi 0, %s72
      %s89 = sphi 0, %s73
      %s95 = sphi 0, %s97
      %s98 = sphi 0, %s95
      %s99 = sphi 0, %s98
      %s115 = sphi 0, %s99
      %s121 = sphi 0, %s123
      %s124 = sphi 0, %s121
      %s125 = sphi 0, %s124
      %s141 = sphi 0, %s125
      %s145 = sphi 0, %s145
      %s147 = sphi 0, %s145
      %s148 = sphi 0, %s147
      %s162 = sphi 0, %s148
      %s166 = sphi 0, %s166
      %s168 = sphi 0, %s166
      %s169 = sphi 0, %s168
      %s183 = sphi 0, %s169
      %s187 = sphi 0, %s187
      %s189 = sphi 0, %s187
      %s190 = sphi 0, %s189
      %s204 = sphi 0, %s190
      %s208 = sphi 0, %s208
      %s210 = sphi 0, %s208
      %s211 = sphi 0, %s210
      %s225 = sphi 0, %s211
      %s229 = sphi 0, %s229
      %s231 = sphi 0, %s229
      %s232 = sphi 0, %s231
      %s246 = sphi 0, %s232
      %s250 = sphi 0, %s250
      %s252 = sphi 0, %s250
      %s253 = sphi 0, %s252
      %s267 = sphi 0, %s253
      %s271 = sphi 0, %s271
      %s273 = sphi 0, %s271
      %s274 = sphi 0, %s273
      %s288 = sphi 0, %s274
      %s292 = sphi 0, %s292
      %s294 = sphi 0, %s292
      %s295 = sphi 0, %s294
      %s309 = sphi 0, %s295
      %s313 = sphi 0, %s313
      %s315 = sphi 0, %s313
      %s316 = sphi 0, %s315
      %s330 = sphi 0, %s316
      %s334 = sphi 0, %s334
      %s336 = sphi 0, %s334
      %s337 = sphi 0, %s336
      %s351 = sphi 0, %s337
      %s355 = sphi 0, %s355
      %s357 = sphi 0, %s355
      %s358 = sphi 0, %s357
      %s372 = sphi 0, %s358
      %s376 = sphi 0, %s376
      %s378 = sphi 0, %s376
      %s379 = sphi 0, %s378
      %s393 = sphi 0, %s379
      %s397 = sphi 0, %s397
      %s399 = sphi 0, %s397
      %s400 = sphi 0, %s399
      %s414 = sphi 0, %s400
      %s418 = sphi 0, %s418
      %s420 = sphi 0, %s418
      %s421 = sphi 0, %s420
      %s435 = sphi 0, %s421
      %s439 = sphi 0, %s439
      %s441 = sphi 0, %s439
      %s442 = sphi 0, %s441
      %s456 = sphi 0, %s442
      %s460 = sphi 0, %s460
      %s462 = sphi 0, %s460
      %s463 = sphi 0, %s462
      %s477 = sphi 0, %s463
      %s481 = sphi 0, %s481
      %s483 = sphi 0, %s481
      %s484 = sphi 0, %s483
      %s498 = sphi 0, %s484
      %s502 = sphi 0, %s502
      %s504 = sphi 0, %s502
      %s505 = sphi 0, %s504
      %s519 = sphi 0, %s505
      %s523 = sphi 0, %s523
      %s525 = sphi 0, %s523
      %s526 = sphi 0, %s525
      %s540 = sphi 0, %s526
      %s544 = sphi 0, %s544
      %s546 = sphi 0, %s544
      %s547 = sphi 0, %s546
      %s561 = sphi 0, %s547
      %s565 = sphi 0, %s565
      %s567 = sphi 0, %s565
      %s568 = sphi 0, %s567
      %s582 = sphi 0, %s568
      %s588 = sphi 0, %s590
      %s591 = sphi 0, %s588
      %s592 = sphi 0, %s591
      %s608 = sphi 0, %s592
    $region4: #{forward.1} parent=1 // loop_header_branch
      %36 = sbr.rel (%p34) target = $region8
    $region5: #{forward.1} parent=1 // loop_body
      %s38 = ssub.s32 %s33, 1
      %s39 = ssub.s32 %s33, 2
      %s40 = sadd.s32 %s33, 1
      %s41 = ssub.s32 %s33, %s40
      %p42 = scmp.eq.s32.totalorder %s41, 0
      %s44 = sadd.s32 %s43, 1
      %s45 = scalar_select %p42, %s43, %s44
      %p48 = pneg %p42
      %p49 = scmp.eq.s32.totalorder %s33, 1
      %p50 = por %p48, %p49
      %p51 = scmp.ne.s32.totalorder %s43, %s46
      %p52 = scmp.eq.s32.totalorder %s33, 0
      %p53 = por %p51, %p52
      %p54 = scmp.ne.s32.totalorder %s43, %s46
      %p55 = scmp.eq.s32.totalorder %s38, 1
      %p56 = por %p54, %p55
      %p57 = scmp.ne.s32.totalorder %s46, %s47
      %p58 = scmp.eq.s32.totalorder %s38, 0
      %p59 = por %p57, %p58
      %p60 = scmp.ne.s32.totalorder %s46, %s47
      %p61 = scmp.eq.s32.totalorder %s39, 1
      %p62 = por %p60, %p61
      %p64 = scmp.ne.s32.totalorder %s47, %s63
      %p65 = scmp.eq.s32.totalorder %s39, 0
      %p66 = por %p64, %p65
      %s67 = ssub.s32 %s33, %s40
      %p68 = scmp.eq.s32.totalorder %s67, 0
      %s70 = sadd.s32 %s69, 1
      %s71 = scalar_select %p68, %s69, %s70
      %p74 = pneg %p68
      %p75 = scmp.eq.s32.totalorder %s33, 1
      %p76 = por %p74, %p75
      %p77 = scmp.ne.s32.totalorder %s69, %s72
      %p78 = scmp.eq.s32.totalorder %s33, 0
      %p79 = por %p77, %p78
      %p80 = scmp.ne.s32.totalorder %s69, %s72
      %p81 = scmp.eq.s32.totalorder %s38, 1
      %p82 = por %p80, %p81
      %p83 = scmp.ne.s32.totalorder %s72, %s73
      %p84 = scmp.eq.s32.totalorder %s38, 0
      %p85 = por %p83, %p84
      %p86 = scmp.ne.s32.totalorder %s72, %s73
      %p87 = scmp.eq.s32.totalorder %s39, 1
      %p88 = por %p86, %p87
      %p90 = scmp.ne.s32.totalorder %s73, %s89
      %p91 = scmp.eq.s32.totalorder %s39, 0
      %p92 = por %p90, %p91
      %s93 = ssub.s32 %s33, %s40
      %p94 = scmp.eq.s32.totalorder %s93, 0
      %s96 = sadd.s32 %s95, 1
      %s97 = scalar_select %p94, %s95, %s96
      %p100 = pneg %p94
      %p101 = scmp.eq.s32.totalorder %s33, 1
      %p102 = por %p100, %p101
      %p103 = scmp.ne.s32.totalorder %s95, %s98
      %p104 = scmp.eq.s32.totalorder %s33, 0
      %p105 = por %p103, %p104
      %p106 = scmp.ne.s32.totalorder %s95, %s98
      %p107 = scmp.eq.s32.totalorder %s38, 1
      %p108 = por %p106, %p107
      %p109 = scmp.ne.s32.totalorder %s98, %s99
      %p110 = scmp.eq.s32.totalorder %s38, 0
      %p111 = por %p109, %p110
      %p112 = scmp.ne.s32.totalorder %s98, %s99
      %p113 = scmp.eq.s32.totalorder %s39, 1
      %p114 = por %p112, %p113
      %p116 = scmp.ne.s32.totalorder %s99, %s115
      %p117 = scmp.eq.s32.totalorder %s39, 0
      %p118 = por %p116, %p117
      %s119 = ssub.s32 %s33, %s40
      %p120 = scmp.eq.s32.totalorder %s119, 0
      %s122 = sadd.s32 %s121, 1
      %s123 = scalar_select %p120, %s121, %s122
      %p126 = pneg %p120
      %p127 = scmp.eq.s32.totalorder %s33, 1
      %p128 = por %p126, %p127
      %p129 = scmp.ne.s32.totalorder %s121, %s124
      %p130 = scmp.eq.s32.totalorder %s33, 0
      %p131 = por %p129, %p130
      %p132 = scmp.ne.s32.totalorder %s121, %s124
      %p133 = scmp.eq.s32.totalorder %s38, 1
      %p134 = por %p132, %p133
      %p135 = scmp.ne.s32.totalorder %s124, %s125
      %p136 = scmp.eq.s32.totalorder %s38, 0
      %p137 = por %p135, %p136
      %p138 = scmp.ne.s32.totalorder %s124, %s125
      %p139 = scmp.eq.s32.totalorder %s39, 1
      %p140 = por %p138, %p139
      %p142 = scmp.ne.s32.totalorder %s125, %s141
      %p143 = scmp.eq.s32.totalorder %s39, 0
      %p144 = por %p142, %p143
      %s146 = sadd.s32 %s145, 1
      %p149 = scmp.eq.s32.totalorder %s33, 1
      %p150 = scmp.ne.s32.totalorder %s145, %s147
      %p151 = scmp.eq.s32.totalorder %s33, 0
      %p152 = por %p150, %p151
      %p153 = scmp.ne.s32.totalorder %s145, %s147
      %p154 = scmp.eq.s32.totalorder %s38, 1
      %p155 = por %p153, %p154
      %p156 = scmp.ne.s32.totalorder %s147, %s148
      %p157 = scmp.eq.s32.totalorder %s38, 0
      %p158 = por %p156, %p157
      %p159 = scmp.ne.s32.totalorder %s147, %s148
      %p160 = scmp.eq.s32.totalorder %s39, 1
      %p161 = por %p159, %p160
      %p163 = scmp.ne.s32.totalorder %s148, %s162
      %p164 = scmp.eq.s32.totalorder %s39, 0
      %p165 = por %p163, %p164
      %s167 = sadd.s32 %s166, 1
      %p170 = scmp.eq.s32.totalorder %s33, 1
      %p171 = scmp.ne.s32.totalorder %s166, %s168
      %p172 = scmp.eq.s32.totalorder %s33, 0
      %p173 = por %p171, %p172
      %p174 = scmp.ne.s32.totalorder %s166, %s168
      %p175 = scmp.eq.s32.totalorder %s38, 1
      %p176 = por %p174, %p175
      %p177 = scmp.ne.s32.totalorder %s168, %s169
      %p178 = scmp.eq.s32.totalorder %s38, 0
      %p179 = por %p177, %p178
      %p180 = scmp.ne.s32.totalorder %s168, %s169
      %p181 = scmp.eq.s32.totalorder %s39, 1
      %p182 = por %p180, %p181
      %p184 = scmp.ne.s32.totalorder %s169, %s183
      %p185 = scmp.eq.s32.totalorder %s39, 0
      %p186 = por %p184, %p185
      %s188 = sadd.s32 %s187, 1
      %p191 = scmp.eq.s32.totalorder %s33, 1
      %p192 = scmp.ne.s32.totalorder %s187, %s189
      %p193 = scmp.eq.s32.totalorder %s33, 0
      %p194 = por %p192, %p193
      %p195 = scmp.ne.s32.totalorder %s187, %s189
      %p196 = scmp.eq.s32.totalorder %s38, 1
      %p197 = por %p195, %p196
      %p198 = scmp.ne.s32.totalorder %s189, %s190
      %p199 = scmp.eq.s32.totalorder %s38, 0
      %p200 = por %p198, %p199
      %p201 = scmp.ne.s32.totalorder %s189, %s190
      %p202 = scmp.eq.s32.totalorder %s39, 1
      %p203 = por %p201, %p202
      %p205 = scmp.ne.s32.totalorder %s190, %s204
      %p206 = scmp.eq.s32.totalorder %s39, 0
      %p207 = por %p205, %p206
      %s209 = sadd.s32 %s208, 1
      %p212 = scmp.eq.s32.totalorder %s33, 1
      %p213 = scmp.ne.s32.totalorder %s208, %s210
      %p214 = scmp.eq.s32.totalorder %s33, 0
      %p215 = por %p213, %p214
      %p216 = scmp.ne.s32.totalorder %s208, %s210
      %p217 = scmp.eq.s32.totalorder %s38, 1
      %p218 = por %p216, %p217
      %p219 = scmp.ne.s32.totalorder %s210, %s211
      %p220 = scmp.eq.s32.totalorder %s38, 0
      %p221 = por %p219, %p220
      %p222 = scmp.ne.s32.totalorder %s210, %s211
      %p223 = scmp.eq.s32.totalorder %s39, 1
      %p224 = por %p222, %p223
      %p226 = scmp.ne.s32.totalorder %s211, %s225
      %p227 = scmp.eq.s32.totalorder %s39, 0
      %p228 = por %p226, %p227
      %s230 = sadd.s32 %s229, 1
      %p233 = scmp.eq.s32.totalorder %s33, 1
      %p234 = scmp.ne.s32.totalorder %s229, %s231
      %p235 = scmp.eq.s32.totalorder %s33, 0
      %p236 = por %p234, %p235
      %p237 = scmp.ne.s32.totalorder %s229, %s231
      %p238 = scmp.eq.s32.totalorder %s38, 1
      %p239 = por %p237, %p238
      %p240 = scmp.ne.s32.totalorder %s231, %s232
      %p241 = scmp.eq.s32.totalorder %s38, 0
      %p242 = por %p240, %p241
      %p243 = scmp.ne.s32.totalorder %s231, %s232
      %p244 = scmp.eq.s32.totalorder %s39, 1
      %p245 = por %p243, %p244
      %p247 = scmp.ne.s32.totalorder %s232, %s246
      %p248 = scmp.eq.s32.totalorder %s39, 0
      %p249 = por %p247, %p248
      %s251 = sadd.s32 %s250, 1
      %p254 = scmp.eq.s32.totalorder %s33, 1
      %p255 = scmp.ne.s32.totalorder %s250, %s252
      %p256 = scmp.eq.s32.totalorder %s33, 0
      %p257 = por %p255, %p256
      %p258 = scmp.ne.s32.totalorder %s250, %s252
      %p259 = scmp.eq.s32.totalorder %s38, 1
      %p260 = por %p258, %p259
      %p261 = scmp.ne.s32.totalorder %s252, %s253
      %p262 = scmp.eq.s32.totalorder %s38, 0
      %p263 = por %p261, %p262
      %p264 = scmp.ne.s32.totalorder %s252, %s253
      %p265 = scmp.eq.s32.totalorder %s39, 1
      %p266 = por %p264, %p265
      %p268 = scmp.ne.s32.totalorder %s253, %s267
      %p269 = scmp.eq.s32.totalorder %s39, 0
      %p270 = por %p268, %p269
      %s272 = sadd.s32 %s271, 1
      %p275 = scmp.eq.s32.totalorder %s33, 1
      %p276 = scmp.ne.s32.totalorder %s271, %s273
      %p277 = scmp.eq.s32.totalorder %s33, 0
      %p278 = por %p276, %p277
      %p279 = scmp.ne.s32.totalorder %s271, %s273
      %p280 = scmp.eq.s32.totalorder %s38, 1
      %p281 = por %p279, %p280
      %p282 = scmp.ne.s32.totalorder %s273, %s274
      %p283 = scmp.eq.s32.totalorder %s38, 0
      %p284 = por %p282, %p283
      %p285 = scmp.ne.s32.totalorder %s273, %s274
      %p286 = scmp.eq.s32.totalorder %s39, 1
      %p287 = por %p285, %p286
      %p289 = scmp.ne.s32.totalorder %s274, %s288
      %p290 = scmp.eq.s32.totalorder %s39, 0
      %p291 = por %p289, %p290
      %s293 = sadd.s32 %s292, 1
      %p296 = scmp.eq.s32.totalorder %s33, 1
      %p297 = scmp.ne.s32.totalorder %s292, %s294
      %p298 = scmp.eq.s32.totalorder %s33, 0
      %p299 = por %p297, %p298
      %p300 = scmp.ne.s32.totalorder %s292, %s294
      %p301 = scmp.eq.s32.totalorder %s38, 1
      %p302 = por %p300, %p301
      %p303 = scmp.ne.s32.totalorder %s294, %s295
      %p304 = scmp.eq.s32.totalorder %s38, 0
      %p305 = por %p303, %p304
      %p306 = scmp.ne.s32.totalorder %s294, %s295
      %p307 = scmp.eq.s32.totalorder %s39, 1
      %p308 = por %p306, %p307
      %p310 = scmp.ne.s32.totalorder %s295, %s309
      %p311 = scmp.eq.s32.totalorder %s39, 0
      %p312 = por %p310, %p311
      %s314 = sadd.s32 %s313, 1
      %p317 = scmp.eq.s32.totalorder %s33, 1
      %p318 = scmp.ne.s32.totalorder %s313, %s315
      %p319 = scmp.eq.s32.totalorder %s33, 0
      %p320 = por %p318, %p319
      %p321 = scmp.ne.s32.totalorder %s313, %s315
      %p322 = scmp.eq.s32.totalorder %s38, 1
      %p323 = por %p321, %p322
      %p324 = scmp.ne.s32.totalorder %s315, %s316
      %p325 = scmp.eq.s32.totalorder %s38, 0
      %p326 = por %p324, %p325
      %p327 = scmp.ne.s32.totalorder %s315, %s316
      %p328 = scmp.eq.s32.totalorder %s39, 1
      %p329 = por %p327, %p328
      %p331 = scmp.ne.s32.totalorder %s316, %s330
      %p332 = scmp.eq.s32.totalorder %s39, 0
      %p333 = por %p331, %p332
      %s335 = sadd.s32 %s334, 1
      %p338 = scmp.eq.s32.totalorder %s33, 1
      %p339 = scmp.ne.s32.totalorder %s334, %s336
      %p340 = scmp.eq.s32.totalorder %s33, 0
      %p341 = por %p339, %p340
      %p342 = scmp.ne.s32.totalorder %s334, %s336
      %p343 = scmp.eq.s32.totalorder %s38, 1
      %p344 = por %p342, %p343
      %p345 = scmp.ne.s32.totalorder %s336, %s337
      %p346 = scmp.eq.s32.totalorder %s38, 0
      %p347 = por %p345, %p346
      %p348 = scmp.ne.s32.totalorder %s336, %s337
      %p349 = scmp.eq.s32.totalorder %s39, 1
      %p350 = por %p348, %p349
      %p352 = scmp.ne.s32.totalorder %s337, %s351
      %p353 = scmp.eq.s32.totalorder %s39, 0
      %p354 = por %p352, %p353
      %s356 = sadd.s32 %s355, 1
      %p359 = scmp.eq.s32.totalorder %s33, 1
      %p360 = scmp.ne.s32.totalorder %s355, %s357
      %p361 = scmp.eq.s32.totalorder %s33, 0
      %p362 = por %p360, %p361
      %p363 = scmp.ne.s32.totalorder %s355, %s357
      %p364 = scmp.eq.s32.totalorder %s38, 1
      %p365 = por %p363, %p364
      %p366 = scmp.ne.s32.totalorder %s357, %s358
      %p367 = scmp.eq.s32.totalorder %s38, 0
      %p368 = por %p366, %p367
      %p369 = scmp.ne.s32.totalorder %s357, %s358
      %p370 = scmp.eq.s32.totalorder %s39, 1
      %p371 = por %p369, %p370
      %p373 = scmp.ne.s32.totalorder %s358, %s372
      %p374 = scmp.eq.s32.totalorder %s39, 0
      %p375 = por %p373, %p374
      %s377 = sadd.s32 %s376, 1
      %p380 = scmp.eq.s32.totalorder %s33, 1
      %p381 = scmp.ne.s32.totalorder %s376, %s378
      %p382 = scmp.eq.s32.totalorder %s33, 0
      %p383 = por %p381, %p382
      %p384 = scmp.ne.s32.totalorder %s376, %s378
      %p385 = scmp.eq.s32.totalorder %s38, 1
      %p386 = por %p384, %p385
      %p387 = scmp.ne.s32.totalorder %s378, %s379
      %p388 = scmp.eq.s32.totalorder %s38, 0
      %p389 = por %p387, %p388
      %p390 = scmp.ne.s32.totalorder %s378, %s379
      %p391 = scmp.eq.s32.totalorder %s39, 1
      %p392 = por %p390, %p391
      %p394 = scmp.ne.s32.totalorder %s379, %s393
      %p395 = scmp.eq.s32.totalorder %s39, 0
      %p396 = por %p394, %p395
      %s398 = sadd.s32 %s397, 1
      %p401 = scmp.eq.s32.totalorder %s33, 1
      %p402 = scmp.ne.s32.totalorder %s397, %s399
      %p403 = scmp.eq.s32.totalorder %s33, 0
      %p404 = por %p402, %p403
      %p405 = scmp.ne.s32.totalorder %s397, %s399
      %p406 = scmp.eq.s32.totalorder %s38, 1
      %p407 = por %p405, %p406
      %p408 = scmp.ne.s32.totalorder %s399, %s400
      %p409 = scmp.eq.s32.totalorder %s38, 0
      %p410 = por %p408, %p409
      %p411 = scmp.ne.s32.totalorder %s399, %s400
      %p412 = scmp.eq.s32.totalorder %s39, 1
      %p413 = por %p411, %p412
      %p415 = scmp.ne.s32.totalorder %s400, %s414
      %p416 = scmp.eq.s32.totalorder %s39, 0
      %p417 = por %p415, %p416
      %s419 = sadd.s32 %s418, 1
      %p422 = scmp.eq.s32.totalorder %s33, 1
      %p423 = scmp.ne.s32.totalorder %s418, %s420
      %p424 = scmp.eq.s32.totalorder %s33, 0
      %p425 = por %p423, %p424
      %p426 = scmp.ne.s32.totalorder %s418, %s420
      %p427 = scmp.eq.s32.totalorder %s38, 1
      %p428 = por %p426, %p427
      %p429 = scmp.ne.s32.totalorder %s420, %s421
      %p430 = scmp.eq.s32.totalorder %s38, 0
      %p431 = por %p429, %p430
      %p432 = scmp.ne.s32.totalorder %s420, %s421
      %p433 = scmp.eq.s32.totalorder %s39, 1
      %p434 = por %p432, %p433
      %p436 = scmp.ne.s32.totalorder %s421, %s435
      %p437 = scmp.eq.s32.totalorder %s39, 0
      %p438 = por %p436, %p437
      %s440 = sadd.s32 %s439, 1
      %p443 = scmp.eq.s32.totalorder %s33, 1
      %p444 = scmp.ne.s32.totalorder %s439, %s441
      %p445 = scmp.eq.s32.totalorder %s33, 0
      %p446 = por %p444, %p445
      %p447 = scmp.ne.s32.totalorder %s439, %s441
      %p448 = scmp.eq.s32.totalorder %s38, 1
      %p449 = por %p447, %p448
      %p450 = scmp.ne.s32.totalorder %s441, %s442
      %p451 = scmp.eq.s32.totalorder %s38, 0
      %p452 = por %p450, %p451
      %p453 = scmp.ne.s32.totalorder %s441, %s442
      %p454 = scmp.eq.s32.totalorder %s39, 1
      %p455 = por %p453, %p454
      %p457 = scmp.ne.s32.totalorder %s442, %s456
      %p458 = scmp.eq.s32.totalorder %s39, 0
      %p459 = por %p457, %p458
      %s461 = sadd.s32 %s460, 1
      %p464 = scmp.eq.s32.totalorder %s33, 1
      %p465 = scmp.ne.s32.totalorder %s460, %s462
      %p466 = scmp.eq.s32.totalorder %s33, 0
      %p467 = por %p465, %p466
      %p468 = scmp.ne.s32.totalorder %s460, %s462
      %p469 = scmp.eq.s32.totalorder %s38, 1
      %p470 = por %p468, %p469
      %p471 = scmp.ne.s32.totalorder %s462, %s463
      %p472 = scmp.eq.s32.totalorder %s38, 0
      %p473 = por %p471, %p472
      %p474 = scmp.ne.s32.totalorder %s462, %s463
      %p475 = scmp.eq.s32.totalorder %s39, 1
      %p476 = por %p474, %p475
      %p478 = scmp.ne.s32.totalorder %s463, %s477
      %p479 = scmp.eq.s32.totalorder %s39, 0
      %p480 = por %p478, %p479
      %s482 = sadd.s32 %s481, 1
      %p485 = scmp.eq.s32.totalorder %s33, 1
      %p486 = scmp.ne.s32.totalorder %s481, %s483
      %p487 = scmp.eq.s32.totalorder %s33, 0
      %p488 = por %p486, %p487
      %p489 = scmp.ne.s32.totalorder %s481, %s483
      %p490 = scmp.eq.s32.totalorder %s38, 1
      %p491 = por %p489, %p490
      %p492 = scmp.ne.s32.totalorder %s483, %s484
      %p493 = scmp.eq.s32.totalorder %s38, 0
      %p494 = por %p492, %p493
      %p495 = scmp.ne.s32.totalorder %s483, %s484
      %p496 = scmp.eq.s32.totalorder %s39, 1
      %p497 = por %p495, %p496
      %p499 = scmp.ne.s32.totalorder %s484, %s498
      %p500 = scmp.eq.s32.totalorder %s39, 0
      %p501 = por %p499, %p500
      %s503 = sadd.s32 %s502, 1
      %p506 = scmp.eq.s32.totalorder %s33, 1
      %p507 = scmp.ne.s32.totalorder %s502, %s504
      %p508 = scmp.eq.s32.totalorder %s33, 0
      %p509 = por %p507, %p508
      %p510 = scmp.ne.s32.totalorder %s502, %s504
      %p511 = scmp.eq.s32.totalorder %s38, 1
      %p512 = por %p510, %p511
      %p513 = scmp.ne.s32.totalorder %s504, %s505
      %p514 = scmp.eq.s32.totalorder %s38, 0
      %p515 = por %p513, %p514
      %p516 = scmp.ne.s32.totalorder %s504, %s505
      %p517 = scmp.eq.s32.totalorder %s39, 1
      %p518 = por %p516, %p517
      %p520 = scmp.ne.s32.totalorder %s505, %s519
      %p521 = scmp.eq.s32.totalorder %s39, 0
      %p522 = por %p520, %p521
      %s524 = sadd.s32 %s523, 1
      %p527 = scmp.eq.s32.totalorder %s33, 1
      %p528 = scmp.ne.s32.totalorder %s523, %s525
      %p529 = scmp.eq.s32.totalorder %s33, 0
      %p530 = por %p528, %p529
      %p531 = scmp.ne.s32.totalorder %s523, %s525
      %p532 = scmp.eq.s32.totalorder %s38, 1
      %p533 = por %p531, %p532
      %p534 = scmp.ne.s32.totalorder %s525, %s526
      %p535 = scmp.eq.s32.totalorder %s38, 0
      %p536 = por %p534, %p535
      %p537 = scmp.ne.s32.totalorder %s525, %s526
      %p538 = scmp.eq.s32.totalorder %s39, 1
      %p539 = por %p537, %p538
      %p541 = scmp.ne.s32.totalorder %s526, %s540
      %p542 = scmp.eq.s32.totalorder %s39, 0
      %p543 = por %p541, %p542
      %s545 = sadd.s32 %s544, 1
      %p548 = scmp.eq.s32.totalorder %s33, 1
      %p549 = scmp.ne.s32.totalorder %s544, %s546
      %p550 = scmp.eq.s32.totalorder %s33, 0
      %p551 = por %p549, %p550
      %p552 = scmp.ne.s32.totalorder %s544, %s546
      %p553 = scmp.eq.s32.totalorder %s38, 1
      %p554 = por %p552, %p553
      %p555 = scmp.ne.s32.totalorder %s546, %s547
      %p556 = scmp.eq.s32.totalorder %s38, 0
      %p557 = por %p555, %p556
      %p558 = scmp.ne.s32.totalorder %s546, %s547
      %p559 = scmp.eq.s32.totalorder %s39, 1
      %p560 = por %p558, %p559
      %p562 = scmp.ne.s32.totalorder %s547, %s561
      %p563 = scmp.eq.s32.totalorder %s39, 0
      %p564 = por %p562, %p563
      %s566 = sadd.s32 %s565, 1
      %p569 = scmp.eq.s32.totalorder %s33, 1
      %p570 = scmp.ne.s32.totalorder %s565, %s567
      %p571 = scmp.eq.s32.totalorder %s33, 0
      %p572 = por %p570, %p571
      %p573 = scmp.ne.s32.totalorder %s565, %s567
      %p574 = scmp.eq.s32.totalorder %s38, 1
      %p575 = por %p573, %p574
      %p576 = scmp.ne.s32.totalorder %s567, %s568
      %p577 = scmp.eq.s32.totalorder %s38, 0
      %p578 = por %p576, %p577
      %p579 = scmp.ne.s32.totalorder %s567, %s568
      %p580 = scmp.eq.s32.totalorder %s39, 1
      %p581 = por %p579, %p580
      %p583 = scmp.ne.s32.totalorder %s568, %s582
      %p584 = scmp.eq.s32.totalorder %s39, 0
      %p585 = por %p583, %p584
      %s586 = ssub.s32 %s33, %s40
      %p587 = scmp.eq.s32.totalorder %s586, 0
      %s589 = sadd.s32 %s588, 1
      %s590 = scalar_select %p587, %s588, %s589
      %p593 = pneg %p587
      %p594 = scmp.eq.s32.totalorder %s33, 1
      %p595 = por %p593, %p594
      %p596 = scmp.ne.s32.totalorder %s588, %s591
      %p597 = scmp.eq.s32.totalorder %s33, 0
      %p598 = por %p596, %p597
      %p599 = scmp.ne.s32.totalorder %s588, %s591
      %p600 = scmp.eq.s32.totalorder %s38, 1
      %p601 = por %p599, %p600
      %p602 = scmp.ne.s32.totalorder %s591, %s592
      %p603 = scmp.eq.s32.totalorder %s38, 0
      %p604 = por %p602, %p603
      %p605 = scmp.ne.s32.totalorder %s591, %s592
      %p606 = scmp.eq.s32.totalorder %s39, 1
      %p607 = por %p605, %p606
      %p609 = scmp.ne.s32.totalorder %s592, %s608
      %p610 = scmp.eq.s32.totalorder %s39, 0
      %p611 = por %p609, %p610
      %p612 = scmp.le.s32.totalorder 1, %s33
      %p613 = scmp.lt.s32.totalorder %s33, 3
      %p614 = pnand %p612, %p613
      %p615 = pneg %p614
      // Predicated region
      $region9: #{forward.1} parent=5 // pred_check
        _
      $region10: #{forward.1} parent=5 // pred_check_branch
        %617 = sbr.rel (%p614) target = $region12
      $region11: #{forward.1} parent=5 // pred_region
        %s618 = ssub.s32 %s33, 1
        // Predicated region
        $region13: #{forward.1} parent=11 // pred_check
          %p619 = pneg %p158
        $region14: #{forward.1} parent=11 // pred_check_branch
          %621 = sbr.rel (%p619) target = $region16
        $region15: #{forward.1} parent=11 // pred_region
          _
        $region16: #{forward.1} parent=11 // pred_fallthru
          _
        // Predicated region
        $region17: #{forward.1} parent=11 // pred_check
          %p622 = pneg %p179
        $region18: #{forward.1} parent=11 // pred_check_branch
          %624 = sbr.rel (%p622) target = $region20
        $region19: #{forward.1} parent=11 // pred_region
          %s626 = ssub.s32 1152, 1152
          %627 = vsyncadd [#allocation3], %s626
          %s628 = sshll.u32 [#allocation2], 4
          %s629 = int_to_ptr.vmem [resolvable:$true] %s628
          %634 = dma.hbm_to_vmem [thread:$0]  %s5, 1152, %s629, [#allocation3], 64, 64, 4
        $region20: #{forward.1} parent=11 // pred_fallthru
          _
        // Predicated region
        $region21: #{forward.1} parent=11 // pred_check
          %p635 = pneg %p200
        $region22: #{forward.1} parent=11 // pred_check_branch
          %637 = sbr.rel (%p635) target = $region24
        $region23: #{forward.1} parent=11 // pred_region
          _
        $region24: #{forward.1} parent=11 // pred_fallthru
          _
        // Predicated region
        $region25: #{forward.1} parent=11 // pred_check
          %p638 = pneg %p221
        $region26: #{forward.1} parent=11 // pred_check_branch
          %640 = sbr.rel (%p638) target = $region28
        $region27: #{forward.1} parent=11 // pred_region
          %s642 = ssub.s32 2880, 2880
          %643 = vsyncadd [#allocation5], %s642
          %s644 = sshll.u32 [#allocation4], 4
          %s645 = int_to_ptr.vmem [resolvable:$true] %s644
          %650 = dma.hbm_to_vmem [thread:$0]  %s7, 2880, %s645, [#allocation5], 64, 64, 4
        $region28: #{forward.1} parent=11 // pred_fallthru
          _
        // Predicated region
        $region29: #{forward.1} parent=11 // pred_check
          %p651 = pneg %p242
        $region30: #{forward.1} parent=11 // pred_check_branch
          %653 = sbr.rel (%p651) target = $region32
        $region31: #{forward.1} parent=11 // pred_region
          _
        $region32: #{forward.1} parent=11 // pred_fallthru
          _
        // Predicated region
        $region33: #{forward.1} parent=11 // pred_check
          %p654 = pneg %p263
        $region34: #{forward.1} parent=11 // pred_check_branch
          %656 = sbr.rel (%p654) target = $region36
        $region35: #{forward.1} parent=11 // pred_region
          _
        $region36: #{forward.1} parent=11 // pred_fallthru
          _
        // Predicated region
        $region37: #{forward.1} parent=11 // pred_check
          %p657 = pneg %p284
        $region38: #{forward.1} parent=11 // pred_check_branch
          %659 = sbr.rel (%p657) target = $region40
        $region39: #{forward.1} parent=11 // pred_region
          _
        $region40: #{forward.1} parent=11 // pred_fallthru
          _
        // Predicated region
        $region41: #{forward.1} parent=11 // pred_check
          %p660 = pneg %p305
        $region42: #{forward.1} parent=11 // pred_check_branch
          %662 = sbr.rel (%p660) target = $region44
        $region43: #{forward.1} parent=11 // pred_region
          _
        $region44: #{forward.1} parent=11 // pred_fallthru
          _
        // Predicated region
        $region45: #{forward.1} parent=11 // pred_check
          %p663 = pneg %p326
        $region46: #{forward.1} parent=11 // pred_check_branch
          %665 = sbr.rel (%p663) target = $region48
        $region47: #{forward.1} parent=11 // pred_region
          _
        $region48: #{forward.1} parent=11 // pred_fallthru
          _
        // Predicated region
        $region49: #{forward.1} parent=11 // pred_check
          %p666 = pneg %p347
        $region50: #{forward.1} parent=11 // pred_check_branch
          %668 = sbr.rel (%p666) target = $region52
        $region51: #{forward.1} parent=11 // pred_region
          _
        $region52: #{forward.1} parent=11 // pred_fallthru
          _
        // Predicated region
        $region53: #{forward.1} parent=11 // pred_check
          %p669 = pneg %p368
        $region54: #{forward.1} parent=11 // pred_check_branch
          %671 = sbr.rel (%p669) target = $region56
        $region55: #{forward.1} parent=11 // pred_region
          _
        $region56: #{forward.1} parent=11 // pred_fallthru
          _
        // Predicated region
        $region57: #{forward.1} parent=11 // pred_check
          %p672 = pneg %p389
        $region58: #{forward.1} parent=11 // pred_check_branch
          %674 = sbr.rel (%p672) target = $region60
        $region59: #{forward.1} parent=11 // pred_region
          _
        $region60: #{forward.1} parent=11 // pred_fallthru
          _
        // Predicated region
        $region61: #{forward.1} parent=11 // pred_check
          %p675 = pneg %p410
        $region62: #{forward.1} parent=11 // pred_check_branch
          %677 = sbr.rel (%p675) target = $region64
        $region63: #{forward.1} parent=11 // pred_region
          _
        $region64: #{forward.1} parent=11 // pred_fallthru
          _
        // Predicated region
        $region65: #{forward.1} parent=11 // pred_check
          %p678 = pneg %p431
        $region66: #{forward.1} parent=11 // pred_check_branch
          %680 = sbr.rel (%p678) target = $region68
        $region67: #{forward.1} parent=11 // pred_region
          %s682 = ssub.s32 9216, 9216
          %683 = vsyncadd [#allocation5], %s682
          %s684 = sshll.u32 [#allocation6], 4
          %s685 = int_to_ptr.vmem [resolvable:$true] %s684
          %690 = dma.hbm_to_vmem [thread:$0]  %s17, 9216, %s685, [#allocation5], 128, 128, 8
        $region68: #{forward.1} parent=11 // pred_fallthru
          _
        // Predicated region
        $region69: #{forward.1} parent=11 // pred_check
          %p691 = pneg %p452
        $region70: #{forward.1} parent=11 // pred_check_branch
          %693 = sbr.rel (%p691) target = $region72
        $region71: #{forward.1} parent=11 // pred_region
          _
        $region72: #{forward.1} parent=11 // pred_fallthru
          _
        // Predicated region
        $region73: #{forward.1} parent=11 // pred_check
          %p694 = pneg %p473
        $region74: #{forward.1} parent=11 // pred_check_branch
          %696 = sbr.rel (%p694) target = $region76
        $region75: #{forward.1} parent=11 // pred_region
          _
        $region76: #{forward.1} parent=11 // pred_fallthru
          _
        // Predicated region
        $region77: #{forward.1} parent=11 // pred_check
          %p697 = pneg %p494
        $region78: #{forward.1} parent=11 // pred_check_branch
          %699 = sbr.rel (%p697) target = $region80
        $region79: #{forward.1} parent=11 // pred_region
          _
        $region80: #{forward.1} parent=11 // pred_fallthru
          _
        // Predicated region
        $region81: #{forward.1} parent=11 // pred_check
          %p700 = pneg %p515
        $region82: #{forward.1} parent=11 // pred_check_branch
          %702 = sbr.rel (%p700) target = $region84
        $region83: #{forward.1} parent=11 // pred_region
          _
        $region84: #{forward.1} parent=11 // pred_fallthru
          _
        // Predicated region
        $region85: #{forward.1} parent=11 // pred_check
          %p703 = pneg %p536
        $region86: #{forward.1} parent=11 // pred_check_branch
          %705 = sbr.rel (%p703) target = $region88
        $region87: #{forward.1} parent=11 // pred_region
          _
        $region88: #{forward.1} parent=11 // pred_fallthru
          _
        // Predicated region
        $region89: #{forward.1} parent=11 // pred_check
          %p706 = pneg %p557
        $region90: #{forward.1} parent=11 // pred_check_branch
          %708 = sbr.rel (%p706) target = $region92
        $region91: #{forward.1} parent=11 // pred_region
          _
        $region92: #{forward.1} parent=11 // pred_fallthru
          _
        // Predicated region
        $region93: #{forward.1} parent=11 // pred_check
          %p709 = pneg %p578
        $region94: #{forward.1} parent=11 // pred_check_branch
          %711 = sbr.rel (%p709) target = $region96
        $region95: #{forward.1} parent=11 // pred_region
          _
        $region96: #{forward.1} parent=11 // pred_fallthru
          _
      $region12: #{forward.1} parent=5 // pred_fallthru
        _
      %p712 = scmp.lt.s32.totalorder %s33, 2
      // Predicated region
      $region97: #{forward.1} parent=5 // pred_check
        %p713 = pneg %p712
      $region98: #{forward.1} parent=5 // pred_check_branch
        %715 = sbr.rel (%p713) target = $region100
      $region99: #{forward.1} parent=5 // pred_region
        // Predicated region
        $region101: #{forward.1} parent=99 // pred_check
          %p716 = pneg %p53
        $region102: #{forward.1} parent=99 // pred_check_branch
          %718 = sbr.rel (%p716) target = $region104
        $region103: #{forward.1} parent=99 // pred_region
          %p719 = scmp.lt.s32.totalorder %s33, 1
          %s720 = scalar_select %p719, %s33, 1
          %s721 = smul.addr %s720, 8
          %s722 = scalar_lea.vmem %s0, %s721
        $region104: #{forward.1} parent=99 // pred_fallthru
          _
        // Predicated region
        $region105: #{forward.1} parent=99 // pred_check
          %p723 = pneg %p79
        $region106: #{forward.1} parent=99 // pred_check_branch
          %725 = sbr.rel (%p723) target = $region108
        $region107: #{forward.1} parent=99 // pred_region
          %p726 = scmp.lt.s32.totalorder %s33, 1
          %s727 = scalar_select %p726, %s33, 1
          %s728 = smul.addr %s727, 4
          %s729 = scalar_lea.vmem %s1, %s728
        $region108: #{forward.1} parent=99 // pred_fallthru
          _
        // Predicated region
        $region109: #{forward.1} parent=99 // pred_check
          %p730 = pneg %p105
        $region110: #{forward.1} parent=99 // pred_check_branch
          %732 = sbr.rel (%p730) target = $region112
        $region111: #{forward.1} parent=99 // pred_region
          %p733 = scmp.lt.s32.totalorder %s33, 1
          %s734 = scalar_select %p733, %s33, 1
          %s735 = smul.addr %s734, 8
          %s736 = scalar_lea.vmem %s2, %s735
        $region112: #{forward.1} parent=99 // pred_fallthru
          _
        // Predicated region
        $region113: #{forward.1} parent=99 // pred_check
          %p737 = pneg %p131
        $region114: #{forward.1} parent=99 // pred_check_branch
          %739 = sbr.rel (%p737) target = $region116
        $region115: #{forward.1} parent=99 // pred_region
          %p740 = scmp.lt.s32.totalorder %s33, 1
          %s741 = scalar_select %p740, %s33, 1
          %s742 = smul.addr %s741, 2
          %s743 = smul.addr %s742, 8
          %s744 = scalar_lea.vmem %s3, %s743
        $region116: #{forward.1} parent=99 // pred_fallthru
          _
      $region100: #{forward.1} parent=5 // pred_fallthru
        _
      %p745 = scmp.le.s32.totalorder 1, %s33
      %p746 = scmp.lt.s32.totalorder %s33, 3
      %p747 = pnand %p745, %p746
      %p748 = pneg %p747
      // Predicated region
      $region117: #{forward.1} parent=5 // pred_check
        _
      $region118: #{forward.1} parent=5 // pred_check_branch
        %750 = sbr.rel (%p747) target = $region120
      $region119: #{forward.1} parent=5 // pred_region
        %s751 = ssub.s32 %s33, 1
        // Predicated region
        $region121: #{forward.1} parent=119 // pred_check
          %p752 = pneg %p179
        $region122: #{forward.1} parent=119 // pred_check_branch
          %754 = sbr.rel (%p752) target = $region124
        $region123: #{forward.1} parent=119 // pred_region
          %755 = dma.done [#allocation3], 1152
        $region124: #{forward.1} parent=119 // pred_fallthru
          _
        // Predicated region
        $region125: #{forward.1} parent=119 // pred_check
          %p756 = pneg %p221
        $region126: #{forward.1} parent=119 // pred_check_branch
          %758 = sbr.rel (%p756) target = $region128
        $region127: #{forward.1} parent=119 // pred_region
          %759 = dma.done [#allocation5], 2880
        $region128: #{forward.1} parent=119 // pred_fallthru
          _
        // Predicated region
        $region129: #{forward.1} parent=119 // pred_check
          %p760 = pneg %p431
        $region130: #{forward.1} parent=119 // pred_check_branch
          %762 = sbr.rel (%p760) target = $region132
        $region131: #{forward.1} parent=119 // pred_region
          %763 = dma.done [#allocation5], 9216
        $region132: #{forward.1} parent=119 // pred_fallthru
          _
        %p764 = scmp.lt.s32.totalorder %s38, 1
        %s765 = scalar_select %p764, %s38, 1
        %s766 = smul.addr %s765, 8
        %s767 = scalar_lea.vmem %s0, %s766
        %p768 = pneg %p59
        %p769 = pneg %p56
        %p770 = scmp.lt.s32.totalorder %s38, 1
        %s771 = scalar_select %p770, %s38, 1
        %s772 = smul.addr %s771, 4
        %s773 = scalar_lea.vmem %s1, %s772
        %p774 = pneg %p85
        %p775 = pneg %p82
        %p776 = scmp.lt.s32.totalorder %s38, 1
        %s777 = scalar_select %p776, %s38, 1
        %s778 = smul.addr %s777, 8
        %s779 = scalar_lea.vmem %s2, %s778
        %p780 = pneg %p111
        %p781 = pneg %p108
        %p782 = scmp.lt.s32.totalorder %s38, 1
        %s783 = scalar_select %p782, %s38, 1
        %s784 = smul.addr %s783, 2
        %s785 = smul.addr %s784, 8
        %s786 = scalar_lea.vmem %s3, %s785
        %p787 = pneg %p137
        %p788 = pneg %p134
        %p789 = pneg %p158
        %p790 = pneg %p155
        %p791 = pneg %p179
        %p792 = pneg %p176
        %p793 = pneg %p200
        %p794 = pneg %p197
        %p795 = pneg %p221
        %p796 = pneg %p218
        %p797 = pneg %p242
        %p798 = pneg %p239
        %p799 = pneg %p263
        %p800 = pneg %p260
        %p801 = pneg %p284
        %p802 = pneg %p281
        %p803 = pneg %p305
        %p804 = pneg %p302
        %p805 = pneg %p326
        %p806 = pneg %p323
        %p807 = pneg %p347
        %p808 = pneg %p344
        %p809 = pneg %p368
        %p810 = pneg %p365
        %p811 = pneg %p389
        %p812 = pneg %p386
        %p813 = pneg %p410
        %p814 = pneg %p407
        %p815 = pneg %p431
        %p816 = pneg %p428
        %p817 = pneg %p452
        %p818 = pneg %p449
        %p819 = pneg %p473
        %p820 = pneg %p470
        %p821 = pneg %p494
        %p822 = pneg %p491
        %p823 = pneg %p515
        %p824 = pneg %p512
        %p825 = pneg %p536
        %p826 = pneg %p533
        %p827 = pneg %p557
        %p828 = pneg %p554
        %p829 = pneg %p578
        %p830 = pneg %p575
        %p831 = pneg %p604
        %p832 = pneg %p601
        %p833 = scmp.lt.s32.totalorder %s38, 1
        %s834 = scalar_select %p833, %s38, 1
        %s835 = smul.addr %s834, 2
        %s836 = smul.addr %s835, 8
        %s837 = scalar_lea.vmem %s25, %s836
        %p838 = scmp.lt.s32.totalorder %s38, 1
        %s839 = scalar_select %p838, %s38, 1
        %s840 = smul.addr %s839, 8
        %s841 = scalar_lea.vmem %s0, %s840
        %p842 = scmp.lt.s32.totalorder %s38, 1
        %s843 = scalar_select %p842, %s38, 1
        %s844 = smul.addr %s843, 4
        %s845 = scalar_lea.vmem %s1, %s844
        %p846 = scmp.lt.s32.totalorder %s38, 1
        %s847 = scalar_select %p846, %s38, 1
        %s848 = smul.addr %s847, 8
        %s849 = scalar_lea.vmem %s2, %s848
        %p850 = scmp.lt.s32.totalorder %s38, 1
        %s851 = scalar_select %p850, %s38, 1
        %s852 = smul.addr %s851, 2
        %s853 = smul.addr %s852, 8
        %s854 = scalar_lea.vmem %s3, %s853
        %p855 = scmp.lt.s32.totalorder %s38, 1
        %s856 = scalar_select %p855, %s38, 1
        %s857 = smul.addr %s856, 2
        %s858 = smul.addr %s857, 8
        %s859 = scalar_lea.vmem %s25, %s858
        %v861 = vld [vmem:[%s841] sm:$0xff]
        %v862 = vpack.c.bf16 %v861, %v861
        %v863 = vld [vmem:[%s4] sm:$0xf]
        %v864 = vld [vmem:[%s4 + $0x4] sm:$0xf]
        %v865 = vld [vmem:[%s4 + $0x8] sm:$0xf]
        %v866 = vld [vmem:[%s4 + $0xc] sm:$0xf]
        %v867 = vld [vmem:[%s4 + $0x10] sm:$0xf]
        %v868 = vld [vmem:[%s4 + $0x14] sm:$0xf]
        %v869 = vld [vmem:[%s4 + $0x18] sm:$0xf]
        %v870 = vld [vmem:[%s4 + $0x1c] sm:$0xf]
        %v871 = vld [vmem:[%s4 + $0x20] sm:$0xf]
        %v872 = vld [vmem:[%s4 + $0x24] sm:$0xf]
        %v873 = vld [vmem:[%s4 + $0x28] sm:$0xf]
        %v874 = vld [vmem:[%s4 + $0x2c] sm:$0xf]
        %v875 = vld [vmem:[%s4 + $0x30] sm:$0xf]
        %v876 = vld [vmem:[%s4 + $0x34] sm:$0xf]
        %v877 = vld [vmem:[%s4 + $0x38] sm:$0xf]
        %v878 = vld [vmem:[%s4 + $0x3c] sm:$0xf]
        %v879 = vld [vmem:[%s4 + $0x40] sm:$0xf]
        %v880 = vld [vmem:[%s4 + $0x44] sm:$0xf]
        %v899 = vunpack.c.l.b16 %v863
        %v900 = vunpack.c.l.b16 %v864
        %v901 = vunpack.c.l.b16 %v865
        %v902 = vunpack.c.l.b16 %v866
        %v903 = vunpack.c.l.b16 %v867
        %v904 = vunpack.c.l.b16 %v868
        %v905 = vunpack.c.l.b16 %v869
        %v906 = vunpack.c.l.b16 %v870
        %v907 = vunpack.c.l.b16 %v871
        %v908 = vunpack.c.l.b16 %v872
        %v909 = vunpack.c.l.b16 %v873
        %v910 = vunpack.c.l.b16 %v874
        %v911 = vunpack.c.l.b16 %v875
        %v912 = vunpack.c.l.b16 %v876
        %v913 = vunpack.c.l.b16 %v877
        %v914 = vunpack.c.l.b16 %v878
        %v915 = vunpack.c.l.b16 %v879
        %v916 = vunpack.c.l.b16 %v880
        %v917 = vpack.c.b16 %v900, %v899
        %v918 = vpack.c.b16 %v902, %v901
        %v919 = vpack.c.b16 %v904, %v903
        %v920 = vpack.c.b16 %v906, %v905
        %v921 = vpack.c.b16 %v908, %v907
        %v922 = vpack.c.b16 %v910, %v909
        %v923 = vpack.c.b16 %v912, %v911
        %v924 = vpack.c.b16 %v914, %v913
        %v925 = vpack.c.b16 %v916, %v915
        %vm926 = vcmask 64512
        %v928 = vsel %vm926, %v917, 0
        %v931 = vsel %vm926, %v918, 0
        %v934 = vsel %vm926, %v919, 0
        %v937 = vsel %vm926, %v920, 0
        %v940 = vsel %vm926, %v921, 0
        %v943 = vsel %vm926, %v922, 0
        %v946 = vsel %vm926, %v923, 0
        %v949 = vsel %vm926, %v924, 0
        %v952 = vsel %vm926, %v925, 0
        %vm954 = vcmask 1043456
        %v956 = vsel %vm954, %v862, 0
        %958 = vmatprep.subr.bf16.mxu0 0
        %959 = vmatpush1.bf16.msra.mxu0 0
        %960 = vmatprep.subr.bf16.mxu0 0
        %961 = vmatpush1.bf16.msra.mxu0 0
        %962 = vmatprep.subr.bf16.mxu0 0
        %963 = vmatpush1.bf16.msra.mxu0 0
        %964 = vmatprep.subr.bf16.mxu0 0
        %965 = vmatpush1.bf16.msra.mxu0 0
        %966 = vmatprep.subr.bf16.mxu0 0
        %967 = vmatpush1.bf16.msra.mxu0 0
        %968 = vmatprep.subr.bf16.mxu0 0
        %969 = vmatpush1.bf16.msra.mxu0 0
        %970 = vmatprep.subr.bf16.mxu0 0
        %971 = vmatpush1.bf16.msra.mxu0 0
        %972 = vmatprep.subr.bf16.mxu0 0
        %973 = vmatpush1.bf16.msra.mxu0 %v956
        %974 = vmatprep.subr.bf16.mxu0 0
        %975 = vmatpush2.bf16.msra.mxu0 0
        %976 = vmatprep.subr.bf16.mxu0 0
        %977 = vmatpush2.bf16.msra.mxu0 0
        %978 = vmatprep.subr.bf16.mxu0 0
        %979 = vmatpush2.bf16.msra.mxu0 0
        %980 = vmatprep.subr.bf16.mxu0 0
        %981 = vmatpush2.bf16.msra.mxu0 0
        %982 = vmatprep.subr.bf16.mxu0 0
        %983 = vmatpush2.bf16.msra.mxu0 0
        %984 = vmatprep.subr.bf16.mxu0 0
        %985 = vmatpush2.bf16.msra.mxu0 0
        %986 = vmatprep.subr.bf16.mxu0 0
        %987 = vmatpush2.bf16.msra.mxu0 0
        %988 = vmatprep.subr.bf16.mxu0 0
        %989 = vmatpush2.bf16.msra.mxu0 0
        %990 = vmatprep.mubr.bf16.mxu0 0
        %991 = vmatmul.mubr.bf16.gmra.mxu0 %v928
        %v992 = vpop.f32.mrf.mxu0
        %v993 = vadd.f32 0.0, %v992
        %v994 = vpop.f32.mrf.mxu0
        %v995 = vpop.f32.mrf.mxu0
        %v996 = vadd.f32 0.0, %v995
        %v997 = vpop.f32.mrf.mxu0
        %998 = vmatprep.mubr.bf16.mxu0 0
        %999 = vmatmul.mubr.bf16.gmra.mxu0 %v931
        %v1000 = vpop.f32.mrf.mxu0
        %v1001 = vadd.f32 0.0, %v1000
        %v1002 = vpop.f32.mrf.mxu0
        %v1003 = vpop.f32.mrf.mxu0
        %v1004 = vadd.f32 0.0, %v1003
        %v1005 = vpop.f32.mrf.mxu0
        %1006 = vmatprep.mubr.bf16.mxu0 0
        %1007 = vmatmul.mubr.bf16.gmra.mxu0 %v934
        %v1008 = vpop.f32.mrf.mxu0
        %v1009 = vadd.f32 0.0, %v1008
        %v1010 = vpop.f32.mrf.mxu0
        %v1011 = vpop.f32.mrf.mxu0
        %v1012 = vadd.f32 0.0, %v1011
        %v1013 = vpop.f32.mrf.mxu0
        %1014 = vmatprep.mubr.bf16.mxu0 0
        %1015 = vmatmul.mubr.bf16.gmra.mxu0 %v937
        %v1016 = vpop.f32.mrf.mxu0
        %v1017 = vadd.f32 0.0, %v1016
        %v1018 = vpop.f32.mrf.mxu0
        %v1019 = vpop.f32.mrf.mxu0
        %v1020 = vadd.f32 0.0, %v1019
        %v1021 = vpop.f32.mrf.mxu0
        %1022 = vmatprep.mubr.bf16.mxu0 0
        %1023 = vmatmul.mubr.bf16.gmra.mxu0 %v940
        %v1024 = vpop.f32.mrf.mxu0
        %v1025 = vadd.f32 0.0, %v1024
        %v1026 = vpop.f32.mrf.mxu0
        %v1027 = vpop.f32.mrf.mxu0
        %v1028 = vadd.f32 0.0, %v1027
        %v1029 = vpop.f32.mrf.mxu0
        %1030 = vmatprep.mubr.bf16.mxu0 0
        %1031 = vmatmul.mubr.bf16.gmra.mxu0 %v943
        %v1032 = vpop.f32.mrf.mxu0
        %v1033 = vadd.f32 0.0, %v1032
        %v1034 = vpop.f32.mrf.mxu0
        %v1035 = vpop.f32.mrf.mxu0
        %v1036 = vadd.f32 0.0, %v1035
        %v1037 = vpop.f32.mrf.mxu0
        %1038 = vmatprep.mubr.bf16.mxu0 0
        %1039 = vmatmul.mubr.bf16.gmra.mxu0 %v946
        %v1040 = vpop.f32.mrf.mxu0
        %v1041 = vadd.f32 0.0, %v1040
        %v1042 = vpop.f32.mrf.mxu0
        %v1043 = vpop.f32.mrf.mxu0
        %v1044 = vadd.f32 0.0, %v1043
        %v1045 = vpop.f32.mrf.mxu0
        %1046 = vmatprep.mubr.bf16.mxu0 0
        %1047 = vmatmul.mubr.bf16.gmra.mxu0 %v949
        %v1048 = vpop.f32.mrf.mxu0
        %v1049 = vadd.f32 0.0, %v1048
        %v1050 = vpop.f32.mrf.mxu0
        %v1051 = vpop.f32.mrf.mxu0
        %v1052 = vadd.f32 0.0, %v1051
        %v1053 = vpop.f32.mrf.mxu0
        %1054 = vmatprep.mubr.bf16.mxu0 0
        %1055 = vmatmul.mubr.bf16.gmra.mxu0 %v952
        %v1056 = vpop.f32.mrf.mxu0
        %v1057 = vadd.f32 0.0, %v1056
        %v1058 = vpop.f32.mrf.mxu0
        %v1059 = vpop.f32.mrf.mxu0
        %v1060 = vadd.f32 0.0, %v1059
        %v1061 = vpop.f32.mrf.mxu0
        %1062 = vdwg.mxu0
        %v1063 = vpack.c.bf16 %v996, %v993
        %v1064 = vpack.c.bf16 %v1004, %v1001
        %v1065 = vpack.c.bf16 %v1012, %v1009
        %v1066 = vpack.c.bf16 %v1020, %v1017
        %v1067 = vpack.c.bf16 %v1028, %v1025
        %v1068 = vpack.c.bf16 %v1036, %v1033
        %v1069 = vpack.c.bf16 %v1044, %v1041
        %v1070 = vpack.c.bf16 %v1052, %v1049
        %v1071 = vpack.c.bf16 %v1060, %v1057
        %v1072 = vld [vmem:[#allocation2] sm:$0xf]
        %v1073 = vld [vmem:[#allocation2 + $0x4] sm:$0xf]
        %s1074 = scalar_lea.vmem [#allocation2], 8
        %v1075 = vld [vmem:[%s1074] sm:$0xf]
        %v1076 = vld [vmem:[%s1074 + $0x4] sm:$0xf]
        %v1079 = vunpack.c.l.b16 %v1075
        %v1080 = vunpack.c.l.b16 %v1076
        %v1081 = vpack.c.b16 %v1080, %v1079
        %vm1083 = vcmask 130048
        %v1085 = vsel %vm1083, %v1064, 0
        %1087 = vmatprep.subr.bf16.mxu0 0
        %1088 = vmatpush1.bf16.msra.mxu0 0
        %1089 = vmatprep.subr.bf16.mxu0 0
        %1090 = vmatpush1.bf16.msra.mxu0 0
        %1091 = vmatprep.subr.bf16.mxu0 0
        %1092 = vmatpush1.bf16.msra.mxu0 0
        %1093 = vmatprep.subr.bf16.mxu0 0
        %1094 = vmatpush1.bf16.msra.mxu0 0
        %1095 = vmatprep.subr.bf16.mxu0 0
        %1096 = vmatpush1.bf16.msra.mxu0 0
        %1097 = vmatprep.subr.bf16.mxu0 0
        %1098 = vmatpush1.bf16.msra.mxu0 0
        %1099 = vmatprep.subr.bf16.mxu0 0
        %1100 = vmatpush1.bf16.msra.mxu0 0
        %1101 = vmatprep.subr.bf16.mxu0 0
        %1102 = vmatpush1.bf16.msra.mxu0 %v1081
        %1103 = vmatprep.subr.bf16.mxu0 0
        %1104 = vmatpush2.bf16.msra.mxu0 0
        %1105 = vmatprep.subr.bf16.mxu0 0
        %1106 = vmatpush2.bf16.msra.mxu0 0
        %1107 = vmatprep.subr.bf16.mxu0 0
        %1108 = vmatpush2.bf16.msra.mxu0 0
        %1109 = vmatprep.subr.bf16.mxu0 0
        %1110 = vmatpush2.bf16.msra.mxu0 0
        %1111 = vmatprep.subr.bf16.mxu0 0
        %1112 = vmatpush2.bf16.msra.mxu0 0
        %1113 = vmatprep.subr.bf16.mxu0 0
        %1114 = vmatpush2.bf16.msra.mxu0 0
        %1115 = vmatprep.subr.bf16.mxu0 0
        %1116 = vmatpush2.bf16.msra.mxu0 0
        %1117 = vmatprep.subr.bf16.mxu0 0
        %1118 = vmatpush2.bf16.msra.mxu0 0
        %1119 = vmatprep.mubr.bf16.mxu0 0
        %1120 = vmatmul.mubr.bf16.gmra.mxu0 %v1085
        %v1121 = vpop.f32.mrf.mxu0
        %v1122 = vadd.f32 0.0, %v1121
        %v1123 = vpop.f32.mrf.mxu0
        %v1124 = vpop.f32.mrf.mxu0
        %v1125 = vadd.f32 0.0, %v1124
        %v1126 = vpop.f32.mrf.mxu0
        %1127 = vdwg.mxu0
        %v1130 = vunpack.c.l.b16 %v1072
        %v1131 = vunpack.c.l.b16 %v1073
        %v1132 = vpack.c.b16 %v1131, %v1130
        %v1135 = vsel %vm1083, %v1063, 0
        %1137 = vmatprep.subr.bf16.mxu0 0
        %1138 = vmatpush1.bf16.msra.mxu0 0
        %1139 = vmatprep.subr.bf16.mxu0 0
        %1140 = vmatpush1.bf16.msra.mxu0 0
        %1141 = vmatprep.subr.bf16.mxu0 0
        %1142 = vmatpush1.bf16.msra.mxu0 0
        %1143 = vmatprep.subr.bf16.mxu0 0
        %1144 = vmatpush1.bf16.msra.mxu0 0
        %1145 = vmatprep.subr.bf16.mxu0 0
        %1146 = vmatpush1.bf16.msra.mxu0 0
        %1147 = vmatprep.subr.bf16.mxu0 0
        %1148 = vmatpush1.bf16.msra.mxu0 0
        %1149 = vmatprep.subr.bf16.mxu0 0
        %1150 = vmatpush1.bf16.msra.mxu0 0
        %1151 = vmatprep.subr.bf16.mxu0 0
        %1152 = vmatpush1.bf16.msra.mxu0 %v1132
        %1153 = vmatprep.subr.bf16.mxu0 0
        %1154 = vmatpush2.bf16.msra.mxu0 0
        %1155 = vmatprep.subr.bf16.mxu0 0
        %1156 = vmatpush2.bf16.msra.mxu0 0
        %1157 = vmatprep.subr.bf16.mxu0 0
        %1158 = vmatpush2.bf16.msra.mxu0 0
        %1159 = vmatprep.subr.bf16.mxu0 0
        %1160 = vmatpush2.bf16.msra.mxu0 0
        %1161 = vmatprep.subr.bf16.mxu0 0
        %1162 = vmatpush2.bf16.msra.mxu0 0
        %1163 = vmatprep.subr.bf16.mxu0 0
        %1164 = vmatpush2.bf16.msra.mxu0 0
        %1165 = vmatprep.subr.bf16.mxu0 0
        %1166 = vmatpush2.bf16.msra.mxu0 0
        %1167 = vmatprep.subr.bf16.mxu0 0
        %1168 = vmatpush2.bf16.msra.mxu0 0
        %1169 = vmatprep.mubr.bf16.mxu0 0
        %1170 = vmatmul.mubr.bf16.gmra.mxu0 %v1135
        %v1171 = vpop.f32.mrf.mxu0
        %v1172 = vadd.f32 %v1122, %v1171
        %v1173 = vpop.f32.mrf.mxu0
        %v1174 = vpop.f32.mrf.mxu0
        %v1175 = vadd.f32 %v1125, %v1174
        %v1176 = vpop.f32.mrf.mxu0
        %1177 = vdwg.mxu0
        %s1178 = scalar_lea.vmem [#allocation2], 16
        %v1179 = vld [vmem:[%s1178] sm:$0xf]
        %v1180 = vld [vmem:[%s1178 + $0x4] sm:$0xf]
        %v1183 = vunpack.c.l.b16 %v1179
        %v1184 = vunpack.c.l.b16 %v1180
        %v1185 = vpack.c.b16 %v1184, %v1183
        %v1188 = vsel %vm1083, %v1065, 0
        %1190 = vmatprep.subr.bf16.mxu0 0
        %1191 = vmatpush1.bf16.msra.mxu0 0
        %1192 = vmatprep.subr.bf16.mxu0 0
        %1193 = vmatpush1.bf16.msra.mxu0 0
        %1194 = vmatprep.subr.bf16.mxu0 0
        %1195 = vmatpush1.bf16.msra.mxu0 0
        %1196 = vmatprep.subr.bf16.mxu0 0
        %1197 = vmatpush1.bf16.msra.mxu0 0
        %1198 = vmatprep.subr.bf16.mxu0 0
        %1199 = vmatpush1.bf16.msra.mxu0 0
        %1200 = vmatprep.subr.bf16.mxu0 0
        %1201 = vmatpush1.bf16.msra.mxu0 0
        %1202 = vmatprep.subr.bf16.mxu0 0
        %1203 = vmatpush1.bf16.msra.mxu0 0
        %1204 = vmatprep.subr.bf16.mxu0 0
        %1205 = vmatpush1.bf16.msra.mxu0 %v1185
        %1206 = vmatprep.subr.bf16.mxu0 0
        %1207 = vmatpush2.bf16.msra.mxu0 0
        %1208 = vmatprep.subr.bf16.mxu0 0
        %1209 = vmatpush2.bf16.msra.mxu0 0
        %1210 = vmatprep.subr.bf16.mxu0 0
        %1211 = vmatpush2.bf16.msra.mxu0 0
        %1212 = vmatprep.subr.bf16.mxu0 0
        %1213 = vmatpush2.bf16.msra.mxu0 0
        %1214 = vmatprep.subr.bf16.mxu0 0
        %1215 = vmatpush2.bf16.msra.mxu0 0
        %1216 = vmatprep.subr.bf16.mxu0 0
        %1217 = vmatpush2.bf16.msra.mxu0 0
        %1218 = vmatprep.subr.bf16.mxu0 0
        %1219 = vmatpush2.bf16.msra.mxu0 0
        %1220 = vmatprep.subr.bf16.mxu0 0
        %1221 = vmatpush2.bf16.msra.mxu0 0
        %1222 = vmatprep.mubr.bf16.mxu0 0
        %1223 = vmatmul.mubr.bf16.gmra.mxu0 %v1188
        %v1224 = vpop.f32.mrf.mxu0
        %v1225 = vadd.f32 0.0, %v1224
        %v1226 = vpop.f32.mrf.mxu0
        %v1227 = vpop.f32.mrf.mxu0
        %v1228 = vadd.f32 0.0, %v1227
        %v1229 = vpop.f32.mrf.mxu0
        %1230 = vdwg.mxu0
        %v1231 = vadd.f32 %v1172, %v1225
        %v1232 = vadd.f32 %v1175, %v1228
        %s1233 = scalar_lea.vmem [#allocation2], 24
        %v1234 = vld [vmem:[%s1233] sm:$0xf]
        %v1235 = vld [vmem:[%s1233 + $0x4] sm:$0xf]
        %v1238 = vunpack.c.l.b16 %v1234
        %v1239 = vunpack.c.l.b16 %v1235
        %v1240 = vpack.c.b16 %v1239, %v1238
        %v1243 = vsel %vm1083, %v1066, 0
        %1245 = vmatprep.subr.bf16.mxu0 0
        %1246 = vmatpush1.bf16.msra.mxu0 0
        %1247 = vmatprep.subr.bf16.mxu0 0
        %1248 = vmatpush1.bf16.msra.mxu0 0
        %1249 = vmatprep.subr.bf16.mxu0 0
        %1250 = vmatpush1.bf16.msra.mxu0 0
        %1251 = vmatprep.subr.bf16.mxu0 0
        %1252 = vmatpush1.bf16.msra.mxu0 0
        %1253 = vmatprep.subr.bf16.mxu0 0
        %1254 = vmatpush1.bf16.msra.mxu0 0
        %1255 = vmatprep.subr.bf16.mxu0 0
        %1256 = vmatpush1.bf16.msra.mxu0 0
        %1257 = vmatprep.subr.bf16.mxu0 0
        %1258 = vmatpush1.bf16.msra.mxu0 0
        %1259 = vmatprep.subr.bf16.mxu0 0
        %1260 = vmatpush1.bf16.msra.mxu0 %v1240
        %1261 = vmatprep.subr.bf16.mxu0 0
        %1262 = vmatpush2.bf16.msra.mxu0 0
        %1263 = vmatprep.subr.bf16.mxu0 0
        %1264 = vmatpush2.bf16.msra.mxu0 0
        %1265 = vmatprep.subr.bf16.mxu0 0
        %1266 = vmatpush2.bf16.msra.mxu0 0
        %1267 = vmatprep.subr.bf16.mxu0 0
        %1268 = vmatpush2.bf16.msra.mxu0 0
        %1269 = vmatprep.subr.bf16.mxu0 0
        %1270 = vmatpush2.bf16.msra.mxu0 0
        %1271 = vmatprep.subr.bf16.mxu0 0
        %1272 = vmatpush2.bf16.msra.mxu0 0
        %1273 = vmatprep.subr.bf16.mxu0 0
        %1274 = vmatpush2.bf16.msra.mxu0 0
        %1275 = vmatprep.subr.bf16.mxu0 0
        %1276 = vmatpush2.bf16.msra.mxu0 0
        %1277 = vmatprep.mubr.bf16.mxu0 0
        %1278 = vmatmul.mubr.bf16.gmra.mxu0 %v1243
        %v1279 = vpop.f32.mrf.mxu0
        %v1280 = vadd.f32 0.0, %v1279
        %v1281 = vpop.f32.mrf.mxu0
        %v1282 = vpop.f32.mrf.mxu0
        %v1283 = vadd.f32 0.0, %v1282
        %v1284 = vpop.f32.mrf.mxu0
        %1285 = vdwg.mxu0
        %v1286 = vadd.f32 %v1231, %v1280
        %v1287 = vadd.f32 %v1232, %v1283
        %s1288 = scalar_lea.vmem [#allocation2], 32
        %v1289 = vld [vmem:[%s1288] sm:$0xf]
        %v1290 = vld [vmem:[%s1288 + $0x4] sm:$0xf]
        %v1293 = vunpack.c.l.b16 %v1289
        %v1294 = vunpack.c.l.b16 %v1290
        %v1295 = vpack.c.b16 %v1294, %v1293
        %v1298 = vsel %vm1083, %v1067, 0
        %1300 = vmatprep.subr.bf16.mxu0 0
        %1301 = vmatpush1.bf16.msra.mxu0 0
        %1302 = vmatprep.subr.bf16.mxu0 0
        %1303 = vmatpush1.bf16.msra.mxu0 0
        %1304 = vmatprep.subr.bf16.mxu0 0
        %1305 = vmatpush1.bf16.msra.mxu0 0
        %1306 = vmatprep.subr.bf16.mxu0 0
        %1307 = vmatpush1.bf16.msra.mxu0 0
        %1308 = vmatprep.subr.bf16.mxu0 0
        %1309 = vmatpush1.bf16.msra.mxu0 0
        %1310 = vmatprep.subr.bf16.mxu0 0
        %1311 = vmatpush1.bf16.msra.mxu0 0
        %1312 = vmatprep.subr.bf16.mxu0 0
        %1313 = vmatpush1.bf16.msra.mxu0 0
        %1314 = vmatprep.subr.bf16.mxu0 0
        %1315 = vmatpush1.bf16.msra.mxu0 %v1295
        %1316 = vmatprep.subr.bf16.mxu0 0
        %1317 = vmatpush2.bf16.msra.mxu0 0
        %1318 = vmatprep.subr.bf16.mxu0 0
        %1319 = vmatpush2.bf16.msra.mxu0 0
        %1320 = vmatprep.subr.bf16.mxu0 0
        %1321 = vmatpush2.bf16.msra.mxu0 0
        %1322 = vmatprep.subr.bf16.mxu0 0
        %1323 = vmatpush2.bf16.msra.mxu0 0
        %1324 = vmatprep.subr.bf16.mxu0 0
        %1325 = vmatpush2.bf16.msra.mxu0 0
        %1326 = vmatprep.subr.bf16.mxu0 0
        %1327 = vmatpush2.bf16.msra.mxu0 0
        %1328 = vmatprep.subr.bf16.mxu0 0
        %1329 = vmatpush2.bf16.msra.mxu0 0
        %1330 = vmatprep.subr.bf16.mxu0 0
        %1331 = vmatpush2.bf16.msra.mxu0 0
        %1332 = vmatprep.mubr.bf16.mxu0 0
        %1333 = vmatmul.mubr.bf16.gmra.mxu0 %v1298
        %v1334 = vpop.f32.mrf.mxu0
        %v1335 = vadd.f32 0.0, %v1334
        %v1336 = vpop.f32.mrf.mxu0
        %v1337 = vpop.f32.mrf.mxu0
        %v1338 = vadd.f32 0.0, %v1337
        %v1339 = vpop.f32.mrf.mxu0
        %1340 = vdwg.mxu0
        %v1341 = vadd.f32 %v1286, %v1335
        %v1342 = vadd.f32 %v1287, %v1338
        %s1343 = scalar_lea.vmem [#allocation2], 40
        %v1344 = vld [vmem:[%s1343] sm:$0xf]
        %v1345 = vld [vmem:[%s1343 + $0x4] sm:$0xf]
        %v1348 = vunpack.c.l.b16 %v1344
        %v1349 = vunpack.c.l.b16 %v1345
        %v1350 = vpack.c.b16 %v1349, %v1348
        %v1353 = vsel %vm1083, %v1068, 0
        %1355 = vmatprep.subr.bf16.mxu0 0
        %1356 = vmatpush1.bf16.msra.mxu0 0
        %1357 = vmatprep.subr.bf16.mxu0 0
        %1358 = vmatpush1.bf16.msra.mxu0 0
        %1359 = vmatprep.subr.bf16.mxu0 0
        %1360 = vmatpush1.bf16.msra.mxu0 0
        %1361 = vmatprep.subr.bf16.mxu0 0
        %1362 = vmatpush1.bf16.msra.mxu0 0
        %1363 = vmatprep.subr.bf16.mxu0 0
        %1364 = vmatpush1.bf16.msra.mxu0 0
        %1365 = vmatprep.subr.bf16.mxu0 0
        %1366 = vmatpush1.bf16.msra.mxu0 0
        %1367 = vmatprep.subr.bf16.mxu0 0
        %1368 = vmatpush1.bf16.msra.mxu0 0
        %1369 = vmatprep.subr.bf16.mxu0 0
        %1370 = vmatpush1.bf16.msra.mxu0 %v1350
        %1371 = vmatprep.subr.bf16.mxu0 0
        %1372 = vmatpush2.bf16.msra.mxu0 0
        %1373 = vmatprep.subr.bf16.mxu0 0
        %1374 = vmatpush2.bf16.msra.mxu0 0
        %1375 = vmatprep.subr.bf16.mxu0 0
        %1376 = vmatpush2.bf16.msra.mxu0 0
        %1377 = vmatprep.subr.bf16.mxu0 0
        %1378 = vmatpush2.bf16.msra.mxu0 0
        %1379 = vmatprep.subr.bf16.mxu0 0
        %1380 = vmatpush2.bf16.msra.mxu0 0
        %1381 = vmatprep.subr.bf16.mxu0 0
        %1382 = vmatpush2.bf16.msra.mxu0 0
        %1383 = vmatprep.subr.bf16.mxu0 0
        %1384 = vmatpush2.bf16.msra.mxu0 0
        %1385 = vmatprep.subr.bf16.mxu0 0
        %1386 = vmatpush2.bf16.msra.mxu0 0
        %1387 = vmatprep.mubr.bf16.mxu0 0
        %1388 = vmatmul.mubr.bf16.gmra.mxu0 %v1353
        %v1389 = vpop.f32.mrf.mxu0
        %v1390 = vadd.f32 0.0, %v1389
        %v1391 = vpop.f32.mrf.mxu0
        %v1392 = vpop.f32.mrf.mxu0
        %v1393 = vadd.f32 0.0, %v1392
        %v1394 = vpop.f32.mrf.mxu0
        %1395 = vdwg.mxu0
        %v1396 = vadd.f32 %v1341, %v1390
        %v1397 = vadd.f32 %v1342, %v1393
        %s1398 = scalar_lea.vmem [#allocation2], 48
        %v1399 = vld [vmem:[%s1398] sm:$0xf]
        %v1400 = vld [vmem:[%s1398 + $0x4] sm:$0xf]
        %v1403 = vunpack.c.l.b16 %v1399
        %v1404 = vunpack.c.l.b16 %v1400
        %v1405 = vpack.c.b16 %v1404, %v1403
        %v1408 = vsel %vm1083, %v1069, 0
        %1410 = vmatprep.subr.bf16.mxu0 0
        %1411 = vmatpush1.bf16.msra.mxu0 0
        %1412 = vmatprep.subr.bf16.mxu0 0
        %1413 = vmatpush1.bf16.msra.mxu0 0
        %1414 = vmatprep.subr.bf16.mxu0 0
        %1415 = vmatpush1.bf16.msra.mxu0 0
        %1416 = vmatprep.subr.bf16.mxu0 0
        %1417 = vmatpush1.bf16.msra.mxu0 0
        %1418 = vmatprep.subr.bf16.mxu0 0
        %1419 = vmatpush1.bf16.msra.mxu0 0
        %1420 = vmatprep.subr.bf16.mxu0 0
        %1421 = vmatpush1.bf16.msra.mxu0 0
        %1422 = vmatprep.subr.bf16.mxu0 0
        %1423 = vmatpush1.bf16.msra.mxu0 0
        %1424 = vmatprep.subr.bf16.mxu0 0
        %1425 = vmatpush1.bf16.msra.mxu0 %v1405
        %1426 = vmatprep.subr.bf16.mxu0 0
        %1427 = vmatpush2.bf16.msra.mxu0 0
        %1428 = vmatprep.subr.bf16.mxu0 0
        %1429 = vmatpush2.bf16.msra.mxu0 0
        %1430 = vmatprep.subr.bf16.mxu0 0
        %1431 = vmatpush2.bf16.msra.mxu0 0
        %1432 = vmatprep.subr.bf16.mxu0 0
        %1433 = vmatpush2.bf16.msra.mxu0 0
        %1434 = vmatprep.subr.bf16.mxu0 0
        %1435 = vmatpush2.bf16.msra.mxu0 0
        %1436 = vmatprep.subr.bf16.mxu0 0
        %1437 = vmatpush2.bf16.msra.mxu0 0
        %1438 = vmatprep.subr.bf16.mxu0 0
        %1439 = vmatpush2.bf16.msra.mxu0 0
        %1440 = vmatprep.subr.bf16.mxu0 0
        %1441 = vmatpush2.bf16.msra.mxu0 0
        %1442 = vmatprep.mubr.bf16.mxu0 0
        %1443 = vmatmul.mubr.bf16.gmra.mxu0 %v1408
        %v1444 = vpop.f32.mrf.mxu0
        %v1445 = vadd.f32 0.0, %v1444
        %v1446 = vpop.f32.mrf.mxu0
        %v1447 = vpop.f32.mrf.mxu0
        %v1448 = vadd.f32 0.0, %v1447
        %v1449 = vpop.f32.mrf.mxu0
        %1450 = vdwg.mxu0
        %v1451 = vadd.f32 %v1396, %v1445
        %v1452 = vadd.f32 %v1397, %v1448
        %s1453 = scalar_lea.vmem [#allocation2], 56
        %v1454 = vld [vmem:[%s1453] sm:$0xf]
        %v1455 = vld [vmem:[%s1453 + $0x4] sm:$0xf]
        %v1458 = vunpack.c.l.b16 %v1454
        %v1459 = vunpack.c.l.b16 %v1455
        %v1460 = vpack.c.b16 %v1459, %v1458
        %v1463 = vsel %vm1083, %v1070, 0
        %1465 = vmatprep.subr.bf16.mxu0 0
        %1466 = vmatpush1.bf16.msra.mxu0 0
        %1467 = vmatprep.subr.bf16.mxu0 0
        %1468 = vmatpush1.bf16.msra.mxu0 0
        %1469 = vmatprep.subr.bf16.mxu0 0
        %1470 = vmatpush1.bf16.msra.mxu0 0
        %1471 = vmatprep.subr.bf16.mxu0 0
        %1472 = vmatpush1.bf16.msra.mxu0 0
        %1473 = vmatprep.subr.bf16.mxu0 0
        %1474 = vmatpush1.bf16.msra.mxu0 0
        %1475 = vmatprep.subr.bf16.mxu0 0
        %1476 = vmatpush1.bf16.msra.mxu0 0
        %1477 = vmatprep.subr.bf16.mxu0 0
        %1478 = vmatpush1.bf16.msra.mxu0 0
        %1479 = vmatprep.subr.bf16.mxu0 0
        %1480 = vmatpush1.bf16.msra.mxu0 %v1460
        %1481 = vmatprep.subr.bf16.mxu0 0
        %1482 = vmatpush2.bf16.msra.mxu0 0
        %1483 = vmatprep.subr.bf16.mxu0 0
        %1484 = vmatpush2.bf16.msra.mxu0 0
        %1485 = vmatprep.subr.bf16.mxu0 0
        %1486 = vmatpush2.bf16.msra.mxu0 0
        %1487 = vmatprep.subr.bf16.mxu0 0
        %1488 = vmatpush2.bf16.msra.mxu0 0
        %1489 = vmatprep.subr.bf16.mxu0 0
        %1490 = vmatpush2.bf16.msra.mxu0 0
        %1491 = vmatprep.subr.bf16.mxu0 0
        %1492 = vmatpush2.bf16.msra.mxu0 0
        %1493 = vmatprep.subr.bf16.mxu0 0
        %1494 = vmatpush2.bf16.msra.mxu0 0
        %1495 = vmatprep.subr.bf16.mxu0 0
        %1496 = vmatpush2.bf16.msra.mxu0 0
        %1497 = vmatprep.mubr.bf16.mxu0 0
        %1498 = vmatmul.mubr.bf16.gmra.mxu0 %v1463
        %v1499 = vpop.f32.mrf.mxu0
        %v1500 = vadd.f32 0.0, %v1499
        %v1501 = vpop.f32.mrf.mxu0
        %v1502 = vpop.f32.mrf.mxu0
        %v1503 = vadd.f32 0.0, %v1502
        %v1504 = vpop.f32.mrf.mxu0
        %1505 = vdwg.mxu0
        %v1506 = vadd.f32 %v1451, %v1500
        %v1507 = vadd.f32 %v1452, %v1503
        %s1508 = scalar_lea.vmem [#allocation2], 64
        %v1509 = vld [vmem:[%s1508] sm:$0xf]
        %v1510 = vld [vmem:[%s1508 + $0x4] sm:$0xf]
        %v1513 = vunpack.c.l.b16 %v1509
        %v1514 = vunpack.c.l.b16 %v1510
        %v1515 = vpack.c.b16 %v1514, %v1513
        %v1518 = vsel %vm1083, %v1071, 0
        %1520 = vmatprep.subr.bf16.mxu0 0
        %1521 = vmatpush1.bf16.msra.mxu0 0
        %1522 = vmatprep.subr.bf16.mxu0 0
        %1523 = vmatpush1.bf16.msra.mxu0 0
        %1524 = vmatprep.subr.bf16.mxu0 0
        %1525 = vmatpush1.bf16.msra.mxu0 0
        %1526 = vmatprep.subr.bf16.mxu0 0
        %1527 = vmatpush1.bf16.msra.mxu0 0
        %1528 = vmatprep.subr.bf16.mxu0 0
        %1529 = vmatpush1.bf16.msra.mxu0 0
        %1530 = vmatprep.subr.bf16.mxu0 0
        %1531 = vmatpush1.bf16.msra.mxu0 0
        %1532 = vmatprep.subr.bf16.mxu0 0
        %1533 = vmatpush1.bf16.msra.mxu0 0
        %1534 = vmatprep.subr.bf16.mxu0 0
        %1535 = vmatpush1.bf16.msra.mxu0 %v1515
        %1536 = vmatprep.subr.bf16.mxu0 0
        %1537 = vmatpush2.bf16.msra.mxu0 0
        %1538 = vmatprep.subr.bf16.mxu0 0
        %1539 = vmatpush2.bf16.msra.mxu0 0
        %1540 = vmatprep.subr.bf16.mxu0 0
        %1541 = vmatpush2.bf16.msra.mxu0 0
        %1542 = vmatprep.subr.bf16.mxu0 0
        %1543 = vmatpush2.bf16.msra.mxu0 0
        %1544 = vmatprep.subr.bf16.mxu0 0
        %1545 = vmatpush2.bf16.msra.mxu0 0
        %1546 = vmatprep.subr.bf16.mxu0 0
        %1547 = vmatpush2.bf16.msra.mxu0 0
        %1548 = vmatprep.subr.bf16.mxu0 0
        %1549 = vmatpush2.bf16.msra.mxu0 0
        %1550 = vmatprep.subr.bf16.mxu0 0
        %1551 = vmatpush2.bf16.msra.mxu0 0
        %1552 = vmatprep.mubr.bf16.mxu0 0
        %1553 = vmatmul.mubr.bf16.gmra.mxu0 %v1518
        %v1554 = vpop.f32.mrf.mxu0
        %v1555 = vadd.f32 0.0, %v1554
        %v1556 = vpop.f32.mrf.mxu0
        %v1557 = vpop.f32.mrf.mxu0
        %v1558 = vadd.f32 0.0, %v1557
        %v1559 = vpop.f32.mrf.mxu0
        %1560 = vdwg.mxu0
        %v1561 = vadd.f32 %v1506, %v1555
        %v1562 = vadd.f32 %v1507, %v1558
        %v1563 = vld [vmem:[%s845] sm:$0xf]
        %v1564 = vpack.c.bf16 %v1563, %v1563
        %v1565 = vld [vmem:[%s6] sm:$0xf]
        %v1566 = vld [vmem:[%s6 + $0x4] sm:$0xf]
        %v1567 = vld [vmem:[%s6 + $0x8] sm:$0xf]
        %v1568 = vld [vmem:[%s6 + $0xc] sm:$0xf]
        %v1569 = vld [vmem:[%s6 + $0x10] sm:$0xf]
        %v1570 = vld [vmem:[%s6 + $0x14] sm:$0xf]
        %v1571 = vld [vmem:[%s6 + $0x18] sm:$0xf]
        %v1572 = vld [vmem:[%s6 + $0x1c] sm:$0xf]
        %v1573 = vld [vmem:[%s6 + $0x20] sm:$0xf]
        %v1574 = vld [vmem:[%s6 + $0x24] sm:$0xf]
        %v1575 = vld [vmem:[%s6 + $0x28] sm:$0xf]
        %v1576 = vld [vmem:[%s6 + $0x2c] sm:$0xf]
        %v1577 = vld [vmem:[%s6 + $0x30] sm:$0xf]
        %v1578 = vld [vmem:[%s6 + $0x34] sm:$0xf]
        %v1579 = vld [vmem:[%s6 + $0x38] sm:$0xf]
        %v1580 = vld [vmem:[%s6 + $0x3c] sm:$0xf]
        %v1581 = vld [vmem:[%s6 + $0x40] sm:$0xf]
        %v1582 = vld [vmem:[%s6 + $0x44] sm:$0xf]
        %v1601 = vunpack.c.l.b16 %v1565
        %v1602 = vunpack.c.l.b16 %v1566
        %v1603 = vunpack.c.l.b16 %v1567
        %v1604 = vunpack.c.l.b16 %v1568
        %v1605 = vunpack.c.l.b16 %v1569
        %v1606 = vunpack.c.l.b16 %v1570
        %v1607 = vunpack.c.l.b16 %v1571
        %v1608 = vunpack.c.l.b16 %v1572
        %v1609 = vunpack.c.l.b16 %v1573
        %v1610 = vunpack.c.l.b16 %v1574
        %v1611 = vunpack.c.l.b16 %v1575
        %v1612 = vunpack.c.l.b16 %v1576
        %v1613 = vunpack.c.l.b16 %v1577
        %v1614 = vunpack.c.l.b16 %v1578
        %v1615 = vunpack.c.l.b16 %v1579
        %v1616 = vunpack.c.l.b16 %v1580
        %v1617 = vunpack.c.l.b16 %v1581
        %v1618 = vunpack.c.l.b16 %v1582
        %v1619 = vpack.c.b16 %v1602, %v1601
        %v1620 = vpack.c.b16 %v1604, %v1603
        %v1621 = vpack.c.b16 %v1606, %v1605
        %v1622 = vpack.c.b16 %v1608, %v1607
        %v1623 = vpack.c.b16 %v1610, %v1609
        %v1624 = vpack.c.b16 %v1612, %v1611
        %v1625 = vpack.c.b16 %v1614, %v1613
        %v1626 = vpack.c.b16 %v1616, %v1615
        %v1627 = vpack.c.b16 %v1618, %v1617
        %vm1628 = vcmask 31744
        %v1630 = vsel %vm1628, %v1619, 0
        %v1633 = vsel %vm1628, %v1620, 0
        %v1636 = vsel %vm1628, %v1621, 0
        %v1639 = vsel %vm1628, %v1622, 0
        %v1642 = vsel %vm1628, %v1623, 0
        %v1645 = vsel %vm1628, %v1624, 0
        %v1648 = vsel %vm1628, %v1625, 0
        %v1651 = vsel %vm1628, %v1626, 0
        %v1654 = vsel %vm1628, %v1627, 0
        %vm1656 = vcmask 1041408
        %v1658 = vsel %vm1656, %v1564, 0
        %1660 = vmatprep.subr.bf16.mxu0 0
        %1661 = vmatpush1.bf16.msra.mxu0 0
        %1662 = vmatprep.subr.bf16.mxu0 0
        %1663 = vmatpush1.bf16.msra.mxu0 0
        %1664 = vmatprep.subr.bf16.mxu0 0
        %1665 = vmatpush1.bf16.msra.mxu0 0
        %1666 = vmatprep.subr.bf16.mxu0 0
        %1667 = vmatpush1.bf16.msra.mxu0 0
        %1668 = vmatprep.subr.bf16.mxu0 0
        %1669 = vmatpush1.bf16.msra.mxu0 0
        %1670 = vmatprep.subr.bf16.mxu0 0
        %1671 = vmatpush1.bf16.msra.mxu0 0
        %1672 = vmatprep.subr.bf16.mxu0 0
        %1673 = vmatpush1.bf16.msra.mxu0 0
        %1674 = vmatprep.subr.bf16.mxu0 0
        %1675 = vmatpush1.bf16.msra.mxu0 %v1658
        %1676 = vmatprep.subr.bf16.mxu0 0
        %1677 = vmatpush2.bf16.msra.mxu0 0
        %1678 = vmatprep.subr.bf16.mxu0 0
        %1679 = vmatpush2.bf16.msra.mxu0 0
        %1680 = vmatprep.subr.bf16.mxu0 0
        %1681 = vmatpush2.bf16.msra.mxu0 0
        %1682 = vmatprep.subr.bf16.mxu0 0
        %1683 = vmatpush2.bf16.msra.mxu0 0
        %1684 = vmatprep.subr.bf16.mxu0 0
        %1685 = vmatpush2.bf16.msra.mxu0 0
        %1686 = vmatprep.subr.bf16.mxu0 0
        %1687 = vmatpush2.bf16.msra.mxu0 0
        %1688 = vmatprep.subr.bf16.mxu0 0
        %1689 = vmatpush2.bf16.msra.mxu0 0
        %1690 = vmatprep.subr.bf16.mxu0 0
        %1691 = vmatpush2.bf16.msra.mxu0 0
        %1692 = vmatprep.mubr.bf16.mxu0 0
        %1693 = vmatmul.mubr.bf16.gmra.mxu0 %v1630
        %v1694 = vpop.f32.mrf.mxu0
        %v1695 = vadd.f32 0.0, %v1694
        %v1696 = vpop.f32.mrf.mxu0
        %v1697 = vpop.f32.mrf.mxu0
        %v1698 = vadd.f32 0.0, %v1697
        %v1699 = vpop.f32.mrf.mxu0
        %1700 = vmatprep.mubr.bf16.mxu0 0
        %1701 = vmatmul.mubr.bf16.gmra.mxu0 %v1633
        %v1702 = vpop.f32.mrf.mxu0
        %v1703 = vadd.f32 0.0, %v1702
        %v1704 = vpop.f32.mrf.mxu0
        %v1705 = vpop.f32.mrf.mxu0
        %v1706 = vadd.f32 0.0, %v1705
        %v1707 = vpop.f32.mrf.mxu0
        %1708 = vmatprep.mubr.bf16.mxu0 0
        %1709 = vmatmul.mubr.bf16.gmra.mxu0 %v1636
        %v1710 = vpop.f32.mrf.mxu0
        %v1711 = vadd.f32 0.0, %v1710
        %v1712 = vpop.f32.mrf.mxu0
        %v1713 = vpop.f32.mrf.mxu0
        %v1714 = vadd.f32 0.0, %v1713
        %v1715 = vpop.f32.mrf.mxu0
        %1716 = vmatprep.mubr.bf16.mxu0 0
        %1717 = vmatmul.mubr.bf16.gmra.mxu0 %v1639
        %v1718 = vpop.f32.mrf.mxu0
        %v1719 = vadd.f32 0.0, %v1718
        %v1720 = vpop.f32.mrf.mxu0
        %v1721 = vpop.f32.mrf.mxu0
        %v1722 = vadd.f32 0.0, %v1721
        %v1723 = vpop.f32.mrf.mxu0
        %1724 = vmatprep.mubr.bf16.mxu0 0
        %1725 = vmatmul.mubr.bf16.gmra.mxu0 %v1642
        %v1726 = vpop.f32.mrf.mxu0
        %v1727 = vadd.f32 0.0, %v1726
        %v1728 = vpop.f32.mrf.mxu0
        %v1729 = vpop.f32.mrf.mxu0
        %v1730 = vadd.f32 0.0, %v1729
        %v1731 = vpop.f32.mrf.mxu0
        %1732 = vmatprep.mubr.bf16.mxu0 0
        %1733 = vmatmul.mubr.bf16.gmra.mxu0 %v1645
        %v1734 = vpop.f32.mrf.mxu0
        %v1735 = vadd.f32 0.0, %v1734
        %v1736 = vpop.f32.mrf.mxu0
        %v1737 = vpop.f32.mrf.mxu0
        %v1738 = vadd.f32 0.0, %v1737
        %v1739 = vpop.f32.mrf.mxu0
        %1740 = vmatprep.mubr.bf16.mxu0 0
        %1741 = vmatmul.mubr.bf16.gmra.mxu0 %v1648
        %v1742 = vpop.f32.mrf.mxu0
        %v1743 = vadd.f32 0.0, %v1742
        %v1744 = vpop.f32.mrf.mxu0
        %v1745 = vpop.f32.mrf.mxu0
        %v1746 = vadd.f32 0.0, %v1745
        %v1747 = vpop.f32.mrf.mxu0
        %1748 = vmatprep.mubr.bf16.mxu0 0
        %1749 = vmatmul.mubr.bf16.gmra.mxu0 %v1651
        %v1750 = vpop.f32.mrf.mxu0
        %v1751 = vadd.f32 0.0, %v1750
        %v1752 = vpop.f32.mrf.mxu0
        %v1753 = vpop.f32.mrf.mxu0
        %v1754 = vadd.f32 0.0, %v1753
        %v1755 = vpop.f32.mrf.mxu0
        %1756 = vmatprep.mubr.bf16.mxu0 0
        %1757 = vmatmul.mubr.bf16.gmra.mxu0 %v1654
        %v1758 = vpop.f32.mrf.mxu0
        %v1759 = vadd.f32 0.0, %v1758
        %v1760 = vpop.f32.mrf.mxu0
        %v1761 = vpop.f32.mrf.mxu0
        %v1762 = vadd.f32 0.0, %v1761
        %v1763 = vpop.f32.mrf.mxu0
        %1764 = vdwg.mxu0
        %v1765 = vpack.c.bf16 %v1698, %v1695
        %v1766 = vpack.c.bf16 %v1706, %v1703
        %v1767 = vpack.c.bf16 %v1714, %v1711
        %v1768 = vpack.c.bf16 %v1722, %v1719
        %v1769 = vpack.c.bf16 %v1730, %v1727
        %v1770 = vpack.c.bf16 %v1738, %v1735
        %v1771 = vpack.c.bf16 %v1746, %v1743
        %v1772 = vpack.c.bf16 %v1754, %v1751
        %v1773 = vpack.c.bf16 %v1762, %v1759
        %v1774 = vld [vmem:[#allocation4] sm:$0xf]
        %v1775 = vld [vmem:[#allocation4 + $0x4] sm:$0xf]
        %v1776 = vld [vmem:[#allocation4 + $0x8] sm:$0xf]
        %v1777 = vld [vmem:[#allocation4 + $0xc] sm:$0xf]
        %v1778 = vld [vmem:[#allocation4 + $0x10] sm:$0x3]
        %v1784 = vunpack.c.l.b16 %v1774
        %v1785 = vunpack.c.l.b16 %v1775
        %v1786 = vunpack.c.l.b16 %v1776
        %v1787 = vunpack.c.l.b16 %v1777
        %v1788 = vunpack.c.l.b16 %v1778
        %v1789 = vpack.c.b16 %v1785, %v1784
        %v1790 = vpack.c.b16 %v1787, %v1786
        %v1791 = vpack.c.b16 %v1788, %v1788
        %vm1794 = vcmask 293888
        %v1796 = vsel %vm1794, %v1765, 0
        %v1799 = vsel %vm1656, %v1791, 0
        %1801 = vmatprep.subr.bf16.mxu0 0
        %1802 = vmatpush1.bf16.msra.mxu0 0
        %1803 = vmatprep.subr.bf16.mxu0 0
        %1804 = vmatpush1.bf16.msra.mxu0 0
        %1805 = vmatprep.subr.bf16.mxu0 0
        %1806 = vmatpush1.bf16.msra.mxu0 0
        %1807 = vmatprep.subr.bf16.mxu0 0
        %1808 = vmatpush1.bf16.msra.mxu0 0
        %1809 = vmatprep.subr.bf16.mxu0 0
        %1810 = vmatpush1.bf16.msra.mxu0 0
        %1811 = vmatprep.subr.bf16.mxu0 0
        %1812 = vmatpush1.bf16.msra.mxu0 %v1799
        %1813 = vmatprep.subr.bf16.mxu0 0
        %1814 = vmatpush1.bf16.msra.mxu0 %v1790
        %1815 = vmatprep.subr.bf16.mxu0 0
        %1816 = vmatpush1.bf16.msra.mxu0 %v1789
        %1817 = vmatprep.subr.bf16.mxu0 0
        %1818 = vmatpush2.bf16.msra.mxu0 0
        %1819 = vmatprep.subr.bf16.mxu0 0
        %1820 = vmatpush2.bf16.msra.mxu0 0
        %1821 = vmatprep.subr.bf16.mxu0 0
        %1822 = vmatpush2.bf16.msra.mxu0 0
        %1823 = vmatprep.subr.bf16.mxu0 0
        %1824 = vmatpush2.bf16.msra.mxu0 0
        %1825 = vmatprep.subr.bf16.mxu0 0
        %1826 = vmatpush2.bf16.msra.mxu0 0
        %1827 = vmatprep.subr.bf16.mxu0 0
        %1828 = vmatpush2.bf16.msra.mxu0 0
        %1829 = vmatprep.subr.bf16.mxu0 0
        %1830 = vmatpush2.bf16.msra.mxu0 0
        %1831 = vmatprep.subr.bf16.mxu0 0
        %1832 = vmatpush2.bf16.msra.mxu0 0
        %1833 = vmatprep.mubr.bf16.mxu0 0
        %1834 = vmatmul.mubr.bf16.gmra.mxu0 %v1796
        %v1835 = vpop.f32.mrf.mxu0
        %v1836 = vadd.f32 0.0, %v1835
        %v1837 = vpop.f32.mrf.mxu0
        %v1838 = vpop.f32.mrf.mxu0
        %v1839 = vadd.f32 0.0, %v1838
        %v1840 = vpop.f32.mrf.mxu0
        %1841 = vdwg.mxu0
        %v1842 = vadd.f32 %v1561, %v1836
        %v1843 = vadd.f32 %v1562, %v1839
        %s1844 = scalar_lea.vmem [#allocation4], 20
        %v1845 = vld [vmem:[%s1844] sm:$0xf]
        %v1846 = vld [vmem:[%s1844 + $0x4] sm:$0xf]
        %v1847 = vld [vmem:[%s1844 + $0x8] sm:$0xf]
        %v1848 = vld [vmem:[%s1844 + $0xc] sm:$0xf]
        %v1849 = vld [vmem:[%s1844 + $0x10] sm:$0x3]
        %v1855 = vunpack.c.l.b16 %v1845
        %v1856 = vunpack.c.l.b16 %v1846
        %v1857 = vunpack.c.l.b16 %v1847
        %v1858 = vunpack.c.l.b16 %v1848
        %v1859 = vunpack.c.l.b16 %v1849
        %v1860 = vpack.c.b16 %v1856, %v1855
        %v1861 = vpack.c.b16 %v1858, %v1857
        %v1862 = vpack.c.b16 %v1859, %v1859
        %v1866 = vsel %vm1794, %v1766, 0
        %v1869 = vsel %vm1656, %v1862, 0
        %1871 = vmatprep.subr.bf16.mxu0 0
        %1872 = vmatpush1.bf16.msra.mxu0 0
        %1873 = vmatprep.subr.bf16.mxu0 0
        %1874 = vmatpush1.bf16.msra.mxu0 0
        %1875 = vmatprep.subr.bf16.mxu0 0
        %1876 = vmatpush1.bf16.msra.mxu0 0
        %1877 = vmatprep.subr.bf16.mxu0 0
        %1878 = vmatpush1.bf16.msra.mxu0 0
        %1879 = vmatprep.subr.bf16.mxu0 0
        %1880 = vmatpush1.bf16.msra.mxu0 0
        %1881 = vmatprep.subr.bf16.mxu0 0
        %1882 = vmatpush1.bf16.msra.mxu0 %v1869
        %1883 = vmatprep.subr.bf16.mxu0 0
        %1884 = vmatpush1.bf16.msra.mxu0 %v1861
        %1885 = vmatprep.subr.bf16.mxu0 0
        %1886 = vmatpush1.bf16.msra.mxu0 %v1860
        %1887 = vmatprep.subr.bf16.mxu0 0
        %1888 = vmatpush2.bf16.msra.mxu0 0
        %1889 = vmatprep.subr.bf16.mxu0 0
        %1890 = vmatpush2.bf16.msra.mxu0 0
        %1891 = vmatprep.subr.bf16.mxu0 0
        %1892 = vmatpush2.bf16.msra.mxu0 0
        %1893 = vmatprep.subr.bf16.mxu0 0
        %1894 = vmatpush2.bf16.msra.mxu0 0
        %1895 = vmatprep.subr.bf16.mxu0 0
        %1896 = vmatpush2.bf16.msra.mxu0 0
        %1897 = vmatprep.subr.bf16.mxu0 0
        %1898 = vmatpush2.bf16.msra.mxu0 0
        %1899 = vmatprep.subr.bf16.mxu0 0
        %1900 = vmatpush2.bf16.msra.mxu0 0
        %1901 = vmatprep.subr.bf16.mxu0 0
        %1902 = vmatpush2.bf16.msra.mxu0 0
        %1903 = vmatprep.mubr.bf16.mxu0 0
        %1904 = vmatmul.mubr.bf16.gmra.mxu0 %v1866
        %v1905 = vpop.f32.mrf.mxu0
        %v1906 = vadd.f32 0.0, %v1905
        %v1907 = vpop.f32.mrf.mxu0
        %v1908 = vpop.f32.mrf.mxu0
        %v1909 = vadd.f32 0.0, %v1908
        %v1910 = vpop.f32.mrf.mxu0
        %1911 = vdwg.mxu0
        %v1912 = vadd.f32 %v1842, %v1906
        %v1913 = vadd.f32 %v1843, %v1909
        %s1914 = scalar_lea.vmem [#allocation4], 40
        %v1915 = vld [vmem:[%s1914] sm:$0xf]
        %v1916 = vld [vmem:[%s1914 + $0x4] sm:$0xf]
        %v1917 = vld [vmem:[%s1914 + $0x8] sm:$0xf]
        %v1918 = vld [vmem:[%s1914 + $0xc] sm:$0xf]
        %v1919 = vld [vmem:[%s1914 + $0x10] sm:$0x3]
        %v1925 = vunpack.c.l.b16 %v1915
        %v1926 = vunpack.c.l.b16 %v1916
        %v1927 = vunpack.c.l.b16 %v1917
        %v1928 = vunpack.c.l.b16 %v1918
        %v1929 = vunpack.c.l.b16 %v1919
        %v1930 = vpack.c.b16 %v1926, %v1925
        %v1931 = vpack.c.b16 %v1928, %v1927
        %v1932 = vpack.c.b16 %v1929, %v1929
        %v1936 = vsel %vm1794, %v1767, 0
        %v1939 = vsel %vm1656, %v1932, 0
        %1941 = vmatprep.subr.bf16.mxu0 0
        %1942 = vmatpush1.bf16.msra.mxu0 0
        %1943 = vmatprep.subr.bf16.mxu0 0
        %1944 = vmatpush1.bf16.msra.mxu0 0
        %1945 = vmatprep.subr.bf16.mxu0 0
        %1946 = vmatpush1.bf16.msra.mxu0 0
        %1947 = vmatprep.subr.bf16.mxu0 0
        %1948 = vmatpush1.bf16.msra.mxu0 0
        %1949 = vmatprep.subr.bf16.mxu0 0
        %1950 = vmatpush1.bf16.msra.mxu0 0
        %1951 = vmatprep.subr.bf16.mxu0 0
        %1952 = vmatpush1.bf16.msra.mxu0 %v1939
        %1953 = vmatprep.subr.bf16.mxu0 0
        %1954 = vmatpush1.bf16.msra.mxu0 %v1931
        %1955 = vmatprep.subr.bf16.mxu0 0
        %1956 = vmatpush1.bf16.msra.mxu0 %v1930
        %1957 = vmatprep.subr.bf16.mxu0 0
        %1958 = vmatpush2.bf16.msra.mxu0 0
        %1959 = vmatprep.subr.bf16.mxu0 0
        %1960 = vmatpush2.bf16.msra.mxu0 0
        %1961 = vmatprep.subr.bf16.mxu0 0
        %1962 = vmatpush2.bf16.msra.mxu0 0
        %1963 = vmatprep.subr.bf16.mxu0 0
        %1964 = vmatpush2.bf16.msra.mxu0 0
        %1965 = vmatprep.subr.bf16.mxu0 0
        %1966 = vmatpush2.bf16.msra.mxu0 0
        %1967 = vmatprep.subr.bf16.mxu0 0
        %1968 = vmatpush2.bf16.msra.mxu0 0
        %1969 = vmatprep.subr.bf16.mxu0 0
        %1970 = vmatpush2.bf16.msra.mxu0 0
        %1971 = vmatprep.subr.bf16.mxu0 0
        %1972 = vmatpush2.bf16.msra.mxu0 0
        %1973 = vmatprep.mubr.bf16.mxu0 0
        %1974 = vmatmul.mubr.bf16.gmra.mxu0 %v1936
        %v1975 = vpop.f32.mrf.mxu0
        %v1976 = vadd.f32 0.0, %v1975
        %v1977 = vpop.f32.mrf.mxu0
        %v1978 = vpop.f32.mrf.mxu0
        %v1979 = vadd.f32 0.0, %v1978
        %v1980 = vpop.f32.mrf.mxu0
        %1981 = vdwg.mxu0
        %v1982 = vadd.f32 %v1912, %v1976
        %v1983 = vadd.f32 %v1913, %v1979
        %s1984 = scalar_lea.vmem [#allocation4], 60
        %v1985 = vld [vmem:[%s1984] sm:$0xf]
        %v1986 = vld [vmem:[%s1984 + $0x4] sm:$0xf]
        %v1987 = vld [vmem:[%s1984 + $0x8] sm:$0xf]
        %v1988 = vld [vmem:[%s1984 + $0xc] sm:$0xf]
        %v1989 = vld [vmem:[%s1984 + $0x10] sm:$0x3]
        %v1995 = vunpack.c.l.b16 %v1985
        %v1996 = vunpack.c.l.b16 %v1986
        %v1997 = vunpack.c.l.b16 %v1987
        %v1998 = vunpack.c.l.b16 %v1988
        %v1999 = vunpack.c.l.b16 %v1989
        %v2000 = vpack.c.b16 %v1996, %v1995
        %v2001 = vpack.c.b16 %v1998, %v1997
        %v2002 = vpack.c.b16 %v1999, %v1999
        %v2006 = vsel %vm1794, %v1768, 0
        %v2009 = vsel %vm1656, %v2002, 0
        %2011 = vmatprep.subr.bf16.mxu0 0
        %2012 = vmatpush1.bf16.msra.mxu0 0
        %2013 = vmatprep.subr.bf16.mxu0 0
        %2014 = vmatpush1.bf16.msra.mxu0 0
        %2015 = vmatprep.subr.bf16.mxu0 0
        %2016 = vmatpush1.bf16.msra.mxu0 0
        %2017 = vmatprep.subr.bf16.mxu0 0
        %2018 = vmatpush1.bf16.msra.mxu0 0
        %2019 = vmatprep.subr.bf16.mxu0 0
        %2020 = vmatpush1.bf16.msra.mxu0 0
        %2021 = vmatprep.subr.bf16.mxu0 0
        %2022 = vmatpush1.bf16.msra.mxu0 %v2009
        %2023 = vmatprep.subr.bf16.mxu0 0
        %2024 = vmatpush1.bf16.msra.mxu0 %v2001
        %2025 = vmatprep.subr.bf16.mxu0 0
        %2026 = vmatpush1.bf16.msra.mxu0 %v2000
        %2027 = vmatprep.subr.bf16.mxu0 0
        %2028 = vmatpush2.bf16.msra.mxu0 0
        %2029 = vmatprep.subr.bf16.mxu0 0
        %2030 = vmatpush2.bf16.msra.mxu0 0
        %2031 = vmatprep.subr.bf16.mxu0 0
        %2032 = vmatpush2.bf16.msra.mxu0 0
        %2033 = vmatprep.subr.bf16.mxu0 0
        %2034 = vmatpush2.bf16.msra.mxu0 0
        %2035 = vmatprep.subr.bf16.mxu0 0
        %2036 = vmatpush2.bf16.msra.mxu0 0
        %2037 = vmatprep.subr.bf16.mxu0 0
        %2038 = vmatpush2.bf16.msra.mxu0 0
        %2039 = vmatprep.subr.bf16.mxu0 0
        %2040 = vmatpush2.bf16.msra.mxu0 0
        %2041 = vmatprep.subr.bf16.mxu0 0
        %2042 = vmatpush2.bf16.msra.mxu0 0
        %2043 = vmatprep.mubr.bf16.mxu0 0
        %2044 = vmatmul.mubr.bf16.gmra.mxu0 %v2006
        %v2045 = vpop.f32.mrf.mxu0
        %v2046 = vadd.f32 0.0, %v2045
        %v2047 = vpop.f32.mrf.mxu0
        %v2048 = vpop.f32.mrf.mxu0
        %v2049 = vadd.f32 0.0, %v2048
        %v2050 = vpop.f32.mrf.mxu0
        %2051 = vdwg.mxu0
        %v2052 = vadd.f32 %v1982, %v2046
        %v2053 = vadd.f32 %v1983, %v2049
        %s2054 = scalar_lea.vmem [#allocation4], 80
        %v2055 = vld [vmem:[%s2054] sm:$0xf]
        %v2056 = vld [vmem:[%s2054 + $0x4] sm:$0xf]
        %v2057 = vld [vmem:[%s2054 + $0x8] sm:$0xf]
        %v2058 = vld [vmem:[%s2054 + $0xc] sm:$0xf]
        %v2059 = vld [vmem:[%s2054 + $0x10] sm:$0x3]
        %v2065 = vunpack.c.l.b16 %v2055
        %v2066 = vunpack.c.l.b16 %v2056
        %v2067 = vunpack.c.l.b16 %v2057
        %v2068 = vunpack.c.l.b16 %v2058
        %v2069 = vunpack.c.l.b16 %v2059
        %v2070 = vpack.c.b16 %v2066, %v2065
        %v2071 = vpack.c.b16 %v2068, %v2067
        %v2072 = vpack.c.b16 %v2069, %v2069
        %v2076 = vsel %vm1794, %v1769, 0
        %v2079 = vsel %vm1656, %v2072, 0
        %2081 = vmatprep.subr.bf16.mxu0 0
        %2082 = vmatpush1.bf16.msra.mxu0 0
        %2083 = vmatprep.subr.bf16.mxu0 0
        %2084 = vmatpush1.bf16.msra.mxu0 0
        %2085 = vmatprep.subr.bf16.mxu0 0
        %2086 = vmatpush1.bf16.msra.mxu0 0
        %2087 = vmatprep.subr.bf16.mxu0 0
        %2088 = vmatpush1.bf16.msra.mxu0 0
        %2089 = vmatprep.subr.bf16.mxu0 0
        %2090 = vmatpush1.bf16.msra.mxu0 0
        %2091 = vmatprep.subr.bf16.mxu0 0
        %2092 = vmatpush1.bf16.msra.mxu0 %v2079
        %2093 = vmatprep.subr.bf16.mxu0 0
        %2094 = vmatpush1.bf16.msra.mxu0 %v2071
        %2095 = vmatprep.subr.bf16.mxu0 0
        %2096 = vmatpush1.bf16.msra.mxu0 %v2070
        %2097 = vmatprep.subr.bf16.mxu0 0
        %2098 = vmatpush2.bf16.msra.mxu0 0
        %2099 = vmatprep.subr.bf16.mxu0 0
        %2100 = vmatpush2.bf16.msra.mxu0 0
        %2101 = vmatprep.subr.bf16.mxu0 0
        %2102 = vmatpush2.bf16.msra.mxu0 0
        %2103 = vmatprep.subr.bf16.mxu0 0
        %2104 = vmatpush2.bf16.msra.mxu0 0
        %2105 = vmatprep.subr.bf16.mxu0 0
        %2106 = vmatpush2.bf16.msra.mxu0 0
        %2107 = vmatprep.subr.bf16.mxu0 0
        %2108 = vmatpush2.bf16.msra.mxu0 0
        %2109 = vmatprep.subr.bf16.mxu0 0
        %2110 = vmatpush2.bf16.msra.mxu0 0
        %2111 = vmatprep.subr.bf16.mxu0 0
        %2112 = vmatpush2.bf16.msra.mxu0 0
        %2113 = vmatprep.mubr.bf16.mxu0 0
        %2114 = vmatmul.mubr.bf16.gmra.mxu0 %v2076
        %v2115 = vpop.f32.mrf.mxu0
        %v2116 = vadd.f32 0.0, %v2115
        %v2117 = vpop.f32.mrf.mxu0
        %v2118 = vpop.f32.mrf.mxu0
        %v2119 = vadd.f32 0.0, %v2118
        %v2120 = vpop.f32.mrf.mxu0
        %2121 = vdwg.mxu0
        %v2122 = vadd.f32 %v2052, %v2116
        %v2123 = vadd.f32 %v2053, %v2119
        %s2124 = scalar_lea.vmem [#allocation4], 100
        %v2125 = vld [vmem:[%s2124] sm:$0xf]
        %v2126 = vld [vmem:[%s2124 + $0x4] sm:$0xf]
        %v2127 = vld [vmem:[%s2124 + $0x8] sm:$0xf]
        %v2128 = vld [vmem:[%s2124 + $0xc] sm:$0xf]
        %v2129 = vld [vmem:[%s2124 + $0x10] sm:$0x3]
        %v2135 = vunpack.c.l.b16 %v2125
        %v2136 = vunpack.c.l.b16 %v2126
        %v2137 = vunpack.c.l.b16 %v2127
        %v2138 = vunpack.c.l.b16 %v2128
        %v2139 = vunpack.c.l.b16 %v2129
        %v2140 = vpack.c.b16 %v2136, %v2135
        %v2141 = vpack.c.b16 %v2138, %v2137
        %v2142 = vpack.c.b16 %v2139, %v2139
        %v2146 = vsel %vm1794, %v1770, 0
        %v2149 = vsel %vm1656, %v2142, 0
        %2151 = vmatprep.subr.bf16.mxu0 0
        %2152 = vmatpush1.bf16.msra.mxu0 0
        %2153 = vmatprep.subr.bf16.mxu0 0
        %2154 = vmatpush1.bf16.msra.mxu0 0
        %2155 = vmatprep.subr.bf16.mxu0 0
        %2156 = vmatpush1.bf16.msra.mxu0 0
        %2157 = vmatprep.subr.bf16.mxu0 0
        %2158 = vmatpush1.bf16.msra.mxu0 0
        %2159 = vmatprep.subr.bf16.mxu0 0
        %2160 = vmatpush1.bf16.msra.mxu0 0
        %2161 = vmatprep.subr.bf16.mxu0 0
        %2162 = vmatpush1.bf16.msra.mxu0 %v2149
        %2163 = vmatprep.subr.bf16.mxu0 0
        %2164 = vmatpush1.bf16.msra.mxu0 %v2141
        %2165 = vmatprep.subr.bf16.mxu0 0
        %2166 = vmatpush1.bf16.msra.mxu0 %v2140
        %2167 = vmatprep.subr.bf16.mxu0 0
        %2168 = vmatpush2.bf16.msra.mxu0 0
        %2169 = vmatprep.subr.bf16.mxu0 0
        %2170 = vmatpush2.bf16.msra.mxu0 0
        %2171 = vmatprep.subr.bf16.mxu0 0
        %2172 = vmatpush2.bf16.msra.mxu0 0
        %2173 = vmatprep.subr.bf16.mxu0 0
        %2174 = vmatpush2.bf16.msra.mxu0 0
        %2175 = vmatprep.subr.bf16.mxu0 0
        %2176 = vmatpush2.bf16.msra.mxu0 0
        %2177 = vmatprep.subr.bf16.mxu0 0
        %2178 = vmatpush2.bf16.msra.mxu0 0
        %2179 = vmatprep.subr.bf16.mxu0 0
        %2180 = vmatpush2.bf16.msra.mxu0 0
        %2181 = vmatprep.subr.bf16.mxu0 0
        %2182 = vmatpush2.bf16.msra.mxu0 0
        %2183 = vmatprep.mubr.bf16.mxu0 0
        %2184 = vmatmul.mubr.bf16.gmra.mxu0 %v2146
        %v2185 = vpop.f32.mrf.mxu0
        %v2186 = vadd.f32 0.0, %v2185
        %v2187 = vpop.f32.mrf.mxu0
        %v2188 = vpop.f32.mrf.mxu0
        %v2189 = vadd.f32 0.0, %v2188
        %v2190 = vpop.f32.mrf.mxu0
        %2191 = vdwg.mxu0
        %v2192 = vadd.f32 %v2122, %v2186
        %v2193 = vadd.f32 %v2123, %v2189
        %s2194 = scalar_lea.vmem [#allocation4], 120
        %v2195 = vld [vmem:[%s2194] sm:$0xf]
        %v2196 = vld [vmem:[%s2194 + $0x4] sm:$0xf]
        %v2197 = vld [vmem:[%s2194 + $0x8] sm:$0xf]
        %v2198 = vld [vmem:[%s2194 + $0xc] sm:$0xf]
        %v2199 = vld [vmem:[%s2194 + $0x10] sm:$0x3]
        %v2205 = vunpack.c.l.b16 %v2195
        %v2206 = vunpack.c.l.b16 %v2196
        %v2207 = vunpack.c.l.b16 %v2197
        %v2208 = vunpack.c.l.b16 %v2198
        %v2209 = vunpack.c.l.b16 %v2199
        %v2210 = vpack.c.b16 %v2206, %v2205
        %v2211 = vpack.c.b16 %v2208, %v2207
        %v2212 = vpack.c.b16 %v2209, %v2209
        %v2216 = vsel %vm1794, %v1771, 0
        %v2219 = vsel %vm1656, %v2212, 0
        %2221 = vmatprep.subr.bf16.mxu0 0
        %2222 = vmatpush1.bf16.msra.mxu0 0
        %2223 = vmatprep.subr.bf16.mxu0 0
        %2224 = vmatpush1.bf16.msra.mxu0 0
        %2225 = vmatprep.subr.bf16.mxu0 0
        %2226 = vmatpush1.bf16.msra.mxu0 0
        %2227 = vmatprep.subr.bf16.mxu0 0
        %2228 = vmatpush1.bf16.msra.mxu0 0
        %2229 = vmatprep.subr.bf16.mxu0 0
        %2230 = vmatpush1.bf16.msra.mxu0 0
        %2231 = vmatprep.subr.bf16.mxu0 0
        %2232 = vmatpush1.bf16.msra.mxu0 %v2219
        %2233 = vmatprep.subr.bf16.mxu0 0
        %2234 = vmatpush1.bf16.msra.mxu0 %v2211
        %2235 = vmatprep.subr.bf16.mxu0 0
        %2236 = vmatpush1.bf16.msra.mxu0 %v2210
        %2237 = vmatprep.subr.bf16.mxu0 0
        %2238 = vmatpush2.bf16.msra.mxu0 0
        %2239 = vmatprep.subr.bf16.mxu0 0
        %2240 = vmatpush2.bf16.msra.mxu0 0
        %2241 = vmatprep.subr.bf16.mxu0 0
        %2242 = vmatpush2.bf16.msra.mxu0 0
        %2243 = vmatprep.subr.bf16.mxu0 0
        %2244 = vmatpush2.bf16.msra.mxu0 0
        %2245 = vmatprep.subr.bf16.mxu0 0
        %2246 = vmatpush2.bf16.msra.mxu0 0
        %2247 = vmatprep.subr.bf16.mxu0 0
        %2248 = vmatpush2.bf16.msra.mxu0 0
        %2249 = vmatprep.subr.bf16.mxu0 0
        %2250 = vmatpush2.bf16.msra.mxu0 0
        %2251 = vmatprep.subr.bf16.mxu0 0
        %2252 = vmatpush2.bf16.msra.mxu0 0
        %2253 = vmatprep.mubr.bf16.mxu0 0
        %2254 = vmatmul.mubr.bf16.gmra.mxu0 %v2216
        %v2255 = vpop.f32.mrf.mxu0
        %v2256 = vadd.f32 0.0, %v2255
        %v2257 = vpop.f32.mrf.mxu0
        %v2258 = vpop.f32.mrf.mxu0
        %v2259 = vadd.f32 0.0, %v2258
        %v2260 = vpop.f32.mrf.mxu0
        %2261 = vdwg.mxu0
        %v2262 = vadd.f32 %v2192, %v2256
        %v2263 = vadd.f32 %v2193, %v2259
        %s2264 = scalar_lea.vmem [#allocation4], 140
        %v2265 = vld [vmem:[%s2264] sm:$0xf]
        %v2266 = vld [vmem:[%s2264 + $0x4] sm:$0xf]
        %v2267 = vld [vmem:[%s2264 + $0x8] sm:$0xf]
        %v2268 = vld [vmem:[%s2264 + $0xc] sm:$0xf]
        %v2269 = vld [vmem:[%s2264 + $0x10] sm:$0x3]
        %v2275 = vunpack.c.l.b16 %v2265
        %v2276 = vunpack.c.l.b16 %v2266
        %v2277 = vunpack.c.l.b16 %v2267
        %v2278 = vunpack.c.l.b16 %v2268
        %v2279 = vunpack.c.l.b16 %v2269
        %v2280 = vpack.c.b16 %v2276, %v2275
        %v2281 = vpack.c.b16 %v2278, %v2277
        %v2282 = vpack.c.b16 %v2279, %v2279
        %v2286 = vsel %vm1794, %v1772, 0
        %v2289 = vsel %vm1656, %v2282, 0
        %2291 = vmatprep.subr.bf16.mxu0 0
        %2292 = vmatpush1.bf16.msra.mxu0 0
        %2293 = vmatprep.subr.bf16.mxu0 0
        %2294 = vmatpush1.bf16.msra.mxu0 0
        %2295 = vmatprep.subr.bf16.mxu0 0
        %2296 = vmatpush1.bf16.msra.mxu0 0
        %2297 = vmatprep.subr.bf16.mxu0 0
        %2298 = vmatpush1.bf16.msra.mxu0 0
        %2299 = vmatprep.subr.bf16.mxu0 0
        %2300 = vmatpush1.bf16.msra.mxu0 0
        %2301 = vmatprep.subr.bf16.mxu0 0
        %2302 = vmatpush1.bf16.msra.mxu0 %v2289
        %2303 = vmatprep.subr.bf16.mxu0 0
        %2304 = vmatpush1.bf16.msra.mxu0 %v2281
        %2305 = vmatprep.subr.bf16.mxu0 0
        %2306 = vmatpush1.bf16.msra.mxu0 %v2280
        %2307 = vmatprep.subr.bf16.mxu0 0
        %2308 = vmatpush2.bf16.msra.mxu0 0
        %2309 = vmatprep.subr.bf16.mxu0 0
        %2310 = vmatpush2.bf16.msra.mxu0 0
        %2311 = vmatprep.subr.bf16.mxu0 0
        %2312 = vmatpush2.bf16.msra.mxu0 0
        %2313 = vmatprep.subr.bf16.mxu0 0
        %2314 = vmatpush2.bf16.msra.mxu0 0
        %2315 = vmatprep.subr.bf16.mxu0 0
        %2316 = vmatpush2.bf16.msra.mxu0 0
        %2317 = vmatprep.subr.bf16.mxu0 0
        %2318 = vmatpush2.bf16.msra.mxu0 0
        %2319 = vmatprep.subr.bf16.mxu0 0
        %2320 = vmatpush2.bf16.msra.mxu0 0
        %2321 = vmatprep.subr.bf16.mxu0 0
        %2322 = vmatpush2.bf16.msra.mxu0 0
        %2323 = vmatprep.mubr.bf16.mxu0 0
        %2324 = vmatmul.mubr.bf16.gmra.mxu0 %v2286
        %v2325 = vpop.f32.mrf.mxu0
        %v2326 = vadd.f32 0.0, %v2325
        %v2327 = vpop.f32.mrf.mxu0
        %v2328 = vpop.f32.mrf.mxu0
        %v2329 = vadd.f32 0.0, %v2328
        %v2330 = vpop.f32.mrf.mxu0
        %2331 = vdwg.mxu0
        %v2332 = vadd.f32 %v2262, %v2326
        %v2333 = vadd.f32 %v2263, %v2329
        %s2334 = scalar_lea.vmem [#allocation4], 160
        %v2335 = vld [vmem:[%s2334] sm:$0xf]
        %v2336 = vld [vmem:[%s2334 + $0x4] sm:$0xf]
        %v2337 = vld [vmem:[%s2334 + $0x8] sm:$0xf]
        %v2338 = vld [vmem:[%s2334 + $0xc] sm:$0xf]
        %v2339 = vld [vmem:[%s2334 + $0x10] sm:$0x3]
        %v2345 = vunpack.c.l.b16 %v2335
        %v2346 = vunpack.c.l.b16 %v2336
        %v2347 = vunpack.c.l.b16 %v2337
        %v2348 = vunpack.c.l.b16 %v2338
        %v2349 = vunpack.c.l.b16 %v2339
        %v2350 = vpack.c.b16 %v2346, %v2345
        %v2351 = vpack.c.b16 %v2348, %v2347
        %v2352 = vpack.c.b16 %v2349, %v2349
        %v2356 = vsel %vm1794, %v1773, 0
        %v2359 = vsel %vm1656, %v2352, 0
        %2361 = vmatprep.subr.bf16.mxu0 0
        %2362 = vmatpush1.bf16.msra.mxu0 0
        %2363 = vmatprep.subr.bf16.mxu0 0
        %2364 = vmatpush1.bf16.msra.mxu0 0
        %2365 = vmatprep.subr.bf16.mxu0 0
        %2366 = vmatpush1.bf16.msra.mxu0 0
        %2367 = vmatprep.subr.bf16.mxu0 0
        %2368 = vmatpush1.bf16.msra.mxu0 0
        %2369 = vmatprep.subr.bf16.mxu0 0
        %2370 = vmatpush1.bf16.msra.mxu0 0
        %2371 = vmatprep.subr.bf16.mxu0 0
        %2372 = vmatpush1.bf16.msra.mxu0 %v2359
        %2373 = vmatprep.subr.bf16.mxu0 0
        %2374 = vmatpush1.bf16.msra.mxu0 %v2351
        %2375 = vmatprep.subr.bf16.mxu0 0
        %2376 = vmatpush1.bf16.msra.mxu0 %v2350
        %2377 = vmatprep.subr.bf16.mxu0 0
        %2378 = vmatpush2.bf16.msra.mxu0 0
        %2379 = vmatprep.subr.bf16.mxu0 0
        %2380 = vmatpush2.bf16.msra.mxu0 0
        %2381 = vmatprep.subr.bf16.mxu0 0
        %2382 = vmatpush2.bf16.msra.mxu0 0
        %2383 = vmatprep.subr.bf16.mxu0 0
        %2384 = vmatpush2.bf16.msra.mxu0 0
        %2385 = vmatprep.subr.bf16.mxu0 0
        %2386 = vmatpush2.bf16.msra.mxu0 0
        %2387 = vmatprep.subr.bf16.mxu0 0
        %2388 = vmatpush2.bf16.msra.mxu0 0
        %2389 = vmatprep.subr.bf16.mxu0 0
        %2390 = vmatpush2.bf16.msra.mxu0 0
        %2391 = vmatprep.subr.bf16.mxu0 0
        %2392 = vmatpush2.bf16.msra.mxu0 0
        %2393 = vmatprep.mubr.bf16.mxu0 0
        %2394 = vmatmul.mubr.bf16.gmra.mxu0 %v2356
        %v2395 = vpop.f32.mrf.mxu0
        %v2396 = vadd.f32 0.0, %v2395
        %v2397 = vpop.f32.mrf.mxu0
        %v2398 = vpop.f32.mrf.mxu0
        %v2399 = vadd.f32 0.0, %v2398
        %v2400 = vpop.f32.mrf.mxu0
        %2401 = vdwg.mxu0
        %v2402 = vadd.f32 %v2332, %v2396
        %v2403 = vadd.f32 %v2333, %v2399
        %v2404 = vld [vmem:[%s8] sm:$0xff]
        %v2405 = vld [vmem:[%s8 + $0x8] sm:$0xff]
        %2407 = vset.pattern.permute.xlu0 0
        %2408 = vperm.xlu0 %2407, %v2404
        %v2409 = vpop.permute.xlu0 %2408
        %2412 = vset.pattern.permute.xlu0 0
        %2413 = vperm.xlu0 %2412, %v2405
        %v2414 = vpop.permute.xlu0 %2413
        %v2416 = vadd.f32 %v2402, %v2409
        %v2417 = vadd.f32 %v2403, %v2414
        %v2418 = vmul.f32 %v2416, 0.01
        %v2419 = vmul.f32 %v2417, 0.01
        %v2420 = vmax.f32 %v2416, %v2418
        %v2421 = vmax.f32 %v2417, %v2419
        %v2422 = vpack.c.bf16 %v2421, %v2420
        %v2423 = vld [vmem:[%s9] sm:$0xf]
        %v2424 = vld [vmem:[%s9 + $0x4] sm:$0xf]
        %v2425 = vld [vmem:[%s9 + $0x8] sm:$0xf]
        %v2426 = vld [vmem:[%s9 + $0xc] sm:$0xf]
        %v2427 = vld [vmem:[%s9 + $0x10] sm:$0xf]
        %v2428 = vld [vmem:[%s9 + $0x14] sm:$0xf]
        %v2429 = vld [vmem:[%s9 + $0x18] sm:$0xf]
        %v2430 = vld [vmem:[%s9 + $0x1c] sm:$0xf]
        %v2431 = vld [vmem:[%s9 + $0x20] sm:$0xf]
        %v2432 = vld [vmem:[%s9 + $0x24] sm:$0xf]
        %v2433 = vld [vmem:[%s9 + $0x28] sm:$0xf]
        %v2434 = vld [vmem:[%s9 + $0x2c] sm:$0xf]
        %v2435 = vld [vmem:[%s9 + $0x30] sm:$0xf]
        %v2436 = vld [vmem:[%s9 + $0x34] sm:$0xf]
        %v2437 = vld [vmem:[%s9 + $0x38] sm:$0xf]
        %v2438 = vld [vmem:[%s9 + $0x3c] sm:$0xf]
        %v2439 = vld [vmem:[%s9 + $0x40] sm:$0xf]
        %v2440 = vld [vmem:[%s9 + $0x44] sm:$0xf]
        %v2459 = vunpack.c.l.b16 %v2423
        %v2460 = vunpack.c.l.b16 %v2424
        %v2461 = vunpack.c.l.b16 %v2425
        %v2462 = vunpack.c.l.b16 %v2426
        %v2463 = vunpack.c.l.b16 %v2427
        %v2464 = vunpack.c.l.b16 %v2428
        %v2465 = vunpack.c.l.b16 %v2429
        %v2466 = vunpack.c.l.b16 %v2430
        %v2467 = vunpack.c.l.b16 %v2431
        %v2468 = vunpack.c.l.b16 %v2432
        %v2469 = vunpack.c.l.b16 %v2433
        %v2470 = vunpack.c.l.b16 %v2434
        %v2471 = vunpack.c.l.b16 %v2435
        %v2472 = vunpack.c.l.b16 %v2436
        %v2473 = vunpack.c.l.b16 %v2437
        %v2474 = vunpack.c.l.b16 %v2438
        %v2475 = vunpack.c.l.b16 %v2439
        %v2476 = vunpack.c.l.b16 %v2440
        %v2477 = vpack.c.b16 %v2460, %v2459
        %v2478 = vpack.c.b16 %v2462, %v2461
        %v2479 = vpack.c.b16 %v2464, %v2463
        %v2480 = vpack.c.b16 %v2466, %v2465
        %v2481 = vpack.c.b16 %v2468, %v2467
        %v2482 = vpack.c.b16 %v2470, %v2469
        %v2483 = vpack.c.b16 %v2472, %v2471
        %v2484 = vpack.c.b16 %v2474, %v2473
        %v2485 = vpack.c.b16 %v2476, %v2475
        %v2487 = vsel %vm1083, %v2477, 0
        %v2490 = vsel %vm1083, %v2478, 0
        %v2493 = vsel %vm1083, %v2479, 0
        %v2496 = vsel %vm1083, %v2480, 0
        %v2499 = vsel %vm1083, %v2481, 0
        %v2502 = vsel %vm1083, %v2482, 0
        %v2505 = vsel %vm1083, %v2483, 0
        %v2508 = vsel %vm1083, %v2484, 0
        %v2511 = vsel %vm1083, %v2485, 0
        %2513 = vmatprep.subr.bf16.mxu0 0
        %2514 = vmatpush1.bf16.msra.mxu0 0
        %2515 = vmatprep.subr.bf16.mxu0 0
        %2516 = vmatpush1.bf16.msra.mxu0 0
        %2517 = vmatprep.subr.bf16.mxu0 0
        %2518 = vmatpush1.bf16.msra.mxu0 0
        %2519 = vmatprep.subr.bf16.mxu0 0
        %2520 = vmatpush1.bf16.msra.mxu0 0
        %2521 = vmatprep.subr.bf16.mxu0 0
        %2522 = vmatpush1.bf16.msra.mxu0 0
        %2523 = vmatprep.subr.bf16.mxu0 0
        %2524 = vmatpush1.bf16.msra.mxu0 0
        %2525 = vmatprep.subr.bf16.mxu0 0
        %2526 = vmatpush1.bf16.msra.mxu0 0
        %2527 = vmatprep.subr.bf16.mxu0 0
        %2528 = vmatpush1.bf16.msra.mxu0 %v2422
        %2529 = vmatprep.subr.bf16.mxu0 0
        %2530 = vmatpush2.bf16.msra.mxu0 0
        %2531 = vmatprep.subr.bf16.mxu0 0
        %2532 = vmatpush2.bf16.msra.mxu0 0
        %2533 = vmatprep.subr.bf16.mxu0 0
        %2534 = vmatpush2.bf16.msra.mxu0 0
        %2535 = vmatprep.subr.bf16.mxu0 0
        %2536 = vmatpush2.bf16.msra.mxu0 0
        %2537 = vmatprep.subr.bf16.mxu0 0
        %2538 = vmatpush2.bf16.msra.mxu0 0
        %2539 = vmatprep.subr.bf16.mxu0 0
        %2540 = vmatpush2.bf16.msra.mxu0 0
        %2541 = vmatprep.subr.bf16.mxu0 0
        %2542 = vmatpush2.bf16.msra.mxu0 0
        %2543 = vmatprep.subr.bf16.mxu0 0
        %2544 = vmatpush2.bf16.msra.mxu0 0
        %2545 = vmatprep.mubr.bf16.mxu0 0
        %2546 = vmatmul.mubr.bf16.gmra.mxu0 %v2487
        %v2547 = vpop.f32.mrf.mxu0
        %v2548 = vadd.f32 0.0, %v2547
        %v2549 = vpop.f32.mrf.mxu0
        %v2550 = vpop.f32.mrf.mxu0
        %v2551 = vadd.f32 0.0, %v2550
        %v2552 = vpop.f32.mrf.mxu0
        %2553 = vmatprep.mubr.bf16.mxu0 0
        %2554 = vmatmul.mubr.bf16.gmra.mxu0 %v2490
        %v2555 = vpop.f32.mrf.mxu0
        %v2556 = vadd.f32 0.0, %v2555
        %v2557 = vpop.f32.mrf.mxu0
        %v2558 = vpop.f32.mrf.mxu0
        %v2559 = vadd.f32 0.0, %v2558
        %v2560 = vpop.f32.mrf.mxu0
        %2561 = vmatprep.mubr.bf16.mxu0 0
        %2562 = vmatmul.mubr.bf16.gmra.mxu0 %v2493
        %v2563 = vpop.f32.mrf.mxu0
        %v2564 = vadd.f32 0.0, %v2563
        %v2565 = vpop.f32.mrf.mxu0
        %v2566 = vpop.f32.mrf.mxu0
        %v2567 = vadd.f32 0.0, %v2566
        %v2568 = vpop.f32.mrf.mxu0
        %2569 = vmatprep.mubr.bf16.mxu0 0
        %2570 = vmatmul.mubr.bf16.gmra.mxu0 %v2496
        %v2571 = vpop.f32.mrf.mxu0
        %v2572 = vadd.f32 0.0, %v2571
        %v2573 = vpop.f32.mrf.mxu0
        %v2574 = vpop.f32.mrf.mxu0
        %v2575 = vadd.f32 0.0, %v2574
        %v2576 = vpop.f32.mrf.mxu0
        %2577 = vmatprep.mubr.bf16.mxu0 0
        %2578 = vmatmul.mubr.bf16.gmra.mxu0 %v2499
        %v2579 = vpop.f32.mrf.mxu0
        %v2580 = vadd.f32 0.0, %v2579
        %v2581 = vpop.f32.mrf.mxu0
        %v2582 = vpop.f32.mrf.mxu0
        %v2583 = vadd.f32 0.0, %v2582
        %v2584 = vpop.f32.mrf.mxu0
        %2585 = vmatprep.mubr.bf16.mxu0 0
        %2586 = vmatmul.mubr.bf16.gmra.mxu0 %v2502
        %v2587 = vpop.f32.mrf.mxu0
        %v2588 = vadd.f32 0.0, %v2587
        %v2589 = vpop.f32.mrf.mxu0
        %v2590 = vpop.f32.mrf.mxu0
        %v2591 = vadd.f32 0.0, %v2590
        %v2592 = vpop.f32.mrf.mxu0
        %2593 = vmatprep.mubr.bf16.mxu0 0
        %2594 = vmatmul.mubr.bf16.gmra.mxu0 %v2505
        %v2595 = vpop.f32.mrf.mxu0
        %v2596 = vadd.f32 0.0, %v2595
        %v2597 = vpop.f32.mrf.mxu0
        %v2598 = vpop.f32.mrf.mxu0
        %v2599 = vadd.f32 0.0, %v2598
        %v2600 = vpop.f32.mrf.mxu0
        %2601 = vmatprep.mubr.bf16.mxu0 0
        %2602 = vmatmul.mubr.bf16.gmra.mxu0 %v2508
        %v2603 = vpop.f32.mrf.mxu0
        %v2604 = vadd.f32 0.0, %v2603
        %v2605 = vpop.f32.mrf.mxu0
        %v2606 = vpop.f32.mrf.mxu0
        %v2607 = vadd.f32 0.0, %v2606
        %v2608 = vpop.f32.mrf.mxu0
        %2609 = vmatprep.mubr.bf16.mxu0 0
        %2610 = vmatmul.mubr.bf16.gmra.mxu0 %v2511
        %v2611 = vpop.f32.mrf.mxu0
        %v2612 = vadd.f32 0.0, %v2611
        %v2613 = vpop.f32.mrf.mxu0
        %v2614 = vpop.f32.mrf.mxu0
        %v2615 = vadd.f32 0.0, %v2614
        %v2616 = vpop.f32.mrf.mxu0
        %2617 = vdwg.mxu0
        %v2618 = vpack.c.bf16 %v2551, %v2548
        %v2619 = vpack.c.bf16 %v2559, %v2556
        %v2620 = vpack.c.bf16 %v2567, %v2564
        %v2621 = vpack.c.bf16 %v2575, %v2572
        %v2622 = vpack.c.bf16 %v2583, %v2580
        %v2623 = vpack.c.bf16 %v2591, %v2588
        %v2624 = vpack.c.bf16 %v2599, %v2596
        %v2625 = vpack.c.bf16 %v2607, %v2604
        %v2626 = vpack.c.bf16 %v2615, %v2612
        %v2627 = vld [vmem:[%s10] sm:$0xf]
        %v2628 = vld [vmem:[%s10 + $0x4] sm:$0xf]
        %v2629 = vld [vmem:[%s10 + $0x8] sm:$0xf]
        %v2630 = vld [vmem:[%s10 + $0xc] sm:$0xf]
        %v2631 = vld [vmem:[%s10 + $0x10] sm:$0xf]
        %v2632 = vld [vmem:[%s10 + $0x14] sm:$0xf]
        %v2633 = vld [vmem:[%s10 + $0x18] sm:$0xf]
        %v2634 = vld [vmem:[%s10 + $0x1c] sm:$0xf]
        %s2635 = scalar_lea.vmem %s10, 32
        %v2636 = vld [vmem:[%s2635] sm:$0xf]
        %v2637 = vld [vmem:[%s2635 + $0x4] sm:$0xf]
        %v2638 = vld [vmem:[%s2635 + $0x8] sm:$0xf]
        %v2639 = vld [vmem:[%s2635 + $0xc] sm:$0xf]
        %v2640 = vld [vmem:[%s2635 + $0x10] sm:$0xf]
        %v2641 = vld [vmem:[%s2635 + $0x14] sm:$0xf]
        %v2642 = vld [vmem:[%s2635 + $0x18] sm:$0xf]
        %v2643 = vld [vmem:[%s2635 + $0x1c] sm:$0xf]
        %v2652 = vunpack.c.l.b16 %v2636
        %v2653 = vunpack.c.l.b16 %v2637
        %v2654 = vunpack.c.l.b16 %v2638
        %v2655 = vunpack.c.l.b16 %v2639
        %v2656 = vunpack.c.l.b16 %v2640
        %v2657 = vunpack.c.l.b16 %v2641
        %v2658 = vunpack.c.l.b16 %v2642
        %v2659 = vunpack.c.l.b16 %v2643
        %v2660 = vpack.c.b16 %v2653, %v2652
        %v2661 = vpack.c.b16 %v2655, %v2654
        %v2662 = vpack.c.b16 %v2657, %v2656
        %v2663 = vpack.c.b16 %v2659, %v2658
        %vm2668 = vcmask 523264
        %v2670 = vsel %vm2668, %v2619, 0
        %2672 = vmatprep.subr.bf16.mxu0 0
        %2673 = vmatpush1.bf16.msra.mxu0 0
        %2674 = vmatprep.subr.bf16.mxu0 0
        %2675 = vmatpush1.bf16.msra.mxu0 0
        %2676 = vmatprep.subr.bf16.mxu0 0
        %2677 = vmatpush1.bf16.msra.mxu0 0
        %2678 = vmatprep.subr.bf16.mxu0 0
        %2679 = vmatpush1.bf16.msra.mxu0 0
        %2680 = vmatprep.subr.bf16.mxu0 0
        %2681 = vmatpush1.bf16.msra.mxu0 %v2663
        %2682 = vmatprep.subr.bf16.mxu0 0
        %2683 = vmatpush1.bf16.msra.mxu0 %v2662
        %2684 = vmatprep.subr.bf16.mxu0 0
        %2685 = vmatpush1.bf16.msra.mxu0 %v2661
        %2686 = vmatprep.subr.bf16.mxu0 0
        %2687 = vmatpush1.bf16.msra.mxu0 %v2660
        %2688 = vmatprep.subr.bf16.mxu0 0
        %2689 = vmatpush2.bf16.msra.mxu0 0
        %2690 = vmatprep.subr.bf16.mxu0 0
        %2691 = vmatpush2.bf16.msra.mxu0 0
        %2692 = vmatprep.subr.bf16.mxu0 0
        %2693 = vmatpush2.bf16.msra.mxu0 0
        %2694 = vmatprep.subr.bf16.mxu0 0
        %2695 = vmatpush2.bf16.msra.mxu0 0
        %2696 = vmatprep.subr.bf16.mxu0 0
        %2697 = vmatpush2.bf16.msra.mxu0 0
        %2698 = vmatprep.subr.bf16.mxu0 0
        %2699 = vmatpush2.bf16.msra.mxu0 0
        %2700 = vmatprep.subr.bf16.mxu0 0
        %2701 = vmatpush2.bf16.msra.mxu0 0
        %2702 = vmatprep.subr.bf16.mxu0 0
        %2703 = vmatpush2.bf16.msra.mxu0 0
        %2704 = vmatprep.mubr.bf16.mxu0 0
        %2705 = vmatmul.mubr.bf16.gmra.mxu0 %v2670
        %v2706 = vpop.f32.mrf.mxu0
        %v2707 = vadd.f32 0.0, %v2706
        %v2708 = vpop.f32.mrf.mxu0
        %v2709 = vpop.f32.mrf.mxu0
        %v2710 = vadd.f32 0.0, %v2709
        %v2711 = vpop.f32.mrf.mxu0
        %2712 = vdwg.mxu0
        %v2721 = vunpack.c.l.b16 %v2627
        %v2722 = vunpack.c.l.b16 %v2628
        %v2723 = vunpack.c.l.b16 %v2629
        %v2724 = vunpack.c.l.b16 %v2630
        %v2725 = vunpack.c.l.b16 %v2631
        %v2726 = vunpack.c.l.b16 %v2632
        %v2727 = vunpack.c.l.b16 %v2633
        %v2728 = vunpack.c.l.b16 %v2634
        %v2729 = vpack.c.b16 %v2722, %v2721
        %v2730 = vpack.c.b16 %v2724, %v2723
        %v2731 = vpack.c.b16 %v2726, %v2725
        %v2732 = vpack.c.b16 %v2728, %v2727
        %v2738 = vsel %vm2668, %v2618, 0
        %2740 = vmatprep.subr.bf16.mxu0 0
        %2741 = vmatpush1.bf16.msra.mxu0 0
        %2742 = vmatprep.subr.bf16.mxu0 0
        %2743 = vmatpush1.bf16.msra.mxu0 0
        %2744 = vmatprep.subr.bf16.mxu0 0
        %2745 = vmatpush1.bf16.msra.mxu0 0
        %2746 = vmatprep.subr.bf16.mxu0 0
        %2747 = vmatpush1.bf16.msra.mxu0 0
        %2748 = vmatprep.subr.bf16.mxu0 0
        %2749 = vmatpush1.bf16.msra.mxu0 %v2732
        %2750 = vmatprep.subr.bf16.mxu0 0
        %2751 = vmatpush1.bf16.msra.mxu0 %v2731
        %2752 = vmatprep.subr.bf16.mxu0 0
        %2753 = vmatpush1.bf16.msra.mxu0 %v2730
        %2754 = vmatprep.subr.bf16.mxu0 0
        %2755 = vmatpush1.bf16.msra.mxu0 %v2729
        %2756 = vmatprep.subr.bf16.mxu0 0
        %2757 = vmatpush2.bf16.msra.mxu0 0
        %2758 = vmatprep.subr.bf16.mxu0 0
        %2759 = vmatpush2.bf16.msra.mxu0 0
        %2760 = vmatprep.subr.bf16.mxu0 0
        %2761 = vmatpush2.bf16.msra.mxu0 0
        %2762 = vmatprep.subr.bf16.mxu0 0
        %2763 = vmatpush2.bf16.msra.mxu0 0
        %2764 = vmatprep.subr.bf16.mxu0 0
        %2765 = vmatpush2.bf16.msra.mxu0 0
        %2766 = vmatprep.subr.bf16.mxu0 0
        %2767 = vmatpush2.bf16.msra.mxu0 0
        %2768 = vmatprep.subr.bf16.mxu0 0
        %2769 = vmatpush2.bf16.msra.mxu0 0
        %2770 = vmatprep.subr.bf16.mxu0 0
        %2771 = vmatpush2.bf16.msra.mxu0 0
        %2772 = vmatprep.mubr.bf16.mxu0 0
        %2773 = vmatmul.mubr.bf16.gmra.mxu0 %v2738
        %v2774 = vpop.f32.mrf.mxu0
        %v2775 = vadd.f32 %v2707, %v2774
        %v2776 = vpop.f32.mrf.mxu0
        %v2777 = vpop.f32.mrf.mxu0
        %v2778 = vadd.f32 %v2710, %v2777
        %v2779 = vpop.f32.mrf.mxu0
        %2780 = vdwg.mxu0
        %s2781 = scalar_lea.vmem %s10, 64
        %v2782 = vld [vmem:[%s2781] sm:$0xf]
        %v2783 = vld [vmem:[%s2781 + $0x4] sm:$0xf]
        %v2784 = vld [vmem:[%s2781 + $0x8] sm:$0xf]
        %v2785 = vld [vmem:[%s2781 + $0xc] sm:$0xf]
        %v2786 = vld [vmem:[%s2781 + $0x10] sm:$0xf]
        %v2787 = vld [vmem:[%s2781 + $0x14] sm:$0xf]
        %v2788 = vld [vmem:[%s2781 + $0x18] sm:$0xf]
        %v2789 = vld [vmem:[%s2781 + $0x1c] sm:$0xf]
        %v2798 = vunpack.c.l.b16 %v2782
        %v2799 = vunpack.c.l.b16 %v2783
        %v2800 = vunpack.c.l.b16 %v2784
        %v2801 = vunpack.c.l.b16 %v2785
        %v2802 = vunpack.c.l.b16 %v2786
        %v2803 = vunpack.c.l.b16 %v2787
        %v2804 = vunpack.c.l.b16 %v2788
        %v2805 = vunpack.c.l.b16 %v2789
        %v2806 = vpack.c.b16 %v2799, %v2798
        %v2807 = vpack.c.b16 %v2801, %v2800
        %v2808 = vpack.c.b16 %v2803, %v2802
        %v2809 = vpack.c.b16 %v2805, %v2804
        %v2815 = vsel %vm2668, %v2620, 0
        %2817 = vmatprep.subr.bf16.mxu0 0
        %2818 = vmatpush1.bf16.msra.mxu0 0
        %2819 = vmatprep.subr.bf16.mxu0 0
        %2820 = vmatpush1.bf16.msra.mxu0 0
        %2821 = vmatprep.subr.bf16.mxu0 0
        %2822 = vmatpush1.bf16.msra.mxu0 0
        %2823 = vmatprep.subr.bf16.mxu0 0
        %2824 = vmatpush1.bf16.msra.mxu0 0
        %2825 = vmatprep.subr.bf16.mxu0 0
        %2826 = vmatpush1.bf16.msra.mxu0 %v2809
        %2827 = vmatprep.subr.bf16.mxu0 0
        %2828 = vmatpush1.bf16.msra.mxu0 %v2808
        %2829 = vmatprep.subr.bf16.mxu0 0
        %2830 = vmatpush1.bf16.msra.mxu0 %v2807
        %2831 = vmatprep.subr.bf16.mxu0 0
        %2832 = vmatpush1.bf16.msra.mxu0 %v2806
        %2833 = vmatprep.subr.bf16.mxu0 0
        %2834 = vmatpush2.bf16.msra.mxu0 0
        %2835 = vmatprep.subr.bf16.mxu0 0
        %2836 = vmatpush2.bf16.msra.mxu0 0
        %2837 = vmatprep.subr.bf16.mxu0 0
        %2838 = vmatpush2.bf16.msra.mxu0 0
        %2839 = vmatprep.subr.bf16.mxu0 0
        %2840 = vmatpush2.bf16.msra.mxu0 0
        %2841 = vmatprep.subr.bf16.mxu0 0
        %2842 = vmatpush2.bf16.msra.mxu0 0
        %2843 = vmatprep.subr.bf16.mxu0 0
        %2844 = vmatpush2.bf16.msra.mxu0 0
        %2845 = vmatprep.subr.bf16.mxu0 0
        %2846 = vmatpush2.bf16.msra.mxu0 0
        %2847 = vmatprep.subr.bf16.mxu0 0
        %2848 = vmatpush2.bf16.msra.mxu0 0
        %2849 = vmatprep.mubr.bf16.mxu0 0
        %2850 = vmatmul.mubr.bf16.gmra.mxu0 %v2815
        %v2851 = vpop.f32.mrf.mxu0
        %v2852 = vadd.f32 0.0, %v2851
        %v2853 = vpop.f32.mrf.mxu0
        %v2854 = vpop.f32.mrf.mxu0
        %v2855 = vadd.f32 0.0, %v2854
        %v2856 = vpop.f32.mrf.mxu0
        %2857 = vdwg.mxu0
        %v2858 = vadd.f32 %v2775, %v2852
        %v2859 = vadd.f32 %v2778, %v2855
        %s2860 = scalar_lea.vmem %s10, 96
        %v2861 = vld [vmem:[%s2860] sm:$0xf]
        %v2862 = vld [vmem:[%s2860 + $0x4] sm:$0xf]
        %v2863 = vld [vmem:[%s2860 + $0x8] sm:$0xf]
        %v2864 = vld [vmem:[%s2860 + $0xc] sm:$0xf]
        %v2865 = vld [vmem:[%s2860 + $0x10] sm:$0xf]
        %v2866 = vld [vmem:[%s2860 + $0x14] sm:$0xf]
        %v2867 = vld [vmem:[%s2860 + $0x18] sm:$0xf]
        %v2868 = vld [vmem:[%s2860 + $0x1c] sm:$0xf]
        %v2877 = vunpack.c.l.b16 %v2861
        %v2878 = vunpack.c.l.b16 %v2862
        %v2879 = vunpack.c.l.b16 %v2863
        %v2880 = vunpack.c.l.b16 %v2864
        %v2881 = vunpack.c.l.b16 %v2865
        %v2882 = vunpack.c.l.b16 %v2866
        %v2883 = vunpack.c.l.b16 %v2867
        %v2884 = vunpack.c.l.b16 %v2868
        %v2885 = vpack.c.b16 %v2878, %v2877
        %v2886 = vpack.c.b16 %v2880, %v2879
        %v2887 = vpack.c.b16 %v2882, %v2881
        %v2888 = vpack.c.b16 %v2884, %v2883
        %v2894 = vsel %vm2668, %v2621, 0
        %2896 = vmatprep.subr.bf16.mxu0 0
        %2897 = vmatpush1.bf16.msra.mxu0 0
        %2898 = vmatprep.subr.bf16.mxu0 0
        %2899 = vmatpush1.bf16.msra.mxu0 0
        %2900 = vmatprep.subr.bf16.mxu0 0
        %2901 = vmatpush1.bf16.msra.mxu0 0
        %2902 = vmatprep.subr.bf16.mxu0 0
        %2903 = vmatpush1.bf16.msra.mxu0 0
        %2904 = vmatprep.subr.bf16.mxu0 0
        %2905 = vmatpush1.bf16.msra.mxu0 %v2888
        %2906 = vmatprep.subr.bf16.mxu0 0
        %2907 = vmatpush1.bf16.msra.mxu0 %v2887
        %2908 = vmatprep.subr.bf16.mxu0 0
        %2909 = vmatpush1.bf16.msra.mxu0 %v2886
        %2910 = vmatprep.subr.bf16.mxu0 0
        %2911 = vmatpush1.bf16.msra.mxu0 %v2885
        %2912 = vmatprep.subr.bf16.mxu0 0
        %2913 = vmatpush2.bf16.msra.mxu0 0
        %2914 = vmatprep.subr.bf16.mxu0 0
        %2915 = vmatpush2.bf16.msra.mxu0 0
        %2916 = vmatprep.subr.bf16.mxu0 0
        %2917 = vmatpush2.bf16.msra.mxu0 0
        %2918 = vmatprep.subr.bf16.mxu0 0
        %2919 = vmatpush2.bf16.msra.mxu0 0
        %2920 = vmatprep.subr.bf16.mxu0 0
        %2921 = vmatpush2.bf16.msra.mxu0 0
        %2922 = vmatprep.subr.bf16.mxu0 0
        %2923 = vmatpush2.bf16.msra.mxu0 0
        %2924 = vmatprep.subr.bf16.mxu0 0
        %2925 = vmatpush2.bf16.msra.mxu0 0
        %2926 = vmatprep.subr.bf16.mxu0 0
        %2927 = vmatpush2.bf16.msra.mxu0 0
        %2928 = vmatprep.mubr.bf16.mxu0 0
        %2929 = vmatmul.mubr.bf16.gmra.mxu0 %v2894
        %v2930 = vpop.f32.mrf.mxu0
        %v2931 = vadd.f32 0.0, %v2930
        %v2932 = vpop.f32.mrf.mxu0
        %v2933 = vpop.f32.mrf.mxu0
        %v2934 = vadd.f32 0.0, %v2933
        %v2935 = vpop.f32.mrf.mxu0
        %2936 = vdwg.mxu0
        %v2937 = vadd.f32 %v2858, %v2931
        %v2938 = vadd.f32 %v2859, %v2934
        %s2939 = scalar_lea.vmem %s10, 128
        %v2940 = vld [vmem:[%s2939] sm:$0xf]
        %v2941 = vld [vmem:[%s2939 + $0x4] sm:$0xf]
        %v2942 = vld [vmem:[%s2939 + $0x8] sm:$0xf]
        %v2943 = vld [vmem:[%s2939 + $0xc] sm:$0xf]
        %v2944 = vld [vmem:[%s2939 + $0x10] sm:$0xf]
        %v2945 = vld [vmem:[%s2939 + $0x14] sm:$0xf]
        %v2946 = vld [vmem:[%s2939 + $0x18] sm:$0xf]
        %v2947 = vld [vmem:[%s2939 + $0x1c] sm:$0xf]
        %v2956 = vunpack.c.l.b16 %v2940
        %v2957 = vunpack.c.l.b16 %v2941
        %v2958 = vunpack.c.l.b16 %v2942
        %v2959 = vunpack.c.l.b16 %v2943
        %v2960 = vunpack.c.l.b16 %v2944
        %v2961 = vunpack.c.l.b16 %v2945
        %v2962 = vunpack.c.l.b16 %v2946
        %v2963 = vunpack.c.l.b16 %v2947
        %v2964 = vpack.c.b16 %v2957, %v2956
        %v2965 = vpack.c.b16 %v2959, %v2958
        %v2966 = vpack.c.b16 %v2961, %v2960
        %v2967 = vpack.c.b16 %v2963, %v2962
        %v2973 = vsel %vm2668, %v2622, 0
        %2975 = vmatprep.subr.bf16.mxu0 0
        %2976 = vmatpush1.bf16.msra.mxu0 0
        %2977 = vmatprep.subr.bf16.mxu0 0
        %2978 = vmatpush1.bf16.msra.mxu0 0
        %2979 = vmatprep.subr.bf16.mxu0 0
        %2980 = vmatpush1.bf16.msra.mxu0 0
        %2981 = vmatprep.subr.bf16.mxu0 0
        %2982 = vmatpush1.bf16.msra.mxu0 0
        %2983 = vmatprep.subr.bf16.mxu0 0
        %2984 = vmatpush1.bf16.msra.mxu0 %v2967
        %2985 = vmatprep.subr.bf16.mxu0 0
        %2986 = vmatpush1.bf16.msra.mxu0 %v2966
        %2987 = vmatprep.subr.bf16.mxu0 0
        %2988 = vmatpush1.bf16.msra.mxu0 %v2965
        %2989 = vmatprep.subr.bf16.mxu0 0
        %2990 = vmatpush1.bf16.msra.mxu0 %v2964
        %2991 = vmatprep.subr.bf16.mxu0 0
        %2992 = vmatpush2.bf16.msra.mxu0 0
        %2993 = vmatprep.subr.bf16.mxu0 0
        %2994 = vmatpush2.bf16.msra.mxu0 0
        %2995 = vmatprep.subr.bf16.mxu0 0
        %2996 = vmatpush2.bf16.msra.mxu0 0
        %2997 = vmatprep.subr.bf16.mxu0 0
        %2998 = vmatpush2.bf16.msra.mxu0 0
        %2999 = vmatprep.subr.bf16.mxu0 0
        %3000 = vmatpush2.bf16.msra.mxu0 0
        %3001 = vmatprep.subr.bf16.mxu0 0
        %3002 = vmatpush2.bf16.msra.mxu0 0
        %3003 = vmatprep.subr.bf16.mxu0 0
        %3004 = vmatpush2.bf16.msra.mxu0 0
        %3005 = vmatprep.subr.bf16.mxu0 0
        %3006 = vmatpush2.bf16.msra.mxu0 0
        %3007 = vmatprep.mubr.bf16.mxu0 0
        %3008 = vmatmul.mubr.bf16.gmra.mxu0 %v2973
        %v3009 = vpop.f32.mrf.mxu0
        %v3010 = vadd.f32 0.0, %v3009
        %v3011 = vpop.f32.mrf.mxu0
        %v3012 = vpop.f32.mrf.mxu0
        %v3013 = vadd.f32 0.0, %v3012
        %v3014 = vpop.f32.mrf.mxu0
        %3015 = vdwg.mxu0
        %v3016 = vadd.f32 %v2937, %v3010
        %v3017 = vadd.f32 %v2938, %v3013
        %s3018 = scalar_lea.vmem %s10, 160
        %v3019 = vld [vmem:[%s3018] sm:$0xf]
        %v3020 = vld [vmem:[%s3018 + $0x4] sm:$0xf]
        %v3021 = vld [vmem:[%s3018 + $0x8] sm:$0xf]
        %v3022 = vld [vmem:[%s3018 + $0xc] sm:$0xf]
        %v3023 = vld [vmem:[%s3018 + $0x10] sm:$0xf]
        %v3024 = vld [vmem:[%s3018 + $0x14] sm:$0xf]
        %v3025 = vld [vmem:[%s3018 + $0x18] sm:$0xf]
        %v3026 = vld [vmem:[%s3018 + $0x1c] sm:$0xf]
        %v3035 = vunpack.c.l.b16 %v3019
        %v3036 = vunpack.c.l.b16 %v3020
        %v3037 = vunpack.c.l.b16 %v3021
        %v3038 = vunpack.c.l.b16 %v3022
        %v3039 = vunpack.c.l.b16 %v3023
        %v3040 = vunpack.c.l.b16 %v3024
        %v3041 = vunpack.c.l.b16 %v3025
        %v3042 = vunpack.c.l.b16 %v3026
        %v3043 = vpack.c.b16 %v3036, %v3035
        %v3044 = vpack.c.b16 %v3038, %v3037
        %v3045 = vpack.c.b16 %v3040, %v3039
        %v3046 = vpack.c.b16 %v3042, %v3041
        %v3052 = vsel %vm2668, %v2623, 0
        %3054 = vmatprep.subr.bf16.mxu0 0
        %3055 = vmatpush1.bf16.msra.mxu0 0
        %3056 = vmatprep.subr.bf16.mxu0 0
        %3057 = vmatpush1.bf16.msra.mxu0 0
        %3058 = vmatprep.subr.bf16.mxu0 0
        %3059 = vmatpush1.bf16.msra.mxu0 0
        %3060 = vmatprep.subr.bf16.mxu0 0
        %3061 = vmatpush1.bf16.msra.mxu0 0
        %3062 = vmatprep.subr.bf16.mxu0 0
        %3063 = vmatpush1.bf16.msra.mxu0 %v3046
        %3064 = vmatprep.subr.bf16.mxu0 0
        %3065 = vmatpush1.bf16.msra.mxu0 %v3045
        %3066 = vmatprep.subr.bf16.mxu0 0
        %3067 = vmatpush1.bf16.msra.mxu0 %v3044
        %3068 = vmatprep.subr.bf16.mxu0 0
        %3069 = vmatpush1.bf16.msra.mxu0 %v3043
        %3070 = vmatprep.subr.bf16.mxu0 0
        %3071 = vmatpush2.bf16.msra.mxu0 0
        %3072 = vmatprep.subr.bf16.mxu0 0
        %3073 = vmatpush2.bf16.msra.mxu0 0
        %3074 = vmatprep.subr.bf16.mxu0 0
        %3075 = vmatpush2.bf16.msra.mxu0 0
        %3076 = vmatprep.subr.bf16.mxu0 0
        %3077 = vmatpush2.bf16.msra.mxu0 0
        %3078 = vmatprep.subr.bf16.mxu0 0
        %3079 = vmatpush2.bf16.msra.mxu0 0
        %3080 = vmatprep.subr.bf16.mxu0 0
        %3081 = vmatpush2.bf16.msra.mxu0 0
        %3082 = vmatprep.subr.bf16.mxu0 0
        %3083 = vmatpush2.bf16.msra.mxu0 0
        %3084 = vmatprep.subr.bf16.mxu0 0
        %3085 = vmatpush2.bf16.msra.mxu0 0
        %3086 = vmatprep.mubr.bf16.mxu0 0
        %3087 = vmatmul.mubr.bf16.gmra.mxu0 %v3052
        %v3088 = vpop.f32.mrf.mxu0
        %v3089 = vadd.f32 0.0, %v3088
        %v3090 = vpop.f32.mrf.mxu0
        %v3091 = vpop.f32.mrf.mxu0
        %v3092 = vadd.f32 0.0, %v3091
        %v3093 = vpop.f32.mrf.mxu0
        %3094 = vdwg.mxu0
        %v3095 = vadd.f32 %v3016, %v3089
        %v3096 = vadd.f32 %v3017, %v3092
        %s3097 = scalar_lea.vmem %s10, 192
        %v3098 = vld [vmem:[%s3097] sm:$0xf]
        %v3099 = vld [vmem:[%s3097 + $0x4] sm:$0xf]
        %v3100 = vld [vmem:[%s3097 + $0x8] sm:$0xf]
        %v3101 = vld [vmem:[%s3097 + $0xc] sm:$0xf]
        %v3102 = vld [vmem:[%s3097 + $0x10] sm:$0xf]
        %v3103 = vld [vmem:[%s3097 + $0x14] sm:$0xf]
        %v3104 = vld [vmem:[%s3097 + $0x18] sm:$0xf]
        %v3105 = vld [vmem:[%s3097 + $0x1c] sm:$0xf]
        %v3114 = vunpack.c.l.b16 %v3098
        %v3115 = vunpack.c.l.b16 %v3099
        %v3116 = vunpack.c.l.b16 %v3100
        %v3117 = vunpack.c.l.b16 %v3101
        %v3118 = vunpack.c.l.b16 %v3102
        %v3119 = vunpack.c.l.b16 %v3103
        %v3120 = vunpack.c.l.b16 %v3104
        %v3121 = vunpack.c.l.b16 %v3105
        %v3122 = vpack.c.b16 %v3115, %v3114
        %v3123 = vpack.c.b16 %v3117, %v3116
        %v3124 = vpack.c.b16 %v3119, %v3118
        %v3125 = vpack.c.b16 %v3121, %v3120
        %v3131 = vsel %vm2668, %v2624, 0
        %3133 = vmatprep.subr.bf16.mxu0 0
        %3134 = vmatpush1.bf16.msra.mxu0 0
        %3135 = vmatprep.subr.bf16.mxu0 0
        %3136 = vmatpush1.bf16.msra.mxu0 0
        %3137 = vmatprep.subr.bf16.mxu0 0
        %3138 = vmatpush1.bf16.msra.mxu0 0
        %3139 = vmatprep.subr.bf16.mxu0 0
        %3140 = vmatpush1.bf16.msra.mxu0 0
        %3141 = vmatprep.subr.bf16.mxu0 0
        %3142 = vmatpush1.bf16.msra.mxu0 %v3125
        %3143 = vmatprep.subr.bf16.mxu0 0
        %3144 = vmatpush1.bf16.msra.mxu0 %v3124
        %3145 = vmatprep.subr.bf16.mxu0 0
        %3146 = vmatpush1.bf16.msra.mxu0 %v3123
        %3147 = vmatprep.subr.bf16.mxu0 0
        %3148 = vmatpush1.bf16.msra.mxu0 %v3122
        %3149 = vmatprep.subr.bf16.mxu0 0
        %3150 = vmatpush2.bf16.msra.mxu0 0
        %3151 = vmatprep.subr.bf16.mxu0 0
        %3152 = vmatpush2.bf16.msra.mxu0 0
        %3153 = vmatprep.subr.bf16.mxu0 0
        %3154 = vmatpush2.bf16.msra.mxu0 0
        %3155 = vmatprep.subr.bf16.mxu0 0
        %3156 = vmatpush2.bf16.msra.mxu0 0
        %3157 = vmatprep.subr.bf16.mxu0 0
        %3158 = vmatpush2.bf16.msra.mxu0 0
        %3159 = vmatprep.subr.bf16.mxu0 0
        %3160 = vmatpush2.bf16.msra.mxu0 0
        %3161 = vmatprep.subr.bf16.mxu0 0
        %3162 = vmatpush2.bf16.msra.mxu0 0
        %3163 = vmatprep.subr.bf16.mxu0 0
        %3164 = vmatpush2.bf16.msra.mxu0 0
        %3165 = vmatprep.mubr.bf16.mxu0 0
        %3166 = vmatmul.mubr.bf16.gmra.mxu0 %v3131
        %v3167 = vpop.f32.mrf.mxu0
        %v3168 = vadd.f32 0.0, %v3167
        %v3169 = vpop.f32.mrf.mxu0
        %v3170 = vpop.f32.mrf.mxu0
        %v3171 = vadd.f32 0.0, %v3170
        %v3172 = vpop.f32.mrf.mxu0
        %3173 = vdwg.mxu0
        %v3174 = vadd.f32 %v3095, %v3168
        %v3175 = vadd.f32 %v3096, %v3171
        %s3176 = scalar_lea.vmem %s10, 224
        %v3177 = vld [vmem:[%s3176] sm:$0xf]
        %v3178 = vld [vmem:[%s3176 + $0x4] sm:$0xf]
        %v3179 = vld [vmem:[%s3176 + $0x8] sm:$0xf]
        %v3180 = vld [vmem:[%s3176 + $0xc] sm:$0xf]
        %v3181 = vld [vmem:[%s3176 + $0x10] sm:$0xf]
        %v3182 = vld [vmem:[%s3176 + $0x14] sm:$0xf]
        %v3183 = vld [vmem:[%s3176 + $0x18] sm:$0xf]
        %v3184 = vld [vmem:[%s3176 + $0x1c] sm:$0xf]
        %v3193 = vunpack.c.l.b16 %v3177
        %v3194 = vunpack.c.l.b16 %v3178
        %v3195 = vunpack.c.l.b16 %v3179
        %v3196 = vunpack.c.l.b16 %v3180
        %v3197 = vunpack.c.l.b16 %v3181
        %v3198 = vunpack.c.l.b16 %v3182
        %v3199 = vunpack.c.l.b16 %v3183
        %v3200 = vunpack.c.l.b16 %v3184
        %v3201 = vpack.c.b16 %v3194, %v3193
        %v3202 = vpack.c.b16 %v3196, %v3195
        %v3203 = vpack.c.b16 %v3198, %v3197
        %v3204 = vpack.c.b16 %v3200, %v3199
        %v3210 = vsel %vm2668, %v2625, 0
        %3212 = vmatprep.subr.bf16.mxu0 0
        %3213 = vmatpush1.bf16.msra.mxu0 0
        %3214 = vmatprep.subr.bf16.mxu0 0
        %3215 = vmatpush1.bf16.msra.mxu0 0
        %3216 = vmatprep.subr.bf16.mxu0 0
        %3217 = vmatpush1.bf16.msra.mxu0 0
        %3218 = vmatprep.subr.bf16.mxu0 0
        %3219 = vmatpush1.bf16.msra.mxu0 0
        %3220 = vmatprep.subr.bf16.mxu0 0
        %3221 = vmatpush1.bf16.msra.mxu0 %v3204
        %3222 = vmatprep.subr.bf16.mxu0 0
        %3223 = vmatpush1.bf16.msra.mxu0 %v3203
        %3224 = vmatprep.subr.bf16.mxu0 0
        %3225 = vmatpush1.bf16.msra.mxu0 %v3202
        %3226 = vmatprep.subr.bf16.mxu0 0
        %3227 = vmatpush1.bf16.msra.mxu0 %v3201
        %3228 = vmatprep.subr.bf16.mxu0 0
        %3229 = vmatpush2.bf16.msra.mxu0 0
        %3230 = vmatprep.subr.bf16.mxu0 0
        %3231 = vmatpush2.bf16.msra.mxu0 0
        %3232 = vmatprep.subr.bf16.mxu0 0
        %3233 = vmatpush2.bf16.msra.mxu0 0
        %3234 = vmatprep.subr.bf16.mxu0 0
        %3235 = vmatpush2.bf16.msra.mxu0 0
        %3236 = vmatprep.subr.bf16.mxu0 0
        %3237 = vmatpush2.bf16.msra.mxu0 0
        %3238 = vmatprep.subr.bf16.mxu0 0
        %3239 = vmatpush2.bf16.msra.mxu0 0
        %3240 = vmatprep.subr.bf16.mxu0 0
        %3241 = vmatpush2.bf16.msra.mxu0 0
        %3242 = vmatprep.subr.bf16.mxu0 0
        %3243 = vmatpush2.bf16.msra.mxu0 0
        %3244 = vmatprep.mubr.bf16.mxu0 0
        %3245 = vmatmul.mubr.bf16.gmra.mxu0 %v3210
        %v3246 = vpop.f32.mrf.mxu0
        %v3247 = vadd.f32 0.0, %v3246
        %v3248 = vpop.f32.mrf.mxu0
        %v3249 = vpop.f32.mrf.mxu0
        %v3250 = vadd.f32 0.0, %v3249
        %v3251 = vpop.f32.mrf.mxu0
        %3252 = vdwg.mxu0
        %v3253 = vadd.f32 %v3174, %v3247
        %v3254 = vadd.f32 %v3175, %v3250
        %s3255 = scalar_lea.vmem %s10, 256
        %v3256 = vld [vmem:[%s3255] sm:$0xf]
        %v3257 = vld [vmem:[%s3255 + $0x4] sm:$0xf]
        %v3258 = vld [vmem:[%s3255 + $0x8] sm:$0xf]
        %v3259 = vld [vmem:[%s3255 + $0xc] sm:$0xf]
        %v3260 = vld [vmem:[%s3255 + $0x10] sm:$0xf]
        %v3261 = vld [vmem:[%s3255 + $0x14] sm:$0xf]
        %v3262 = vld [vmem:[%s3255 + $0x18] sm:$0xf]
        %v3263 = vld [vmem:[%s3255 + $0x1c] sm:$0xf]
        %v3272 = vunpack.c.l.b16 %v3256
        %v3273 = vunpack.c.l.b16 %v3257
        %v3274 = vunpack.c.l.b16 %v3258
        %v3275 = vunpack.c.l.b16 %v3259
        %v3276 = vunpack.c.l.b16 %v3260
        %v3277 = vunpack.c.l.b16 %v3261
        %v3278 = vunpack.c.l.b16 %v3262
        %v3279 = vunpack.c.l.b16 %v3263
        %v3280 = vpack.c.b16 %v3273, %v3272
        %v3281 = vpack.c.b16 %v3275, %v3274
        %v3282 = vpack.c.b16 %v3277, %v3276
        %v3283 = vpack.c.b16 %v3279, %v3278
        %v3289 = vsel %vm2668, %v2626, 0
        %3291 = vmatprep.subr.bf16.mxu0 0
        %3292 = vmatpush1.bf16.msra.mxu0 0
        %3293 = vmatprep.subr.bf16.mxu0 0
        %3294 = vmatpush1.bf16.msra.mxu0 0
        %3295 = vmatprep.subr.bf16.mxu0 0
        %3296 = vmatpush1.bf16.msra.mxu0 0
        %3297 = vmatprep.subr.bf16.mxu0 0
        %3298 = vmatpush1.bf16.msra.mxu0 0
        %3299 = vmatprep.subr.bf16.mxu0 0
        %3300 = vmatpush1.bf16.msra.mxu0 %v3283
        %3301 = vmatprep.subr.bf16.mxu0 0
        %3302 = vmatpush1.bf16.msra.mxu0 %v3282
        %3303 = vmatprep.subr.bf16.mxu0 0
        %3304 = vmatpush1.bf16.msra.mxu0 %v3281
        %3305 = vmatprep.subr.bf16.mxu0 0
        %3306 = vmatpush1.bf16.msra.mxu0 %v3280
        %3307 = vmatprep.subr.bf16.mxu0 0
        %3308 = vmatpush2.bf16.msra.mxu0 0
        %3309 = vmatprep.subr.bf16.mxu0 0
        %3310 = vmatpush2.bf16.msra.mxu0 0
        %3311 = vmatprep.subr.bf16.mxu0 0
        %3312 = vmatpush2.bf16.msra.mxu0 0
        %3313 = vmatprep.subr.bf16.mxu0 0
        %3314 = vmatpush2.bf16.msra.mxu0 0
        %3315 = vmatprep.subr.bf16.mxu0 0
        %3316 = vmatpush2.bf16.msra.mxu0 0
        %3317 = vmatprep.subr.bf16.mxu0 0
        %3318 = vmatpush2.bf16.msra.mxu0 0
        %3319 = vmatprep.subr.bf16.mxu0 0
        %3320 = vmatpush2.bf16.msra.mxu0 0
        %3321 = vmatprep.subr.bf16.mxu0 0
        %3322 = vmatpush2.bf16.msra.mxu0 0
        %3323 = vmatprep.mubr.bf16.mxu0 0
        %3324 = vmatmul.mubr.bf16.gmra.mxu0 %v3289
        %v3325 = vpop.f32.mrf.mxu0
        %v3326 = vadd.f32 0.0, %v3325
        %v3327 = vpop.f32.mrf.mxu0
        %v3328 = vpop.f32.mrf.mxu0
        %v3329 = vadd.f32 0.0, %v3328
        %v3330 = vpop.f32.mrf.mxu0
        %3331 = vdwg.mxu0
        %v3332 = vadd.f32 %v3253, %v3326
        %v3333 = vadd.f32 %v3254, %v3329
        %v3334 = vld [vmem:[%s849] sm:$0xff]
        %v3335 = vpack.c.bf16 %v3334, %v3334
        %v3336 = vld [vmem:[%s11] sm:$0xf]
        %v3337 = vld [vmem:[%s11 + $0x4] sm:$0xf]
        %v3338 = vld [vmem:[%s11 + $0x8] sm:$0xf]
        %v3339 = vld [vmem:[%s11 + $0xc] sm:$0xf]
        %v3340 = vld [vmem:[%s11 + $0x10] sm:$0xf]
        %v3341 = vld [vmem:[%s11 + $0x14] sm:$0xf]
        %v3342 = vld [vmem:[%s11 + $0x18] sm:$0xf]
        %v3343 = vld [vmem:[%s11 + $0x1c] sm:$0xf]
        %v3344 = vld [vmem:[%s11 + $0x20] sm:$0xf]
        %v3345 = vld [vmem:[%s11 + $0x24] sm:$0xf]
        %v3346 = vld [vmem:[%s11 + $0x28] sm:$0xf]
        %v3347 = vld [vmem:[%s11 + $0x2c] sm:$0xf]
        %v3348 = vld [vmem:[%s11 + $0x30] sm:$0xf]
        %v3349 = vld [vmem:[%s11 + $0x34] sm:$0xf]
        %v3350 = vld [vmem:[%s11 + $0x38] sm:$0xf]
        %v3351 = vld [vmem:[%s11 + $0x3c] sm:$0xf]
        %v3352 = vld [vmem:[%s11 + $0x40] sm:$0xf]
        %v3353 = vld [vmem:[%s11 + $0x44] sm:$0xf]
        %v3372 = vunpack.c.l.b16 %v3336
        %v3373 = vunpack.c.l.b16 %v3337
        %v3374 = vunpack.c.l.b16 %v3338
        %v3375 = vunpack.c.l.b16 %v3339
        %v3376 = vunpack.c.l.b16 %v3340
        %v3377 = vunpack.c.l.b16 %v3341
        %v3378 = vunpack.c.l.b16 %v3342
        %v3379 = vunpack.c.l.b16 %v3343
        %v3380 = vunpack.c.l.b16 %v3344
        %v3381 = vunpack.c.l.b16 %v3345
        %v3382 = vunpack.c.l.b16 %v3346
        %v3383 = vunpack.c.l.b16 %v3347
        %v3384 = vunpack.c.l.b16 %v3348
        %v3385 = vunpack.c.l.b16 %v3349
        %v3386 = vunpack.c.l.b16 %v3350
        %v3387 = vunpack.c.l.b16 %v3351
        %v3388 = vunpack.c.l.b16 %v3352
        %v3389 = vunpack.c.l.b16 %v3353
        %v3390 = vpack.c.b16 %v3373, %v3372
        %v3391 = vpack.c.b16 %v3375, %v3374
        %v3392 = vpack.c.b16 %v3377, %v3376
        %v3393 = vpack.c.b16 %v3379, %v3378
        %v3394 = vpack.c.b16 %v3381, %v3380
        %v3395 = vpack.c.b16 %v3383, %v3382
        %v3396 = vpack.c.b16 %v3385, %v3384
        %v3397 = vpack.c.b16 %v3387, %v3386
        %v3398 = vpack.c.b16 %v3389, %v3388
        %v3400 = vsel %vm926, %v3390, 0
        %v3403 = vsel %vm926, %v3391, 0
        %v3406 = vsel %vm926, %v3392, 0
        %v3409 = vsel %vm926, %v3393, 0
        %v3412 = vsel %vm926, %v3394, 0
        %v3415 = vsel %vm926, %v3395, 0
        %v3418 = vsel %vm926, %v3396, 0
        %v3421 = vsel %vm926, %v3397, 0
        %v3424 = vsel %vm926, %v3398, 0
        %v3427 = vsel %vm954, %v3335, 0
        %3429 = vmatprep.subr.bf16.mxu0 0
        %3430 = vmatpush1.bf16.msra.mxu0 0
        %3431 = vmatprep.subr.bf16.mxu0 0
        %3432 = vmatpush1.bf16.msra.mxu0 0
        %3433 = vmatprep.subr.bf16.mxu0 0
        %3434 = vmatpush1.bf16.msra.mxu0 0
        %3435 = vmatprep.subr.bf16.mxu0 0
        %3436 = vmatpush1.bf16.msra.mxu0 0
        %3437 = vmatprep.subr.bf16.mxu0 0
        %3438 = vmatpush1.bf16.msra.mxu0 0
        %3439 = vmatprep.subr.bf16.mxu0 0
        %3440 = vmatpush1.bf16.msra.mxu0 0
        %3441 = vmatprep.subr.bf16.mxu0 0
        %3442 = vmatpush1.bf16.msra.mxu0 0
        %3443 = vmatprep.subr.bf16.mxu0 0
        %3444 = vmatpush1.bf16.msra.mxu0 %v3427
        %3445 = vmatprep.subr.bf16.mxu0 0
        %3446 = vmatpush2.bf16.msra.mxu0 0
        %3447 = vmatprep.subr.bf16.mxu0 0
        %3448 = vmatpush2.bf16.msra.mxu0 0
        %3449 = vmatprep.subr.bf16.mxu0 0
        %3450 = vmatpush2.bf16.msra.mxu0 0
        %3451 = vmatprep.subr.bf16.mxu0 0
        %3452 = vmatpush2.bf16.msra.mxu0 0
        %3453 = vmatprep.subr.bf16.mxu0 0
        %3454 = vmatpush2.bf16.msra.mxu0 0
        %3455 = vmatprep.subr.bf16.mxu0 0
        %3456 = vmatpush2.bf16.msra.mxu0 0
        %3457 = vmatprep.subr.bf16.mxu0 0
        %3458 = vmatpush2.bf16.msra.mxu0 0
        %3459 = vmatprep.subr.bf16.mxu0 0
        %3460 = vmatpush2.bf16.msra.mxu0 0
        %3461 = vmatprep.mubr.bf16.mxu0 0
        %3462 = vmatmul.mubr.bf16.gmra.mxu0 %v3400
        %v3463 = vpop.f32.mrf.mxu0
        %v3464 = vadd.f32 0.0, %v3463
        %v3465 = vpop.f32.mrf.mxu0
        %v3466 = vpop.f32.mrf.mxu0
        %v3467 = vadd.f32 0.0, %v3466
        %v3468 = vpop.f32.mrf.mxu0
        %3469 = vmatprep.mubr.bf16.mxu0 0
        %3470 = vmatmul.mubr.bf16.gmra.mxu0 %v3403
        %v3471 = vpop.f32.mrf.mxu0
        %v3472 = vadd.f32 0.0, %v3471
        %v3473 = vpop.f32.mrf.mxu0
        %v3474 = vpop.f32.mrf.mxu0
        %v3475 = vadd.f32 0.0, %v3474
        %v3476 = vpop.f32.mrf.mxu0
        %3477 = vmatprep.mubr.bf16.mxu0 0
        %3478 = vmatmul.mubr.bf16.gmra.mxu0 %v3406
        %v3479 = vpop.f32.mrf.mxu0
        %v3480 = vadd.f32 0.0, %v3479
        %v3481 = vpop.f32.mrf.mxu0
        %v3482 = vpop.f32.mrf.mxu0
        %v3483 = vadd.f32 0.0, %v3482
        %v3484 = vpop.f32.mrf.mxu0
        %3485 = vmatprep.mubr.bf16.mxu0 0
        %3486 = vmatmul.mubr.bf16.gmra.mxu0 %v3409
        %v3487 = vpop.f32.mrf.mxu0
        %v3488 = vadd.f32 0.0, %v3487
        %v3489 = vpop.f32.mrf.mxu0
        %v3490 = vpop.f32.mrf.mxu0
        %v3491 = vadd.f32 0.0, %v3490
        %v3492 = vpop.f32.mrf.mxu0
        %3493 = vmatprep.mubr.bf16.mxu0 0
        %3494 = vmatmul.mubr.bf16.gmra.mxu0 %v3412
        %v3495 = vpop.f32.mrf.mxu0
        %v3496 = vadd.f32 0.0, %v3495
        %v3497 = vpop.f32.mrf.mxu0
        %v3498 = vpop.f32.mrf.mxu0
        %v3499 = vadd.f32 0.0, %v3498
        %v3500 = vpop.f32.mrf.mxu0
        %3501 = vmatprep.mubr.bf16.mxu0 0
        %3502 = vmatmul.mubr.bf16.gmra.mxu0 %v3415
        %v3503 = vpop.f32.mrf.mxu0
        %v3504 = vadd.f32 0.0, %v3503
        %v3505 = vpop.f32.mrf.mxu0
        %v3506 = vpop.f32.mrf.mxu0
        %v3507 = vadd.f32 0.0, %v3506
        %v3508 = vpop.f32.mrf.mxu0
        %3509 = vmatprep.mubr.bf16.mxu0 0
        %3510 = vmatmul.mubr.bf16.gmra.mxu0 %v3418
        %v3511 = vpop.f32.mrf.mxu0
        %v3512 = vadd.f32 0.0, %v3511
        %v3513 = vpop.f32.mrf.mxu0
        %v3514 = vpop.f32.mrf.mxu0
        %v3515 = vadd.f32 0.0, %v3514
        %v3516 = vpop.f32.mrf.mxu0
        %3517 = vmatprep.mubr.bf16.mxu0 0
        %3518 = vmatmul.mubr.bf16.gmra.mxu0 %v3421
        %v3519 = vpop.f32.mrf.mxu0
        %v3520 = vadd.f32 0.0, %v3519
        %v3521 = vpop.f32.mrf.mxu0
        %v3522 = vpop.f32.mrf.mxu0
        %v3523 = vadd.f32 0.0, %v3522
        %v3524 = vpop.f32.mrf.mxu0
        %3525 = vmatprep.mubr.bf16.mxu0 0
        %3526 = vmatmul.mubr.bf16.gmra.mxu0 %v3424
        %v3527 = vpop.f32.mrf.mxu0
        %v3528 = vadd.f32 0.0, %v3527
        %v3529 = vpop.f32.mrf.mxu0
        %v3530 = vpop.f32.mrf.mxu0
        %v3531 = vadd.f32 0.0, %v3530
        %v3532 = vpop.f32.mrf.mxu0
        %3533 = vdwg.mxu0
        %v3534 = vpack.c.bf16 %v3467, %v3464
        %v3535 = vpack.c.bf16 %v3475, %v3472
        %v3536 = vpack.c.bf16 %v3483, %v3480
        %v3537 = vpack.c.bf16 %v3491, %v3488
        %v3538 = vpack.c.bf16 %v3499, %v3496
        %v3539 = vpack.c.bf16 %v3507, %v3504
        %v3540 = vpack.c.bf16 %v3515, %v3512
        %v3541 = vpack.c.bf16 %v3523, %v3520
        %v3542 = vpack.c.bf16 %v3531, %v3528
        %v3543 = vld [vmem:[%s12] sm:$0xf]
        %v3544 = vld [vmem:[%s12 + $0x4] sm:$0xf]
        %v3545 = vld [vmem:[%s12 + $0x8] sm:$0xf]
        %v3546 = vld [vmem:[%s12 + $0xc] sm:$0xf]
        %v3547 = vld [vmem:[%s12 + $0x10] sm:$0xf]
        %v3548 = vld [vmem:[%s12 + $0x14] sm:$0xf]
        %v3549 = vld [vmem:[%s12 + $0x18] sm:$0xf]
        %v3550 = vld [vmem:[%s12 + $0x1c] sm:$0xf]
        %v3551 = vld [vmem:[%s12 + $0x20] sm:$0xf]
        %v3552 = vld [vmem:[%s12 + $0x24] sm:$0xf]
        %v3553 = vld [vmem:[%s12 + $0x28] sm:$0xf]
        %v3554 = vld [vmem:[%s12 + $0x2c] sm:$0xf]
        %v3555 = vld [vmem:[%s12 + $0x30] sm:$0x3]
        %v3569 = vunpack.c.l.b16 %v3543
        %v3570 = vunpack.c.l.b16 %v3544
        %v3571 = vunpack.c.l.b16 %v3545
        %v3572 = vunpack.c.l.b16 %v3546
        %v3573 = vunpack.c.l.b16 %v3547
        %v3574 = vunpack.c.l.b16 %v3548
        %v3575 = vunpack.c.l.b16 %v3549
        %v3576 = vunpack.c.l.b16 %v3550
        %v3577 = vunpack.c.l.b16 %v3551
        %v3578 = vunpack.c.l.b16 %v3552
        %v3579 = vunpack.c.l.b16 %v3553
        %v3580 = vunpack.c.l.b16 %v3554
        %v3581 = vunpack.c.l.b16 %v3555
        %v3582 = vpack.c.b16 %v3570, %v3569
        %v3583 = vpack.c.b16 %v3572, %v3571
        %v3584 = vpack.c.b16 %v3574, %v3573
        %v3585 = vpack.c.b16 %v3576, %v3575
        %v3586 = vpack.c.b16 %v3578, %v3577
        %v3587 = vpack.c.b16 %v3580, %v3579
        %v3588 = vpack.c.b16 %v3581, %v3581
        %vm3595 = vcmask 818176
        %v3597 = vsel %vm3595, %v3534, 0
        %v3600 = vsel %vm1656, %v3588, 0
        %3602 = vmatprep.subr.bf16.mxu0 0
        %3603 = vmatpush1.bf16.msra.mxu0 0
        %3604 = vmatprep.subr.bf16.mxu0 0
        %3605 = vmatpush1.bf16.msra.mxu0 %v3600
        %3606 = vmatprep.subr.bf16.mxu0 0
        %3607 = vmatpush1.bf16.msra.mxu0 %v3587
        %3608 = vmatprep.subr.bf16.mxu0 0
        %3609 = vmatpush1.bf16.msra.mxu0 %v3586
        %3610 = vmatprep.subr.bf16.mxu0 0
        %3611 = vmatpush1.bf16.msra.mxu0 %v3585
        %3612 = vmatprep.subr.bf16.mxu0 0
        %3613 = vmatpush1.bf16.msra.mxu0 %v3584
        %3614 = vmatprep.subr.bf16.mxu0 0
        %3615 = vmatpush1.bf16.msra.mxu0 %v3583
        %3616 = vmatprep.subr.bf16.mxu0 0
        %3617 = vmatpush1.bf16.msra.mxu0 %v3582
        %3618 = vmatprep.subr.bf16.mxu0 0
        %3619 = vmatpush2.bf16.msra.mxu0 0
        %3620 = vmatprep.subr.bf16.mxu0 0
        %3621 = vmatpush2.bf16.msra.mxu0 0
        %3622 = vmatprep.subr.bf16.mxu0 0
        %3623 = vmatpush2.bf16.msra.mxu0 0
        %3624 = vmatprep.subr.bf16.mxu0 0
        %3625 = vmatpush2.bf16.msra.mxu0 0
        %3626 = vmatprep.subr.bf16.mxu0 0
        %3627 = vmatpush2.bf16.msra.mxu0 0
        %3628 = vmatprep.subr.bf16.mxu0 0
        %3629 = vmatpush2.bf16.msra.mxu0 0
        %3630 = vmatprep.subr.bf16.mxu0 0
        %3631 = vmatpush2.bf16.msra.mxu0 0
        %3632 = vmatprep.subr.bf16.mxu0 0
        %3633 = vmatpush2.bf16.msra.mxu0 0
        %3634 = vmatprep.mubr.bf16.mxu0 0
        %3635 = vmatmul.mubr.bf16.gmra.mxu0 %v3597
        %v3636 = vpop.f32.mrf.mxu0
        %v3637 = vadd.f32 0.0, %v3636
        %v3638 = vpop.f32.mrf.mxu0
        %v3639 = vpop.f32.mrf.mxu0
        %v3640 = vadd.f32 0.0, %v3639
        %v3641 = vpop.f32.mrf.mxu0
        %3642 = vdwg.mxu0
        %v3643 = vadd.f32 %v3332, %v3637
        %v3644 = vadd.f32 %v3333, %v3640
        %s3645 = scalar_lea.vmem %s12, 52
        %v3646 = vld [vmem:[%s3645] sm:$0xf]
        %v3647 = vld [vmem:[%s3645 + $0x4] sm:$0xf]
        %v3648 = vld [vmem:[%s3645 + $0x8] sm:$0xf]
        %v3649 = vld [vmem:[%s3645 + $0xc] sm:$0xf]
        %v3650 = vld [vmem:[%s3645 + $0x10] sm:$0xf]
        %v3651 = vld [vmem:[%s3645 + $0x14] sm:$0xf]
        %v3652 = vld [vmem:[%s3645 + $0x18] sm:$0xf]
        %v3653 = vld [vmem:[%s3645 + $0x1c] sm:$0xf]
        %v3654 = vld [vmem:[%s3645 + $0x20] sm:$0xf]
        %v3655 = vld [vmem:[%s3645 + $0x24] sm:$0xf]
        %v3656 = vld [vmem:[%s3645 + $0x28] sm:$0xf]
        %v3657 = vld [vmem:[%s3645 + $0x2c] sm:$0xf]
        %v3658 = vld [vmem:[%s3645 + $0x30] sm:$0x3]
        %v3672 = vunpack.c.l.b16 %v3646
        %v3673 = vunpack.c.l.b16 %v3647
        %v3674 = vunpack.c.l.b16 %v3648
        %v3675 = vunpack.c.l.b16 %v3649
        %v3676 = vunpack.c.l.b16 %v3650
        %v3677 = vunpack.c.l.b16 %v3651
        %v3678 = vunpack.c.l.b16 %v3652
        %v3679 = vunpack.c.l.b16 %v3653
        %v3680 = vunpack.c.l.b16 %v3654
        %v3681 = vunpack.c.l.b16 %v3655
        %v3682 = vunpack.c.l.b16 %v3656
        %v3683 = vunpack.c.l.b16 %v3657
        %v3684 = vunpack.c.l.b16 %v3658
        %v3685 = vpack.c.b16 %v3673, %v3672
        %v3686 = vpack.c.b16 %v3675, %v3674
        %v3687 = vpack.c.b16 %v3677, %v3676
        %v3688 = vpack.c.b16 %v3679, %v3678
        %v3689 = vpack.c.b16 %v3681, %v3680
        %v3690 = vpack.c.b16 %v3683, %v3682
        %v3691 = vpack.c.b16 %v3684, %v3684
        %v3699 = vsel %vm3595, %v3535, 0
        %v3702 = vsel %vm1656, %v3691, 0
        %3704 = vmatprep.subr.bf16.mxu0 0
        %3705 = vmatpush1.bf16.msra.mxu0 0
        %3706 = vmatprep.subr.bf16.mxu0 0
        %3707 = vmatpush1.bf16.msra.mxu0 %v3702
        %3708 = vmatprep.subr.bf16.mxu0 0
        %3709 = vmatpush1.bf16.msra.mxu0 %v3690
        %3710 = vmatprep.subr.bf16.mxu0 0
        %3711 = vmatpush1.bf16.msra.mxu0 %v3689
        %3712 = vmatprep.subr.bf16.mxu0 0
        %3713 = vmatpush1.bf16.msra.mxu0 %v3688
        %3714 = vmatprep.subr.bf16.mxu0 0
        %3715 = vmatpush1.bf16.msra.mxu0 %v3687
        %3716 = vmatprep.subr.bf16.mxu0 0
        %3717 = vmatpush1.bf16.msra.mxu0 %v3686
        %3718 = vmatprep.subr.bf16.mxu0 0
        %3719 = vmatpush1.bf16.msra.mxu0 %v3685
        %3720 = vmatprep.subr.bf16.mxu0 0
        %3721 = vmatpush2.bf16.msra.mxu0 0
        %3722 = vmatprep.subr.bf16.mxu0 0
        %3723 = vmatpush2.bf16.msra.mxu0 0
        %3724 = vmatprep.subr.bf16.mxu0 0
        %3725 = vmatpush2.bf16.msra.mxu0 0
        %3726 = vmatprep.subr.bf16.mxu0 0
        %3727 = vmatpush2.bf16.msra.mxu0 0
        %3728 = vmatprep.subr.bf16.mxu0 0
        %3729 = vmatpush2.bf16.msra.mxu0 0
        %3730 = vmatprep.subr.bf16.mxu0 0
        %3731 = vmatpush2.bf16.msra.mxu0 0
        %3732 = vmatprep.subr.bf16.mxu0 0
        %3733 = vmatpush2.bf16.msra.mxu0 0
        %3734 = vmatprep.subr.bf16.mxu0 0
        %3735 = vmatpush2.bf16.msra.mxu0 0
        %3736 = vmatprep.mubr.bf16.mxu0 0
        %3737 = vmatmul.mubr.bf16.gmra.mxu0 %v3699
        %v3738 = vpop.f32.mrf.mxu0
        %v3739 = vadd.f32 0.0, %v3738
        %v3740 = vpop.f32.mrf.mxu0
        %v3741 = vpop.f32.mrf.mxu0
        %v3742 = vadd.f32 0.0, %v3741
        %v3743 = vpop.f32.mrf.mxu0
        %3744 = vdwg.mxu0
        %v3745 = vadd.f32 %v3643, %v3739
        %v3746 = vadd.f32 %v3644, %v3742
        %s3747 = scalar_lea.vmem %s12, 104
        %v3748 = vld [vmem:[%s3747] sm:$0xf]
        %v3749 = vld [vmem:[%s3747 + $0x4] sm:$0xf]
        %v3750 = vld [vmem:[%s3747 + $0x8] sm:$0xf]
        %v3751 = vld [vmem:[%s3747 + $0xc] sm:$0xf]
        %v3752 = vld [vmem:[%s3747 + $0x10] sm:$0xf]
        %v3753 = vld [vmem:[%s3747 + $0x14] sm:$0xf]
        %v3754 = vld [vmem:[%s3747 + $0x18] sm:$0xf]
        %v3755 = vld [vmem:[%s3747 + $0x1c] sm:$0xf]
        %v3756 = vld [vmem:[%s3747 + $0x20] sm:$0xf]
        %v3757 = vld [vmem:[%s3747 + $0x24] sm:$0xf]
        %v3758 = vld [vmem:[%s3747 + $0x28] sm:$0xf]
        %v3759 = vld [vmem:[%s3747 + $0x2c] sm:$0xf]
        %v3760 = vld [vmem:[%s3747 + $0x30] sm:$0x3]
        %v3774 = vunpack.c.l.b16 %v3748
        %v3775 = vunpack.c.l.b16 %v3749
        %v3776 = vunpack.c.l.b16 %v3750
        %v3777 = vunpack.c.l.b16 %v3751
        %v3778 = vunpack.c.l.b16 %v3752
        %v3779 = vunpack.c.l.b16 %v3753
        %v3780 = vunpack.c.l.b16 %v3754
        %v3781 = vunpack.c.l.b16 %v3755
        %v3782 = vunpack.c.l.b16 %v3756
        %v3783 = vunpack.c.l.b16 %v3757
        %v3784 = vunpack.c.l.b16 %v3758
        %v3785 = vunpack.c.l.b16 %v3759
        %v3786 = vunpack.c.l.b16 %v3760
        %v3787 = vpack.c.b16 %v3775, %v3774
        %v3788 = vpack.c.b16 %v3777, %v3776
        %v3789 = vpack.c.b16 %v3779, %v3778
        %v3790 = vpack.c.b16 %v3781, %v3780
        %v3791 = vpack.c.b16 %v3783, %v3782
        %v3792 = vpack.c.b16 %v3785, %v3784
        %v3793 = vpack.c.b16 %v3786, %v3786
        %v3801 = vsel %vm3595, %v3536, 0
        %v3804 = vsel %vm1656, %v3793, 0
        %3806 = vmatprep.subr.bf16.mxu0 0
        %3807 = vmatpush1.bf16.msra.mxu0 0
        %3808 = vmatprep.subr.bf16.mxu0 0
        %3809 = vmatpush1.bf16.msra.mxu0 %v3804
        %3810 = vmatprep.subr.bf16.mxu0 0
        %3811 = vmatpush1.bf16.msra.mxu0 %v3792
        %3812 = vmatprep.subr.bf16.mxu0 0
        %3813 = vmatpush1.bf16.msra.mxu0 %v3791
        %3814 = vmatprep.subr.bf16.mxu0 0
        %3815 = vmatpush1.bf16.msra.mxu0 %v3790
        %3816 = vmatprep.subr.bf16.mxu0 0
        %3817 = vmatpush1.bf16.msra.mxu0 %v3789
        %3818 = vmatprep.subr.bf16.mxu0 0
        %3819 = vmatpush1.bf16.msra.mxu0 %v3788
        %3820 = vmatprep.subr.bf16.mxu0 0
        %3821 = vmatpush1.bf16.msra.mxu0 %v3787
        %3822 = vmatprep.subr.bf16.mxu0 0
        %3823 = vmatpush2.bf16.msra.mxu0 0
        %3824 = vmatprep.subr.bf16.mxu0 0
        %3825 = vmatpush2.bf16.msra.mxu0 0
        %3826 = vmatprep.subr.bf16.mxu0 0
        %3827 = vmatpush2.bf16.msra.mxu0 0
        %3828 = vmatprep.subr.bf16.mxu0 0
        %3829 = vmatpush2.bf16.msra.mxu0 0
        %3830 = vmatprep.subr.bf16.mxu0 0
        %3831 = vmatpush2.bf16.msra.mxu0 0
        %3832 = vmatprep.subr.bf16.mxu0 0
        %3833 = vmatpush2.bf16.msra.mxu0 0
        %3834 = vmatprep.subr.bf16.mxu0 0
        %3835 = vmatpush2.bf16.msra.mxu0 0
        %3836 = vmatprep.subr.bf16.mxu0 0
        %3837 = vmatpush2.bf16.msra.mxu0 0
        %3838 = vmatprep.mubr.bf16.mxu0 0
        %3839 = vmatmul.mubr.bf16.gmra.mxu0 %v3801
        %v3840 = vpop.f32.mrf.mxu0
        %v3841 = vadd.f32 0.0, %v3840
        %v3842 = vpop.f32.mrf.mxu0
        %v3843 = vpop.f32.mrf.mxu0
        %v3844 = vadd.f32 0.0, %v3843
        %v3845 = vpop.f32.mrf.mxu0
        %3846 = vdwg.mxu0
        %v3847 = vadd.f32 %v3745, %v3841
        %v3848 = vadd.f32 %v3746, %v3844
        %s3849 = scalar_lea.vmem %s12, 156
        %v3850 = vld [vmem:[%s3849] sm:$0xf]
        %v3851 = vld [vmem:[%s3849 + $0x4] sm:$0xf]
        %v3852 = vld [vmem:[%s3849 + $0x8] sm:$0xf]
        %v3853 = vld [vmem:[%s3849 + $0xc] sm:$0xf]
        %v3854 = vld [vmem:[%s3849 + $0x10] sm:$0xf]
        %v3855 = vld [vmem:[%s3849 + $0x14] sm:$0xf]
        %v3856 = vld [vmem:[%s3849 + $0x18] sm:$0xf]
        %v3857 = vld [vmem:[%s3849 + $0x1c] sm:$0xf]
        %v3858 = vld [vmem:[%s3849 + $0x20] sm:$0xf]
        %v3859 = vld [vmem:[%s3849 + $0x24] sm:$0xf]
        %v3860 = vld [vmem:[%s3849 + $0x28] sm:$0xf]
        %v3861 = vld [vmem:[%s3849 + $0x2c] sm:$0xf]
        %v3862 = vld [vmem:[%s3849 + $0x30] sm:$0x3]
        %v3876 = vunpack.c.l.b16 %v3850
        %v3877 = vunpack.c.l.b16 %v3851
        %v3878 = vunpack.c.l.b16 %v3852
        %v3879 = vunpack.c.l.b16 %v3853
        %v3880 = vunpack.c.l.b16 %v3854
        %v3881 = vunpack.c.l.b16 %v3855
        %v3882 = vunpack.c.l.b16 %v3856
        %v3883 = vunpack.c.l.b16 %v3857
        %v3884 = vunpack.c.l.b16 %v3858
        %v3885 = vunpack.c.l.b16 %v3859
        %v3886 = vunpack.c.l.b16 %v3860
        %v3887 = vunpack.c.l.b16 %v3861
        %v3888 = vunpack.c.l.b16 %v3862
        %v3889 = vpack.c.b16 %v3877, %v3876
        %v3890 = vpack.c.b16 %v3879, %v3878
        %v3891 = vpack.c.b16 %v3881, %v3880
        %v3892 = vpack.c.b16 %v3883, %v3882
        %v3893 = vpack.c.b16 %v3885, %v3884
        %v3894 = vpack.c.b16 %v3887, %v3886
        %v3895 = vpack.c.b16 %v3888, %v3888
        %v3903 = vsel %vm3595, %v3537, 0
        %v3906 = vsel %vm1656, %v3895, 0
        %3908 = vmatprep.subr.bf16.mxu0 0
        %3909 = vmatpush1.bf16.msra.mxu0 0
        %3910 = vmatprep.subr.bf16.mxu0 0
        %3911 = vmatpush1.bf16.msra.mxu0 %v3906
        %3912 = vmatprep.subr.bf16.mxu0 0
        %3913 = vmatpush1.bf16.msra.mxu0 %v3894
        %3914 = vmatprep.subr.bf16.mxu0 0
        %3915 = vmatpush1.bf16.msra.mxu0 %v3893
        %3916 = vmatprep.subr.bf16.mxu0 0
        %3917 = vmatpush1.bf16.msra.mxu0 %v3892
        %3918 = vmatprep.subr.bf16.mxu0 0
        %3919 = vmatpush1.bf16.msra.mxu0 %v3891
        %3920 = vmatprep.subr.bf16.mxu0 0
        %3921 = vmatpush1.bf16.msra.mxu0 %v3890
        %3922 = vmatprep.subr.bf16.mxu0 0
        %3923 = vmatpush1.bf16.msra.mxu0 %v3889
        %3924 = vmatprep.subr.bf16.mxu0 0
        %3925 = vmatpush2.bf16.msra.mxu0 0
        %3926 = vmatprep.subr.bf16.mxu0 0
        %3927 = vmatpush2.bf16.msra.mxu0 0
        %3928 = vmatprep.subr.bf16.mxu0 0
        %3929 = vmatpush2.bf16.msra.mxu0 0
        %3930 = vmatprep.subr.bf16.mxu0 0
        %3931 = vmatpush2.bf16.msra.mxu0 0
        %3932 = vmatprep.subr.bf16.mxu0 0
        %3933 = vmatpush2.bf16.msra.mxu0 0
        %3934 = vmatprep.subr.bf16.mxu0 0
        %3935 = vmatpush2.bf16.msra.mxu0 0
        %3936 = vmatprep.subr.bf16.mxu0 0
        %3937 = vmatpush2.bf16.msra.mxu0 0
        %3938 = vmatprep.subr.bf16.mxu0 0
        %3939 = vmatpush2.bf16.msra.mxu0 0
        %3940 = vmatprep.mubr.bf16.mxu0 0
        %3941 = vmatmul.mubr.bf16.gmra.mxu0 %v3903
        %v3942 = vpop.f32.mrf.mxu0
        %v3943 = vadd.f32 0.0, %v3942
        %v3944 = vpop.f32.mrf.mxu0
        %v3945 = vpop.f32.mrf.mxu0
        %v3946 = vadd.f32 0.0, %v3945
        %v3947 = vpop.f32.mrf.mxu0
        %3948 = vdwg.mxu0
        %v3949 = vadd.f32 %v3847, %v3943
        %v3950 = vadd.f32 %v3848, %v3946
        %s3951 = scalar_lea.vmem %s12, 208
        %v3952 = vld [vmem:[%s3951] sm:$0xf]
        %v3953 = vld [vmem:[%s3951 + $0x4] sm:$0xf]
        %v3954 = vld [vmem:[%s3951 + $0x8] sm:$0xf]
        %v3955 = vld [vmem:[%s3951 + $0xc] sm:$0xf]
        %v3956 = vld [vmem:[%s3951 + $0x10] sm:$0xf]
        %v3957 = vld [vmem:[%s3951 + $0x14] sm:$0xf]
        %v3958 = vld [vmem:[%s3951 + $0x18] sm:$0xf]
        %v3959 = vld [vmem:[%s3951 + $0x1c] sm:$0xf]
        %v3960 = vld [vmem:[%s3951 + $0x20] sm:$0xf]
        %v3961 = vld [vmem:[%s3951 + $0x24] sm:$0xf]
        %v3962 = vld [vmem:[%s3951 + $0x28] sm:$0xf]
        %v3963 = vld [vmem:[%s3951 + $0x2c] sm:$0xf]
        %v3964 = vld [vmem:[%s3951 + $0x30] sm:$0x3]
        %v3978 = vunpack.c.l.b16 %v3952
        %v3979 = vunpack.c.l.b16 %v3953
        %v3980 = vunpack.c.l.b16 %v3954
        %v3981 = vunpack.c.l.b16 %v3955
        %v3982 = vunpack.c.l.b16 %v3956
        %v3983 = vunpack.c.l.b16 %v3957
        %v3984 = vunpack.c.l.b16 %v3958
        %v3985 = vunpack.c.l.b16 %v3959
        %v3986 = vunpack.c.l.b16 %v3960
        %v3987 = vunpack.c.l.b16 %v3961
        %v3988 = vunpack.c.l.b16 %v3962
        %v3989 = vunpack.c.l.b16 %v3963
        %v3990 = vunpack.c.l.b16 %v3964
        %v3991 = vpack.c.b16 %v3979, %v3978
        %v3992 = vpack.c.b16 %v3981, %v3980
        %v3993 = vpack.c.b16 %v3983, %v3982
        %v3994 = vpack.c.b16 %v3985, %v3984
        %v3995 = vpack.c.b16 %v3987, %v3986
        %v3996 = vpack.c.b16 %v3989, %v3988
        %v3997 = vpack.c.b16 %v3990, %v3990
        %v4005 = vsel %vm3595, %v3538, 0
        %v4008 = vsel %vm1656, %v3997, 0
        %4010 = vmatprep.subr.bf16.mxu0 0
        %4011 = vmatpush1.bf16.msra.mxu0 0
        %4012 = vmatprep.subr.bf16.mxu0 0
        %4013 = vmatpush1.bf16.msra.mxu0 %v4008
        %4014 = vmatprep.subr.bf16.mxu0 0
        %4015 = vmatpush1.bf16.msra.mxu0 %v3996
        %4016 = vmatprep.subr.bf16.mxu0 0
        %4017 = vmatpush1.bf16.msra.mxu0 %v3995
        %4018 = vmatprep.subr.bf16.mxu0 0
        %4019 = vmatpush1.bf16.msra.mxu0 %v3994
        %4020 = vmatprep.subr.bf16.mxu0 0
        %4021 = vmatpush1.bf16.msra.mxu0 %v3993
        %4022 = vmatprep.subr.bf16.mxu0 0
        %4023 = vmatpush1.bf16.msra.mxu0 %v3992
        %4024 = vmatprep.subr.bf16.mxu0 0
        %4025 = vmatpush1.bf16.msra.mxu0 %v3991
        %4026 = vmatprep.subr.bf16.mxu0 0
        %4027 = vmatpush2.bf16.msra.mxu0 0
        %4028 = vmatprep.subr.bf16.mxu0 0
        %4029 = vmatpush2.bf16.msra.mxu0 0
        %4030 = vmatprep.subr.bf16.mxu0 0
        %4031 = vmatpush2.bf16.msra.mxu0 0
        %4032 = vmatprep.subr.bf16.mxu0 0
        %4033 = vmatpush2.bf16.msra.mxu0 0
        %4034 = vmatprep.subr.bf16.mxu0 0
        %4035 = vmatpush2.bf16.msra.mxu0 0
        %4036 = vmatprep.subr.bf16.mxu0 0
        %4037 = vmatpush2.bf16.msra.mxu0 0
        %4038 = vmatprep.subr.bf16.mxu0 0
        %4039 = vmatpush2.bf16.msra.mxu0 0
        %4040 = vmatprep.subr.bf16.mxu0 0
        %4041 = vmatpush2.bf16.msra.mxu0 0
        %4042 = vmatprep.mubr.bf16.mxu0 0
        %4043 = vmatmul.mubr.bf16.gmra.mxu0 %v4005
        %v4044 = vpop.f32.mrf.mxu0
        %v4045 = vadd.f32 0.0, %v4044
        %v4046 = vpop.f32.mrf.mxu0
        %v4047 = vpop.f32.mrf.mxu0
        %v4048 = vadd.f32 0.0, %v4047
        %v4049 = vpop.f32.mrf.mxu0
        %4050 = vdwg.mxu0
        %v4051 = vadd.f32 %v3949, %v4045
        %v4052 = vadd.f32 %v3950, %v4048
        %s4053 = scalar_lea.vmem %s12, 260
        %v4054 = vld [vmem:[%s4053] sm:$0xf]
        %v4055 = vld [vmem:[%s4053 + $0x4] sm:$0xf]
        %v4056 = vld [vmem:[%s4053 + $0x8] sm:$0xf]
        %v4057 = vld [vmem:[%s4053 + $0xc] sm:$0xf]
        %v4058 = vld [vmem:[%s4053 + $0x10] sm:$0xf]
        %v4059 = vld [vmem:[%s4053 + $0x14] sm:$0xf]
        %v4060 = vld [vmem:[%s4053 + $0x18] sm:$0xf]
        %v4061 = vld [vmem:[%s4053 + $0x1c] sm:$0xf]
        %v4062 = vld [vmem:[%s4053 + $0x20] sm:$0xf]
        %v4063 = vld [vmem:[%s4053 + $0x24] sm:$0xf]
        %v4064 = vld [vmem:[%s4053 + $0x28] sm:$0xf]
        %v4065 = vld [vmem:[%s4053 + $0x2c] sm:$0xf]
        %v4066 = vld [vmem:[%s4053 + $0x30] sm:$0x3]
        %v4080 = vunpack.c.l.b16 %v4054
        %v4081 = vunpack.c.l.b16 %v4055
        %v4082 = vunpack.c.l.b16 %v4056
        %v4083 = vunpack.c.l.b16 %v4057
        %v4084 = vunpack.c.l.b16 %v4058
        %v4085 = vunpack.c.l.b16 %v4059
        %v4086 = vunpack.c.l.b16 %v4060
        %v4087 = vunpack.c.l.b16 %v4061
        %v4088 = vunpack.c.l.b16 %v4062
        %v4089 = vunpack.c.l.b16 %v4063
        %v4090 = vunpack.c.l.b16 %v4064
        %v4091 = vunpack.c.l.b16 %v4065
        %v4092 = vunpack.c.l.b16 %v4066
        %v4093 = vpack.c.b16 %v4081, %v4080
        %v4094 = vpack.c.b16 %v4083, %v4082
        %v4095 = vpack.c.b16 %v4085, %v4084
        %v4096 = vpack.c.b16 %v4087, %v4086
        %v4097 = vpack.c.b16 %v4089, %v4088
        %v4098 = vpack.c.b16 %v4091, %v4090
        %v4099 = vpack.c.b16 %v4092, %v4092
        %v4107 = vsel %vm3595, %v3539, 0
        %v4110 = vsel %vm1656, %v4099, 0
        %4112 = vmatprep.subr.bf16.mxu0 0
        %4113 = vmatpush1.bf16.msra.mxu0 0
        %4114 = vmatprep.subr.bf16.mxu0 0
        %4115 = vmatpush1.bf16.msra.mxu0 %v4110
        %4116 = vmatprep.subr.bf16.mxu0 0
        %4117 = vmatpush1.bf16.msra.mxu0 %v4098
        %4118 = vmatprep.subr.bf16.mxu0 0
        %4119 = vmatpush1.bf16.msra.mxu0 %v4097
        %4120 = vmatprep.subr.bf16.mxu0 0
        %4121 = vmatpush1.bf16.msra.mxu0 %v4096
        %4122 = vmatprep.subr.bf16.mxu0 0
        %4123 = vmatpush1.bf16.msra.mxu0 %v4095
        %4124 = vmatprep.subr.bf16.mxu0 0
        %4125 = vmatpush1.bf16.msra.mxu0 %v4094
        %4126 = vmatprep.subr.bf16.mxu0 0
        %4127 = vmatpush1.bf16.msra.mxu0 %v4093
        %4128 = vmatprep.subr.bf16.mxu0 0
        %4129 = vmatpush2.bf16.msra.mxu0 0
        %4130 = vmatprep.subr.bf16.mxu0 0
        %4131 = vmatpush2.bf16.msra.mxu0 0
        %4132 = vmatprep.subr.bf16.mxu0 0
        %4133 = vmatpush2.bf16.msra.mxu0 0
        %4134 = vmatprep.subr.bf16.mxu0 0
        %4135 = vmatpush2.bf16.msra.mxu0 0
        %4136 = vmatprep.subr.bf16.mxu0 0
        %4137 = vmatpush2.bf16.msra.mxu0 0
        %4138 = vmatprep.subr.bf16.mxu0 0
        %4139 = vmatpush2.bf16.msra.mxu0 0
        %4140 = vmatprep.subr.bf16.mxu0 0
        %4141 = vmatpush2.bf16.msra.mxu0 0
        %4142 = vmatprep.subr.bf16.mxu0 0
        %4143 = vmatpush2.bf16.msra.mxu0 0
        %4144 = vmatprep.mubr.bf16.mxu0 0
        %4145 = vmatmul.mubr.bf16.gmra.mxu0 %v4107
        %v4146 = vpop.f32.mrf.mxu0
        %v4147 = vadd.f32 0.0, %v4146
        %v4148 = vpop.f32.mrf.mxu0
        %v4149 = vpop.f32.mrf.mxu0
        %v4150 = vadd.f32 0.0, %v4149
        %v4151 = vpop.f32.mrf.mxu0
        %4152 = vdwg.mxu0
        %v4153 = vadd.f32 %v4051, %v4147
        %v4154 = vadd.f32 %v4052, %v4150
        %s4155 = scalar_lea.vmem %s12, 312
        %v4156 = vld [vmem:[%s4155] sm:$0xf]
        %v4157 = vld [vmem:[%s4155 + $0x4] sm:$0xf]
        %v4158 = vld [vmem:[%s4155 + $0x8] sm:$0xf]
        %v4159 = vld [vmem:[%s4155 + $0xc] sm:$0xf]
        %v4160 = vld [vmem:[%s4155 + $0x10] sm:$0xf]
        %v4161 = vld [vmem:[%s4155 + $0x14] sm:$0xf]
        %v4162 = vld [vmem:[%s4155 + $0x18] sm:$0xf]
        %v4163 = vld [vmem:[%s4155 + $0x1c] sm:$0xf]
        %v4164 = vld [vmem:[%s4155 + $0x20] sm:$0xf]
        %v4165 = vld [vmem:[%s4155 + $0x24] sm:$0xf]
        %v4166 = vld [vmem:[%s4155 + $0x28] sm:$0xf]
        %v4167 = vld [vmem:[%s4155 + $0x2c] sm:$0xf]
        %v4168 = vld [vmem:[%s4155 + $0x30] sm:$0x3]
        %v4182 = vunpack.c.l.b16 %v4156
        %v4183 = vunpack.c.l.b16 %v4157
        %v4184 = vunpack.c.l.b16 %v4158
        %v4185 = vunpack.c.l.b16 %v4159
        %v4186 = vunpack.c.l.b16 %v4160
        %v4187 = vunpack.c.l.b16 %v4161
        %v4188 = vunpack.c.l.b16 %v4162
        %v4189 = vunpack.c.l.b16 %v4163
        %v4190 = vunpack.c.l.b16 %v4164
        %v4191 = vunpack.c.l.b16 %v4165
        %v4192 = vunpack.c.l.b16 %v4166
        %v4193 = vunpack.c.l.b16 %v4167
        %v4194 = vunpack.c.l.b16 %v4168
        %v4195 = vpack.c.b16 %v4183, %v4182
        %v4196 = vpack.c.b16 %v4185, %v4184
        %v4197 = vpack.c.b16 %v4187, %v4186
        %v4198 = vpack.c.b16 %v4189, %v4188
        %v4199 = vpack.c.b16 %v4191, %v4190
        %v4200 = vpack.c.b16 %v4193, %v4192
        %v4201 = vpack.c.b16 %v4194, %v4194
        %v4209 = vsel %vm3595, %v3540, 0
        %v4212 = vsel %vm1656, %v4201, 0
        %4214 = vmatprep.subr.bf16.mxu0 0
        %4215 = vmatpush1.bf16.msra.mxu0 0
        %4216 = vmatprep.subr.bf16.mxu0 0
        %4217 = vmatpush1.bf16.msra.mxu0 %v4212
        %4218 = vmatprep.subr.bf16.mxu0 0
        %4219 = vmatpush1.bf16.msra.mxu0 %v4200
        %4220 = vmatprep.subr.bf16.mxu0 0
        %4221 = vmatpush1.bf16.msra.mxu0 %v4199
        %4222 = vmatprep.subr.bf16.mxu0 0
        %4223 = vmatpush1.bf16.msra.mxu0 %v4198
        %4224 = vmatprep.subr.bf16.mxu0 0
        %4225 = vmatpush1.bf16.msra.mxu0 %v4197
        %4226 = vmatprep.subr.bf16.mxu0 0
        %4227 = vmatpush1.bf16.msra.mxu0 %v4196
        %4228 = vmatprep.subr.bf16.mxu0 0
        %4229 = vmatpush1.bf16.msra.mxu0 %v4195
        %4230 = vmatprep.subr.bf16.mxu0 0
        %4231 = vmatpush2.bf16.msra.mxu0 0
        %4232 = vmatprep.subr.bf16.mxu0 0
        %4233 = vmatpush2.bf16.msra.mxu0 0
        %4234 = vmatprep.subr.bf16.mxu0 0
        %4235 = vmatpush2.bf16.msra.mxu0 0
        %4236 = vmatprep.subr.bf16.mxu0 0
        %4237 = vmatpush2.bf16.msra.mxu0 0
        %4238 = vmatprep.subr.bf16.mxu0 0
        %4239 = vmatpush2.bf16.msra.mxu0 0
        %4240 = vmatprep.subr.bf16.mxu0 0
        %4241 = vmatpush2.bf16.msra.mxu0 0
        %4242 = vmatprep.subr.bf16.mxu0 0
        %4243 = vmatpush2.bf16.msra.mxu0 0
        %4244 = vmatprep.subr.bf16.mxu0 0
        %4245 = vmatpush2.bf16.msra.mxu0 0
        %4246 = vmatprep.mubr.bf16.mxu0 0
        %4247 = vmatmul.mubr.bf16.gmra.mxu0 %v4209
        %v4248 = vpop.f32.mrf.mxu0
        %v4249 = vadd.f32 0.0, %v4248
        %v4250 = vpop.f32.mrf.mxu0
        %v4251 = vpop.f32.mrf.mxu0
        %v4252 = vadd.f32 0.0, %v4251
        %v4253 = vpop.f32.mrf.mxu0
        %4254 = vdwg.mxu0
        %v4255 = vadd.f32 %v4153, %v4249
        %v4256 = vadd.f32 %v4154, %v4252
        %s4257 = scalar_lea.vmem %s12, 364
        %v4258 = vld [vmem:[%s4257] sm:$0xf]
        %v4259 = vld [vmem:[%s4257 + $0x4] sm:$0xf]
        %v4260 = vld [vmem:[%s4257 + $0x8] sm:$0xf]
        %v4261 = vld [vmem:[%s4257 + $0xc] sm:$0xf]
        %v4262 = vld [vmem:[%s4257 + $0x10] sm:$0xf]
        %v4263 = vld [vmem:[%s4257 + $0x14] sm:$0xf]
        %v4264 = vld [vmem:[%s4257 + $0x18] sm:$0xf]
        %v4265 = vld [vmem:[%s4257 + $0x1c] sm:$0xf]
        %v4266 = vld [vmem:[%s4257 + $0x20] sm:$0xf]
        %v4267 = vld [vmem:[%s4257 + $0x24] sm:$0xf]
        %v4268 = vld [vmem:[%s4257 + $0x28] sm:$0xf]
        %v4269 = vld [vmem:[%s4257 + $0x2c] sm:$0xf]
        %v4270 = vld [vmem:[%s4257 + $0x30] sm:$0x3]
        %v4284 = vunpack.c.l.b16 %v4258
        %v4285 = vunpack.c.l.b16 %v4259
        %v4286 = vunpack.c.l.b16 %v4260
        %v4287 = vunpack.c.l.b16 %v4261
        %v4288 = vunpack.c.l.b16 %v4262
        %v4289 = vunpack.c.l.b16 %v4263
        %v4290 = vunpack.c.l.b16 %v4264
        %v4291 = vunpack.c.l.b16 %v4265
        %v4292 = vunpack.c.l.b16 %v4266
        %v4293 = vunpack.c.l.b16 %v4267
        %v4294 = vunpack.c.l.b16 %v4268
        %v4295 = vunpack.c.l.b16 %v4269
        %v4296 = vunpack.c.l.b16 %v4270
        %v4297 = vpack.c.b16 %v4285, %v4284
        %v4298 = vpack.c.b16 %v4287, %v4286
        %v4299 = vpack.c.b16 %v4289, %v4288
        %v4300 = vpack.c.b16 %v4291, %v4290
        %v4301 = vpack.c.b16 %v4293, %v4292
        %v4302 = vpack.c.b16 %v4295, %v4294
        %v4303 = vpack.c.b16 %v4296, %v4296
        %v4311 = vsel %vm3595, %v3541, 0
        %v4314 = vsel %vm1656, %v4303, 0
        %4316 = vmatprep.subr.bf16.mxu0 0
        %4317 = vmatpush1.bf16.msra.mxu0 0
        %4318 = vmatprep.subr.bf16.mxu0 0
        %4319 = vmatpush1.bf16.msra.mxu0 %v4314
        %4320 = vmatprep.subr.bf16.mxu0 0
        %4321 = vmatpush1.bf16.msra.mxu0 %v4302
        %4322 = vmatprep.subr.bf16.mxu0 0
        %4323 = vmatpush1.bf16.msra.mxu0 %v4301
        %4324 = vmatprep.subr.bf16.mxu0 0
        %4325 = vmatpush1.bf16.msra.mxu0 %v4300
        %4326 = vmatprep.subr.bf16.mxu0 0
        %4327 = vmatpush1.bf16.msra.mxu0 %v4299
        %4328 = vmatprep.subr.bf16.mxu0 0
        %4329 = vmatpush1.bf16.msra.mxu0 %v4298
        %4330 = vmatprep.subr.bf16.mxu0 0
        %4331 = vmatpush1.bf16.msra.mxu0 %v4297
        %4332 = vmatprep.subr.bf16.mxu0 0
        %4333 = vmatpush2.bf16.msra.mxu0 0
        %4334 = vmatprep.subr.bf16.mxu0 0
        %4335 = vmatpush2.bf16.msra.mxu0 0
        %4336 = vmatprep.subr.bf16.mxu0 0
        %4337 = vmatpush2.bf16.msra.mxu0 0
        %4338 = vmatprep.subr.bf16.mxu0 0
        %4339 = vmatpush2.bf16.msra.mxu0 0
        %4340 = vmatprep.subr.bf16.mxu0 0
        %4341 = vmatpush2.bf16.msra.mxu0 0
        %4342 = vmatprep.subr.bf16.mxu0 0
        %4343 = vmatpush2.bf16.msra.mxu0 0
        %4344 = vmatprep.subr.bf16.mxu0 0
        %4345 = vmatpush2.bf16.msra.mxu0 0
        %4346 = vmatprep.subr.bf16.mxu0 0
        %4347 = vmatpush2.bf16.msra.mxu0 0
        %4348 = vmatprep.mubr.bf16.mxu0 0
        %4349 = vmatmul.mubr.bf16.gmra.mxu0 %v4311
        %v4350 = vpop.f32.mrf.mxu0
        %v4351 = vadd.f32 0.0, %v4350
        %v4352 = vpop.f32.mrf.mxu0
        %v4353 = vpop.f32.mrf.mxu0
        %v4354 = vadd.f32 0.0, %v4353
        %v4355 = vpop.f32.mrf.mxu0
        %4356 = vdwg.mxu0
        %v4357 = vadd.f32 %v4255, %v4351
        %v4358 = vadd.f32 %v4256, %v4354
        %s4359 = scalar_lea.vmem %s12, 416
        %v4360 = vld [vmem:[%s4359] sm:$0xf]
        %v4361 = vld [vmem:[%s4359 + $0x4] sm:$0xf]
        %v4362 = vld [vmem:[%s4359 + $0x8] sm:$0xf]
        %v4363 = vld [vmem:[%s4359 + $0xc] sm:$0xf]
        %v4364 = vld [vmem:[%s4359 + $0x10] sm:$0xf]
        %v4365 = vld [vmem:[%s4359 + $0x14] sm:$0xf]
        %v4366 = vld [vmem:[%s4359 + $0x18] sm:$0xf]
        %v4367 = vld [vmem:[%s4359 + $0x1c] sm:$0xf]
        %v4368 = vld [vmem:[%s4359 + $0x20] sm:$0xf]
        %v4369 = vld [vmem:[%s4359 + $0x24] sm:$0xf]
        %v4370 = vld [vmem:[%s4359 + $0x28] sm:$0xf]
        %v4371 = vld [vmem:[%s4359 + $0x2c] sm:$0xf]
        %v4372 = vld [vmem:[%s4359 + $0x30] sm:$0x3]
        %v4386 = vunpack.c.l.b16 %v4360
        %v4387 = vunpack.c.l.b16 %v4361
        %v4388 = vunpack.c.l.b16 %v4362
        %v4389 = vunpack.c.l.b16 %v4363
        %v4390 = vunpack.c.l.b16 %v4364
        %v4391 = vunpack.c.l.b16 %v4365
        %v4392 = vunpack.c.l.b16 %v4366
        %v4393 = vunpack.c.l.b16 %v4367
        %v4394 = vunpack.c.l.b16 %v4368
        %v4395 = vunpack.c.l.b16 %v4369
        %v4396 = vunpack.c.l.b16 %v4370
        %v4397 = vunpack.c.l.b16 %v4371
        %v4398 = vunpack.c.l.b16 %v4372
        %v4399 = vpack.c.b16 %v4387, %v4386
        %v4400 = vpack.c.b16 %v4389, %v4388
        %v4401 = vpack.c.b16 %v4391, %v4390
        %v4402 = vpack.c.b16 %v4393, %v4392
        %v4403 = vpack.c.b16 %v4395, %v4394
        %v4404 = vpack.c.b16 %v4397, %v4396
        %v4405 = vpack.c.b16 %v4398, %v4398
        %v4413 = vsel %vm3595, %v3542, 0
        %v4416 = vsel %vm1656, %v4405, 0
        %4418 = vmatprep.subr.bf16.mxu0 0
        %4419 = vmatpush1.bf16.msra.mxu0 0
        %4420 = vmatprep.subr.bf16.mxu0 0
        %4421 = vmatpush1.bf16.msra.mxu0 %v4416
        %4422 = vmatprep.subr.bf16.mxu0 0
        %4423 = vmatpush1.bf16.msra.mxu0 %v4404
        %4424 = vmatprep.subr.bf16.mxu0 0
        %4425 = vmatpush1.bf16.msra.mxu0 %v4403
        %4426 = vmatprep.subr.bf16.mxu0 0
        %4427 = vmatpush1.bf16.msra.mxu0 %v4402
        %4428 = vmatprep.subr.bf16.mxu0 0
        %4429 = vmatpush1.bf16.msra.mxu0 %v4401
        %4430 = vmatprep.subr.bf16.mxu0 0
        %4431 = vmatpush1.bf16.msra.mxu0 %v4400
        %4432 = vmatprep.subr.bf16.mxu0 0
        %4433 = vmatpush1.bf16.msra.mxu0 %v4399
        %4434 = vmatprep.subr.bf16.mxu0 0
        %4435 = vmatpush2.bf16.msra.mxu0 0
        %4436 = vmatprep.subr.bf16.mxu0 0
        %4437 = vmatpush2.bf16.msra.mxu0 0
        %4438 = vmatprep.subr.bf16.mxu0 0
        %4439 = vmatpush2.bf16.msra.mxu0 0
        %4440 = vmatprep.subr.bf16.mxu0 0
        %4441 = vmatpush2.bf16.msra.mxu0 0
        %4442 = vmatprep.subr.bf16.mxu0 0
        %4443 = vmatpush2.bf16.msra.mxu0 0
        %4444 = vmatprep.subr.bf16.mxu0 0
        %4445 = vmatpush2.bf16.msra.mxu0 0
        %4446 = vmatprep.subr.bf16.mxu0 0
        %4447 = vmatpush2.bf16.msra.mxu0 0
        %4448 = vmatprep.subr.bf16.mxu0 0
        %4449 = vmatpush2.bf16.msra.mxu0 0
        %4450 = vmatprep.mubr.bf16.mxu0 0
        %4451 = vmatmul.mubr.bf16.gmra.mxu0 %v4413
        %v4452 = vpop.f32.mrf.mxu0
        %v4453 = vadd.f32 0.0, %v4452
        %v4454 = vpop.f32.mrf.mxu0
        %v4455 = vpop.f32.mrf.mxu0
        %v4456 = vadd.f32 0.0, %v4455
        %v4457 = vpop.f32.mrf.mxu0
        %4458 = vdwg.mxu0
        %v4459 = vadd.f32 %v4357, %v4453
        %v4460 = vadd.f32 %v4358, %v4456
        %v4461 = vld [vmem:[%s13] sm:$0xff]
        %v4462 = vld [vmem:[%s13 + $0x8] sm:$0xff]
        %4464 = vset.pattern.permute.xlu0 0
        %4465 = vperm.xlu0 %4464, %v4461
        %v4466 = vpop.permute.xlu0 %4465
        %4469 = vset.pattern.permute.xlu0 0
        %4470 = vperm.xlu0 %4469, %v4462
        %v4471 = vpop.permute.xlu0 %4470
        %v4473 = vadd.f32 %v4459, %v4466
        %v4474 = vadd.f32 %v4460, %v4471
        %v4475 = vmul.f32 %v4473, 0.01
        %v4476 = vmul.f32 %v4474, 0.01
        %v4477 = vmax.f32 %v4473, %v4475
        %v4478 = vmax.f32 %v4474, %v4476
        %v4479 = vpack.c.bf16 %v4478, %v4477
        %v4480 = vld [vmem:[%s14] sm:$0xf]
        %v4481 = vld [vmem:[%s14 + $0x4] sm:$0xf]
        %v4482 = vld [vmem:[%s14 + $0x8] sm:$0xf]
        %v4483 = vld [vmem:[%s14 + $0xc] sm:$0xf]
        %v4484 = vld [vmem:[%s14 + $0x10] sm:$0xf]
        %v4485 = vld [vmem:[%s14 + $0x14] sm:$0xf]
        %v4486 = vld [vmem:[%s14 + $0x18] sm:$0xf]
        %v4487 = vld [vmem:[%s14 + $0x1c] sm:$0xf]
        %v4488 = vld [vmem:[%s14 + $0x20] sm:$0xf]
        %v4489 = vld [vmem:[%s14 + $0x24] sm:$0xf]
        %v4490 = vld [vmem:[%s14 + $0x28] sm:$0xf]
        %v4491 = vld [vmem:[%s14 + $0x2c] sm:$0xf]
        %v4492 = vld [vmem:[%s14 + $0x30] sm:$0xf]
        %v4493 = vld [vmem:[%s14 + $0x34] sm:$0xf]
        %v4494 = vld [vmem:[%s14 + $0x38] sm:$0xf]
        %v4495 = vld [vmem:[%s14 + $0x3c] sm:$0xf]
        %v4496 = vld [vmem:[%s14 + $0x40] sm:$0xf]
        %v4497 = vld [vmem:[%s14 + $0x44] sm:$0xf]
        %v4516 = vunpack.c.l.b16 %v4480
        %v4517 = vunpack.c.l.b16 %v4481
        %v4518 = vunpack.c.l.b16 %v4482
        %v4519 = vunpack.c.l.b16 %v4483
        %v4520 = vunpack.c.l.b16 %v4484
        %v4521 = vunpack.c.l.b16 %v4485
        %v4522 = vunpack.c.l.b16 %v4486
        %v4523 = vunpack.c.l.b16 %v4487
        %v4524 = vunpack.c.l.b16 %v4488
        %v4525 = vunpack.c.l.b16 %v4489
        %v4526 = vunpack.c.l.b16 %v4490
        %v4527 = vunpack.c.l.b16 %v4491
        %v4528 = vunpack.c.l.b16 %v4492
        %v4529 = vunpack.c.l.b16 %v4493
        %v4530 = vunpack.c.l.b16 %v4494
        %v4531 = vunpack.c.l.b16 %v4495
        %v4532 = vunpack.c.l.b16 %v4496
        %v4533 = vunpack.c.l.b16 %v4497
        %v4534 = vpack.c.b16 %v4517, %v4516
        %v4535 = vpack.c.b16 %v4519, %v4518
        %v4536 = vpack.c.b16 %v4521, %v4520
        %v4537 = vpack.c.b16 %v4523, %v4522
        %v4538 = vpack.c.b16 %v4525, %v4524
        %v4539 = vpack.c.b16 %v4527, %v4526
        %v4540 = vpack.c.b16 %v4529, %v4528
        %v4541 = vpack.c.b16 %v4531, %v4530
        %v4542 = vpack.c.b16 %v4533, %v4532
        %v4544 = vsel %vm1083, %v4534, 0
        %v4547 = vsel %vm1083, %v4535, 0
        %v4550 = vsel %vm1083, %v4536, 0
        %v4553 = vsel %vm1083, %v4537, 0
        %v4556 = vsel %vm1083, %v4538, 0
        %v4559 = vsel %vm1083, %v4539, 0
        %v4562 = vsel %vm1083, %v4540, 0
        %v4565 = vsel %vm1083, %v4541, 0
        %v4568 = vsel %vm1083, %v4542, 0
        %4570 = vmatprep.subr.bf16.mxu0 0
        %4571 = vmatpush1.bf16.msra.mxu0 0
        %4572 = vmatprep.subr.bf16.mxu0 0
        %4573 = vmatpush1.bf16.msra.mxu0 0
        %4574 = vmatprep.subr.bf16.mxu0 0
        %4575 = vmatpush1.bf16.msra.mxu0 0
        %4576 = vmatprep.subr.bf16.mxu0 0
        %4577 = vmatpush1.bf16.msra.mxu0 0
        %4578 = vmatprep.subr.bf16.mxu0 0
        %4579 = vmatpush1.bf16.msra.mxu0 0
        %4580 = vmatprep.subr.bf16.mxu0 0
        %4581 = vmatpush1.bf16.msra.mxu0 0
        %4582 = vmatprep.subr.bf16.mxu0 0
        %4583 = vmatpush1.bf16.msra.mxu0 0
        %4584 = vmatprep.subr.bf16.mxu0 0
        %4585 = vmatpush1.bf16.msra.mxu0 %v4479
        %4586 = vmatprep.subr.bf16.mxu0 0
        %4587 = vmatpush2.bf16.msra.mxu0 0
        %4588 = vmatprep.subr.bf16.mxu0 0
        %4589 = vmatpush2.bf16.msra.mxu0 0
        %4590 = vmatprep.subr.bf16.mxu0 0
        %4591 = vmatpush2.bf16.msra.mxu0 0
        %4592 = vmatprep.subr.bf16.mxu0 0
        %4593 = vmatpush2.bf16.msra.mxu0 0
        %4594 = vmatprep.subr.bf16.mxu0 0
        %4595 = vmatpush2.bf16.msra.mxu0 0
        %4596 = vmatprep.subr.bf16.mxu0 0
        %4597 = vmatpush2.bf16.msra.mxu0 0
        %4598 = vmatprep.subr.bf16.mxu0 0
        %4599 = vmatpush2.bf16.msra.mxu0 0
        %4600 = vmatprep.subr.bf16.mxu0 0
        %4601 = vmatpush2.bf16.msra.mxu0 0
        %4602 = vmatprep.mubr.bf16.mxu0 0
        %4603 = vmatmul.mubr.bf16.gmra.mxu0 %v4544
        %v4604 = vpop.f32.mrf.mxu0
        %v4605 = vadd.f32 0.0, %v4604
        %v4606 = vpop.f32.mrf.mxu0
        %v4607 = vpop.f32.mrf.mxu0
        %v4608 = vadd.f32 0.0, %v4607
        %v4609 = vpop.f32.mrf.mxu0
        %4610 = vmatprep.mubr.bf16.mxu0 0
        %4611 = vmatmul.mubr.bf16.gmra.mxu0 %v4547
        %v4612 = vpop.f32.mrf.mxu0
        %v4613 = vadd.f32 0.0, %v4612
        %v4614 = vpop.f32.mrf.mxu0
        %v4615 = vpop.f32.mrf.mxu0
        %v4616 = vadd.f32 0.0, %v4615
        %v4617 = vpop.f32.mrf.mxu0
        %4618 = vmatprep.mubr.bf16.mxu0 0
        %4619 = vmatmul.mubr.bf16.gmra.mxu0 %v4550
        %v4620 = vpop.f32.mrf.mxu0
        %v4621 = vadd.f32 0.0, %v4620
        %v4622 = vpop.f32.mrf.mxu0
        %v4623 = vpop.f32.mrf.mxu0
        %v4624 = vadd.f32 0.0, %v4623
        %v4625 = vpop.f32.mrf.mxu0
        %4626 = vmatprep.mubr.bf16.mxu0 0
        %4627 = vmatmul.mubr.bf16.gmra.mxu0 %v4553
        %v4628 = vpop.f32.mrf.mxu0
        %v4629 = vadd.f32 0.0, %v4628
        %v4630 = vpop.f32.mrf.mxu0
        %v4631 = vpop.f32.mrf.mxu0
        %v4632 = vadd.f32 0.0, %v4631
        %v4633 = vpop.f32.mrf.mxu0
        %4634 = vmatprep.mubr.bf16.mxu0 0
        %4635 = vmatmul.mubr.bf16.gmra.mxu0 %v4556
        %v4636 = vpop.f32.mrf.mxu0
        %v4637 = vadd.f32 0.0, %v4636
        %v4638 = vpop.f32.mrf.mxu0
        %v4639 = vpop.f32.mrf.mxu0
        %v4640 = vadd.f32 0.0, %v4639
        %v4641 = vpop.f32.mrf.mxu0
        %4642 = vmatprep.mubr.bf16.mxu0 0
        %4643 = vmatmul.mubr.bf16.gmra.mxu0 %v4559
        %v4644 = vpop.f32.mrf.mxu0
        %v4645 = vadd.f32 0.0, %v4644
        %v4646 = vpop.f32.mrf.mxu0
        %v4647 = vpop.f32.mrf.mxu0
        %v4648 = vadd.f32 0.0, %v4647
        %v4649 = vpop.f32.mrf.mxu0
        %4650 = vmatprep.mubr.bf16.mxu0 0
        %4651 = vmatmul.mubr.bf16.gmra.mxu0 %v4562
        %v4652 = vpop.f32.mrf.mxu0
        %v4653 = vadd.f32 0.0, %v4652
        %v4654 = vpop.f32.mrf.mxu0
        %v4655 = vpop.f32.mrf.mxu0
        %v4656 = vadd.f32 0.0, %v4655
        %v4657 = vpop.f32.mrf.mxu0
        %4658 = vmatprep.mubr.bf16.mxu0 0
        %4659 = vmatmul.mubr.bf16.gmra.mxu0 %v4565
        %v4660 = vpop.f32.mrf.mxu0
        %v4661 = vadd.f32 0.0, %v4660
        %v4662 = vpop.f32.mrf.mxu0
        %v4663 = vpop.f32.mrf.mxu0
        %v4664 = vadd.f32 0.0, %v4663
        %v4665 = vpop.f32.mrf.mxu0
        %4666 = vmatprep.mubr.bf16.mxu0 0
        %4667 = vmatmul.mubr.bf16.gmra.mxu0 %v4568
        %v4668 = vpop.f32.mrf.mxu0
        %v4669 = vadd.f32 0.0, %v4668
        %v4670 = vpop.f32.mrf.mxu0
        %v4671 = vpop.f32.mrf.mxu0
        %v4672 = vadd.f32 0.0, %v4671
        %v4673 = vpop.f32.mrf.mxu0
        %4674 = vdwg.mxu0
        %v4675 = vpack.c.bf16 %v4608, %v4605
        %v4676 = vpack.c.bf16 %v4616, %v4613
        %v4677 = vpack.c.bf16 %v4624, %v4621
        %v4678 = vpack.c.bf16 %v4632, %v4629
        %v4679 = vpack.c.bf16 %v4640, %v4637
        %v4680 = vpack.c.bf16 %v4648, %v4645
        %v4681 = vpack.c.bf16 %v4656, %v4653
        %v4682 = vpack.c.bf16 %v4664, %v4661
        %v4683 = vpack.c.bf16 %v4672, %v4669
        %v4685 = vsel %vm2668, %v4676, 0
        %4687 = vmatprep.subr.bf16.mxu0 0
        %4688 = vmatpush1.bf16.msra.mxu0 0
        %4689 = vmatprep.subr.bf16.mxu0 0
        %4690 = vmatpush1.bf16.msra.mxu0 0
        %4691 = vmatprep.subr.bf16.mxu0 0
        %4692 = vmatpush1.bf16.msra.mxu0 0
        %4693 = vmatprep.subr.bf16.mxu0 0
        %4694 = vmatpush1.bf16.msra.mxu0 0
        %4695 = vmatprep.subr.bf16.mxu0 0
        %4696 = vmatpush1.bf16.msra.mxu0 %v2663
        %4697 = vmatprep.subr.bf16.mxu0 0
        %4698 = vmatpush1.bf16.msra.mxu0 %v2662
        %4699 = vmatprep.subr.bf16.mxu0 0
        %4700 = vmatpush1.bf16.msra.mxu0 %v2661
        %4701 = vmatprep.subr.bf16.mxu0 0
        %4702 = vmatpush1.bf16.msra.mxu0 %v2660
        %4703 = vmatprep.subr.bf16.mxu0 0
        %4704 = vmatpush2.bf16.msra.mxu0 0
        %4705 = vmatprep.subr.bf16.mxu0 0
        %4706 = vmatpush2.bf16.msra.mxu0 0
        %4707 = vmatprep.subr.bf16.mxu0 0
        %4708 = vmatpush2.bf16.msra.mxu0 0
        %4709 = vmatprep.subr.bf16.mxu0 0
        %4710 = vmatpush2.bf16.msra.mxu0 0
        %4711 = vmatprep.subr.bf16.mxu0 0
        %4712 = vmatpush2.bf16.msra.mxu0 0
        %4713 = vmatprep.subr.bf16.mxu0 0
        %4714 = vmatpush2.bf16.msra.mxu0 0
        %4715 = vmatprep.subr.bf16.mxu0 0
        %4716 = vmatpush2.bf16.msra.mxu0 0
        %4717 = vmatprep.subr.bf16.mxu0 0
        %4718 = vmatpush2.bf16.msra.mxu0 0
        %4719 = vmatprep.mubr.bf16.mxu0 0
        %4720 = vmatmul.mubr.bf16.gmra.mxu0 %v4685
        %v4721 = vpop.f32.mrf.mxu0
        %v4722 = vadd.f32 0.0, %v4721
        %v4723 = vpop.f32.mrf.mxu0
        %v4724 = vpop.f32.mrf.mxu0
        %v4725 = vadd.f32 0.0, %v4724
        %v4726 = vpop.f32.mrf.mxu0
        %4727 = vdwg.mxu0
        %v4729 = vsel %vm2668, %v4675, 0
        %4731 = vmatprep.subr.bf16.mxu0 0
        %4732 = vmatpush1.bf16.msra.mxu0 0
        %4733 = vmatprep.subr.bf16.mxu0 0
        %4734 = vmatpush1.bf16.msra.mxu0 0
        %4735 = vmatprep.subr.bf16.mxu0 0
        %4736 = vmatpush1.bf16.msra.mxu0 0
        %4737 = vmatprep.subr.bf16.mxu0 0
        %4738 = vmatpush1.bf16.msra.mxu0 0
        %4739 = vmatprep.subr.bf16.mxu0 0
        %4740 = vmatpush1.bf16.msra.mxu0 %v2732
        %4741 = vmatprep.subr.bf16.mxu0 0
        %4742 = vmatpush1.bf16.msra.mxu0 %v2731
        %4743 = vmatprep.subr.bf16.mxu0 0
        %4744 = vmatpush1.bf16.msra.mxu0 %v2730
        %4745 = vmatprep.subr.bf16.mxu0 0
        %4746 = vmatpush1.bf16.msra.mxu0 %v2729
        %4747 = vmatprep.subr.bf16.mxu0 0
        %4748 = vmatpush2.bf16.msra.mxu0 0
        %4749 = vmatprep.subr.bf16.mxu0 0
        %4750 = vmatpush2.bf16.msra.mxu0 0
        %4751 = vmatprep.subr.bf16.mxu0 0
        %4752 = vmatpush2.bf16.msra.mxu0 0
        %4753 = vmatprep.subr.bf16.mxu0 0
        %4754 = vmatpush2.bf16.msra.mxu0 0
        %4755 = vmatprep.subr.bf16.mxu0 0
        %4756 = vmatpush2.bf16.msra.mxu0 0
        %4757 = vmatprep.subr.bf16.mxu0 0
        %4758 = vmatpush2.bf16.msra.mxu0 0
        %4759 = vmatprep.subr.bf16.mxu0 0
        %4760 = vmatpush2.bf16.msra.mxu0 0
        %4761 = vmatprep.subr.bf16.mxu0 0
        %4762 = vmatpush2.bf16.msra.mxu0 0
        %4763 = vmatprep.mubr.bf16.mxu0 0
        %4764 = vmatmul.mubr.bf16.gmra.mxu0 %v4729
        %v4765 = vpop.f32.mrf.mxu0
        %v4766 = vadd.f32 %v4722, %v4765
        %v4767 = vpop.f32.mrf.mxu0
        %v4768 = vpop.f32.mrf.mxu0
        %v4769 = vadd.f32 %v4725, %v4768
        %v4770 = vpop.f32.mrf.mxu0
        %4771 = vdwg.mxu0
        %v4773 = vsel %vm2668, %v4677, 0
        %4775 = vmatprep.subr.bf16.mxu0 0
        %4776 = vmatpush1.bf16.msra.mxu0 0
        %4777 = vmatprep.subr.bf16.mxu0 0
        %4778 = vmatpush1.bf16.msra.mxu0 0
        %4779 = vmatprep.subr.bf16.mxu0 0
        %4780 = vmatpush1.bf16.msra.mxu0 0
        %4781 = vmatprep.subr.bf16.mxu0 0
        %4782 = vmatpush1.bf16.msra.mxu0 0
        %4783 = vmatprep.subr.bf16.mxu0 0
        %4784 = vmatpush1.bf16.msra.mxu0 %v2809
        %4785 = vmatprep.subr.bf16.mxu0 0
        %4786 = vmatpush1.bf16.msra.mxu0 %v2808
        %4787 = vmatprep.subr.bf16.mxu0 0
        %4788 = vmatpush1.bf16.msra.mxu0 %v2807
        %4789 = vmatprep.subr.bf16.mxu0 0
        %4790 = vmatpush1.bf16.msra.mxu0 %v2806
        %4791 = vmatprep.subr.bf16.mxu0 0
        %4792 = vmatpush2.bf16.msra.mxu0 0
        %4793 = vmatprep.subr.bf16.mxu0 0
        %4794 = vmatpush2.bf16.msra.mxu0 0
        %4795 = vmatprep.subr.bf16.mxu0 0
        %4796 = vmatpush2.bf16.msra.mxu0 0
        %4797 = vmatprep.subr.bf16.mxu0 0
        %4798 = vmatpush2.bf16.msra.mxu0 0
        %4799 = vmatprep.subr.bf16.mxu0 0
        %4800 = vmatpush2.bf16.msra.mxu0 0
        %4801 = vmatprep.subr.bf16.mxu0 0
        %4802 = vmatpush2.bf16.msra.mxu0 0
        %4803 = vmatprep.subr.bf16.mxu0 0
        %4804 = vmatpush2.bf16.msra.mxu0 0
        %4805 = vmatprep.subr.bf16.mxu0 0
        %4806 = vmatpush2.bf16.msra.mxu0 0
        %4807 = vmatprep.mubr.bf16.mxu0 0
        %4808 = vmatmul.mubr.bf16.gmra.mxu0 %v4773
        %v4809 = vpop.f32.mrf.mxu0
        %v4810 = vadd.f32 0.0, %v4809
        %v4811 = vpop.f32.mrf.mxu0
        %v4812 = vpop.f32.mrf.mxu0
        %v4813 = vadd.f32 0.0, %v4812
        %v4814 = vpop.f32.mrf.mxu0
        %4815 = vdwg.mxu0
        %v4816 = vadd.f32 %v4766, %v4810
        %v4817 = vadd.f32 %v4769, %v4813
        %v4819 = vsel %vm2668, %v4678, 0
        %4821 = vmatprep.subr.bf16.mxu0 0
        %4822 = vmatpush1.bf16.msra.mxu0 0
        %4823 = vmatprep.subr.bf16.mxu0 0
        %4824 = vmatpush1.bf16.msra.mxu0 0
        %4825 = vmatprep.subr.bf16.mxu0 0
        %4826 = vmatpush1.bf16.msra.mxu0 0
        %4827 = vmatprep.subr.bf16.mxu0 0
        %4828 = vmatpush1.bf16.msra.mxu0 0
        %4829 = vmatprep.subr.bf16.mxu0 0
        %4830 = vmatpush1.bf16.msra.mxu0 %v2888
        %4831 = vmatprep.subr.bf16.mxu0 0
        %4832 = vmatpush1.bf16.msra.mxu0 %v2887
        %4833 = vmatprep.subr.bf16.mxu0 0
        %4834 = vmatpush1.bf16.msra.mxu0 %v2886
        %4835 = vmatprep.subr.bf16.mxu0 0
        %4836 = vmatpush1.bf16.msra.mxu0 %v2885
        %4837 = vmatprep.subr.bf16.mxu0 0
        %4838 = vmatpush2.bf16.msra.mxu0 0
        %4839 = vmatprep.subr.bf16.mxu0 0
        %4840 = vmatpush2.bf16.msra.mxu0 0
        %4841 = vmatprep.subr.bf16.mxu0 0
        %4842 = vmatpush2.bf16.msra.mxu0 0
        %4843 = vmatprep.subr.bf16.mxu0 0
        %4844 = vmatpush2.bf16.msra.mxu0 0
        %4845 = vmatprep.subr.bf16.mxu0 0
        %4846 = vmatpush2.bf16.msra.mxu0 0
        %4847 = vmatprep.subr.bf16.mxu0 0
        %4848 = vmatpush2.bf16.msra.mxu0 0
        %4849 = vmatprep.subr.bf16.mxu0 0
        %4850 = vmatpush2.bf16.msra.mxu0 0
        %4851 = vmatprep.subr.bf16.mxu0 0
        %4852 = vmatpush2.bf16.msra.mxu0 0
        %4853 = vmatprep.mubr.bf16.mxu0 0
        %4854 = vmatmul.mubr.bf16.gmra.mxu0 %v4819
        %v4855 = vpop.f32.mrf.mxu0
        %v4856 = vadd.f32 0.0, %v4855
        %v4857 = vpop.f32.mrf.mxu0
        %v4858 = vpop.f32.mrf.mxu0
        %v4859 = vadd.f32 0.0, %v4858
        %v4860 = vpop.f32.mrf.mxu0
        %4861 = vdwg.mxu0
        %v4862 = vadd.f32 %v4816, %v4856
        %v4863 = vadd.f32 %v4817, %v4859
        %v4865 = vsel %vm2668, %v4679, 0
        %4867 = vmatprep.subr.bf16.mxu0 0
        %4868 = vmatpush1.bf16.msra.mxu0 0
        %4869 = vmatprep.subr.bf16.mxu0 0
        %4870 = vmatpush1.bf16.msra.mxu0 0
        %4871 = vmatprep.subr.bf16.mxu0 0
        %4872 = vmatpush1.bf16.msra.mxu0 0
        %4873 = vmatprep.subr.bf16.mxu0 0
        %4874 = vmatpush1.bf16.msra.mxu0 0
        %4875 = vmatprep.subr.bf16.mxu0 0
        %4876 = vmatpush1.bf16.msra.mxu0 %v2967
        %4877 = vmatprep.subr.bf16.mxu0 0
        %4878 = vmatpush1.bf16.msra.mxu0 %v2966
        %4879 = vmatprep.subr.bf16.mxu0 0
        %4880 = vmatpush1.bf16.msra.mxu0 %v2965
        %4881 = vmatprep.subr.bf16.mxu0 0
        %4882 = vmatpush1.bf16.msra.mxu0 %v2964
        %4883 = vmatprep.subr.bf16.mxu0 0
        %4884 = vmatpush2.bf16.msra.mxu0 0
        %4885 = vmatprep.subr.bf16.mxu0 0
        %4886 = vmatpush2.bf16.msra.mxu0 0
        %4887 = vmatprep.subr.bf16.mxu0 0
        %4888 = vmatpush2.bf16.msra.mxu0 0
        %4889 = vmatprep.subr.bf16.mxu0 0
        %4890 = vmatpush2.bf16.msra.mxu0 0
        %4891 = vmatprep.subr.bf16.mxu0 0
        %4892 = vmatpush2.bf16.msra.mxu0 0
        %4893 = vmatprep.subr.bf16.mxu0 0
        %4894 = vmatpush2.bf16.msra.mxu0 0
        %4895 = vmatprep.subr.bf16.mxu0 0
        %4896 = vmatpush2.bf16.msra.mxu0 0
        %4897 = vmatprep.subr.bf16.mxu0 0
        %4898 = vmatpush2.bf16.msra.mxu0 0
        %4899 = vmatprep.mubr.bf16.mxu0 0
        %4900 = vmatmul.mubr.bf16.gmra.mxu0 %v4865
        %v4901 = vpop.f32.mrf.mxu0
        %v4902 = vadd.f32 0.0, %v4901
        %v4903 = vpop.f32.mrf.mxu0
        %v4904 = vpop.f32.mrf.mxu0
        %v4905 = vadd.f32 0.0, %v4904
        %v4906 = vpop.f32.mrf.mxu0
        %4907 = vdwg.mxu0
        %v4908 = vadd.f32 %v4862, %v4902
        %v4909 = vadd.f32 %v4863, %v4905
        %v4911 = vsel %vm2668, %v4680, 0
        %4913 = vmatprep.subr.bf16.mxu0 0
        %4914 = vmatpush1.bf16.msra.mxu0 0
        %4915 = vmatprep.subr.bf16.mxu0 0
        %4916 = vmatpush1.bf16.msra.mxu0 0
        %4917 = vmatprep.subr.bf16.mxu0 0
        %4918 = vmatpush1.bf16.msra.mxu0 0
        %4919 = vmatprep.subr.bf16.mxu0 0
        %4920 = vmatpush1.bf16.msra.mxu0 0
        %4921 = vmatprep.subr.bf16.mxu0 0
        %4922 = vmatpush1.bf16.msra.mxu0 %v3046
        %4923 = vmatprep.subr.bf16.mxu0 0
        %4924 = vmatpush1.bf16.msra.mxu0 %v3045
        %4925 = vmatprep.subr.bf16.mxu0 0
        %4926 = vmatpush1.bf16.msra.mxu0 %v3044
        %4927 = vmatprep.subr.bf16.mxu0 0
        %4928 = vmatpush1.bf16.msra.mxu0 %v3043
        %4929 = vmatprep.subr.bf16.mxu0 0
        %4930 = vmatpush2.bf16.msra.mxu0 0
        %4931 = vmatprep.subr.bf16.mxu0 0
        %4932 = vmatpush2.bf16.msra.mxu0 0
        %4933 = vmatprep.subr.bf16.mxu0 0
        %4934 = vmatpush2.bf16.msra.mxu0 0
        %4935 = vmatprep.subr.bf16.mxu0 0
        %4936 = vmatpush2.bf16.msra.mxu0 0
        %4937 = vmatprep.subr.bf16.mxu0 0
        %4938 = vmatpush2.bf16.msra.mxu0 0
        %4939 = vmatprep.subr.bf16.mxu0 0
        %4940 = vmatpush2.bf16.msra.mxu0 0
        %4941 = vmatprep.subr.bf16.mxu0 0
        %4942 = vmatpush2.bf16.msra.mxu0 0
        %4943 = vmatprep.subr.bf16.mxu0 0
        %4944 = vmatpush2.bf16.msra.mxu0 0
        %4945 = vmatprep.mubr.bf16.mxu0 0
        %4946 = vmatmul.mubr.bf16.gmra.mxu0 %v4911
        %v4947 = vpop.f32.mrf.mxu0
        %v4948 = vadd.f32 0.0, %v4947
        %v4949 = vpop.f32.mrf.mxu0
        %v4950 = vpop.f32.mrf.mxu0
        %v4951 = vadd.f32 0.0, %v4950
        %v4952 = vpop.f32.mrf.mxu0
        %4953 = vdwg.mxu0
        %v4954 = vadd.f32 %v4908, %v4948
        %v4955 = vadd.f32 %v4909, %v4951
        %v4957 = vsel %vm2668, %v4681, 0
        %4959 = vmatprep.subr.bf16.mxu0 0
        %4960 = vmatpush1.bf16.msra.mxu0 0
        %4961 = vmatprep.subr.bf16.mxu0 0
        %4962 = vmatpush1.bf16.msra.mxu0 0
        %4963 = vmatprep.subr.bf16.mxu0 0
        %4964 = vmatpush1.bf16.msra.mxu0 0
        %4965 = vmatprep.subr.bf16.mxu0 0
        %4966 = vmatpush1.bf16.msra.mxu0 0
        %4967 = vmatprep.subr.bf16.mxu0 0
        %4968 = vmatpush1.bf16.msra.mxu0 %v3125
        %4969 = vmatprep.subr.bf16.mxu0 0
        %4970 = vmatpush1.bf16.msra.mxu0 %v3124
        %4971 = vmatprep.subr.bf16.mxu0 0
        %4972 = vmatpush1.bf16.msra.mxu0 %v3123
        %4973 = vmatprep.subr.bf16.mxu0 0
        %4974 = vmatpush1.bf16.msra.mxu0 %v3122
        %4975 = vmatprep.subr.bf16.mxu0 0
        %4976 = vmatpush2.bf16.msra.mxu0 0
        %4977 = vmatprep.subr.bf16.mxu0 0
        %4978 = vmatpush2.bf16.msra.mxu0 0
        %4979 = vmatprep.subr.bf16.mxu0 0
        %4980 = vmatpush2.bf16.msra.mxu0 0
        %4981 = vmatprep.subr.bf16.mxu0 0
        %4982 = vmatpush2.bf16.msra.mxu0 0
        %4983 = vmatprep.subr.bf16.mxu0 0
        %4984 = vmatpush2.bf16.msra.mxu0 0
        %4985 = vmatprep.subr.bf16.mxu0 0
        %4986 = vmatpush2.bf16.msra.mxu0 0
        %4987 = vmatprep.subr.bf16.mxu0 0
        %4988 = vmatpush2.bf16.msra.mxu0 0
        %4989 = vmatprep.subr.bf16.mxu0 0
        %4990 = vmatpush2.bf16.msra.mxu0 0
        %4991 = vmatprep.mubr.bf16.mxu0 0
        %4992 = vmatmul.mubr.bf16.gmra.mxu0 %v4957
        %v4993 = vpop.f32.mrf.mxu0
        %v4994 = vadd.f32 0.0, %v4993
        %v4995 = vpop.f32.mrf.mxu0
        %v4996 = vpop.f32.mrf.mxu0
        %v4997 = vadd.f32 0.0, %v4996
        %v4998 = vpop.f32.mrf.mxu0
        %4999 = vdwg.mxu0
        %v5000 = vadd.f32 %v4954, %v4994
        %v5001 = vadd.f32 %v4955, %v4997
        %v5003 = vsel %vm2668, %v4682, 0
        %5005 = vmatprep.subr.bf16.mxu0 0
        %5006 = vmatpush1.bf16.msra.mxu0 0
        %5007 = vmatprep.subr.bf16.mxu0 0
        %5008 = vmatpush1.bf16.msra.mxu0 0
        %5009 = vmatprep.subr.bf16.mxu0 0
        %5010 = vmatpush1.bf16.msra.mxu0 0
        %5011 = vmatprep.subr.bf16.mxu0 0
        %5012 = vmatpush1.bf16.msra.mxu0 0
        %5013 = vmatprep.subr.bf16.mxu0 0
        %5014 = vmatpush1.bf16.msra.mxu0 %v3204
        %5015 = vmatprep.subr.bf16.mxu0 0
        %5016 = vmatpush1.bf16.msra.mxu0 %v3203
        %5017 = vmatprep.subr.bf16.mxu0 0
        %5018 = vmatpush1.bf16.msra.mxu0 %v3202
        %5019 = vmatprep.subr.bf16.mxu0 0
        %5020 = vmatpush1.bf16.msra.mxu0 %v3201
        %5021 = vmatprep.subr.bf16.mxu0 0
        %5022 = vmatpush2.bf16.msra.mxu0 0
        %5023 = vmatprep.subr.bf16.mxu0 0
        %5024 = vmatpush2.bf16.msra.mxu0 0
        %5025 = vmatprep.subr.bf16.mxu0 0
        %5026 = vmatpush2.bf16.msra.mxu0 0
        %5027 = vmatprep.subr.bf16.mxu0 0
        %5028 = vmatpush2.bf16.msra.mxu0 0
        %5029 = vmatprep.subr.bf16.mxu0 0
        %5030 = vmatpush2.bf16.msra.mxu0 0
        %5031 = vmatprep.subr.bf16.mxu0 0
        %5032 = vmatpush2.bf16.msra.mxu0 0
        %5033 = vmatprep.subr.bf16.mxu0 0
        %5034 = vmatpush2.bf16.msra.mxu0 0
        %5035 = vmatprep.subr.bf16.mxu0 0
        %5036 = vmatpush2.bf16.msra.mxu0 0
        %5037 = vmatprep.mubr.bf16.mxu0 0
        %5038 = vmatmul.mubr.bf16.gmra.mxu0 %v5003
        %v5039 = vpop.f32.mrf.mxu0
        %v5040 = vadd.f32 0.0, %v5039
        %v5041 = vpop.f32.mrf.mxu0
        %v5042 = vpop.f32.mrf.mxu0
        %v5043 = vadd.f32 0.0, %v5042
        %v5044 = vpop.f32.mrf.mxu0
        %5045 = vdwg.mxu0
        %v5046 = vadd.f32 %v5000, %v5040
        %v5047 = vadd.f32 %v5001, %v5043
        %v5049 = vsel %vm2668, %v4683, 0
        %5051 = vmatprep.subr.bf16.mxu0 0
        %5052 = vmatpush1.bf16.msra.mxu0 0
        %5053 = vmatprep.subr.bf16.mxu0 0
        %5054 = vmatpush1.bf16.msra.mxu0 0
        %5055 = vmatprep.subr.bf16.mxu0 0
        %5056 = vmatpush1.bf16.msra.mxu0 0
        %5057 = vmatprep.subr.bf16.mxu0 0
        %5058 = vmatpush1.bf16.msra.mxu0 0
        %5059 = vmatprep.subr.bf16.mxu0 0
        %5060 = vmatpush1.bf16.msra.mxu0 %v3283
        %5061 = vmatprep.subr.bf16.mxu0 0
        %5062 = vmatpush1.bf16.msra.mxu0 %v3282
        %5063 = vmatprep.subr.bf16.mxu0 0
        %5064 = vmatpush1.bf16.msra.mxu0 %v3281
        %5065 = vmatprep.subr.bf16.mxu0 0
        %5066 = vmatpush1.bf16.msra.mxu0 %v3280
        %5067 = vmatprep.subr.bf16.mxu0 0
        %5068 = vmatpush2.bf16.msra.mxu0 0
        %5069 = vmatprep.subr.bf16.mxu0 0
        %5070 = vmatpush2.bf16.msra.mxu0 0
        %5071 = vmatprep.subr.bf16.mxu0 0
        %5072 = vmatpush2.bf16.msra.mxu0 0
        %5073 = vmatprep.subr.bf16.mxu0 0
        %5074 = vmatpush2.bf16.msra.mxu0 0
        %5075 = vmatprep.subr.bf16.mxu0 0
        %5076 = vmatpush2.bf16.msra.mxu0 0
        %5077 = vmatprep.subr.bf16.mxu0 0
        %5078 = vmatpush2.bf16.msra.mxu0 0
        %5079 = vmatprep.subr.bf16.mxu0 0
        %5080 = vmatpush2.bf16.msra.mxu0 0
        %5081 = vmatprep.subr.bf16.mxu0 0
        %5082 = vmatpush2.bf16.msra.mxu0 0
        %5083 = vmatprep.mubr.bf16.mxu0 0
        %5084 = vmatmul.mubr.bf16.gmra.mxu0 %v5049
        %v5085 = vpop.f32.mrf.mxu0
        %v5086 = vadd.f32 0.0, %v5085
        %v5087 = vpop.f32.mrf.mxu0
        %v5088 = vpop.f32.mrf.mxu0
        %v5089 = vadd.f32 0.0, %v5088
        %v5090 = vpop.f32.mrf.mxu0
        %5091 = vdwg.mxu0
        %v5092 = vadd.f32 %v5046, %v5086
        %v5093 = vadd.f32 %v5047, %v5089
        %v5094 = vld [vmem:[%s15] sm:$0xff]
        %v5095 = vld [vmem:[%s15 + $0x8] sm:$0xff]
        %5097 = vset.pattern.permute.xlu0 0
        %5098 = vperm.xlu0 %5097, %v5094
        %v5099 = vpop.permute.xlu0 %5098
        %5102 = vset.pattern.permute.xlu0 0
        %5103 = vperm.xlu0 %5102, %v5095
        %v5104 = vpop.permute.xlu0 %5103
        %v5106 = vadd.f32 %v5092, %v5099
        %v5107 = vadd.f32 %v5093, %v5104
        %v5108 = vmul.f32 %v5106, 0.01
        %v5109 = vmul.f32 %v5107, 0.01
        %v5110 = vmax.f32 %v5106, %v5108
        %v5111 = vmax.f32 %v5107, %v5109
        %v5112 = vpack.c.bf16 %v5111, %v5110
        %v5113 = vld [vmem:[%s16] sm:$0xf]
        %v5114 = vld [vmem:[%s16 + $0x4] sm:$0xf]
        %v5115 = vld [vmem:[%s16 + $0x8] sm:$0xf]
        %v5116 = vld [vmem:[%s16 + $0xc] sm:$0xf]
        %v5117 = vld [vmem:[%s16 + $0x10] sm:$0xf]
        %v5118 = vld [vmem:[%s16 + $0x14] sm:$0xf]
        %v5119 = vld [vmem:[%s16 + $0x18] sm:$0xf]
        %v5120 = vld [vmem:[%s16 + $0x1c] sm:$0xf]
        %v5121 = vld [vmem:[%s16 + $0x20] sm:$0xf]
        %v5131 = vunpack.c.l.b16 %v5113
        %v5132 = vunpack.c.l.b16 %v5114
        %v5133 = vunpack.c.l.b16 %v5115
        %v5134 = vunpack.c.l.b16 %v5116
        %v5135 = vunpack.c.l.b16 %v5117
        %v5136 = vunpack.c.l.b16 %v5118
        %v5137 = vunpack.c.l.b16 %v5119
        %v5138 = vunpack.c.l.b16 %v5120
        %v5139 = vunpack.c.l.b16 %v5121
        %v5140 = vpack.c.b16 %v5132, %v5131
        %v5141 = vpack.c.b16 %v5134, %v5133
        %v5142 = vpack.c.b16 %v5136, %v5135
        %v5143 = vpack.c.b16 %v5138, %v5137
        %v5144 = vpack.c.b16 %v5139, %v5139
        %v5146 = vsel %vm1083, %v5140, 0
        %v5149 = vsel %vm1083, %v5141, 0
        %v5152 = vsel %vm1083, %v5142, 0
        %v5155 = vsel %vm1083, %v5143, 0
        %v5158 = vsel %vm1083, %v5144, 0
        %5160 = vmatprep.subr.bf16.mxu0 0
        %5161 = vmatpush1.bf16.msra.mxu0 0
        %5162 = vmatprep.subr.bf16.mxu0 0
        %5163 = vmatpush1.bf16.msra.mxu0 0
        %5164 = vmatprep.subr.bf16.mxu0 0
        %5165 = vmatpush1.bf16.msra.mxu0 0
        %5166 = vmatprep.subr.bf16.mxu0 0
        %5167 = vmatpush1.bf16.msra.mxu0 0
        %5168 = vmatprep.subr.bf16.mxu0 0
        %5169 = vmatpush1.bf16.msra.mxu0 0
        %5170 = vmatprep.subr.bf16.mxu0 0
        %5171 = vmatpush1.bf16.msra.mxu0 0
        %5172 = vmatprep.subr.bf16.mxu0 0
        %5173 = vmatpush1.bf16.msra.mxu0 0
        %5174 = vmatprep.subr.bf16.mxu0 0
        %5175 = vmatpush1.bf16.msra.mxu0 %v5112
        %5176 = vmatprep.subr.bf16.mxu0 0
        %5177 = vmatpush2.bf16.msra.mxu0 0
        %5178 = vmatprep.subr.bf16.mxu0 0
        %5179 = vmatpush2.bf16.msra.mxu0 0
        %5180 = vmatprep.subr.bf16.mxu0 0
        %5181 = vmatpush2.bf16.msra.mxu0 0
        %5182 = vmatprep.subr.bf16.mxu0 0
        %5183 = vmatpush2.bf16.msra.mxu0 0
        %5184 = vmatprep.subr.bf16.mxu0 0
        %5185 = vmatpush2.bf16.msra.mxu0 0
        %5186 = vmatprep.subr.bf16.mxu0 0
        %5187 = vmatpush2.bf16.msra.mxu0 0
        %5188 = vmatprep.subr.bf16.mxu0 0
        %5189 = vmatpush2.bf16.msra.mxu0 0
        %5190 = vmatprep.subr.bf16.mxu0 0
        %5191 = vmatpush2.bf16.msra.mxu0 0
        %5192 = vmatprep.mubr.bf16.mxu0 0
        %5193 = vmatmul.mubr.bf16.gmra.mxu0 %v5146
        %v5194 = vpop.f32.mrf.mxu0
        %v5195 = vadd.f32 0.0, %v5194
        %v5196 = vpop.f32.mrf.mxu0
        %v5197 = vpop.f32.mrf.mxu0
        %v5198 = vadd.f32 0.0, %v5197
        %v5199 = vpop.f32.mrf.mxu0
        %5200 = vmatprep.mubr.bf16.mxu0 0
        %5201 = vmatmul.mubr.bf16.gmra.mxu0 %v5149
        %v5202 = vpop.f32.mrf.mxu0
        %v5203 = vadd.f32 0.0, %v5202
        %v5204 = vpop.f32.mrf.mxu0
        %v5205 = vpop.f32.mrf.mxu0
        %v5206 = vadd.f32 0.0, %v5205
        %v5207 = vpop.f32.mrf.mxu0
        %5208 = vmatprep.mubr.bf16.mxu0 0
        %5209 = vmatmul.mubr.bf16.gmra.mxu0 %v5152
        %v5210 = vpop.f32.mrf.mxu0
        %v5211 = vadd.f32 0.0, %v5210
        %v5212 = vpop.f32.mrf.mxu0
        %v5213 = vpop.f32.mrf.mxu0
        %v5214 = vadd.f32 0.0, %v5213
        %v5215 = vpop.f32.mrf.mxu0
        %5216 = vmatprep.mubr.bf16.mxu0 0
        %5217 = vmatmul.mubr.bf16.gmra.mxu0 %v5155
        %v5218 = vpop.f32.mrf.mxu0
        %v5219 = vadd.f32 0.0, %v5218
        %v5220 = vpop.f32.mrf.mxu0
        %v5221 = vpop.f32.mrf.mxu0
        %v5222 = vadd.f32 0.0, %v5221
        %v5223 = vpop.f32.mrf.mxu0
        %5224 = vmatprep.mubr.bf16.mxu0 0
        %5225 = vmatmul.mubr.bf16.gmra.mxu0 %v5158
        %v5226 = vpop.f32.mrf.mxu0
        %v5227 = vadd.f32 0.0, %v5226
        %v5228 = vpop.f32.mrf.mxu0
        %v5229 = vpop.f32.mrf.mxu0
        %v5230 = vpop.f32.mrf.mxu0
        %5231 = vdwg.mxu0
        %v5232 = vpack.c.bf16 %v5198, %v5195
        %v5233 = vpack.c.bf16 %v5206, %v5203
        %v5234 = vpack.c.bf16 %v5214, %v5211
        %v5235 = vpack.c.bf16 %v5222, %v5219
        %v5236 = vpack.c.bf16 %v5227, %v5227
        %v5237 = vld [vmem:[#allocation6] sm:$0xff]
        %v5238 = vld [vmem:[#allocation6 + $0x8] sm:$0xff]
        %v5239 = vld [vmem:[#allocation6 + $0x10] sm:$0xff]
        %v5240 = vld [vmem:[#allocation6 + $0x18] sm:$0xff]
        %v5241 = vld [vmem:[#allocation6 + $0x20] sm:$0xff]
        %v5242 = vld [vmem:[#allocation6 + $0x28] sm:$0xff]
        %v5243 = vld [vmem:[#allocation6 + $0x30] sm:$0xff]
        %v5244 = vld [vmem:[#allocation6 + $0x38] sm:$0xff]
        %s5245 = scalar_lea.vmem [#allocation6], 64
        %v5246 = vld [vmem:[%s5245] sm:$0xff]
        %v5247 = vld [vmem:[%s5245 + $0x8] sm:$0xff]
        %v5248 = vld [vmem:[%s5245 + $0x10] sm:$0xff]
        %v5249 = vld [vmem:[%s5245 + $0x18] sm:$0xff]
        %v5250 = vld [vmem:[%s5245 + $0x20] sm:$0xff]
        %v5251 = vld [vmem:[%s5245 + $0x28] sm:$0xff]
        %v5252 = vld [vmem:[%s5245 + $0x30] sm:$0xff]
        %v5253 = vld [vmem:[%s5245 + $0x38] sm:$0xff]
        %v5255 = vrot.slane %v5232, 4
        %v5264 = vunpack.c.l.b16 %v5246
        %v5265 = vunpack.c.h.b16 %v5246
        %v5266 = vunpack.c.l.b16 %v5247
        %v5267 = vunpack.c.h.b16 %v5247
        %v5268 = vunpack.c.l.b16 %v5248
        %v5269 = vunpack.c.h.b16 %v5248
        %v5270 = vunpack.c.l.b16 %v5249
        %v5271 = vunpack.c.h.b16 %v5249
        %v5272 = vunpack.c.l.b16 %v5250
        %v5273 = vunpack.c.h.b16 %v5250
        %v5274 = vunpack.c.l.b16 %v5251
        %v5275 = vunpack.c.h.b16 %v5251
        %v5276 = vunpack.c.l.b16 %v5252
        %v5277 = vunpack.c.h.b16 %v5252
        %v5278 = vunpack.c.l.b16 %v5253
        %v5279 = vunpack.c.h.b16 %v5253
        %v5280 = vpack.c.b16 %v5266, %v5264
        %v5281 = vpack.c.b16 %v5267, %v5265
        %v5282 = vpack.c.b16 %v5270, %v5268
        %v5283 = vpack.c.b16 %v5271, %v5269
        %v5284 = vpack.c.b16 %v5274, %v5272
        %v5285 = vpack.c.b16 %v5275, %v5273
        %v5286 = vpack.c.b16 %v5278, %v5276
        %v5287 = vpack.c.b16 %v5279, %v5277
        %v5297 = vsel %vm2668, %v5255, 0
        %5299 = vmatprep.subr.bf16.mxu0 0
        %5300 = vmatpush1.bf16.msra.mxu0 0
        %5301 = vmatprep.subr.bf16.mxu0 0
        %5302 = vmatpush1.bf16.msra.mxu0 0
        %5303 = vmatprep.subr.bf16.mxu0 0
        %5304 = vmatpush1.bf16.msra.mxu0 0
        %5305 = vmatprep.subr.bf16.mxu0 0
        %5306 = vmatpush1.bf16.msra.mxu0 0
        %5307 = vmatprep.subr.bf16.mxu0 %v5287
        %5308 = vmatpush1.bf16.msra.mxu0 %v5286
        %5309 = vmatprep.subr.bf16.mxu0 %v5285
        %5310 = vmatpush1.bf16.msra.mxu0 %v5284
        %5311 = vmatprep.subr.bf16.mxu0 %v5283
        %5312 = vmatpush1.bf16.msra.mxu0 %v5282
        %5313 = vmatprep.subr.bf16.mxu0 %v5281
        %5314 = vmatpush1.bf16.msra.mxu0 %v5280
        %5315 = vmatprep.subr.bf16.mxu0 0
        %5316 = vmatpush2.bf16.msra.mxu0 0
        %5317 = vmatprep.subr.bf16.mxu0 0
        %5318 = vmatpush2.bf16.msra.mxu0 0
        %5319 = vmatprep.subr.bf16.mxu0 0
        %5320 = vmatpush2.bf16.msra.mxu0 0
        %5321 = vmatprep.subr.bf16.mxu0 0
        %5322 = vmatpush2.bf16.msra.mxu0 0
        %5323 = vmatprep.subr.bf16.mxu0 0
        %5324 = vmatpush2.bf16.msra.mxu0 0
        %5325 = vmatprep.subr.bf16.mxu0 0
        %5326 = vmatpush2.bf16.msra.mxu0 0
        %5327 = vmatprep.subr.bf16.mxu0 0
        %5328 = vmatpush2.bf16.msra.mxu0 0
        %5329 = vmatprep.subr.bf16.mxu0 0
        %5330 = vmatpush2.bf16.msra.mxu0 0
        %5331 = vmatprep.mubr.bf16.mxu0 0
        %5332 = vmatmul.mubr.bf16.gmra.mxu0 %v5297
        %v5333 = vpop.f32.mrf.mxu0
        %v5334 = vadd.f32 0.0, %v5333
        %v5335 = vpop.f32.mrf.mxu0
        %v5336 = vadd.f32 0.0, %v5335
        %v5337 = vpop.f32.mrf.mxu0
        %v5338 = vpop.f32.mrf.mxu0
        %5339 = vdwg.mxu0
        %v5348 = vunpack.c.l.b16 %v5237
        %v5349 = vunpack.c.h.b16 %v5237
        %v5350 = vunpack.c.l.b16 %v5238
        %v5351 = vunpack.c.h.b16 %v5238
        %v5352 = vunpack.c.l.b16 %v5239
        %v5353 = vunpack.c.h.b16 %v5239
        %v5354 = vunpack.c.l.b16 %v5240
        %v5355 = vunpack.c.h.b16 %v5240
        %v5356 = vunpack.c.l.b16 %v5241
        %v5357 = vunpack.c.h.b16 %v5241
        %v5358 = vunpack.c.l.b16 %v5242
        %v5359 = vunpack.c.h.b16 %v5242
        %v5360 = vunpack.c.l.b16 %v5243
        %v5361 = vunpack.c.h.b16 %v5243
        %v5362 = vunpack.c.l.b16 %v5244
        %v5363 = vunpack.c.h.b16 %v5244
        %v5364 = vpack.c.b16 %v5350, %v5348
        %v5365 = vpack.c.b16 %v5351, %v5349
        %v5366 = vpack.c.b16 %v5354, %v5352
        %v5367 = vpack.c.b16 %v5355, %v5353
        %v5368 = vpack.c.b16 %v5358, %v5356
        %v5369 = vpack.c.b16 %v5359, %v5357
        %v5370 = vpack.c.b16 %v5362, %v5360
        %v5371 = vpack.c.b16 %v5363, %v5361
        %v5381 = vsel %vm2668, %v5232, 0
        %5383 = vmatprep.subr.bf16.mxu0 0
        %5384 = vmatpush1.bf16.msra.mxu0 0
        %5385 = vmatprep.subr.bf16.mxu0 0
        %5386 = vmatpush1.bf16.msra.mxu0 0
        %5387 = vmatprep.subr.bf16.mxu0 0
        %5388 = vmatpush1.bf16.msra.mxu0 0
        %5389 = vmatprep.subr.bf16.mxu0 0
        %5390 = vmatpush1.bf16.msra.mxu0 0
        %5391 = vmatprep.subr.bf16.mxu0 %v5371
        %5392 = vmatpush1.bf16.msra.mxu0 %v5370
        %5393 = vmatprep.subr.bf16.mxu0 %v5369
        %5394 = vmatpush1.bf16.msra.mxu0 %v5368
        %5395 = vmatprep.subr.bf16.mxu0 %v5367
        %5396 = vmatpush1.bf16.msra.mxu0 %v5366
        %5397 = vmatprep.subr.bf16.mxu0 %v5365
        %5398 = vmatpush1.bf16.msra.mxu0 %v5364
        %5399 = vmatprep.subr.bf16.mxu0 0
        %5400 = vmatpush2.bf16.msra.mxu0 0
        %5401 = vmatprep.subr.bf16.mxu0 0
        %5402 = vmatpush2.bf16.msra.mxu0 0
        %5403 = vmatprep.subr.bf16.mxu0 0
        %5404 = vmatpush2.bf16.msra.mxu0 0
        %5405 = vmatprep.subr.bf16.mxu0 0
        %5406 = vmatpush2.bf16.msra.mxu0 0
        %5407 = vmatprep.subr.bf16.mxu0 0
        %5408 = vmatpush2.bf16.msra.mxu0 0
        %5409 = vmatprep.subr.bf16.mxu0 0
        %5410 = vmatpush2.bf16.msra.mxu0 0
        %5411 = vmatprep.subr.bf16.mxu0 0
        %5412 = vmatpush2.bf16.msra.mxu0 0
        %5413 = vmatprep.subr.bf16.mxu0 0
        %5414 = vmatpush2.bf16.msra.mxu0 0
        %5415 = vmatprep.mubr.bf16.mxu0 0
        %5416 = vmatmul.mubr.bf16.gmra.mxu0 %v5381
        %v5417 = vpop.f32.mrf.mxu0
        %v5418 = vadd.f32 %v5334, %v5417
        %v5419 = vpop.f32.mrf.mxu0
        %v5420 = vadd.f32 %v5336, %v5419
        %v5421 = vpop.f32.mrf.mxu0
        %v5422 = vpop.f32.mrf.mxu0
        %5423 = vdwg.mxu0
        %s5424 = scalar_lea.vmem [#allocation6], 128
        %v5425 = vld [vmem:[%s5424] sm:$0xff]
        %v5426 = vld [vmem:[%s5424 + $0x8] sm:$0xff]
        %v5427 = vld [vmem:[%s5424 + $0x10] sm:$0xff]
        %v5428 = vld [vmem:[%s5424 + $0x18] sm:$0xff]
        %v5429 = vld [vmem:[%s5424 + $0x20] sm:$0xff]
        %v5430 = vld [vmem:[%s5424 + $0x28] sm:$0xff]
        %v5431 = vld [vmem:[%s5424 + $0x30] sm:$0xff]
        %v5432 = vld [vmem:[%s5424 + $0x38] sm:$0xff]
        %v5441 = vunpack.c.l.b16 %v5425
        %v5442 = vunpack.c.h.b16 %v5425
        %v5443 = vunpack.c.l.b16 %v5426
        %v5444 = vunpack.c.h.b16 %v5426
        %v5445 = vunpack.c.l.b16 %v5427
        %v5446 = vunpack.c.h.b16 %v5427
        %v5447 = vunpack.c.l.b16 %v5428
        %v5448 = vunpack.c.h.b16 %v5428
        %v5449 = vunpack.c.l.b16 %v5429
        %v5450 = vunpack.c.h.b16 %v5429
        %v5451 = vunpack.c.l.b16 %v5430
        %v5452 = vunpack.c.h.b16 %v5430
        %v5453 = vunpack.c.l.b16 %v5431
        %v5454 = vunpack.c.h.b16 %v5431
        %v5455 = vunpack.c.l.b16 %v5432
        %v5456 = vunpack.c.h.b16 %v5432
        %v5457 = vpack.c.b16 %v5443, %v5441
        %v5458 = vpack.c.b16 %v5444, %v5442
        %v5459 = vpack.c.b16 %v5447, %v5445
        %v5460 = vpack.c.b16 %v5448, %v5446
        %v5461 = vpack.c.b16 %v5451, %v5449
        %v5462 = vpack.c.b16 %v5452, %v5450
        %v5463 = vpack.c.b16 %v5455, %v5453
        %v5464 = vpack.c.b16 %v5456, %v5454
        %v5474 = vsel %vm2668, %v5233, 0
        %5476 = vmatprep.subr.bf16.mxu0 0
        %5477 = vmatpush1.bf16.msra.mxu0 0
        %5478 = vmatprep.subr.bf16.mxu0 0
        %5479 = vmatpush1.bf16.msra.mxu0 0
        %5480 = vmatprep.subr.bf16.mxu0 0
        %5481 = vmatpush1.bf16.msra.mxu0 0
        %5482 = vmatprep.subr.bf16.mxu0 0
        %5483 = vmatpush1.bf16.msra.mxu0 0
        %5484 = vmatprep.subr.bf16.mxu0 %v5464
        %5485 = vmatpush1.bf16.msra.mxu0 %v5463
        %5486 = vmatprep.subr.bf16.mxu0 %v5462
        %5487 = vmatpush1.bf16.msra.mxu0 %v5461
        %5488 = vmatprep.subr.bf16.mxu0 %v5460
        %5489 = vmatpush1.bf16.msra.mxu0 %v5459
        %5490 = vmatprep.subr.bf16.mxu0 %v5458
        %5491 = vmatpush1.bf16.msra.mxu0 %v5457
        %5492 = vmatprep.subr.bf16.mxu0 0
        %5493 = vmatpush2.bf16.msra.mxu0 0
        %5494 = vmatprep.subr.bf16.mxu0 0
        %5495 = vmatpush2.bf16.msra.mxu0 0
        %5496 = vmatprep.subr.bf16.mxu0 0
        %5497 = vmatpush2.bf16.msra.mxu0 0
        %5498 = vmatprep.subr.bf16.mxu0 0
        %5499 = vmatpush2.bf16.msra.mxu0 0
        %5500 = vmatprep.subr.bf16.mxu0 0
        %5501 = vmatpush2.bf16.msra.mxu0 0
        %5502 = vmatprep.subr.bf16.mxu0 0
        %5503 = vmatpush2.bf16.msra.mxu0 0
        %5504 = vmatprep.subr.bf16.mxu0 0
        %5505 = vmatpush2.bf16.msra.mxu0 0
        %5506 = vmatprep.subr.bf16.mxu0 0
        %5507 = vmatpush2.bf16.msra.mxu0 0
        %5508 = vmatprep.mubr.bf16.mxu0 0
        %5509 = vmatmul.mubr.bf16.gmra.mxu0 %v5474
        %v5510 = vpop.f32.mrf.mxu0
        %v5511 = vadd.f32 0.0, %v5510
        %v5512 = vpop.f32.mrf.mxu0
        %v5513 = vadd.f32 0.0, %v5512
        %v5514 = vpop.f32.mrf.mxu0
        %v5515 = vpop.f32.mrf.mxu0
        %5516 = vdwg.mxu0
        %v5517 = vadd.f32 %v5418, %v5511
        %v5518 = vadd.f32 %v5420, %v5513
        %s5519 = scalar_lea.vmem [#allocation6], 192
        %v5520 = vld [vmem:[%s5519] sm:$0xff]
        %v5521 = vld [vmem:[%s5519 + $0x8] sm:$0xff]
        %v5522 = vld [vmem:[%s5519 + $0x10] sm:$0xff]
        %v5523 = vld [vmem:[%s5519 + $0x18] sm:$0xff]
        %v5524 = vld [vmem:[%s5519 + $0x20] sm:$0xff]
        %v5525 = vld [vmem:[%s5519 + $0x28] sm:$0xff]
        %v5526 = vld [vmem:[%s5519 + $0x30] sm:$0xff]
        %v5527 = vld [vmem:[%s5519 + $0x38] sm:$0xff]
        %v5529 = vrot.slane %v5233, 4
        %v5538 = vunpack.c.l.b16 %v5520
        %v5539 = vunpack.c.h.b16 %v5520
        %v5540 = vunpack.c.l.b16 %v5521
        %v5541 = vunpack.c.h.b16 %v5521
        %v5542 = vunpack.c.l.b16 %v5522
        %v5543 = vunpack.c.h.b16 %v5522
        %v5544 = vunpack.c.l.b16 %v5523
        %v5545 = vunpack.c.h.b16 %v5523
        %v5546 = vunpack.c.l.b16 %v5524
        %v5547 = vunpack.c.h.b16 %v5524
        %v5548 = vunpack.c.l.b16 %v5525
        %v5549 = vunpack.c.h.b16 %v5525
        %v5550 = vunpack.c.l.b16 %v5526
        %v5551 = vunpack.c.h.b16 %v5526
        %v5552 = vunpack.c.l.b16 %v5527
        %v5553 = vunpack.c.h.b16 %v5527
        %v5554 = vpack.c.b16 %v5540, %v5538
        %v5555 = vpack.c.b16 %v5541, %v5539
        %v5556 = vpack.c.b16 %v5544, %v5542
        %v5557 = vpack.c.b16 %v5545, %v5543
        %v5558 = vpack.c.b16 %v5548, %v5546
        %v5559 = vpack.c.b16 %v5549, %v5547
        %v5560 = vpack.c.b16 %v5552, %v5550
        %v5561 = vpack.c.b16 %v5553, %v5551
        %v5571 = vsel %vm2668, %v5529, 0
        %5573 = vmatprep.subr.bf16.mxu0 0
        %5574 = vmatpush1.bf16.msra.mxu0 0
        %5575 = vmatprep.subr.bf16.mxu0 0
        %5576 = vmatpush1.bf16.msra.mxu0 0
        %5577 = vmatprep.subr.bf16.mxu0 0
        %5578 = vmatpush1.bf16.msra.mxu0 0
        %5579 = vmatprep.subr.bf16.mxu0 0
        %5580 = vmatpush1.bf16.msra.mxu0 0
        %5581 = vmatprep.subr.bf16.mxu0 %v5561
        %5582 = vmatpush1.bf16.msra.mxu0 %v5560
        %5583 = vmatprep.subr.bf16.mxu0 %v5559
        %5584 = vmatpush1.bf16.msra.mxu0 %v5558
        %5585 = vmatprep.subr.bf16.mxu0 %v5557
        %5586 = vmatpush1.bf16.msra.mxu0 %v5556
        %5587 = vmatprep.subr.bf16.mxu0 %v5555
        %5588 = vmatpush1.bf16.msra.mxu0 %v5554
        %5589 = vmatprep.subr.bf16.mxu0 0
        %5590 = vmatpush2.bf16.msra.mxu0 0
        %5591 = vmatprep.subr.bf16.mxu0 0
        %5592 = vmatpush2.bf16.msra.mxu0 0
        %5593 = vmatprep.subr.bf16.mxu0 0
        %5594 = vmatpush2.bf16.msra.mxu0 0
        %5595 = vmatprep.subr.bf16.mxu0 0
        %5596 = vmatpush2.bf16.msra.mxu0 0
        %5597 = vmatprep.subr.bf16.mxu0 0
        %5598 = vmatpush2.bf16.msra.mxu0 0
        %5599 = vmatprep.subr.bf16.mxu0 0
        %5600 = vmatpush2.bf16.msra.mxu0 0
        %5601 = vmatprep.subr.bf16.mxu0 0
        %5602 = vmatpush2.bf16.msra.mxu0 0
        %5603 = vmatprep.subr.bf16.mxu0 0
        %5604 = vmatpush2.bf16.msra.mxu0 0
        %5605 = vmatprep.mubr.bf16.mxu0 0
        %5606 = vmatmul.mubr.bf16.gmra.mxu0 %v5571
        %v5607 = vpop.f32.mrf.mxu0
        %v5608 = vadd.f32 0.0, %v5607
        %v5609 = vpop.f32.mrf.mxu0
        %v5610 = vadd.f32 0.0, %v5609
        %v5611 = vpop.f32.mrf.mxu0
        %v5612 = vpop.f32.mrf.mxu0
        %5613 = vdwg.mxu0
        %v5614 = vadd.f32 %v5517, %v5608
        %v5615 = vadd.f32 %v5518, %v5610
        %s5616 = scalar_lea.vmem [#allocation6], 256
        %v5617 = vld [vmem:[%s5616] sm:$0xff]
        %v5618 = vld [vmem:[%s5616 + $0x8] sm:$0xff]
        %v5619 = vld [vmem:[%s5616 + $0x10] sm:$0xff]
        %v5620 = vld [vmem:[%s5616 + $0x18] sm:$0xff]
        %v5621 = vld [vmem:[%s5616 + $0x20] sm:$0xff]
        %v5622 = vld [vmem:[%s5616 + $0x28] sm:$0xff]
        %v5623 = vld [vmem:[%s5616 + $0x30] sm:$0xff]
        %v5624 = vld [vmem:[%s5616 + $0x38] sm:$0xff]
        %v5633 = vunpack.c.l.b16 %v5617
        %v5634 = vunpack.c.h.b16 %v5617
        %v5635 = vunpack.c.l.b16 %v5618
        %v5636 = vunpack.c.h.b16 %v5618
        %v5637 = vunpack.c.l.b16 %v5619
        %v5638 = vunpack.c.h.b16 %v5619
        %v5639 = vunpack.c.l.b16 %v5620
        %v5640 = vunpack.c.h.b16 %v5620
        %v5641 = vunpack.c.l.b16 %v5621
        %v5642 = vunpack.c.h.b16 %v5621
        %v5643 = vunpack.c.l.b16 %v5622
        %v5644 = vunpack.c.h.b16 %v5622
        %v5645 = vunpack.c.l.b16 %v5623
        %v5646 = vunpack.c.h.b16 %v5623
        %v5647 = vunpack.c.l.b16 %v5624
        %v5648 = vunpack.c.h.b16 %v5624
        %v5649 = vpack.c.b16 %v5635, %v5633
        %v5650 = vpack.c.b16 %v5636, %v5634
        %v5651 = vpack.c.b16 %v5639, %v5637
        %v5652 = vpack.c.b16 %v5640, %v5638
        %v5653 = vpack.c.b16 %v5643, %v5641
        %v5654 = vpack.c.b16 %v5644, %v5642
        %v5655 = vpack.c.b16 %v5647, %v5645
        %v5656 = vpack.c.b16 %v5648, %v5646
        %v5666 = vsel %vm2668, %v5234, 0
        %5668 = vmatprep.subr.bf16.mxu0 0
        %5669 = vmatpush1.bf16.msra.mxu0 0
        %5670 = vmatprep.subr.bf16.mxu0 0
        %5671 = vmatpush1.bf16.msra.mxu0 0
        %5672 = vmatprep.subr.bf16.mxu0 0
        %5673 = vmatpush1.bf16.msra.mxu0 0
        %5674 = vmatprep.subr.bf16.mxu0 0
        %5675 = vmatpush1.bf16.msra.mxu0 0
        %5676 = vmatprep.subr.bf16.mxu0 %v5656
        %5677 = vmatpush1.bf16.msra.mxu0 %v5655
        %5678 = vmatprep.subr.bf16.mxu0 %v5654
        %5679 = vmatpush1.bf16.msra.mxu0 %v5653
        %5680 = vmatprep.subr.bf16.mxu0 %v5652
        %5681 = vmatpush1.bf16.msra.mxu0 %v5651
        %5682 = vmatprep.subr.bf16.mxu0 %v5650
        %5683 = vmatpush1.bf16.msra.mxu0 %v5649
        %5684 = vmatprep.subr.bf16.mxu0 0
        %5685 = vmatpush2.bf16.msra.mxu0 0
        %5686 = vmatprep.subr.bf16.mxu0 0
        %5687 = vmatpush2.bf16.msra.mxu0 0
        %5688 = vmatprep.subr.bf16.mxu0 0
        %5689 = vmatpush2.bf16.msra.mxu0 0
        %5690 = vmatprep.subr.bf16.mxu0 0
        %5691 = vmatpush2.bf16.msra.mxu0 0
        %5692 = vmatprep.subr.bf16.mxu0 0
        %5693 = vmatpush2.bf16.msra.mxu0 0
        %5694 = vmatprep.subr.bf16.mxu0 0
        %5695 = vmatpush2.bf16.msra.mxu0 0
        %5696 = vmatprep.subr.bf16.mxu0 0
        %5697 = vmatpush2.bf16.msra.mxu0 0
        %5698 = vmatprep.subr.bf16.mxu0 0
        %5699 = vmatpush2.bf16.msra.mxu0 0
        %5700 = vmatprep.mubr.bf16.mxu0 0
        %5701 = vmatmul.mubr.bf16.gmra.mxu0 %v5666
        %v5702 = vpop.f32.mrf.mxu0
        %v5703 = vadd.f32 0.0, %v5702
        %v5704 = vpop.f32.mrf.mxu0
        %v5705 = vadd.f32 0.0, %v5704
        %v5706 = vpop.f32.mrf.mxu0
        %v5707 = vpop.f32.mrf.mxu0
        %5708 = vdwg.mxu0
        %v5709 = vadd.f32 %v5614, %v5703
        %v5710 = vadd.f32 %v5615, %v5705
        %s5711 = scalar_lea.vmem [#allocation6], 320
        %v5712 = vld [vmem:[%s5711] sm:$0xff]
        %v5713 = vld [vmem:[%s5711 + $0x8] sm:$0xff]
        %v5714 = vld [vmem:[%s5711 + $0x10] sm:$0xff]
        %v5715 = vld [vmem:[%s5711 + $0x18] sm:$0xff]
        %v5716 = vld [vmem:[%s5711 + $0x20] sm:$0xff]
        %v5717 = vld [vmem:[%s5711 + $0x28] sm:$0xff]
        %v5718 = vld [vmem:[%s5711 + $0x30] sm:$0xff]
        %v5719 = vld [vmem:[%s5711 + $0x38] sm:$0xff]
        %v5721 = vrot.slane %v5234, 4
        %v5730 = vunpack.c.l.b16 %v5712
        %v5731 = vunpack.c.h.b16 %v5712
        %v5732 = vunpack.c.l.b16 %v5713
        %v5733 = vunpack.c.h.b16 %v5713
        %v5734 = vunpack.c.l.b16 %v5714
        %v5735 = vunpack.c.h.b16 %v5714
        %v5736 = vunpack.c.l.b16 %v5715
        %v5737 = vunpack.c.h.b16 %v5715
        %v5738 = vunpack.c.l.b16 %v5716
        %v5739 = vunpack.c.h.b16 %v5716
        %v5740 = vunpack.c.l.b16 %v5717
        %v5741 = vunpack.c.h.b16 %v5717
        %v5742 = vunpack.c.l.b16 %v5718
        %v5743 = vunpack.c.h.b16 %v5718
        %v5744 = vunpack.c.l.b16 %v5719
        %v5745 = vunpack.c.h.b16 %v5719
        %v5746 = vpack.c.b16 %v5732, %v5730
        %v5747 = vpack.c.b16 %v5733, %v5731
        %v5748 = vpack.c.b16 %v5736, %v5734
        %v5749 = vpack.c.b16 %v5737, %v5735
        %v5750 = vpack.c.b16 %v5740, %v5738
        %v5751 = vpack.c.b16 %v5741, %v5739
        %v5752 = vpack.c.b16 %v5744, %v5742
        %v5753 = vpack.c.b16 %v5745, %v5743
        %v5763 = vsel %vm2668, %v5721, 0
        %5765 = vmatprep.subr.bf16.mxu0 0
        %5766 = vmatpush1.bf16.msra.mxu0 0
        %5767 = vmatprep.subr.bf16.mxu0 0
        %5768 = vmatpush1.bf16.msra.mxu0 0
        %5769 = vmatprep.subr.bf16.mxu0 0
        %5770 = vmatpush1.bf16.msra.mxu0 0
        %5771 = vmatprep.subr.bf16.mxu0 0
        %5772 = vmatpush1.bf16.msra.mxu0 0
        %5773 = vmatprep.subr.bf16.mxu0 %v5753
        %5774 = vmatpush1.bf16.msra.mxu0 %v5752
        %5775 = vmatprep.subr.bf16.mxu0 %v5751
        %5776 = vmatpush1.bf16.msra.mxu0 %v5750
        %5777 = vmatprep.subr.bf16.mxu0 %v5749
        %5778 = vmatpush1.bf16.msra.mxu0 %v5748
        %5779 = vmatprep.subr.bf16.mxu0 %v5747
        %5780 = vmatpush1.bf16.msra.mxu0 %v5746
        %5781 = vmatprep.subr.bf16.mxu0 0
        %5782 = vmatpush2.bf16.msra.mxu0 0
        %5783 = vmatprep.subr.bf16.mxu0 0
        %5784 = vmatpush2.bf16.msra.mxu0 0
        %5785 = vmatprep.subr.bf16.mxu0 0
        %5786 = vmatpush2.bf16.msra.mxu0 0
        %5787 = vmatprep.subr.bf16.mxu0 0
        %5788 = vmatpush2.bf16.msra.mxu0 0
        %5789 = vmatprep.subr.bf16.mxu0 0
        %5790 = vmatpush2.bf16.msra.mxu0 0
        %5791 = vmatprep.subr.bf16.mxu0 0
        %5792 = vmatpush2.bf16.msra.mxu0 0
        %5793 = vmatprep.subr.bf16.mxu0 0
        %5794 = vmatpush2.bf16.msra.mxu0 0
        %5795 = vmatprep.subr.bf16.mxu0 0
        %5796 = vmatpush2.bf16.msra.mxu0 0
        %5797 = vmatprep.mubr.bf16.mxu0 0
        %5798 = vmatmul.mubr.bf16.gmra.mxu0 %v5763
        %v5799 = vpop.f32.mrf.mxu0
        %v5800 = vadd.f32 0.0, %v5799
        %v5801 = vpop.f32.mrf.mxu0
        %v5802 = vadd.f32 0.0, %v5801
        %v5803 = vpop.f32.mrf.mxu0
        %v5804 = vpop.f32.mrf.mxu0
        %5805 = vdwg.mxu0
        %v5806 = vadd.f32 %v5709, %v5800
        %v5807 = vadd.f32 %v5710, %v5802
        %s5808 = scalar_lea.vmem [#allocation6], 384
        %v5809 = vld [vmem:[%s5808] sm:$0xff]
        %v5810 = vld [vmem:[%s5808 + $0x8] sm:$0xff]
        %v5811 = vld [vmem:[%s5808 + $0x10] sm:$0xff]
        %v5812 = vld [vmem:[%s5808 + $0x18] sm:$0xff]
        %v5813 = vld [vmem:[%s5808 + $0x20] sm:$0xff]
        %v5814 = vld [vmem:[%s5808 + $0x28] sm:$0xff]
        %v5815 = vld [vmem:[%s5808 + $0x30] sm:$0xff]
        %v5816 = vld [vmem:[%s5808 + $0x38] sm:$0xff]
        %v5825 = vunpack.c.l.b16 %v5809
        %v5826 = vunpack.c.h.b16 %v5809
        %v5827 = vunpack.c.l.b16 %v5810
        %v5828 = vunpack.c.h.b16 %v5810
        %v5829 = vunpack.c.l.b16 %v5811
        %v5830 = vunpack.c.h.b16 %v5811
        %v5831 = vunpack.c.l.b16 %v5812
        %v5832 = vunpack.c.h.b16 %v5812
        %v5833 = vunpack.c.l.b16 %v5813
        %v5834 = vunpack.c.h.b16 %v5813
        %v5835 = vunpack.c.l.b16 %v5814
        %v5836 = vunpack.c.h.b16 %v5814
        %v5837 = vunpack.c.l.b16 %v5815
        %v5838 = vunpack.c.h.b16 %v5815
        %v5839 = vunpack.c.l.b16 %v5816
        %v5840 = vunpack.c.h.b16 %v5816
        %v5841 = vpack.c.b16 %v5827, %v5825
        %v5842 = vpack.c.b16 %v5828, %v5826
        %v5843 = vpack.c.b16 %v5831, %v5829
        %v5844 = vpack.c.b16 %v5832, %v5830
        %v5845 = vpack.c.b16 %v5835, %v5833
        %v5846 = vpack.c.b16 %v5836, %v5834
        %v5847 = vpack.c.b16 %v5839, %v5837
        %v5848 = vpack.c.b16 %v5840, %v5838
        %v5858 = vsel %vm2668, %v5235, 0
        %5860 = vmatprep.subr.bf16.mxu0 0
        %5861 = vmatpush1.bf16.msra.mxu0 0
        %5862 = vmatprep.subr.bf16.mxu0 0
        %5863 = vmatpush1.bf16.msra.mxu0 0
        %5864 = vmatprep.subr.bf16.mxu0 0
        %5865 = vmatpush1.bf16.msra.mxu0 0
        %5866 = vmatprep.subr.bf16.mxu0 0
        %5867 = vmatpush1.bf16.msra.mxu0 0
        %5868 = vmatprep.subr.bf16.mxu0 %v5848
        %5869 = vmatpush1.bf16.msra.mxu0 %v5847
        %5870 = vmatprep.subr.bf16.mxu0 %v5846
        %5871 = vmatpush1.bf16.msra.mxu0 %v5845
        %5872 = vmatprep.subr.bf16.mxu0 %v5844
        %5873 = vmatpush1.bf16.msra.mxu0 %v5843
        %5874 = vmatprep.subr.bf16.mxu0 %v5842
        %5875 = vmatpush1.bf16.msra.mxu0 %v5841
        %5876 = vmatprep.subr.bf16.mxu0 0
        %5877 = vmatpush2.bf16.msra.mxu0 0
        %5878 = vmatprep.subr.bf16.mxu0 0
        %5879 = vmatpush2.bf16.msra.mxu0 0
        %5880 = vmatprep.subr.bf16.mxu0 0
        %5881 = vmatpush2.bf16.msra.mxu0 0
        %5882 = vmatprep.subr.bf16.mxu0 0
        %5883 = vmatpush2.bf16.msra.mxu0 0
        %5884 = vmatprep.subr.bf16.mxu0 0
        %5885 = vmatpush2.bf16.msra.mxu0 0
        %5886 = vmatprep.subr.bf16.mxu0 0
        %5887 = vmatpush2.bf16.msra.mxu0 0
        %5888 = vmatprep.subr.bf16.mxu0 0
        %5889 = vmatpush2.bf16.msra.mxu0 0
        %5890 = vmatprep.subr.bf16.mxu0 0
        %5891 = vmatpush2.bf16.msra.mxu0 0
        %5892 = vmatprep.mubr.bf16.mxu0 0
        %5893 = vmatmul.mubr.bf16.gmra.mxu0 %v5858
        %v5894 = vpop.f32.mrf.mxu0
        %v5895 = vadd.f32 0.0, %v5894
        %v5896 = vpop.f32.mrf.mxu0
        %v5897 = vadd.f32 0.0, %v5896
        %v5898 = vpop.f32.mrf.mxu0
        %v5899 = vpop.f32.mrf.mxu0
        %5900 = vdwg.mxu0
        %v5901 = vadd.f32 %v5806, %v5895
        %v5902 = vadd.f32 %v5807, %v5897
        %s5903 = scalar_lea.vmem [#allocation6], 448
        %v5904 = vld [vmem:[%s5903] sm:$0xff]
        %v5905 = vld [vmem:[%s5903 + $0x8] sm:$0xff]
        %v5906 = vld [vmem:[%s5903 + $0x10] sm:$0xff]
        %v5907 = vld [vmem:[%s5903 + $0x18] sm:$0xff]
        %v5908 = vld [vmem:[%s5903 + $0x20] sm:$0xff]
        %v5909 = vld [vmem:[%s5903 + $0x28] sm:$0xff]
        %v5910 = vld [vmem:[%s5903 + $0x30] sm:$0xff]
        %v5911 = vld [vmem:[%s5903 + $0x38] sm:$0xff]
        %v5913 = vrot.slane %v5235, 4
        %v5922 = vunpack.c.l.b16 %v5904
        %v5923 = vunpack.c.h.b16 %v5904
        %v5924 = vunpack.c.l.b16 %v5905
        %v5925 = vunpack.c.h.b16 %v5905
        %v5926 = vunpack.c.l.b16 %v5906
        %v5927 = vunpack.c.h.b16 %v5906
        %v5928 = vunpack.c.l.b16 %v5907
        %v5929 = vunpack.c.h.b16 %v5907
        %v5930 = vunpack.c.l.b16 %v5908
        %v5931 = vunpack.c.h.b16 %v5908
        %v5932 = vunpack.c.l.b16 %v5909
        %v5933 = vunpack.c.h.b16 %v5909
        %v5934 = vunpack.c.l.b16 %v5910
        %v5935 = vunpack.c.h.b16 %v5910
        %v5936 = vunpack.c.l.b16 %v5911
        %v5937 = vunpack.c.h.b16 %v5911
        %v5938 = vpack.c.b16 %v5924, %v5922
        %v5939 = vpack.c.b16 %v5925, %v5923
        %v5940 = vpack.c.b16 %v5928, %v5926
        %v5941 = vpack.c.b16 %v5929, %v5927
        %v5942 = vpack.c.b16 %v5932, %v5930
        %v5943 = vpack.c.b16 %v5933, %v5931
        %v5944 = vpack.c.b16 %v5936, %v5934
        %v5945 = vpack.c.b16 %v5937, %v5935
        %v5955 = vsel %vm2668, %v5913, 0
        %5957 = vmatprep.subr.bf16.mxu0 0
        %5958 = vmatpush1.bf16.msra.mxu0 0
        %5959 = vmatprep.subr.bf16.mxu0 0
        %5960 = vmatpush1.bf16.msra.mxu0 0
        %5961 = vmatprep.subr.bf16.mxu0 0
        %5962 = vmatpush1.bf16.msra.mxu0 0
        %5963 = vmatprep.subr.bf16.mxu0 0
        %5964 = vmatpush1.bf16.msra.mxu0 0
        %5965 = vmatprep.subr.bf16.mxu0 %v5945
        %5966 = vmatpush1.bf16.msra.mxu0 %v5944
        %5967 = vmatprep.subr.bf16.mxu0 %v5943
        %5968 = vmatpush1.bf16.msra.mxu0 %v5942
        %5969 = vmatprep.subr.bf16.mxu0 %v5941
        %5970 = vmatpush1.bf16.msra.mxu0 %v5940
        %5971 = vmatprep.subr.bf16.mxu0 %v5939
        %5972 = vmatpush1.bf16.msra.mxu0 %v5938
        %5973 = vmatprep.subr.bf16.mxu0 0
        %5974 = vmatpush2.bf16.msra.mxu0 0
        %5975 = vmatprep.subr.bf16.mxu0 0
        %5976 = vmatpush2.bf16.msra.mxu0 0
        %5977 = vmatprep.subr.bf16.mxu0 0
        %5978 = vmatpush2.bf16.msra.mxu0 0
        %5979 = vmatprep.subr.bf16.mxu0 0
        %5980 = vmatpush2.bf16.msra.mxu0 0
        %5981 = vmatprep.subr.bf16.mxu0 0
        %5982 = vmatpush2.bf16.msra.mxu0 0
        %5983 = vmatprep.subr.bf16.mxu0 0
        %5984 = vmatpush2.bf16.msra.mxu0 0
        %5985 = vmatprep.subr.bf16.mxu0 0
        %5986 = vmatpush2.bf16.msra.mxu0 0
        %5987 = vmatprep.subr.bf16.mxu0 0
        %5988 = vmatpush2.bf16.msra.mxu0 0
        %5989 = vmatprep.mubr.bf16.mxu0 0
        %5990 = vmatmul.mubr.bf16.gmra.mxu0 %v5955
        %v5991 = vpop.f32.mrf.mxu0
        %v5992 = vadd.f32 0.0, %v5991
        %v5993 = vpop.f32.mrf.mxu0
        %v5994 = vadd.f32 0.0, %v5993
        %v5995 = vpop.f32.mrf.mxu0
        %v5996 = vpop.f32.mrf.mxu0
        %5997 = vdwg.mxu0
        %v5998 = vadd.f32 %v5901, %v5992
        %v5999 = vadd.f32 %v5902, %v5994
        %s6000 = scalar_lea.vmem [#allocation6], 512
        %v6001 = vld [vmem:[%s6000] sm:$0xff]
        %v6002 = vld [vmem:[%s6000 + $0x8] sm:$0xff]
        %v6003 = vld [vmem:[%s6000 + $0x10] sm:$0xff]
        %v6004 = vld [vmem:[%s6000 + $0x18] sm:$0xff]
        %v6005 = vld [vmem:[%s6000 + $0x20] sm:$0xff]
        %v6006 = vld [vmem:[%s6000 + $0x28] sm:$0xff]
        %v6007 = vld [vmem:[%s6000 + $0x30] sm:$0xff]
        %v6008 = vld [vmem:[%s6000 + $0x38] sm:$0xff]
        %v6017 = vunpack.c.l.b16 %v6001
        %v6018 = vunpack.c.h.b16 %v6001
        %v6019 = vunpack.c.l.b16 %v6002
        %v6020 = vunpack.c.h.b16 %v6002
        %v6021 = vunpack.c.l.b16 %v6003
        %v6022 = vunpack.c.h.b16 %v6003
        %v6023 = vunpack.c.l.b16 %v6004
        %v6024 = vunpack.c.h.b16 %v6004
        %v6025 = vunpack.c.l.b16 %v6005
        %v6026 = vunpack.c.h.b16 %v6005
        %v6027 = vunpack.c.l.b16 %v6006
        %v6028 = vunpack.c.h.b16 %v6006
        %v6029 = vunpack.c.l.b16 %v6007
        %v6030 = vunpack.c.h.b16 %v6007
        %v6031 = vunpack.c.l.b16 %v6008
        %v6032 = vunpack.c.h.b16 %v6008
        %v6033 = vpack.c.b16 %v6019, %v6017
        %v6034 = vpack.c.b16 %v6020, %v6018
        %v6035 = vpack.c.b16 %v6023, %v6021
        %v6036 = vpack.c.b16 %v6024, %v6022
        %v6037 = vpack.c.b16 %v6027, %v6025
        %v6038 = vpack.c.b16 %v6028, %v6026
        %v6039 = vpack.c.b16 %v6031, %v6029
        %v6040 = vpack.c.b16 %v6032, %v6030
        %v6050 = vsel %vm2668, %v5236, 0
        %6052 = vmatprep.subr.bf16.mxu0 0
        %6053 = vmatpush1.bf16.msra.mxu0 0
        %6054 = vmatprep.subr.bf16.mxu0 0
        %6055 = vmatpush1.bf16.msra.mxu0 0
        %6056 = vmatprep.subr.bf16.mxu0 0
        %6057 = vmatpush1.bf16.msra.mxu0 0
        %6058 = vmatprep.subr.bf16.mxu0 0
        %6059 = vmatpush1.bf16.msra.mxu0 0
        %6060 = vmatprep.subr.bf16.mxu0 %v6040
        %6061 = vmatpush1.bf16.msra.mxu0 %v6039
        %6062 = vmatprep.subr.bf16.mxu0 %v6038
        %6063 = vmatpush1.bf16.msra.mxu0 %v6037
        %6064 = vmatprep.subr.bf16.mxu0 %v6036
        %6065 = vmatpush1.bf16.msra.mxu0 %v6035
        %6066 = vmatprep.subr.bf16.mxu0 %v6034
        %6067 = vmatpush1.bf16.msra.mxu0 %v6033
        %6068 = vmatprep.subr.bf16.mxu0 0
        %6069 = vmatpush2.bf16.msra.mxu0 0
        %6070 = vmatprep.subr.bf16.mxu0 0
        %6071 = vmatpush2.bf16.msra.mxu0 0
        %6072 = vmatprep.subr.bf16.mxu0 0
        %6073 = vmatpush2.bf16.msra.mxu0 0
        %6074 = vmatprep.subr.bf16.mxu0 0
        %6075 = vmatpush2.bf16.msra.mxu0 0
        %6076 = vmatprep.subr.bf16.mxu0 0
        %6077 = vmatpush2.bf16.msra.mxu0 0
        %6078 = vmatprep.subr.bf16.mxu0 0
        %6079 = vmatpush2.bf16.msra.mxu0 0
        %6080 = vmatprep.subr.bf16.mxu0 0
        %6081 = vmatpush2.bf16.msra.mxu0 0
        %6082 = vmatprep.subr.bf16.mxu0 0
        %6083 = vmatpush2.bf16.msra.mxu0 0
        %6084 = vmatprep.mubr.bf16.mxu0 0
        %6085 = vmatmul.mubr.bf16.gmra.mxu0 %v6050
        %v6086 = vpop.f32.mrf.mxu0
        %v6087 = vadd.f32 0.0, %v6086
        %v6088 = vpop.f32.mrf.mxu0
        %v6089 = vadd.f32 0.0, %v6088
        %v6090 = vpop.f32.mrf.mxu0
        %v6091 = vpop.f32.mrf.mxu0
        %6092 = vdwg.mxu0
        %v6093 = vadd.f32 %v5998, %v6087
        %v6094 = vadd.f32 %v5999, %v6089
        %v6095 = vld [vmem:[%s18] sm:$0xff]
        %6097 = vset.pattern.permute.xlu0 0
        %6098 = vperm.xlu0 %6097, %v6095
        %v6099 = vpop.permute.xlu0 %6098
        %v6101 = vadd.f32 %v6093, %v6099
        %v6102 = vadd.f32 %v6094, %v6099
        %v6103 = vmul.f32 %v6101, 0.01
        %v6104 = vmul.f32 %v6102, 0.01
        %v6105 = vmax.f32 %v6101, %v6103
        %v6106 = vmax.f32 %v6102, %v6104
        %v6107 = vpack.c.bf16 %v6105, %v6105
        %v6108 = vpack.c.bf16 %v6106, %v6106
        %v6109 = vld [vmem:[%s19] sm:$0xf]
        %v6110 = vld [vmem:[%s19 + $0x4] sm:$0xf]
        %v6111 = vld [vmem:[%s19 + $0x8] sm:$0xf]
        %v6112 = vld [vmem:[%s19 + $0xc] sm:$0xf]
        %v6113 = vld [vmem:[%s19 + $0x10] sm:$0xf]
        %v6114 = vld [vmem:[%s19 + $0x14] sm:$0xf]
        %v6115 = vld [vmem:[%s19 + $0x18] sm:$0xf]
        %v6116 = vld [vmem:[%s19 + $0x1c] sm:$0xf]
        %v6117 = vld [vmem:[%s19 + $0x20] sm:$0xf]
        %v6127 = vunpack.c.l.b16 %v6109
        %v6128 = vunpack.c.l.b16 %v6110
        %v6129 = vunpack.c.l.b16 %v6111
        %v6130 = vunpack.c.l.b16 %v6112
        %v6131 = vunpack.c.l.b16 %v6113
        %v6132 = vunpack.c.l.b16 %v6114
        %v6133 = vunpack.c.l.b16 %v6115
        %v6134 = vunpack.c.l.b16 %v6116
        %v6135 = vunpack.c.l.b16 %v6117
        %v6136 = vpack.c.b16 %v6128, %v6127
        %v6137 = vpack.c.b16 %v6130, %v6129
        %v6138 = vpack.c.b16 %v6132, %v6131
        %v6139 = vpack.c.b16 %v6134, %v6133
        %v6140 = vpack.c.b16 %v6135, %v6135
        %v6142 = vsel %vm926, %v6136, 0
        %v6145 = vsel %vm926, %v6137, 0
        %v6148 = vsel %vm926, %v6138, 0
        %v6151 = vsel %vm926, %v6139, 0
        %v6154 = vsel %vm926, %v6140, 0
        %v6157 = vsel %vm954, %v6107, 0
        %v6160 = vsel %vm954, %v6108, 0
        %6162 = vmatprep.subr.bf16.mxu0 0
        %6163 = vmatpush1.bf16.msra.mxu0 0
        %6164 = vmatprep.subr.bf16.mxu0 0
        %6165 = vmatpush1.bf16.msra.mxu0 0
        %6166 = vmatprep.subr.bf16.mxu0 0
        %6167 = vmatpush1.bf16.msra.mxu0 0
        %6168 = vmatprep.subr.bf16.mxu0 0
        %6169 = vmatpush1.bf16.msra.mxu0 0
        %6170 = vmatprep.subr.bf16.mxu0 0
        %6171 = vmatpush1.bf16.msra.mxu0 0
        %6172 = vmatprep.subr.bf16.mxu0 0
        %6173 = vmatpush1.bf16.msra.mxu0 0
        %6174 = vmatprep.subr.bf16.mxu0 0
        %6175 = vmatpush1.bf16.msra.mxu0 0
        %6176 = vmatprep.subr.bf16.mxu0 %v6160
        %6177 = vmatpush1.bf16.msra.mxu0 %v6157
        %6178 = vmatprep.subr.bf16.mxu0 0
        %6179 = vmatpush2.bf16.msra.mxu0 0
        %6180 = vmatprep.subr.bf16.mxu0 0
        %6181 = vmatpush2.bf16.msra.mxu0 0
        %6182 = vmatprep.subr.bf16.mxu0 0
        %6183 = vmatpush2.bf16.msra.mxu0 0
        %6184 = vmatprep.subr.bf16.mxu0 0
        %6185 = vmatpush2.bf16.msra.mxu0 0
        %6186 = vmatprep.subr.bf16.mxu0 0
        %6187 = vmatpush2.bf16.msra.mxu0 0
        %6188 = vmatprep.subr.bf16.mxu0 0
        %6189 = vmatpush2.bf16.msra.mxu0 0
        %6190 = vmatprep.subr.bf16.mxu0 0
        %6191 = vmatpush2.bf16.msra.mxu0 0
        %6192 = vmatprep.subr.bf16.mxu0 0
        %6193 = vmatpush2.bf16.msra.mxu0 0
        %6194 = vmatprep.mubr.bf16.mxu0 0
        %6195 = vmatmul.mubr.bf16.gmra.mxu0 %v6142
        %v6196 = vpop.f32.mrf.mxu0
        %v6197 = vadd.f32 0.0, %v6196
        %v6198 = vpop.f32.mrf.mxu0
        %v6199 = vadd.f32 0.0, %v6198
        %v6200 = vpop.f32.mrf.mxu0
        %v6201 = vadd.f32 0.0, %v6200
        %v6202 = vpop.f32.mrf.mxu0
        %v6203 = vadd.f32 0.0, %v6202
        %6204 = vmatprep.mubr.bf16.mxu0 0
        %6205 = vmatmul.mubr.bf16.gmra.mxu0 %v6145
        %v6206 = vpop.f32.mrf.mxu0
        %v6207 = vadd.f32 0.0, %v6206
        %v6208 = vpop.f32.mrf.mxu0
        %v6209 = vadd.f32 0.0, %v6208
        %v6210 = vpop.f32.mrf.mxu0
        %v6211 = vadd.f32 0.0, %v6210
        %v6212 = vpop.f32.mrf.mxu0
        %v6213 = vadd.f32 0.0, %v6212
        %6214 = vmatprep.mubr.bf16.mxu0 0
        %6215 = vmatmul.mubr.bf16.gmra.mxu0 %v6148
        %v6216 = vpop.f32.mrf.mxu0
        %v6217 = vadd.f32 0.0, %v6216
        %v6218 = vpop.f32.mrf.mxu0
        %v6219 = vadd.f32 0.0, %v6218
        %v6220 = vpop.f32.mrf.mxu0
        %v6221 = vadd.f32 0.0, %v6220
        %v6222 = vpop.f32.mrf.mxu0
        %v6223 = vadd.f32 0.0, %v6222
        %6224 = vmatprep.mubr.bf16.mxu0 0
        %6225 = vmatmul.mubr.bf16.gmra.mxu0 %v6151
        %v6226 = vpop.f32.mrf.mxu0
        %v6227 = vadd.f32 0.0, %v6226
        %v6228 = vpop.f32.mrf.mxu0
        %v6229 = vadd.f32 0.0, %v6228
        %v6230 = vpop.f32.mrf.mxu0
        %v6231 = vadd.f32 0.0, %v6230
        %v6232 = vpop.f32.mrf.mxu0
        %v6233 = vadd.f32 0.0, %v6232
        %6234 = vmatprep.mubr.bf16.mxu0 0
        %6235 = vmatmul.mubr.bf16.gmra.mxu0 %v6154
        %v6236 = vpop.f32.mrf.mxu0
        %v6237 = vadd.f32 0.0, %v6236
        %v6238 = vpop.f32.mrf.mxu0
        %v6239 = vadd.f32 0.0, %v6238
        %v6240 = vpop.f32.mrf.mxu0
        %v6241 = vpop.f32.mrf.mxu0
        %6242 = vdwg.mxu0
        %v6243 = vpack.c.bf16 %v6201, %v6197
        %v6244 = vpack.c.bf16 %v6203, %v6199
        %v6245 = vpack.c.bf16 %v6211, %v6207
        %v6246 = vpack.c.bf16 %v6213, %v6209
        %v6247 = vpack.c.bf16 %v6221, %v6217
        %v6248 = vpack.c.bf16 %v6223, %v6219
        %v6249 = vpack.c.bf16 %v6231, %v6227
        %v6250 = vpack.c.bf16 %v6233, %v6229
        %v6251 = vpack.c.bf16 %v6237, %v6237
        %v6252 = vpack.c.bf16 %v6239, %v6239
        %v6253 = vld [vmem:[%s20] sm:$0xff]
        %v6254 = vld [vmem:[%s20 + $0x8] sm:$0xff]
        %v6255 = vld [vmem:[%s20 + $0x10] sm:$0xff]
        %v6256 = vld [vmem:[%s20 + $0x18] sm:$0xff]
        %v6257 = vld [vmem:[%s20 + $0x20] sm:$0xff]
        %v6258 = vld [vmem:[%s20 + $0x28] sm:$0xff]
        %v6259 = vld [vmem:[%s20 + $0x30] sm:$0xff]
        %v6260 = vld [vmem:[%s20 + $0x38] sm:$0xff]
        %v6261 = vld [vmem:[%s20 + $0x40] sm:$0xff]
        %v6262 = vld [vmem:[%s20 + $0x48] sm:$0xff]
        %v6263 = vld [vmem:[%s20 + $0x50] sm:$0xff]
        %v6264 = vld [vmem:[%s20 + $0x58] sm:$0xff]
        %v6265 = vld [vmem:[%s20 + $0x60] sm:$0xff]
        %v6266 = vld [vmem:[%s20 + $0x68] sm:$0xff]
        %v6267 = vld [vmem:[%s20 + $0x70] sm:$0xff]
        %v6268 = vld [vmem:[%s20 + $0x78] sm:$0xff]
        %v6269 = vld [vmem:[%s20 + $0x80] sm:$0xff]
        %v6270 = vld [vmem:[%s20 + $0x88] sm:$0xff]
        %v6271 = vld [vmem:[%s20 + $0x90] sm:$0xff]
        %v6272 = vld [vmem:[%s20 + $0x98] sm:$0xff]
        %v6273 = vld [vmem:[%s20 + $0xa0] sm:$0xff]
        %v6274 = vld [vmem:[%s20 + $0xa8] sm:$0xff]
        %v6275 = vld [vmem:[%s20 + $0xb0] sm:$0xff]
        %v6276 = vld [vmem:[%s20 + $0xb8] sm:$0xff]
        %v6277 = vld [vmem:[%s20 + $0xc0] sm:$0xff]
        %v6278 = vld [vmem:[%s20 + $0xc8] sm:$0xff]
        %v6279 = vld [vmem:[%s20 + $0xd0] sm:$0xff]
        %v6280 = vld [vmem:[%s20 + $0xd8] sm:$0xff]
        %v6281 = vld [vmem:[%s20 + $0xe0] sm:$0xff]
        %v6282 = vld [vmem:[%s20 + $0xe8] sm:$0xff]
        %v6283 = vld [vmem:[%s20 + $0xf0] sm:$0xff]
        %v6284 = vld [vmem:[%s20 + $0xf8] sm:$0xff]
        %s6285 = scalar_lea.vmem %s20, 256
        %v6286 = vld [vmem:[%s6285] sm:$0xff]
        %v6287 = vld [vmem:[%s6285 + $0x8] sm:$0xff]
        %v6288 = vld [vmem:[%s6285 + $0x10] sm:$0xff]
        %v6289 = vld [vmem:[%s6285 + $0x18] sm:$0xff]
        %v6290 = vld [vmem:[%s6285 + $0x20] sm:$0xff]
        %v6291 = vld [vmem:[%s6285 + $0x28] sm:$0xff]
        %v6292 = vld [vmem:[%s6285 + $0x30] sm:$0xff]
        %v6293 = vld [vmem:[%s6285 + $0x38] sm:$0xff]
        %v6294 = vld [vmem:[%s6285 + $0x40] sm:$0xff]
        %v6295 = vld [vmem:[%s6285 + $0x48] sm:$0xff]
        %v6296 = vld [vmem:[%s6285 + $0x50] sm:$0xff]
        %v6297 = vld [vmem:[%s6285 + $0x58] sm:$0xff]
        %v6298 = vld [vmem:[%s6285 + $0x60] sm:$0xff]
        %v6299 = vld [vmem:[%s6285 + $0x68] sm:$0xff]
        %v6300 = vld [vmem:[%s6285 + $0x70] sm:$0xff]
        %v6301 = vld [vmem:[%s6285 + $0x78] sm:$0xff]
        %v6302 = vld [vmem:[%s6285 + $0x80] sm:$0xff]
        %v6303 = vld [vmem:[%s6285 + $0x88] sm:$0xff]
        %v6304 = vld [vmem:[%s6285 + $0x90] sm:$0xff]
        %v6305 = vld [vmem:[%s6285 + $0x98] sm:$0xff]
        %v6306 = vld [vmem:[%s6285 + $0xa0] sm:$0xff]
        %v6307 = vld [vmem:[%s6285 + $0xa8] sm:$0xff]
        %v6308 = vld [vmem:[%s6285 + $0xb0] sm:$0xff]
        %v6309 = vld [vmem:[%s6285 + $0xb8] sm:$0xff]
        %v6310 = vld [vmem:[%s6285 + $0xc0] sm:$0xff]
        %v6311 = vld [vmem:[%s6285 + $0xc8] sm:$0xff]
        %v6312 = vld [vmem:[%s6285 + $0xd0] sm:$0xff]
        %v6313 = vld [vmem:[%s6285 + $0xd8] sm:$0xff]
        %v6314 = vld [vmem:[%s6285 + $0xe0] sm:$0xff]
        %v6315 = vld [vmem:[%s6285 + $0xe8] sm:$0xff]
        %v6316 = vld [vmem:[%s6285 + $0xf0] sm:$0xff]
        %v6317 = vld [vmem:[%s6285 + $0xf8] sm:$0xff]
        %v6320 = vrot.slane %v6243, 4
        %v6321 = vrot.slane %v6244, 4
        %v6356 = vunpack.c.l.b16 %v6286
        %v6357 = vunpack.c.h.b16 %v6286
        %v6358 = vunpack.c.l.b16 %v6287
        %v6359 = vunpack.c.h.b16 %v6287
        %v6360 = vunpack.c.l.b16 %v6288
        %v6361 = vunpack.c.h.b16 %v6288
        %v6362 = vunpack.c.l.b16 %v6289
        %v6363 = vunpack.c.h.b16 %v6289
        %v6364 = vunpack.c.l.b16 %v6290
        %v6365 = vunpack.c.h.b16 %v6290
        %v6366 = vunpack.c.l.b16 %v6291
        %v6367 = vunpack.c.h.b16 %v6291
        %v6368 = vunpack.c.l.b16 %v6292
        %v6369 = vunpack.c.h.b16 %v6292
        %v6370 = vunpack.c.l.b16 %v6293
        %v6371 = vunpack.c.h.b16 %v6293
        %v6372 = vunpack.c.l.b16 %v6294
        %v6373 = vunpack.c.h.b16 %v6294
        %v6374 = vunpack.c.l.b16 %v6295
        %v6375 = vunpack.c.h.b16 %v6295
        %v6376 = vunpack.c.l.b16 %v6296
        %v6377 = vunpack.c.h.b16 %v6296
        %v6378 = vunpack.c.l.b16 %v6297
        %v6379 = vunpack.c.h.b16 %v6297
        %v6380 = vunpack.c.l.b16 %v6298
        %v6381 = vunpack.c.h.b16 %v6298
        %v6382 = vunpack.c.l.b16 %v6299
        %v6383 = vunpack.c.h.b16 %v6299
        %v6384 = vunpack.c.l.b16 %v6300
        %v6385 = vunpack.c.h.b16 %v6300
        %v6386 = vunpack.c.l.b16 %v6301
        %v6387 = vunpack.c.h.b16 %v6301
        %v6388 = vunpack.c.l.b16 %v6302
        %v6389 = vunpack.c.h.b16 %v6302
        %v6390 = vunpack.c.l.b16 %v6303
        %v6391 = vunpack.c.h.b16 %v6303
        %v6392 = vunpack.c.l.b16 %v6304
        %v6393 = vunpack.c.h.b16 %v6304
        %v6394 = vunpack.c.l.b16 %v6305
        %v6395 = vunpack.c.h.b16 %v6305
        %v6396 = vunpack.c.l.b16 %v6306
        %v6397 = vunpack.c.h.b16 %v6306
        %v6398 = vunpack.c.l.b16 %v6307
        %v6399 = vunpack.c.h.b16 %v6307
        %v6400 = vunpack.c.l.b16 %v6308
        %v6401 = vunpack.c.h.b16 %v6308
        %v6402 = vunpack.c.l.b16 %v6309
        %v6403 = vunpack.c.h.b16 %v6309
        %v6404 = vunpack.c.l.b16 %v6310
        %v6405 = vunpack.c.h.b16 %v6310
        %v6406 = vunpack.c.l.b16 %v6311
        %v6407 = vunpack.c.h.b16 %v6311
        %v6408 = vunpack.c.l.b16 %v6312
        %v6409 = vunpack.c.h.b16 %v6312
        %v6410 = vunpack.c.l.b16 %v6313
        %v6411 = vunpack.c.h.b16 %v6313
        %v6412 = vunpack.c.l.b16 %v6314
        %v6413 = vunpack.c.h.b16 %v6314
        %v6414 = vunpack.c.l.b16 %v6315
        %v6415 = vunpack.c.h.b16 %v6315
        %v6416 = vunpack.c.l.b16 %v6316
        %v6417 = vunpack.c.h.b16 %v6316
        %v6418 = vunpack.c.l.b16 %v6317
        %v6419 = vunpack.c.h.b16 %v6317
        %v6420 = vpack.c.b16 %v6358, %v6356
        %v6421 = vpack.c.b16 %v6359, %v6357
        %v6422 = vpack.c.b16 %v6362, %v6360
        %v6423 = vpack.c.b16 %v6363, %v6361
        %v6424 = vpack.c.b16 %v6366, %v6364
        %v6425 = vpack.c.b16 %v6367, %v6365
        %v6426 = vpack.c.b16 %v6370, %v6368
        %v6427 = vpack.c.b16 %v6371, %v6369
        %v6428 = vpack.c.b16 %v6374, %v6372
        %v6429 = vpack.c.b16 %v6375, %v6373
        %v6430 = vpack.c.b16 %v6378, %v6376
        %v6431 = vpack.c.b16 %v6379, %v6377
        %v6432 = vpack.c.b16 %v6382, %v6380
        %v6433 = vpack.c.b16 %v6383, %v6381
        %v6434 = vpack.c.b16 %v6386, %v6384
        %v6435 = vpack.c.b16 %v6387, %v6385
        %v6436 = vpack.c.b16 %v6390, %v6388
        %v6437 = vpack.c.b16 %v6391, %v6389
        %v6438 = vpack.c.b16 %v6394, %v6392
        %v6439 = vpack.c.b16 %v6395, %v6393
        %v6440 = vpack.c.b16 %v6398, %v6396
        %v6441 = vpack.c.b16 %v6399, %v6397
        %v6442 = vpack.c.b16 %v6402, %v6400
        %v6443 = vpack.c.b16 %v6403, %v6401
        %v6444 = vpack.c.b16 %v6406, %v6404
        %v6445 = vpack.c.b16 %v6407, %v6405
        %v6446 = vpack.c.b16 %v6410, %v6408
        %v6447 = vpack.c.b16 %v6411, %v6409
        %v6448 = vpack.c.b16 %v6414, %v6412
        %v6449 = vpack.c.b16 %v6415, %v6413
        %v6450 = vpack.c.b16 %v6418, %v6416
        %v6451 = vpack.c.b16 %v6419, %v6417
        %6484 = vmatprep.subr.bf16.mxu0 %v6435
        %6485 = vmatpush1.bf16.msra.mxu0 %v6434
        %6486 = vmatprep.subr.bf16.mxu0 %v6433
        %6487 = vmatpush1.bf16.msra.mxu0 %v6432
        %6488 = vmatprep.subr.bf16.mxu0 %v6431
        %6489 = vmatpush1.bf16.msra.mxu0 %v6430
        %6490 = vmatprep.subr.bf16.mxu0 %v6429
        %6491 = vmatpush1.bf16.msra.mxu0 %v6428
        %6492 = vmatprep.subr.bf16.mxu0 %v6427
        %6493 = vmatpush1.bf16.msra.mxu0 %v6426
        %6494 = vmatprep.subr.bf16.mxu0 %v6425
        %6495 = vmatpush1.bf16.msra.mxu0 %v6424
        %6496 = vmatprep.subr.bf16.mxu0 %v6423
        %6497 = vmatpush1.bf16.msra.mxu0 %v6422
        %6498 = vmatprep.subr.bf16.mxu0 %v6421
        %6499 = vmatpush1.bf16.msra.mxu0 %v6420
        %6500 = vmatprep.subr.bf16.mxu0 %v6451
        %6501 = vmatpush2.bf16.msra.mxu0 %v6450
        %6502 = vmatprep.subr.bf16.mxu0 %v6449
        %6503 = vmatpush2.bf16.msra.mxu0 %v6448
        %6504 = vmatprep.subr.bf16.mxu0 %v6447
        %6505 = vmatpush2.bf16.msra.mxu0 %v6446
        %6506 = vmatprep.subr.bf16.mxu0 %v6445
        %6507 = vmatpush2.bf16.msra.mxu0 %v6444
        %6508 = vmatprep.subr.bf16.mxu0 %v6443
        %6509 = vmatpush2.bf16.msra.mxu0 %v6442
        %6510 = vmatprep.subr.bf16.mxu0 %v6441
        %6511 = vmatpush2.bf16.msra.mxu0 %v6440
        %6512 = vmatprep.subr.bf16.mxu0 %v6439
        %6513 = vmatpush2.bf16.msra.mxu0 %v6438
        %6514 = vmatprep.subr.bf16.mxu0 %v6437
        %6515 = vmatpush2.bf16.msra.mxu0 %v6436
        %6516 = vmatprep.mubr.bf16.mxu0 %v6321
        %6517 = vmatmul.mubr.bf16.gmra.mxu0 %v6320
        %v6518 = vpop.f32.mrf.mxu0
        %v6519 = vadd.f32 0.0, %v6518
        %v6520 = vpop.f32.mrf.mxu0
        %v6521 = vadd.f32 0.0, %v6520
        %v6522 = vpop.f32.mrf.mxu0
        %v6523 = vpop.f32.mrf.mxu0
        %6524 = vdwg.mxu0
        %v6557 = vunpack.c.l.b16 %v6253
        %v6558 = vunpack.c.h.b16 %v6253
        %v6559 = vunpack.c.l.b16 %v6254
        %v6560 = vunpack.c.h.b16 %v6254
        %v6561 = vunpack.c.l.b16 %v6255
        %v6562 = vunpack.c.h.b16 %v6255
        %v6563 = vunpack.c.l.b16 %v6256
        %v6564 = vunpack.c.h.b16 %v6256
        %v6565 = vunpack.c.l.b16 %v6257
        %v6566 = vunpack.c.h.b16 %v6257
        %v6567 = vunpack.c.l.b16 %v6258
        %v6568 = vunpack.c.h.b16 %v6258
        %v6569 = vunpack.c.l.b16 %v6259
        %v6570 = vunpack.c.h.b16 %v6259
        %v6571 = vunpack.c.l.b16 %v6260
        %v6572 = vunpack.c.h.b16 %v6260
        %v6573 = vunpack.c.l.b16 %v6261
        %v6574 = vunpack.c.h.b16 %v6261
        %v6575 = vunpack.c.l.b16 %v6262
        %v6576 = vunpack.c.h.b16 %v6262
        %v6577 = vunpack.c.l.b16 %v6263
        %v6578 = vunpack.c.h.b16 %v6263
        %v6579 = vunpack.c.l.b16 %v6264
        %v6580 = vunpack.c.h.b16 %v6264
        %v6581 = vunpack.c.l.b16 %v6265
        %v6582 = vunpack.c.h.b16 %v6265
        %v6583 = vunpack.c.l.b16 %v6266
        %v6584 = vunpack.c.h.b16 %v6266
        %v6585 = vunpack.c.l.b16 %v6267
        %v6586 = vunpack.c.h.b16 %v6267
        %v6587 = vunpack.c.l.b16 %v6268
        %v6588 = vunpack.c.h.b16 %v6268
        %v6589 = vunpack.c.l.b16 %v6269
        %v6590 = vunpack.c.h.b16 %v6269
        %v6591 = vunpack.c.l.b16 %v6270
        %v6592 = vunpack.c.h.b16 %v6270
        %v6593 = vunpack.c.l.b16 %v6271
        %v6594 = vunpack.c.h.b16 %v6271
        %v6595 = vunpack.c.l.b16 %v6272
        %v6596 = vunpack.c.h.b16 %v6272
        %v6597 = vunpack.c.l.b16 %v6273
        %v6598 = vunpack.c.h.b16 %v6273
        %v6599 = vunpack.c.l.b16 %v6274
        %v6600 = vunpack.c.h.b16 %v6274
        %v6601 = vunpack.c.l.b16 %v6275
        %v6602 = vunpack.c.h.b16 %v6275
        %v6603 = vunpack.c.l.b16 %v6276
        %v6604 = vunpack.c.h.b16 %v6276
        %v6605 = vunpack.c.l.b16 %v6277
        %v6606 = vunpack.c.h.b16 %v6277
        %v6607 = vunpack.c.l.b16 %v6278
        %v6608 = vunpack.c.h.b16 %v6278
        %v6609 = vunpack.c.l.b16 %v6279
        %v6610 = vunpack.c.h.b16 %v6279
        %v6611 = vunpack.c.l.b16 %v6280
        %v6612 = vunpack.c.h.b16 %v6280
        %v6613 = vunpack.c.l.b16 %v6281
        %v6614 = vunpack.c.h.b16 %v6281
        %v6615 = vunpack.c.l.b16 %v6282
        %v6616 = vunpack.c.h.b16 %v6282
        %v6617 = vunpack.c.l.b16 %v6283
        %v6618 = vunpack.c.h.b16 %v6283
        %v6619 = vunpack.c.l.b16 %v6284
        %v6620 = vunpack.c.h.b16 %v6284
        %v6621 = vpack.c.b16 %v6559, %v6557
        %v6622 = vpack.c.b16 %v6560, %v6558
        %v6623 = vpack.c.b16 %v6563, %v6561
        %v6624 = vpack.c.b16 %v6564, %v6562
        %v6625 = vpack.c.b16 %v6567, %v6565
        %v6626 = vpack.c.b16 %v6568, %v6566
        %v6627 = vpack.c.b16 %v6571, %v6569
        %v6628 = vpack.c.b16 %v6572, %v6570
        %v6629 = vpack.c.b16 %v6575, %v6573
        %v6630 = vpack.c.b16 %v6576, %v6574
        %v6631 = vpack.c.b16 %v6579, %v6577
        %v6632 = vpack.c.b16 %v6580, %v6578
        %v6633 = vpack.c.b16 %v6583, %v6581
        %v6634 = vpack.c.b16 %v6584, %v6582
        %v6635 = vpack.c.b16 %v6587, %v6585
        %v6636 = vpack.c.b16 %v6588, %v6586
        %v6637 = vpack.c.b16 %v6591, %v6589
        %v6638 = vpack.c.b16 %v6592, %v6590
        %v6639 = vpack.c.b16 %v6595, %v6593
        %v6640 = vpack.c.b16 %v6596, %v6594
        %v6641 = vpack.c.b16 %v6599, %v6597
        %v6642 = vpack.c.b16 %v6600, %v6598
        %v6643 = vpack.c.b16 %v6603, %v6601
        %v6644 = vpack.c.b16 %v6604, %v6602
        %v6645 = vpack.c.b16 %v6607, %v6605
        %v6646 = vpack.c.b16 %v6608, %v6606
        %v6647 = vpack.c.b16 %v6611, %v6609
        %v6648 = vpack.c.b16 %v6612, %v6610
        %v6649 = vpack.c.b16 %v6615, %v6613
        %v6650 = vpack.c.b16 %v6616, %v6614
        %v6651 = vpack.c.b16 %v6619, %v6617
        %v6652 = vpack.c.b16 %v6620, %v6618
        %6685 = vmatprep.subr.bf16.mxu0 %v6636
        %6686 = vmatpush1.bf16.msra.mxu0 %v6635
        %6687 = vmatprep.subr.bf16.mxu0 %v6634
        %6688 = vmatpush1.bf16.msra.mxu0 %v6633
        %6689 = vmatprep.subr.bf16.mxu0 %v6632
        %6690 = vmatpush1.bf16.msra.mxu0 %v6631
        %6691 = vmatprep.subr.bf16.mxu0 %v6630
        %6692 = vmatpush1.bf16.msra.mxu0 %v6629
        %6693 = vmatprep.subr.bf16.mxu0 %v6628
        %6694 = vmatpush1.bf16.msra.mxu0 %v6627
        %6695 = vmatprep.subr.bf16.mxu0 %v6626
        %6696 = vmatpush1.bf16.msra.mxu0 %v6625
        %6697 = vmatprep.subr.bf16.mxu0 %v6624
        %6698 = vmatpush1.bf16.msra.mxu0 %v6623
        %6699 = vmatprep.subr.bf16.mxu0 %v6622
        %6700 = vmatpush1.bf16.msra.mxu0 %v6621
        %6701 = vmatprep.subr.bf16.mxu0 %v6652
        %6702 = vmatpush2.bf16.msra.mxu0 %v6651
        %6703 = vmatprep.subr.bf16.mxu0 %v6650
        %6704 = vmatpush2.bf16.msra.mxu0 %v6649
        %6705 = vmatprep.subr.bf16.mxu0 %v6648
        %6706 = vmatpush2.bf16.msra.mxu0 %v6647
        %6707 = vmatprep.subr.bf16.mxu0 %v6646
        %6708 = vmatpush2.bf16.msra.mxu0 %v6645
        %6709 = vmatprep.subr.bf16.mxu0 %v6644
        %6710 = vmatpush2.bf16.msra.mxu0 %v6643
        %6711 = vmatprep.subr.bf16.mxu0 %v6642
        %6712 = vmatpush2.bf16.msra.mxu0 %v6641
        %6713 = vmatprep.subr.bf16.mxu0 %v6640
        %6714 = vmatpush2.bf16.msra.mxu0 %v6639
        %6715 = vmatprep.subr.bf16.mxu0 %v6638
        %6716 = vmatpush2.bf16.msra.mxu0 %v6637
        %6717 = vmatprep.mubr.bf16.mxu0 %v6244
        %6718 = vmatmul.mubr.bf16.gmra.mxu0 %v6243
        %v6719 = vpop.f32.mrf.mxu0
        %v6720 = vadd.f32 %v6519, %v6719
        %v6721 = vpop.f32.mrf.mxu0
        %v6722 = vadd.f32 %v6521, %v6721
        %v6723 = vpop.f32.mrf.mxu0
        %v6724 = vpop.f32.mrf.mxu0
        %6725 = vdwg.mxu0
        %s6726 = scalar_lea.vmem %s20, 512
        %v6727 = vld [vmem:[%s6726] sm:$0xff]
        %v6728 = vld [vmem:[%s6726 + $0x8] sm:$0xff]
        %v6729 = vld [vmem:[%s6726 + $0x10] sm:$0xff]
        %v6730 = vld [vmem:[%s6726 + $0x18] sm:$0xff]
        %v6731 = vld [vmem:[%s6726 + $0x20] sm:$0xff]
        %v6732 = vld [vmem:[%s6726 + $0x28] sm:$0xff]
        %v6733 = vld [vmem:[%s6726 + $0x30] sm:$0xff]
        %v6734 = vld [vmem:[%s6726 + $0x38] sm:$0xff]
        %v6735 = vld [vmem:[%s6726 + $0x40] sm:$0xff]
        %v6736 = vld [vmem:[%s6726 + $0x48] sm:$0xff]
        %v6737 = vld [vmem:[%s6726 + $0x50] sm:$0xff]
        %v6738 = vld [vmem:[%s6726 + $0x58] sm:$0xff]
        %v6739 = vld [vmem:[%s6726 + $0x60] sm:$0xff]
        %v6740 = vld [vmem:[%s6726 + $0x68] sm:$0xff]
        %v6741 = vld [vmem:[%s6726 + $0x70] sm:$0xff]
        %v6742 = vld [vmem:[%s6726 + $0x78] sm:$0xff]
        %v6743 = vld [vmem:[%s6726 + $0x80] sm:$0xff]
        %v6744 = vld [vmem:[%s6726 + $0x88] sm:$0xff]
        %v6745 = vld [vmem:[%s6726 + $0x90] sm:$0xff]
        %v6746 = vld [vmem:[%s6726 + $0x98] sm:$0xff]
        %v6747 = vld [vmem:[%s6726 + $0xa0] sm:$0xff]
        %v6748 = vld [vmem:[%s6726 + $0xa8] sm:$0xff]
        %v6749 = vld [vmem:[%s6726 + $0xb0] sm:$0xff]
        %v6750 = vld [vmem:[%s6726 + $0xb8] sm:$0xff]
        %v6751 = vld [vmem:[%s6726 + $0xc0] sm:$0xff]
        %v6752 = vld [vmem:[%s6726 + $0xc8] sm:$0xff]
        %v6753 = vld [vmem:[%s6726 + $0xd0] sm:$0xff]
        %v6754 = vld [vmem:[%s6726 + $0xd8] sm:$0xff]
        %v6755 = vld [vmem:[%s6726 + $0xe0] sm:$0xff]
        %v6756 = vld [vmem:[%s6726 + $0xe8] sm:$0xff]
        %v6757 = vld [vmem:[%s6726 + $0xf0] sm:$0xff]
        %v6758 = vld [vmem:[%s6726 + $0xf8] sm:$0xff]
        %v6791 = vunpack.c.l.b16 %v6727
        %v6792 = vunpack.c.h.b16 %v6727
        %v6793 = vunpack.c.l.b16 %v6728
        %v6794 = vunpack.c.h.b16 %v6728
        %v6795 = vunpack.c.l.b16 %v6729
        %v6796 = vunpack.c.h.b16 %v6729
        %v6797 = vunpack.c.l.b16 %v6730
        %v6798 = vunpack.c.h.b16 %v6730
        %v6799 = vunpack.c.l.b16 %v6731
        %v6800 = vunpack.c.h.b16 %v6731
        %v6801 = vunpack.c.l.b16 %v6732
        %v6802 = vunpack.c.h.b16 %v6732
        %v6803 = vunpack.c.l.b16 %v6733
        %v6804 = vunpack.c.h.b16 %v6733
        %v6805 = vunpack.c.l.b16 %v6734
        %v6806 = vunpack.c.h.b16 %v6734
        %v6807 = vunpack.c.l.b16 %v6735
        %v6808 = vunpack.c.h.b16 %v6735
        %v6809 = vunpack.c.l.b16 %v6736
        %v6810 = vunpack.c.h.b16 %v6736
        %v6811 = vunpack.c.l.b16 %v6737
        %v6812 = vunpack.c.h.b16 %v6737
        %v6813 = vunpack.c.l.b16 %v6738
        %v6814 = vunpack.c.h.b16 %v6738
        %v6815 = vunpack.c.l.b16 %v6739
        %v6816 = vunpack.c.h.b16 %v6739
        %v6817 = vunpack.c.l.b16 %v6740
        %v6818 = vunpack.c.h.b16 %v6740
        %v6819 = vunpack.c.l.b16 %v6741
        %v6820 = vunpack.c.h.b16 %v6741
        %v6821 = vunpack.c.l.b16 %v6742
        %v6822 = vunpack.c.h.b16 %v6742
        %v6823 = vunpack.c.l.b16 %v6743
        %v6824 = vunpack.c.h.b16 %v6743
        %v6825 = vunpack.c.l.b16 %v6744
        %v6826 = vunpack.c.h.b16 %v6744
        %v6827 = vunpack.c.l.b16 %v6745
        %v6828 = vunpack.c.h.b16 %v6745
        %v6829 = vunpack.c.l.b16 %v6746
        %v6830 = vunpack.c.h.b16 %v6746
        %v6831 = vunpack.c.l.b16 %v6747
        %v6832 = vunpack.c.h.b16 %v6747
        %v6833 = vunpack.c.l.b16 %v6748
        %v6834 = vunpack.c.h.b16 %v6748
        %v6835 = vunpack.c.l.b16 %v6749
        %v6836 = vunpack.c.h.b16 %v6749
        %v6837 = vunpack.c.l.b16 %v6750
        %v6838 = vunpack.c.h.b16 %v6750
        %v6839 = vunpack.c.l.b16 %v6751
        %v6840 = vunpack.c.h.b16 %v6751
        %v6841 = vunpack.c.l.b16 %v6752
        %v6842 = vunpack.c.h.b16 %v6752
        %v6843 = vunpack.c.l.b16 %v6753
        %v6844 = vunpack.c.h.b16 %v6753
        %v6845 = vunpack.c.l.b16 %v6754
        %v6846 = vunpack.c.h.b16 %v6754
        %v6847 = vunpack.c.l.b16 %v6755
        %v6848 = vunpack.c.h.b16 %v6755
        %v6849 = vunpack.c.l.b16 %v6756
        %v6850 = vunpack.c.h.b16 %v6756
        %v6851 = vunpack.c.l.b16 %v6757
        %v6852 = vunpack.c.h.b16 %v6757
        %v6853 = vunpack.c.l.b16 %v6758
        %v6854 = vunpack.c.h.b16 %v6758
        %v6855 = vpack.c.b16 %v6793, %v6791
        %v6856 = vpack.c.b16 %v6794, %v6792
        %v6857 = vpack.c.b16 %v6797, %v6795
        %v6858 = vpack.c.b16 %v6798, %v6796
        %v6859 = vpack.c.b16 %v6801, %v6799
        %v6860 = vpack.c.b16 %v6802, %v6800
        %v6861 = vpack.c.b16 %v6805, %v6803
        %v6862 = vpack.c.b16 %v6806, %v6804
        %v6863 = vpack.c.b16 %v6809, %v6807
        %v6864 = vpack.c.b16 %v6810, %v6808
        %v6865 = vpack.c.b16 %v6813, %v6811
        %v6866 = vpack.c.b16 %v6814, %v6812
        %v6867 = vpack.c.b16 %v6817, %v6815
        %v6868 = vpack.c.b16 %v6818, %v6816
        %v6869 = vpack.c.b16 %v6821, %v6819
        %v6870 = vpack.c.b16 %v6822, %v6820
        %v6871 = vpack.c.b16 %v6825, %v6823
        %v6872 = vpack.c.b16 %v6826, %v6824
        %v6873 = vpack.c.b16 %v6829, %v6827
        %v6874 = vpack.c.b16 %v6830, %v6828
        %v6875 = vpack.c.b16 %v6833, %v6831
        %v6876 = vpack.c.b16 %v6834, %v6832
        %v6877 = vpack.c.b16 %v6837, %v6835
        %v6878 = vpack.c.b16 %v6838, %v6836
        %v6879 = vpack.c.b16 %v6841, %v6839
        %v6880 = vpack.c.b16 %v6842, %v6840
        %v6881 = vpack.c.b16 %v6845, %v6843
        %v6882 = vpack.c.b16 %v6846, %v6844
        %v6883 = vpack.c.b16 %v6849, %v6847
        %v6884 = vpack.c.b16 %v6850, %v6848
        %v6885 = vpack.c.b16 %v6853, %v6851
        %v6886 = vpack.c.b16 %v6854, %v6852
        %6919 = vmatprep.subr.bf16.mxu0 %v6870
        %6920 = vmatpush1.bf16.msra.mxu0 %v6869
        %6921 = vmatprep.subr.bf16.mxu0 %v6868
        %6922 = vmatpush1.bf16.msra.mxu0 %v6867
        %6923 = vmatprep.subr.bf16.mxu0 %v6866
        %6924 = vmatpush1.bf16.msra.mxu0 %v6865
        %6925 = vmatprep.subr.bf16.mxu0 %v6864
        %6926 = vmatpush1.bf16.msra.mxu0 %v6863
        %6927 = vmatprep.subr.bf16.mxu0 %v6862
        %6928 = vmatpush1.bf16.msra.mxu0 %v6861
        %6929 = vmatprep.subr.bf16.mxu0 %v6860
        %6930 = vmatpush1.bf16.msra.mxu0 %v6859
        %6931 = vmatprep.subr.bf16.mxu0 %v6858
        %6932 = vmatpush1.bf16.msra.mxu0 %v6857
        %6933 = vmatprep.subr.bf16.mxu0 %v6856
        %6934 = vmatpush1.bf16.msra.mxu0 %v6855
        %6935 = vmatprep.subr.bf16.mxu0 %v6886
        %6936 = vmatpush2.bf16.msra.mxu0 %v6885
        %6937 = vmatprep.subr.bf16.mxu0 %v6884
        %6938 = vmatpush2.bf16.msra.mxu0 %v6883
        %6939 = vmatprep.subr.bf16.mxu0 %v6882
        %6940 = vmatpush2.bf16.msra.mxu0 %v6881
        %6941 = vmatprep.subr.bf16.mxu0 %v6880
        %6942 = vmatpush2.bf16.msra.mxu0 %v6879
        %6943 = vmatprep.subr.bf16.mxu0 %v6878
        %6944 = vmatpush2.bf16.msra.mxu0 %v6877
        %6945 = vmatprep.subr.bf16.mxu0 %v6876
        %6946 = vmatpush2.bf16.msra.mxu0 %v6875
        %6947 = vmatprep.subr.bf16.mxu0 %v6874
        %6948 = vmatpush2.bf16.msra.mxu0 %v6873
        %6949 = vmatprep.subr.bf16.mxu0 %v6872
        %6950 = vmatpush2.bf16.msra.mxu0 %v6871
        %6951 = vmatprep.mubr.bf16.mxu0 %v6246
        %6952 = vmatmul.mubr.bf16.gmra.mxu0 %v6245
        %v6953 = vpop.f32.mrf.mxu0
        %v6954 = vadd.f32 0.0, %v6953
        %v6955 = vpop.f32.mrf.mxu0
        %v6956 = vadd.f32 0.0, %v6955
        %v6957 = vpop.f32.mrf.mxu0
        %v6958 = vpop.f32.mrf.mxu0
        %6959 = vdwg.mxu0
        %v6960 = vadd.f32 %v6720, %v6954
        %v6961 = vadd.f32 %v6722, %v6956
        %s6962 = scalar_lea.vmem %s20, 768
        %v6963 = vld [vmem:[%s6962] sm:$0xff]
        %v6964 = vld [vmem:[%s6962 + $0x8] sm:$0xff]
        %v6965 = vld [vmem:[%s6962 + $0x10] sm:$0xff]
        %v6966 = vld [vmem:[%s6962 + $0x18] sm:$0xff]
        %v6967 = vld [vmem:[%s6962 + $0x20] sm:$0xff]
        %v6968 = vld [vmem:[%s6962 + $0x28] sm:$0xff]
        %v6969 = vld [vmem:[%s6962 + $0x30] sm:$0xff]
        %v6970 = vld [vmem:[%s6962 + $0x38] sm:$0xff]
        %v6971 = vld [vmem:[%s6962 + $0x40] sm:$0xff]
        %v6972 = vld [vmem:[%s6962 + $0x48] sm:$0xff]
        %v6973 = vld [vmem:[%s6962 + $0x50] sm:$0xff]
        %v6974 = vld [vmem:[%s6962 + $0x58] sm:$0xff]
        %v6975 = vld [vmem:[%s6962 + $0x60] sm:$0xff]
        %v6976 = vld [vmem:[%s6962 + $0x68] sm:$0xff]
        %v6977 = vld [vmem:[%s6962 + $0x70] sm:$0xff]
        %v6978 = vld [vmem:[%s6962 + $0x78] sm:$0xff]
        %v6979 = vld [vmem:[%s6962 + $0x80] sm:$0xff]
        %v6980 = vld [vmem:[%s6962 + $0x88] sm:$0xff]
        %v6981 = vld [vmem:[%s6962 + $0x90] sm:$0xff]
        %v6982 = vld [vmem:[%s6962 + $0x98] sm:$0xff]
        %v6983 = vld [vmem:[%s6962 + $0xa0] sm:$0xff]
        %v6984 = vld [vmem:[%s6962 + $0xa8] sm:$0xff]
        %v6985 = vld [vmem:[%s6962 + $0xb0] sm:$0xff]
        %v6986 = vld [vmem:[%s6962 + $0xb8] sm:$0xff]
        %v6987 = vld [vmem:[%s6962 + $0xc0] sm:$0xff]
        %v6988 = vld [vmem:[%s6962 + $0xc8] sm:$0xff]
        %v6989 = vld [vmem:[%s6962 + $0xd0] sm:$0xff]
        %v6990 = vld [vmem:[%s6962 + $0xd8] sm:$0xff]
        %v6991 = vld [vmem:[%s6962 + $0xe0] sm:$0xff]
        %v6992 = vld [vmem:[%s6962 + $0xe8] sm:$0xff]
        %v6993 = vld [vmem:[%s6962 + $0xf0] sm:$0xff]
        %v6994 = vld [vmem:[%s6962 + $0xf8] sm:$0xff]
        %v6997 = vrot.slane %v6245, 4
        %v6998 = vrot.slane %v6246, 4
        %v7033 = vunpack.c.l.b16 %v6963
        %v7034 = vunpack.c.h.b16 %v6963
        %v7035 = vunpack.c.l.b16 %v6964
        %v7036 = vunpack.c.h.b16 %v6964
        %v7037 = vunpack.c.l.b16 %v6965
        %v7038 = vunpack.c.h.b16 %v6965
        %v7039 = vunpack.c.l.b16 %v6966
        %v7040 = vunpack.c.h.b16 %v6966
        %v7041 = vunpack.c.l.b16 %v6967
        %v7042 = vunpack.c.h.b16 %v6967
        %v7043 = vunpack.c.l.b16 %v6968
        %v7044 = vunpack.c.h.b16 %v6968
        %v7045 = vunpack.c.l.b16 %v6969
        %v7046 = vunpack.c.h.b16 %v6969
        %v7047 = vunpack.c.l.b16 %v6970
        %v7048 = vunpack.c.h.b16 %v6970
        %v7049 = vunpack.c.l.b16 %v6971
        %v7050 = vunpack.c.h.b16 %v6971
        %v7051 = vunpack.c.l.b16 %v6972
        %v7052 = vunpack.c.h.b16 %v6972
        %v7053 = vunpack.c.l.b16 %v6973
        %v7054 = vunpack.c.h.b16 %v6973
        %v7055 = vunpack.c.l.b16 %v6974
        %v7056 = vunpack.c.h.b16 %v6974
        %v7057 = vunpack.c.l.b16 %v6975
        %v7058 = vunpack.c.h.b16 %v6975
        %v7059 = vunpack.c.l.b16 %v6976
        %v7060 = vunpack.c.h.b16 %v6976
        %v7061 = vunpack.c.l.b16 %v6977
        %v7062 = vunpack.c.h.b16 %v6977
        %v7063 = vunpack.c.l.b16 %v6978
        %v7064 = vunpack.c.h.b16 %v6978
        %v7065 = vunpack.c.l.b16 %v6979
        %v7066 = vunpack.c.h.b16 %v6979
        %v7067 = vunpack.c.l.b16 %v6980
        %v7068 = vunpack.c.h.b16 %v6980
        %v7069 = vunpack.c.l.b16 %v6981
        %v7070 = vunpack.c.h.b16 %v6981
        %v7071 = vunpack.c.l.b16 %v6982
        %v7072 = vunpack.c.h.b16 %v6982
        %v7073 = vunpack.c.l.b16 %v6983
        %v7074 = vunpack.c.h.b16 %v6983
        %v7075 = vunpack.c.l.b16 %v6984
        %v7076 = vunpack.c.h.b16 %v6984
        %v7077 = vunpack.c.l.b16 %v6985
        %v7078 = vunpack.c.h.b16 %v6985
        %v7079 = vunpack.c.l.b16 %v6986
        %v7080 = vunpack.c.h.b16 %v6986
        %v7081 = vunpack.c.l.b16 %v6987
        %v7082 = vunpack.c.h.b16 %v6987
        %v7083 = vunpack.c.l.b16 %v6988
        %v7084 = vunpack.c.h.b16 %v6988
        %v7085 = vunpack.c.l.b16 %v6989
        %v7086 = vunpack.c.h.b16 %v6989
        %v7087 = vunpack.c.l.b16 %v6990
        %v7088 = vunpack.c.h.b16 %v6990
        %v7089 = vunpack.c.l.b16 %v6991
        %v7090 = vunpack.c.h.b16 %v6991
        %v7091 = vunpack.c.l.b16 %v6992
        %v7092 = vunpack.c.h.b16 %v6992
        %v7093 = vunpack.c.l.b16 %v6993
        %v7094 = vunpack.c.h.b16 %v6993
        %v7095 = vunpack.c.l.b16 %v6994
        %v7096 = vunpack.c.h.b16 %v6994
        %v7097 = vpack.c.b16 %v7035, %v7033
        %v7098 = vpack.c.b16 %v7036, %v7034
        %v7099 = vpack.c.b16 %v7039, %v7037
        %v7100 = vpack.c.b16 %v7040, %v7038
        %v7101 = vpack.c.b16 %v7043, %v7041
        %v7102 = vpack.c.b16 %v7044, %v7042
        %v7103 = vpack.c.b16 %v7047, %v7045
        %v7104 = vpack.c.b16 %v7048, %v7046
        %v7105 = vpack.c.b16 %v7051, %v7049
        %v7106 = vpack.c.b16 %v7052, %v7050
        %v7107 = vpack.c.b16 %v7055, %v7053
        %v7108 = vpack.c.b16 %v7056, %v7054
        %v7109 = vpack.c.b16 %v7059, %v7057
        %v7110 = vpack.c.b16 %v7060, %v7058
        %v7111 = vpack.c.b16 %v7063, %v7061
        %v7112 = vpack.c.b16 %v7064, %v7062
        %v7113 = vpack.c.b16 %v7067, %v7065
        %v7114 = vpack.c.b16 %v7068, %v7066
        %v7115 = vpack.c.b16 %v7071, %v7069
        %v7116 = vpack.c.b16 %v7072, %v7070
        %v7117 = vpack.c.b16 %v7075, %v7073
        %v7118 = vpack.c.b16 %v7076, %v7074
        %v7119 = vpack.c.b16 %v7079, %v7077
        %v7120 = vpack.c.b16 %v7080, %v7078
        %v7121 = vpack.c.b16 %v7083, %v7081
        %v7122 = vpack.c.b16 %v7084, %v7082
        %v7123 = vpack.c.b16 %v7087, %v7085
        %v7124 = vpack.c.b16 %v7088, %v7086
        %v7125 = vpack.c.b16 %v7091, %v7089
        %v7126 = vpack.c.b16 %v7092, %v7090
        %v7127 = vpack.c.b16 %v7095, %v7093
        %v7128 = vpack.c.b16 %v7096, %v7094
        %7161 = vmatprep.subr.bf16.mxu0 %v7112
        %7162 = vmatpush1.bf16.msra.mxu0 %v7111
        %7163 = vmatprep.subr.bf16.mxu0 %v7110
        %7164 = vmatpush1.bf16.msra.mxu0 %v7109
        %7165 = vmatprep.subr.bf16.mxu0 %v7108
        %7166 = vmatpush1.bf16.msra.mxu0 %v7107
        %7167 = vmatprep.subr.bf16.mxu0 %v7106
        %7168 = vmatpush1.bf16.msra.mxu0 %v7105
        %7169 = vmatprep.subr.bf16.mxu0 %v7104
        %7170 = vmatpush1.bf16.msra.mxu0 %v7103
        %7171 = vmatprep.subr.bf16.mxu0 %v7102
        %7172 = vmatpush1.bf16.msra.mxu0 %v7101
        %7173 = vmatprep.subr.bf16.mxu0 %v7100
        %7174 = vmatpush1.bf16.msra.mxu0 %v7099
        %7175 = vmatprep.subr.bf16.mxu0 %v7098
        %7176 = vmatpush1.bf16.msra.mxu0 %v7097
        %7177 = vmatprep.subr.bf16.mxu0 %v7128
        %7178 = vmatpush2.bf16.msra.mxu0 %v7127
        %7179 = vmatprep.subr.bf16.mxu0 %v7126
        %7180 = vmatpush2.bf16.msra.mxu0 %v7125
        %7181 = vmatprep.subr.bf16.mxu0 %v7124
        %7182 = vmatpush2.bf16.msra.mxu0 %v7123
        %7183 = vmatprep.subr.bf16.mxu0 %v7122
        %7184 = vmatpush2.bf16.msra.mxu0 %v7121
        %7185 = vmatprep.subr.bf16.mxu0 %v7120
        %7186 = vmatpush2.bf16.msra.mxu0 %v7119
        %7187 = vmatprep.subr.bf16.mxu0 %v7118
        %7188 = vmatpush2.bf16.msra.mxu0 %v7117
        %7189 = vmatprep.subr.bf16.mxu0 %v7116
        %7190 = vmatpush2.bf16.msra.mxu0 %v7115
        %7191 = vmatprep.subr.bf16.mxu0 %v7114
        %7192 = vmatpush2.bf16.msra.mxu0 %v7113
        %7193 = vmatprep.mubr.bf16.mxu0 %v6998
        %7194 = vmatmul.mubr.bf16.gmra.mxu0 %v6997
        %v7195 = vpop.f32.mrf.mxu0
        %v7196 = vadd.f32 0.0, %v7195
        %v7197 = vpop.f32.mrf.mxu0
        %v7198 = vadd.f32 0.0, %v7197
        %v7199 = vpop.f32.mrf.mxu0
        %v7200 = vpop.f32.mrf.mxu0
        %7201 = vdwg.mxu0
        %v7202 = vadd.f32 %v6960, %v7196
        %v7203 = vadd.f32 %v6961, %v7198
        %s7204 = scalar_lea.vmem %s20, 1024
        %v7205 = vld [vmem:[%s7204] sm:$0xff]
        %v7206 = vld [vmem:[%s7204 + $0x8] sm:$0xff]
        %v7207 = vld [vmem:[%s7204 + $0x10] sm:$0xff]
        %v7208 = vld [vmem:[%s7204 + $0x18] sm:$0xff]
        %v7209 = vld [vmem:[%s7204 + $0x20] sm:$0xff]
        %v7210 = vld [vmem:[%s7204 + $0x28] sm:$0xff]
        %v7211 = vld [vmem:[%s7204 + $0x30] sm:$0xff]
        %v7212 = vld [vmem:[%s7204 + $0x38] sm:$0xff]
        %v7213 = vld [vmem:[%s7204 + $0x40] sm:$0xff]
        %v7214 = vld [vmem:[%s7204 + $0x48] sm:$0xff]
        %v7215 = vld [vmem:[%s7204 + $0x50] sm:$0xff]
        %v7216 = vld [vmem:[%s7204 + $0x58] sm:$0xff]
        %v7217 = vld [vmem:[%s7204 + $0x60] sm:$0xff]
        %v7218 = vld [vmem:[%s7204 + $0x68] sm:$0xff]
        %v7219 = vld [vmem:[%s7204 + $0x70] sm:$0xff]
        %v7220 = vld [vmem:[%s7204 + $0x78] sm:$0xff]
        %v7221 = vld [vmem:[%s7204 + $0x80] sm:$0xff]
        %v7222 = vld [vmem:[%s7204 + $0x88] sm:$0xff]
        %v7223 = vld [vmem:[%s7204 + $0x90] sm:$0xff]
        %v7224 = vld [vmem:[%s7204 + $0x98] sm:$0xff]
        %v7225 = vld [vmem:[%s7204 + $0xa0] sm:$0xff]
        %v7226 = vld [vmem:[%s7204 + $0xa8] sm:$0xff]
        %v7227 = vld [vmem:[%s7204 + $0xb0] sm:$0xff]
        %v7228 = vld [vmem:[%s7204 + $0xb8] sm:$0xff]
        %v7229 = vld [vmem:[%s7204 + $0xc0] sm:$0xff]
        %v7230 = vld [vmem:[%s7204 + $0xc8] sm:$0xff]
        %v7231 = vld [vmem:[%s7204 + $0xd0] sm:$0xff]
        %v7232 = vld [vmem:[%s7204 + $0xd8] sm:$0xff]
        %v7233 = vld [vmem:[%s7204 + $0xe0] sm:$0xff]
        %v7234 = vld [vmem:[%s7204 + $0xe8] sm:$0xff]
        %v7235 = vld [vmem:[%s7204 + $0xf0] sm:$0xff]
        %v7236 = vld [vmem:[%s7204 + $0xf8] sm:$0xff]
        %v7269 = vunpack.c.l.b16 %v7205
        %v7270 = vunpack.c.h.b16 %v7205
        %v7271 = vunpack.c.l.b16 %v7206
        %v7272 = vunpack.c.h.b16 %v7206
        %v7273 = vunpack.c.l.b16 %v7207
        %v7274 = vunpack.c.h.b16 %v7207
        %v7275 = vunpack.c.l.b16 %v7208
        %v7276 = vunpack.c.h.b16 %v7208
        %v7277 = vunpack.c.l.b16 %v7209
        %v7278 = vunpack.c.h.b16 %v7209
        %v7279 = vunpack.c.l.b16 %v7210
        %v7280 = vunpack.c.h.b16 %v7210
        %v7281 = vunpack.c.l.b16 %v7211
        %v7282 = vunpack.c.h.b16 %v7211
        %v7283 = vunpack.c.l.b16 %v7212
        %v7284 = vunpack.c.h.b16 %v7212
        %v7285 = vunpack.c.l.b16 %v7213
        %v7286 = vunpack.c.h.b16 %v7213
        %v7287 = vunpack.c.l.b16 %v7214
        %v7288 = vunpack.c.h.b16 %v7214
        %v7289 = vunpack.c.l.b16 %v7215
        %v7290 = vunpack.c.h.b16 %v7215
        %v7291 = vunpack.c.l.b16 %v7216
        %v7292 = vunpack.c.h.b16 %v7216
        %v7293 = vunpack.c.l.b16 %v7217
        %v7294 = vunpack.c.h.b16 %v7217
        %v7295 = vunpack.c.l.b16 %v7218
        %v7296 = vunpack.c.h.b16 %v7218
        %v7297 = vunpack.c.l.b16 %v7219
        %v7298 = vunpack.c.h.b16 %v7219
        %v7299 = vunpack.c.l.b16 %v7220
        %v7300 = vunpack.c.h.b16 %v7220
        %v7301 = vunpack.c.l.b16 %v7221
        %v7302 = vunpack.c.h.b16 %v7221
        %v7303 = vunpack.c.l.b16 %v7222
        %v7304 = vunpack.c.h.b16 %v7222
        %v7305 = vunpack.c.l.b16 %v7223
        %v7306 = vunpack.c.h.b16 %v7223
        %v7307 = vunpack.c.l.b16 %v7224
        %v7308 = vunpack.c.h.b16 %v7224
        %v7309 = vunpack.c.l.b16 %v7225
        %v7310 = vunpack.c.h.b16 %v7225
        %v7311 = vunpack.c.l.b16 %v7226
        %v7312 = vunpack.c.h.b16 %v7226
        %v7313 = vunpack.c.l.b16 %v7227
        %v7314 = vunpack.c.h.b16 %v7227
        %v7315 = vunpack.c.l.b16 %v7228
        %v7316 = vunpack.c.h.b16 %v7228
        %v7317 = vunpack.c.l.b16 %v7229
        %v7318 = vunpack.c.h.b16 %v7229
        %v7319 = vunpack.c.l.b16 %v7230
        %v7320 = vunpack.c.h.b16 %v7230
        %v7321 = vunpack.c.l.b16 %v7231
        %v7322 = vunpack.c.h.b16 %v7231
        %v7323 = vunpack.c.l.b16 %v7232
        %v7324 = vunpack.c.h.b16 %v7232
        %v7325 = vunpack.c.l.b16 %v7233
        %v7326 = vunpack.c.h.b16 %v7233
        %v7327 = vunpack.c.l.b16 %v7234
        %v7328 = vunpack.c.h.b16 %v7234
        %v7329 = vunpack.c.l.b16 %v7235
        %v7330 = vunpack.c.h.b16 %v7235
        %v7331 = vunpack.c.l.b16 %v7236
        %v7332 = vunpack.c.h.b16 %v7236
        %v7333 = vpack.c.b16 %v7271, %v7269
        %v7334 = vpack.c.b16 %v7272, %v7270
        %v7335 = vpack.c.b16 %v7275, %v7273
        %v7336 = vpack.c.b16 %v7276, %v7274
        %v7337 = vpack.c.b16 %v7279, %v7277
        %v7338 = vpack.c.b16 %v7280, %v7278
        %v7339 = vpack.c.b16 %v7283, %v7281
        %v7340 = vpack.c.b16 %v7284, %v7282
        %v7341 = vpack.c.b16 %v7287, %v7285
        %v7342 = vpack.c.b16 %v7288, %v7286
        %v7343 = vpack.c.b16 %v7291, %v7289
        %v7344 = vpack.c.b16 %v7292, %v7290
        %v7345 = vpack.c.b16 %v7295, %v7293
        %v7346 = vpack.c.b16 %v7296, %v7294
        %v7347 = vpack.c.b16 %v7299, %v7297
        %v7348 = vpack.c.b16 %v7300, %v7298
        %v7349 = vpack.c.b16 %v7303, %v7301
        %v7350 = vpack.c.b16 %v7304, %v7302
        %v7351 = vpack.c.b16 %v7307, %v7305
        %v7352 = vpack.c.b16 %v7308, %v7306
        %v7353 = vpack.c.b16 %v7311, %v7309
        %v7354 = vpack.c.b16 %v7312, %v7310
        %v7355 = vpack.c.b16 %v7315, %v7313
        %v7356 = vpack.c.b16 %v7316, %v7314
        %v7357 = vpack.c.b16 %v7319, %v7317
        %v7358 = vpack.c.b16 %v7320, %v7318
        %v7359 = vpack.c.b16 %v7323, %v7321
        %v7360 = vpack.c.b16 %v7324, %v7322
        %v7361 = vpack.c.b16 %v7327, %v7325
        %v7362 = vpack.c.b16 %v7328, %v7326
        %v7363 = vpack.c.b16 %v7331, %v7329
        %v7364 = vpack.c.b16 %v7332, %v7330
        %7397 = vmatprep.subr.bf16.mxu0 %v7348
        %7398 = vmatpush1.bf16.msra.mxu0 %v7347
        %7399 = vmatprep.subr.bf16.mxu0 %v7346
        %7400 = vmatpush1.bf16.msra.mxu0 %v7345
        %7401 = vmatprep.subr.bf16.mxu0 %v7344
        %7402 = vmatpush1.bf16.msra.mxu0 %v7343
        %7403 = vmatprep.subr.bf16.mxu0 %v7342
        %7404 = vmatpush1.bf16.msra.mxu0 %v7341
        %7405 = vmatprep.subr.bf16.mxu0 %v7340
        %7406 = vmatpush1.bf16.msra.mxu0 %v7339
        %7407 = vmatprep.subr.bf16.mxu0 %v7338
        %7408 = vmatpush1.bf16.msra.mxu0 %v7337
        %7409 = vmatprep.subr.bf16.mxu0 %v7336
        %7410 = vmatpush1.bf16.msra.mxu0 %v7335
        %7411 = vmatprep.subr.bf16.mxu0 %v7334
        %7412 = vmatpush1.bf16.msra.mxu0 %v7333
        %7413 = vmatprep.subr.bf16.mxu0 %v7364
        %7414 = vmatpush2.bf16.msra.mxu0 %v7363
        %7415 = vmatprep.subr.bf16.mxu0 %v7362
        %7416 = vmatpush2.bf16.msra.mxu0 %v7361
        %7417 = vmatprep.subr.bf16.mxu0 %v7360
        %7418 = vmatpush2.bf16.msra.mxu0 %v7359
        %7419 = vmatprep.subr.bf16.mxu0 %v7358
        %7420 = vmatpush2.bf16.msra.mxu0 %v7357
        %7421 = vmatprep.subr.bf16.mxu0 %v7356
        %7422 = vmatpush2.bf16.msra.mxu0 %v7355
        %7423 = vmatprep.subr.bf16.mxu0 %v7354
        %7424 = vmatpush2.bf16.msra.mxu0 %v7353
        %7425 = vmatprep.subr.bf16.mxu0 %v7352
        %7426 = vmatpush2.bf16.msra.mxu0 %v7351
        %7427 = vmatprep.subr.bf16.mxu0 %v7350
        %7428 = vmatpush2.bf16.msra.mxu0 %v7349
        %7429 = vmatprep.mubr.bf16.mxu0 %v6248
        %7430 = vmatmul.mubr.bf16.gmra.mxu0 %v6247
        %v7431 = vpop.f32.mrf.mxu0
        %v7432 = vadd.f32 0.0, %v7431
        %v7433 = vpop.f32.mrf.mxu0
        %v7434 = vadd.f32 0.0, %v7433
        %v7435 = vpop.f32.mrf.mxu0
        %v7436 = vpop.f32.mrf.mxu0
        %7437 = vdwg.mxu0
        %v7438 = vadd.f32 %v7202, %v7432
        %v7439 = vadd.f32 %v7203, %v7434
        %s7440 = scalar_lea.vmem %s20, 1280
        %v7441 = vld [vmem:[%s7440] sm:$0xff]
        %v7442 = vld [vmem:[%s7440 + $0x8] sm:$0xff]
        %v7443 = vld [vmem:[%s7440 + $0x10] sm:$0xff]
        %v7444 = vld [vmem:[%s7440 + $0x18] sm:$0xff]
        %v7445 = vld [vmem:[%s7440 + $0x20] sm:$0xff]
        %v7446 = vld [vmem:[%s7440 + $0x28] sm:$0xff]
        %v7447 = vld [vmem:[%s7440 + $0x30] sm:$0xff]
        %v7448 = vld [vmem:[%s7440 + $0x38] sm:$0xff]
        %v7449 = vld [vmem:[%s7440 + $0x40] sm:$0xff]
        %v7450 = vld [vmem:[%s7440 + $0x48] sm:$0xff]
        %v7451 = vld [vmem:[%s7440 + $0x50] sm:$0xff]
        %v7452 = vld [vmem:[%s7440 + $0x58] sm:$0xff]
        %v7453 = vld [vmem:[%s7440 + $0x60] sm:$0xff]
        %v7454 = vld [vmem:[%s7440 + $0x68] sm:$0xff]
        %v7455 = vld [vmem:[%s7440 + $0x70] sm:$0xff]
        %v7456 = vld [vmem:[%s7440 + $0x78] sm:$0xff]
        %v7457 = vld [vmem:[%s7440 + $0x80] sm:$0xff]
        %v7458 = vld [vmem:[%s7440 + $0x88] sm:$0xff]
        %v7459 = vld [vmem:[%s7440 + $0x90] sm:$0xff]
        %v7460 = vld [vmem:[%s7440 + $0x98] sm:$0xff]
        %v7461 = vld [vmem:[%s7440 + $0xa0] sm:$0xff]
        %v7462 = vld [vmem:[%s7440 + $0xa8] sm:$0xff]
        %v7463 = vld [vmem:[%s7440 + $0xb0] sm:$0xff]
        %v7464 = vld [vmem:[%s7440 + $0xb8] sm:$0xff]
        %v7465 = vld [vmem:[%s7440 + $0xc0] sm:$0xff]
        %v7466 = vld [vmem:[%s7440 + $0xc8] sm:$0xff]
        %v7467 = vld [vmem:[%s7440 + $0xd0] sm:$0xff]
        %v7468 = vld [vmem:[%s7440 + $0xd8] sm:$0xff]
        %v7469 = vld [vmem:[%s7440 + $0xe0] sm:$0xff]
        %v7470 = vld [vmem:[%s7440 + $0xe8] sm:$0xff]
        %v7471 = vld [vmem:[%s7440 + $0xf0] sm:$0xff]
        %v7472 = vld [vmem:[%s7440 + $0xf8] sm:$0xff]
        %v7475 = vrot.slane %v6247, 4
        %v7476 = vrot.slane %v6248, 4
        %v7511 = vunpack.c.l.b16 %v7441
        %v7512 = vunpack.c.h.b16 %v7441
        %v7513 = vunpack.c.l.b16 %v7442
        %v7514 = vunpack.c.h.b16 %v7442
        %v7515 = vunpack.c.l.b16 %v7443
        %v7516 = vunpack.c.h.b16 %v7443
        %v7517 = vunpack.c.l.b16 %v7444
        %v7518 = vunpack.c.h.b16 %v7444
        %v7519 = vunpack.c.l.b16 %v7445
        %v7520 = vunpack.c.h.b16 %v7445
        %v7521 = vunpack.c.l.b16 %v7446
        %v7522 = vunpack.c.h.b16 %v7446
        %v7523 = vunpack.c.l.b16 %v7447
        %v7524 = vunpack.c.h.b16 %v7447
        %v7525 = vunpack.c.l.b16 %v7448
        %v7526 = vunpack.c.h.b16 %v7448
        %v7527 = vunpack.c.l.b16 %v7449
        %v7528 = vunpack.c.h.b16 %v7449
        %v7529 = vunpack.c.l.b16 %v7450
        %v7530 = vunpack.c.h.b16 %v7450
        %v7531 = vunpack.c.l.b16 %v7451
        %v7532 = vunpack.c.h.b16 %v7451
        %v7533 = vunpack.c.l.b16 %v7452
        %v7534 = vunpack.c.h.b16 %v7452
        %v7535 = vunpack.c.l.b16 %v7453
        %v7536 = vunpack.c.h.b16 %v7453
        %v7537 = vunpack.c.l.b16 %v7454
        %v7538 = vunpack.c.h.b16 %v7454
        %v7539 = vunpack.c.l.b16 %v7455
        %v7540 = vunpack.c.h.b16 %v7455
        %v7541 = vunpack.c.l.b16 %v7456
        %v7542 = vunpack.c.h.b16 %v7456
        %v7543 = vunpack.c.l.b16 %v7457
        %v7544 = vunpack.c.h.b16 %v7457
        %v7545 = vunpack.c.l.b16 %v7458
        %v7546 = vunpack.c.h.b16 %v7458
        %v7547 = vunpack.c.l.b16 %v7459
        %v7548 = vunpack.c.h.b16 %v7459
        %v7549 = vunpack.c.l.b16 %v7460
        %v7550 = vunpack.c.h.b16 %v7460
        %v7551 = vunpack.c.l.b16 %v7461
        %v7552 = vunpack.c.h.b16 %v7461
        %v7553 = vunpack.c.l.b16 %v7462
        %v7554 = vunpack.c.h.b16 %v7462
        %v7555 = vunpack.c.l.b16 %v7463
        %v7556 = vunpack.c.h.b16 %v7463
        %v7557 = vunpack.c.l.b16 %v7464
        %v7558 = vunpack.c.h.b16 %v7464
        %v7559 = vunpack.c.l.b16 %v7465
        %v7560 = vunpack.c.h.b16 %v7465
        %v7561 = vunpack.c.l.b16 %v7466
        %v7562 = vunpack.c.h.b16 %v7466
        %v7563 = vunpack.c.l.b16 %v7467
        %v7564 = vunpack.c.h.b16 %v7467
        %v7565 = vunpack.c.l.b16 %v7468
        %v7566 = vunpack.c.h.b16 %v7468
        %v7567 = vunpack.c.l.b16 %v7469
        %v7568 = vunpack.c.h.b16 %v7469
        %v7569 = vunpack.c.l.b16 %v7470
        %v7570 = vunpack.c.h.b16 %v7470
        %v7571 = vunpack.c.l.b16 %v7471
        %v7572 = vunpack.c.h.b16 %v7471
        %v7573 = vunpack.c.l.b16 %v7472
        %v7574 = vunpack.c.h.b16 %v7472
        %v7575 = vpack.c.b16 %v7513, %v7511
        %v7576 = vpack.c.b16 %v7514, %v7512
        %v7577 = vpack.c.b16 %v7517, %v7515
        %v7578 = vpack.c.b16 %v7518, %v7516
        %v7579 = vpack.c.b16 %v7521, %v7519
        %v7580 = vpack.c.b16 %v7522, %v7520
        %v7581 = vpack.c.b16 %v7525, %v7523
        %v7582 = vpack.c.b16 %v7526, %v7524
        %v7583 = vpack.c.b16 %v7529, %v7527
        %v7584 = vpack.c.b16 %v7530, %v7528
        %v7585 = vpack.c.b16 %v7533, %v7531
        %v7586 = vpack.c.b16 %v7534, %v7532
        %v7587 = vpack.c.b16 %v7537, %v7535
        %v7588 = vpack.c.b16 %v7538, %v7536
        %v7589 = vpack.c.b16 %v7541, %v7539
        %v7590 = vpack.c.b16 %v7542, %v7540
        %v7591 = vpack.c.b16 %v7545, %v7543
        %v7592 = vpack.c.b16 %v7546, %v7544
        %v7593 = vpack.c.b16 %v7549, %v7547
        %v7594 = vpack.c.b16 %v7550, %v7548
        %v7595 = vpack.c.b16 %v7553, %v7551
        %v7596 = vpack.c.b16 %v7554, %v7552
        %v7597 = vpack.c.b16 %v7557, %v7555
        %v7598 = vpack.c.b16 %v7558, %v7556
        %v7599 = vpack.c.b16 %v7561, %v7559
        %v7600 = vpack.c.b16 %v7562, %v7560
        %v7601 = vpack.c.b16 %v7565, %v7563
        %v7602 = vpack.c.b16 %v7566, %v7564
        %v7603 = vpack.c.b16 %v7569, %v7567
        %v7604 = vpack.c.b16 %v7570, %v7568
        %v7605 = vpack.c.b16 %v7573, %v7571
        %v7606 = vpack.c.b16 %v7574, %v7572
        %7639 = vmatprep.subr.bf16.mxu0 %v7590
        %7640 = vmatpush1.bf16.msra.mxu0 %v7589
        %7641 = vmatprep.subr.bf16.mxu0 %v7588
        %7642 = vmatpush1.bf16.msra.mxu0 %v7587
        %7643 = vmatprep.subr.bf16.mxu0 %v7586
        %7644 = vmatpush1.bf16.msra.mxu0 %v7585
        %7645 = vmatprep.subr.bf16.mxu0 %v7584
        %7646 = vmatpush1.bf16.msra.mxu0 %v7583
        %7647 = vmatprep.subr.bf16.mxu0 %v7582
        %7648 = vmatpush1.bf16.msra.mxu0 %v7581
        %7649 = vmatprep.subr.bf16.mxu0 %v7580
        %7650 = vmatpush1.bf16.msra.mxu0 %v7579
        %7651 = vmatprep.subr.bf16.mxu0 %v7578
        %7652 = vmatpush1.bf16.msra.mxu0 %v7577
        %7653 = vmatprep.subr.bf16.mxu0 %v7576
        %7654 = vmatpush1.bf16.msra.mxu0 %v7575
        %7655 = vmatprep.subr.bf16.mxu0 %v7606
        %7656 = vmatpush2.bf16.msra.mxu0 %v7605
        %7657 = vmatprep.subr.bf16.mxu0 %v7604
        %7658 = vmatpush2.bf16.msra.mxu0 %v7603
        %7659 = vmatprep.subr.bf16.mxu0 %v7602
        %7660 = vmatpush2.bf16.msra.mxu0 %v7601
        %7661 = vmatprep.subr.bf16.mxu0 %v7600
        %7662 = vmatpush2.bf16.msra.mxu0 %v7599
        %7663 = vmatprep.subr.bf16.mxu0 %v7598
        %7664 = vmatpush2.bf16.msra.mxu0 %v7597
        %7665 = vmatprep.subr.bf16.mxu0 %v7596
        %7666 = vmatpush2.bf16.msra.mxu0 %v7595
        %7667 = vmatprep.subr.bf16.mxu0 %v7594
        %7668 = vmatpush2.bf16.msra.mxu0 %v7593
        %7669 = vmatprep.subr.bf16.mxu0 %v7592
        %7670 = vmatpush2.bf16.msra.mxu0 %v7591
        %7671 = vmatprep.mubr.bf16.mxu0 %v7476
        %7672 = vmatmul.mubr.bf16.gmra.mxu0 %v7475
        %v7673 = vpop.f32.mrf.mxu0
        %v7674 = vadd.f32 0.0, %v7673
        %v7675 = vpop.f32.mrf.mxu0
        %v7676 = vadd.f32 0.0, %v7675
        %v7677 = vpop.f32.mrf.mxu0
        %v7678 = vpop.f32.mrf.mxu0
        %7679 = vdwg.mxu0
        %v7680 = vadd.f32 %v7438, %v7674
        %v7681 = vadd.f32 %v7439, %v7676
        %s7682 = scalar_lea.vmem %s20, 1536
        %v7683 = vld [vmem:[%s7682] sm:$0xff]
        %v7684 = vld [vmem:[%s7682 + $0x8] sm:$0xff]
        %v7685 = vld [vmem:[%s7682 + $0x10] sm:$0xff]
        %v7686 = vld [vmem:[%s7682 + $0x18] sm:$0xff]
        %v7687 = vld [vmem:[%s7682 + $0x20] sm:$0xff]
        %v7688 = vld [vmem:[%s7682 + $0x28] sm:$0xff]
        %v7689 = vld [vmem:[%s7682 + $0x30] sm:$0xff]
        %v7690 = vld [vmem:[%s7682 + $0x38] sm:$0xff]
        %v7691 = vld [vmem:[%s7682 + $0x40] sm:$0xff]
        %v7692 = vld [vmem:[%s7682 + $0x48] sm:$0xff]
        %v7693 = vld [vmem:[%s7682 + $0x50] sm:$0xff]
        %v7694 = vld [vmem:[%s7682 + $0x58] sm:$0xff]
        %v7695 = vld [vmem:[%s7682 + $0x60] sm:$0xff]
        %v7696 = vld [vmem:[%s7682 + $0x68] sm:$0xff]
        %v7697 = vld [vmem:[%s7682 + $0x70] sm:$0xff]
        %v7698 = vld [vmem:[%s7682 + $0x78] sm:$0xff]
        %v7699 = vld [vmem:[%s7682 + $0x80] sm:$0xff]
        %v7700 = vld [vmem:[%s7682 + $0x88] sm:$0xff]
        %v7701 = vld [vmem:[%s7682 + $0x90] sm:$0xff]
        %v7702 = vld [vmem:[%s7682 + $0x98] sm:$0xff]
        %v7703 = vld [vmem:[%s7682 + $0xa0] sm:$0xff]
        %v7704 = vld [vmem:[%s7682 + $0xa8] sm:$0xff]
        %v7705 = vld [vmem:[%s7682 + $0xb0] sm:$0xff]
        %v7706 = vld [vmem:[%s7682 + $0xb8] sm:$0xff]
        %v7707 = vld [vmem:[%s7682 + $0xc0] sm:$0xff]
        %v7708 = vld [vmem:[%s7682 + $0xc8] sm:$0xff]
        %v7709 = vld [vmem:[%s7682 + $0xd0] sm:$0xff]
        %v7710 = vld [vmem:[%s7682 + $0xd8] sm:$0xff]
        %v7711 = vld [vmem:[%s7682 + $0xe0] sm:$0xff]
        %v7712 = vld [vmem:[%s7682 + $0xe8] sm:$0xff]
        %v7713 = vld [vmem:[%s7682 + $0xf0] sm:$0xff]
        %v7714 = vld [vmem:[%s7682 + $0xf8] sm:$0xff]
        %v7747 = vunpack.c.l.b16 %v7683
        %v7748 = vunpack.c.h.b16 %v7683
        %v7749 = vunpack.c.l.b16 %v7684
        %v7750 = vunpack.c.h.b16 %v7684
        %v7751 = vunpack.c.l.b16 %v7685
        %v7752 = vunpack.c.h.b16 %v7685
        %v7753 = vunpack.c.l.b16 %v7686
        %v7754 = vunpack.c.h.b16 %v7686
        %v7755 = vunpack.c.l.b16 %v7687
        %v7756 = vunpack.c.h.b16 %v7687
        %v7757 = vunpack.c.l.b16 %v7688
        %v7758 = vunpack.c.h.b16 %v7688
        %v7759 = vunpack.c.l.b16 %v7689
        %v7760 = vunpack.c.h.b16 %v7689
        %v7761 = vunpack.c.l.b16 %v7690
        %v7762 = vunpack.c.h.b16 %v7690
        %v7763 = vunpack.c.l.b16 %v7691
        %v7764 = vunpack.c.h.b16 %v7691
        %v7765 = vunpack.c.l.b16 %v7692
        %v7766 = vunpack.c.h.b16 %v7692
        %v7767 = vunpack.c.l.b16 %v7693
        %v7768 = vunpack.c.h.b16 %v7693
        %v7769 = vunpack.c.l.b16 %v7694
        %v7770 = vunpack.c.h.b16 %v7694
        %v7771 = vunpack.c.l.b16 %v7695
        %v7772 = vunpack.c.h.b16 %v7695
        %v7773 = vunpack.c.l.b16 %v7696
        %v7774 = vunpack.c.h.b16 %v7696
        %v7775 = vunpack.c.l.b16 %v7697
        %v7776 = vunpack.c.h.b16 %v7697
        %v7777 = vunpack.c.l.b16 %v7698
        %v7778 = vunpack.c.h.b16 %v7698
        %v7779 = vunpack.c.l.b16 %v7699
        %v7780 = vunpack.c.h.b16 %v7699
        %v7781 = vunpack.c.l.b16 %v7700
        %v7782 = vunpack.c.h.b16 %v7700
        %v7783 = vunpack.c.l.b16 %v7701
        %v7784 = vunpack.c.h.b16 %v7701
        %v7785 = vunpack.c.l.b16 %v7702
        %v7786 = vunpack.c.h.b16 %v7702
        %v7787 = vunpack.c.l.b16 %v7703
        %v7788 = vunpack.c.h.b16 %v7703
        %v7789 = vunpack.c.l.b16 %v7704
        %v7790 = vunpack.c.h.b16 %v7704
        %v7791 = vunpack.c.l.b16 %v7705
        %v7792 = vunpack.c.h.b16 %v7705
        %v7793 = vunpack.c.l.b16 %v7706
        %v7794 = vunpack.c.h.b16 %v7706
        %v7795 = vunpack.c.l.b16 %v7707
        %v7796 = vunpack.c.h.b16 %v7707
        %v7797 = vunpack.c.l.b16 %v7708
        %v7798 = vunpack.c.h.b16 %v7708
        %v7799 = vunpack.c.l.b16 %v7709
        %v7800 = vunpack.c.h.b16 %v7709
        %v7801 = vunpack.c.l.b16 %v7710
        %v7802 = vunpack.c.h.b16 %v7710
        %v7803 = vunpack.c.l.b16 %v7711
        %v7804 = vunpack.c.h.b16 %v7711
        %v7805 = vunpack.c.l.b16 %v7712
        %v7806 = vunpack.c.h.b16 %v7712
        %v7807 = vunpack.c.l.b16 %v7713
        %v7808 = vunpack.c.h.b16 %v7713
        %v7809 = vunpack.c.l.b16 %v7714
        %v7810 = vunpack.c.h.b16 %v7714
        %v7811 = vpack.c.b16 %v7749, %v7747
        %v7812 = vpack.c.b16 %v7750, %v7748
        %v7813 = vpack.c.b16 %v7753, %v7751
        %v7814 = vpack.c.b16 %v7754, %v7752
        %v7815 = vpack.c.b16 %v7757, %v7755
        %v7816 = vpack.c.b16 %v7758, %v7756
        %v7817 = vpack.c.b16 %v7761, %v7759
        %v7818 = vpack.c.b16 %v7762, %v7760
        %v7819 = vpack.c.b16 %v7765, %v7763
        %v7820 = vpack.c.b16 %v7766, %v7764
        %v7821 = vpack.c.b16 %v7769, %v7767
        %v7822 = vpack.c.b16 %v7770, %v7768
        %v7823 = vpack.c.b16 %v7773, %v7771
        %v7824 = vpack.c.b16 %v7774, %v7772
        %v7825 = vpack.c.b16 %v7777, %v7775
        %v7826 = vpack.c.b16 %v7778, %v7776
        %v7827 = vpack.c.b16 %v7781, %v7779
        %v7828 = vpack.c.b16 %v7782, %v7780
        %v7829 = vpack.c.b16 %v7785, %v7783
        %v7830 = vpack.c.b16 %v7786, %v7784
        %v7831 = vpack.c.b16 %v7789, %v7787
        %v7832 = vpack.c.b16 %v7790, %v7788
        %v7833 = vpack.c.b16 %v7793, %v7791
        %v7834 = vpack.c.b16 %v7794, %v7792
        %v7835 = vpack.c.b16 %v7797, %v7795
        %v7836 = vpack.c.b16 %v7798, %v7796
        %v7837 = vpack.c.b16 %v7801, %v7799
        %v7838 = vpack.c.b16 %v7802, %v7800
        %v7839 = vpack.c.b16 %v7805, %v7803
        %v7840 = vpack.c.b16 %v7806, %v7804
        %v7841 = vpack.c.b16 %v7809, %v7807
        %v7842 = vpack.c.b16 %v7810, %v7808
        %7875 = vmatprep.subr.bf16.mxu0 %v7826
        %7876 = vmatpush1.bf16.msra.mxu0 %v7825
        %7877 = vmatprep.subr.bf16.mxu0 %v7824
        %7878 = vmatpush1.bf16.msra.mxu0 %v7823
        %7879 = vmatprep.subr.bf16.mxu0 %v7822
        %7880 = vmatpush1.bf16.msra.mxu0 %v7821
        %7881 = vmatprep.subr.bf16.mxu0 %v7820
        %7882 = vmatpush1.bf16.msra.mxu0 %v7819
        %7883 = vmatprep.subr.bf16.mxu0 %v7818
        %7884 = vmatpush1.bf16.msra.mxu0 %v7817
        %7885 = vmatprep.subr.bf16.mxu0 %v7816
        %7886 = vmatpush1.bf16.msra.mxu0 %v7815
        %7887 = vmatprep.subr.bf16.mxu0 %v7814
        %7888 = vmatpush1.bf16.msra.mxu0 %v7813
        %7889 = vmatprep.subr.bf16.mxu0 %v7812
        %7890 = vmatpush1.bf16.msra.mxu0 %v7811
        %7891 = vmatprep.subr.bf16.mxu0 %v7842
        %7892 = vmatpush2.bf16.msra.mxu0 %v7841
        %7893 = vmatprep.subr.bf16.mxu0 %v7840
        %7894 = vmatpush2.bf16.msra.mxu0 %v7839
        %7895 = vmatprep.subr.bf16.mxu0 %v7838
        %7896 = vmatpush2.bf16.msra.mxu0 %v7837
        %7897 = vmatprep.subr.bf16.mxu0 %v7836
        %7898 = vmatpush2.bf16.msra.mxu0 %v7835
        %7899 = vmatprep.subr.bf16.mxu0 %v7834
        %7900 = vmatpush2.bf16.msra.mxu0 %v7833
        %7901 = vmatprep.subr.bf16.mxu0 %v7832
        %7902 = vmatpush2.bf16.msra.mxu0 %v7831
        %7903 = vmatprep.subr.bf16.mxu0 %v7830
        %7904 = vmatpush2.bf16.msra.mxu0 %v7829
        %7905 = vmatprep.subr.bf16.mxu0 %v7828
        %7906 = vmatpush2.bf16.msra.mxu0 %v7827
        %7907 = vmatprep.mubr.bf16.mxu0 %v6250
        %7908 = vmatmul.mubr.bf16.gmra.mxu0 %v6249
        %v7909 = vpop.f32.mrf.mxu0
        %v7910 = vadd.f32 0.0, %v7909
        %v7911 = vpop.f32.mrf.mxu0
        %v7912 = vadd.f32 0.0, %v7911
        %v7913 = vpop.f32.mrf.mxu0
        %v7914 = vpop.f32.mrf.mxu0
        %7915 = vdwg.mxu0
        %v7916 = vadd.f32 %v7680, %v7910
        %v7917 = vadd.f32 %v7681, %v7912
        %s7918 = scalar_lea.vmem %s20, 1792
        %v7919 = vld [vmem:[%s7918] sm:$0xff]
        %v7920 = vld [vmem:[%s7918 + $0x8] sm:$0xff]
        %v7921 = vld [vmem:[%s7918 + $0x10] sm:$0xff]
        %v7922 = vld [vmem:[%s7918 + $0x18] sm:$0xff]
        %v7923 = vld [vmem:[%s7918 + $0x20] sm:$0xff]
        %v7924 = vld [vmem:[%s7918 + $0x28] sm:$0xff]
        %v7925 = vld [vmem:[%s7918 + $0x30] sm:$0xff]
        %v7926 = vld [vmem:[%s7918 + $0x38] sm:$0xff]
        %v7927 = vld [vmem:[%s7918 + $0x40] sm:$0xff]
        %v7928 = vld [vmem:[%s7918 + $0x48] sm:$0xff]
        %v7929 = vld [vmem:[%s7918 + $0x50] sm:$0xff]
        %v7930 = vld [vmem:[%s7918 + $0x58] sm:$0xff]
        %v7931 = vld [vmem:[%s7918 + $0x60] sm:$0xff]
        %v7932 = vld [vmem:[%s7918 + $0x68] sm:$0xff]
        %v7933 = vld [vmem:[%s7918 + $0x70] sm:$0xff]
        %v7934 = vld [vmem:[%s7918 + $0x78] sm:$0xff]
        %v7935 = vld [vmem:[%s7918 + $0x80] sm:$0xff]
        %v7936 = vld [vmem:[%s7918 + $0x88] sm:$0xff]
        %v7937 = vld [vmem:[%s7918 + $0x90] sm:$0xff]
        %v7938 = vld [vmem:[%s7918 + $0x98] sm:$0xff]
        %v7939 = vld [vmem:[%s7918 + $0xa0] sm:$0xff]
        %v7940 = vld [vmem:[%s7918 + $0xa8] sm:$0xff]
        %v7941 = vld [vmem:[%s7918 + $0xb0] sm:$0xff]
        %v7942 = vld [vmem:[%s7918 + $0xb8] sm:$0xff]
        %v7943 = vld [vmem:[%s7918 + $0xc0] sm:$0xff]
        %v7944 = vld [vmem:[%s7918 + $0xc8] sm:$0xff]
        %v7945 = vld [vmem:[%s7918 + $0xd0] sm:$0xff]
        %v7946 = vld [vmem:[%s7918 + $0xd8] sm:$0xff]
        %v7947 = vld [vmem:[%s7918 + $0xe0] sm:$0xff]
        %v7948 = vld [vmem:[%s7918 + $0xe8] sm:$0xff]
        %v7949 = vld [vmem:[%s7918 + $0xf0] sm:$0xff]
        %v7950 = vld [vmem:[%s7918 + $0xf8] sm:$0xff]
        %v7953 = vrot.slane %v6249, 4
        %v7954 = vrot.slane %v6250, 4
        %v7989 = vunpack.c.l.b16 %v7919
        %v7990 = vunpack.c.h.b16 %v7919
        %v7991 = vunpack.c.l.b16 %v7920
        %v7992 = vunpack.c.h.b16 %v7920
        %v7993 = vunpack.c.l.b16 %v7921
        %v7994 = vunpack.c.h.b16 %v7921
        %v7995 = vunpack.c.l.b16 %v7922
        %v7996 = vunpack.c.h.b16 %v7922
        %v7997 = vunpack.c.l.b16 %v7923
        %v7998 = vunpack.c.h.b16 %v7923
        %v7999 = vunpack.c.l.b16 %v7924
        %v8000 = vunpack.c.h.b16 %v7924
        %v8001 = vunpack.c.l.b16 %v7925
        %v8002 = vunpack.c.h.b16 %v7925
        %v8003 = vunpack.c.l.b16 %v7926
        %v8004 = vunpack.c.h.b16 %v7926
        %v8005 = vunpack.c.l.b16 %v7927
        %v8006 = vunpack.c.h.b16 %v7927
        %v8007 = vunpack.c.l.b16 %v7928
        %v8008 = vunpack.c.h.b16 %v7928
        %v8009 = vunpack.c.l.b16 %v7929
        %v8010 = vunpack.c.h.b16 %v7929
        %v8011 = vunpack.c.l.b16 %v7930
        %v8012 = vunpack.c.h.b16 %v7930
        %v8013 = vunpack.c.l.b16 %v7931
        %v8014 = vunpack.c.h.b16 %v7931
        %v8015 = vunpack.c.l.b16 %v7932
        %v8016 = vunpack.c.h.b16 %v7932
        %v8017 = vunpack.c.l.b16 %v7933
        %v8018 = vunpack.c.h.b16 %v7933
        %v8019 = vunpack.c.l.b16 %v7934
        %v8020 = vunpack.c.h.b16 %v7934
        %v8021 = vunpack.c.l.b16 %v7935
        %v8022 = vunpack.c.h.b16 %v7935
        %v8023 = vunpack.c.l.b16 %v7936
        %v8024 = vunpack.c.h.b16 %v7936
        %v8025 = vunpack.c.l.b16 %v7937
        %v8026 = vunpack.c.h.b16 %v7937
        %v8027 = vunpack.c.l.b16 %v7938
        %v8028 = vunpack.c.h.b16 %v7938
        %v8029 = vunpack.c.l.b16 %v7939
        %v8030 = vunpack.c.h.b16 %v7939
        %v8031 = vunpack.c.l.b16 %v7940
        %v8032 = vunpack.c.h.b16 %v7940
        %v8033 = vunpack.c.l.b16 %v7941
        %v8034 = vunpack.c.h.b16 %v7941
        %v8035 = vunpack.c.l.b16 %v7942
        %v8036 = vunpack.c.h.b16 %v7942
        %v8037 = vunpack.c.l.b16 %v7943
        %v8038 = vunpack.c.h.b16 %v7943
        %v8039 = vunpack.c.l.b16 %v7944
        %v8040 = vunpack.c.h.b16 %v7944
        %v8041 = vunpack.c.l.b16 %v7945
        %v8042 = vunpack.c.h.b16 %v7945
        %v8043 = vunpack.c.l.b16 %v7946
        %v8044 = vunpack.c.h.b16 %v7946
        %v8045 = vunpack.c.l.b16 %v7947
        %v8046 = vunpack.c.h.b16 %v7947
        %v8047 = vunpack.c.l.b16 %v7948
        %v8048 = vunpack.c.h.b16 %v7948
        %v8049 = vunpack.c.l.b16 %v7949
        %v8050 = vunpack.c.h.b16 %v7949
        %v8051 = vunpack.c.l.b16 %v7950
        %v8052 = vunpack.c.h.b16 %v7950
        %v8053 = vpack.c.b16 %v7991, %v7989
        %v8054 = vpack.c.b16 %v7992, %v7990
        %v8055 = vpack.c.b16 %v7995, %v7993
        %v8056 = vpack.c.b16 %v7996, %v7994
        %v8057 = vpack.c.b16 %v7999, %v7997
        %v8058 = vpack.c.b16 %v8000, %v7998
        %v8059 = vpack.c.b16 %v8003, %v8001
        %v8060 = vpack.c.b16 %v8004, %v8002
        %v8061 = vpack.c.b16 %v8007, %v8005
        %v8062 = vpack.c.b16 %v8008, %v8006
        %v8063 = vpack.c.b16 %v8011, %v8009
        %v8064 = vpack.c.b16 %v8012, %v8010
        %v8065 = vpack.c.b16 %v8015, %v8013
        %v8066 = vpack.c.b16 %v8016, %v8014
        %v8067 = vpack.c.b16 %v8019, %v8017
        %v8068 = vpack.c.b16 %v8020, %v8018
        %v8069 = vpack.c.b16 %v8023, %v8021
        %v8070 = vpack.c.b16 %v8024, %v8022
        %v8071 = vpack.c.b16 %v8027, %v8025
        %v8072 = vpack.c.b16 %v8028, %v8026
        %v8073 = vpack.c.b16 %v8031, %v8029
        %v8074 = vpack.c.b16 %v8032, %v8030
        %v8075 = vpack.c.b16 %v8035, %v8033
        %v8076 = vpack.c.b16 %v8036, %v8034
        %v8077 = vpack.c.b16 %v8039, %v8037
        %v8078 = vpack.c.b16 %v8040, %v8038
        %v8079 = vpack.c.b16 %v8043, %v8041
        %v8080 = vpack.c.b16 %v8044, %v8042
        %v8081 = vpack.c.b16 %v8047, %v8045
        %v8082 = vpack.c.b16 %v8048, %v8046
        %v8083 = vpack.c.b16 %v8051, %v8049
        %v8084 = vpack.c.b16 %v8052, %v8050
        %8117 = vmatprep.subr.bf16.mxu0 %v8068
        %8118 = vmatpush1.bf16.msra.mxu0 %v8067
        %8119 = vmatprep.subr.bf16.mxu0 %v8066
        %8120 = vmatpush1.bf16.msra.mxu0 %v8065
        %8121 = vmatprep.subr.bf16.mxu0 %v8064
        %8122 = vmatpush1.bf16.msra.mxu0 %v8063
        %8123 = vmatprep.subr.bf16.mxu0 %v8062
        %8124 = vmatpush1.bf16.msra.mxu0 %v8061
        %8125 = vmatprep.subr.bf16.mxu0 %v8060
        %8126 = vmatpush1.bf16.msra.mxu0 %v8059
        %8127 = vmatprep.subr.bf16.mxu0 %v8058
        %8128 = vmatpush1.bf16.msra.mxu0 %v8057
        %8129 = vmatprep.subr.bf16.mxu0 %v8056
        %8130 = vmatpush1.bf16.msra.mxu0 %v8055
        %8131 = vmatprep.subr.bf16.mxu0 %v8054
        %8132 = vmatpush1.bf16.msra.mxu0 %v8053
        %8133 = vmatprep.subr.bf16.mxu0 %v8084
        %8134 = vmatpush2.bf16.msra.mxu0 %v8083
        %8135 = vmatprep.subr.bf16.mxu0 %v8082
        %8136 = vmatpush2.bf16.msra.mxu0 %v8081
        %8137 = vmatprep.subr.bf16.mxu0 %v8080
        %8138 = vmatpush2.bf16.msra.mxu0 %v8079
        %8139 = vmatprep.subr.bf16.mxu0 %v8078
        %8140 = vmatpush2.bf16.msra.mxu0 %v8077
        %8141 = vmatprep.subr.bf16.mxu0 %v8076
        %8142 = vmatpush2.bf16.msra.mxu0 %v8075
        %8143 = vmatprep.subr.bf16.mxu0 %v8074
        %8144 = vmatpush2.bf16.msra.mxu0 %v8073
        %8145 = vmatprep.subr.bf16.mxu0 %v8072
        %8146 = vmatpush2.bf16.msra.mxu0 %v8071
        %8147 = vmatprep.subr.bf16.mxu0 %v8070
        %8148 = vmatpush2.bf16.msra.mxu0 %v8069
        %8149 = vmatprep.mubr.bf16.mxu0 %v7954
        %8150 = vmatmul.mubr.bf16.gmra.mxu0 %v7953
        %v8151 = vpop.f32.mrf.mxu0
        %v8152 = vadd.f32 0.0, %v8151
        %v8153 = vpop.f32.mrf.mxu0
        %v8154 = vadd.f32 0.0, %v8153
        %v8155 = vpop.f32.mrf.mxu0
        %v8156 = vpop.f32.mrf.mxu0
        %8157 = vdwg.mxu0
        %v8158 = vadd.f32 %v7916, %v8152
        %v8159 = vadd.f32 %v7917, %v8154
        %s8160 = scalar_lea.vmem %s20, 2048
        %v8161 = vld [vmem:[%s8160] sm:$0xff]
        %v8162 = vld [vmem:[%s8160 + $0x8] sm:$0xff]
        %v8163 = vld [vmem:[%s8160 + $0x10] sm:$0xff]
        %v8164 = vld [vmem:[%s8160 + $0x18] sm:$0xff]
        %v8165 = vld [vmem:[%s8160 + $0x20] sm:$0xff]
        %v8166 = vld [vmem:[%s8160 + $0x28] sm:$0xff]
        %v8167 = vld [vmem:[%s8160 + $0x30] sm:$0xff]
        %v8168 = vld [vmem:[%s8160 + $0x38] sm:$0xff]
        %v8169 = vld [vmem:[%s8160 + $0x40] sm:$0xff]
        %v8170 = vld [vmem:[%s8160 + $0x48] sm:$0xff]
        %v8171 = vld [vmem:[%s8160 + $0x50] sm:$0xff]
        %v8172 = vld [vmem:[%s8160 + $0x58] sm:$0xff]
        %v8173 = vld [vmem:[%s8160 + $0x60] sm:$0xff]
        %v8174 = vld [vmem:[%s8160 + $0x68] sm:$0xff]
        %v8175 = vld [vmem:[%s8160 + $0x70] sm:$0xff]
        %v8176 = vld [vmem:[%s8160 + $0x78] sm:$0xff]
        %v8177 = vld [vmem:[%s8160 + $0x80] sm:$0xff]
        %v8178 = vld [vmem:[%s8160 + $0x88] sm:$0xff]
        %v8179 = vld [vmem:[%s8160 + $0x90] sm:$0xff]
        %v8180 = vld [vmem:[%s8160 + $0x98] sm:$0xff]
        %v8181 = vld [vmem:[%s8160 + $0xa0] sm:$0xff]
        %v8182 = vld [vmem:[%s8160 + $0xa8] sm:$0xff]
        %v8183 = vld [vmem:[%s8160 + $0xb0] sm:$0xff]
        %v8184 = vld [vmem:[%s8160 + $0xb8] sm:$0xff]
        %v8185 = vld [vmem:[%s8160 + $0xc0] sm:$0xff]
        %v8186 = vld [vmem:[%s8160 + $0xc8] sm:$0xff]
        %v8187 = vld [vmem:[%s8160 + $0xd0] sm:$0xff]
        %v8188 = vld [vmem:[%s8160 + $0xd8] sm:$0xff]
        %v8189 = vld [vmem:[%s8160 + $0xe0] sm:$0xff]
        %v8190 = vld [vmem:[%s8160 + $0xe8] sm:$0xff]
        %v8191 = vld [vmem:[%s8160 + $0xf0] sm:$0xff]
        %v8192 = vld [vmem:[%s8160 + $0xf8] sm:$0xff]
        %v8225 = vunpack.c.l.b16 %v8161
        %v8226 = vunpack.c.h.b16 %v8161
        %v8227 = vunpack.c.l.b16 %v8162
        %v8228 = vunpack.c.h.b16 %v8162
        %v8229 = vunpack.c.l.b16 %v8163
        %v8230 = vunpack.c.h.b16 %v8163
        %v8231 = vunpack.c.l.b16 %v8164
        %v8232 = vunpack.c.h.b16 %v8164
        %v8233 = vunpack.c.l.b16 %v8165
        %v8234 = vunpack.c.h.b16 %v8165
        %v8235 = vunpack.c.l.b16 %v8166
        %v8236 = vunpack.c.h.b16 %v8166
        %v8237 = vunpack.c.l.b16 %v8167
        %v8238 = vunpack.c.h.b16 %v8167
        %v8239 = vunpack.c.l.b16 %v8168
        %v8240 = vunpack.c.h.b16 %v8168
        %v8241 = vunpack.c.l.b16 %v8169
        %v8242 = vunpack.c.h.b16 %v8169
        %v8243 = vunpack.c.l.b16 %v8170
        %v8244 = vunpack.c.h.b16 %v8170
        %v8245 = vunpack.c.l.b16 %v8171
        %v8246 = vunpack.c.h.b16 %v8171
        %v8247 = vunpack.c.l.b16 %v8172
        %v8248 = vunpack.c.h.b16 %v8172
        %v8249 = vunpack.c.l.b16 %v8173
        %v8250 = vunpack.c.h.b16 %v8173
        %v8251 = vunpack.c.l.b16 %v8174
        %v8252 = vunpack.c.h.b16 %v8174
        %v8253 = vunpack.c.l.b16 %v8175
        %v8254 = vunpack.c.h.b16 %v8175
        %v8255 = vunpack.c.l.b16 %v8176
        %v8256 = vunpack.c.h.b16 %v8176
        %v8257 = vunpack.c.l.b16 %v8177
        %v8258 = vunpack.c.h.b16 %v8177
        %v8259 = vunpack.c.l.b16 %v8178
        %v8260 = vunpack.c.h.b16 %v8178
        %v8261 = vunpack.c.l.b16 %v8179
        %v8262 = vunpack.c.h.b16 %v8179
        %v8263 = vunpack.c.l.b16 %v8180
        %v8264 = vunpack.c.h.b16 %v8180
        %v8265 = vunpack.c.l.b16 %v8181
        %v8266 = vunpack.c.h.b16 %v8181
        %v8267 = vunpack.c.l.b16 %v8182
        %v8268 = vunpack.c.h.b16 %v8182
        %v8269 = vunpack.c.l.b16 %v8183
        %v8270 = vunpack.c.h.b16 %v8183
        %v8271 = vunpack.c.l.b16 %v8184
        %v8272 = vunpack.c.h.b16 %v8184
        %v8273 = vunpack.c.l.b16 %v8185
        %v8274 = vunpack.c.h.b16 %v8185
        %v8275 = vunpack.c.l.b16 %v8186
        %v8276 = vunpack.c.h.b16 %v8186
        %v8277 = vunpack.c.l.b16 %v8187
        %v8278 = vunpack.c.h.b16 %v8187
        %v8279 = vunpack.c.l.b16 %v8188
        %v8280 = vunpack.c.h.b16 %v8188
        %v8281 = vunpack.c.l.b16 %v8189
        %v8282 = vunpack.c.h.b16 %v8189
        %v8283 = vunpack.c.l.b16 %v8190
        %v8284 = vunpack.c.h.b16 %v8190
        %v8285 = vunpack.c.l.b16 %v8191
        %v8286 = vunpack.c.h.b16 %v8191
        %v8287 = vunpack.c.l.b16 %v8192
        %v8288 = vunpack.c.h.b16 %v8192
        %v8289 = vpack.c.b16 %v8227, %v8225
        %v8290 = vpack.c.b16 %v8228, %v8226
        %v8291 = vpack.c.b16 %v8231, %v8229
        %v8292 = vpack.c.b16 %v8232, %v8230
        %v8293 = vpack.c.b16 %v8235, %v8233
        %v8294 = vpack.c.b16 %v8236, %v8234
        %v8295 = vpack.c.b16 %v8239, %v8237
        %v8296 = vpack.c.b16 %v8240, %v8238
        %v8297 = vpack.c.b16 %v8243, %v8241
        %v8298 = vpack.c.b16 %v8244, %v8242
        %v8299 = vpack.c.b16 %v8247, %v8245
        %v8300 = vpack.c.b16 %v8248, %v8246
        %v8301 = vpack.c.b16 %v8251, %v8249
        %v8302 = vpack.c.b16 %v8252, %v8250
        %v8303 = vpack.c.b16 %v8255, %v8253
        %v8304 = vpack.c.b16 %v8256, %v8254
        %v8305 = vpack.c.b16 %v8259, %v8257
        %v8306 = vpack.c.b16 %v8260, %v8258
        %v8307 = vpack.c.b16 %v8263, %v8261
        %v8308 = vpack.c.b16 %v8264, %v8262
        %v8309 = vpack.c.b16 %v8267, %v8265
        %v8310 = vpack.c.b16 %v8268, %v8266
        %v8311 = vpack.c.b16 %v8271, %v8269
        %v8312 = vpack.c.b16 %v8272, %v8270
        %v8313 = vpack.c.b16 %v8275, %v8273
        %v8314 = vpack.c.b16 %v8276, %v8274
        %v8315 = vpack.c.b16 %v8279, %v8277
        %v8316 = vpack.c.b16 %v8280, %v8278
        %v8317 = vpack.c.b16 %v8283, %v8281
        %v8318 = vpack.c.b16 %v8284, %v8282
        %v8319 = vpack.c.b16 %v8287, %v8285
        %v8320 = vpack.c.b16 %v8288, %v8286
        %8353 = vmatprep.subr.bf16.mxu0 %v8304
        %8354 = vmatpush1.bf16.msra.mxu0 %v8303
        %8355 = vmatprep.subr.bf16.mxu0 %v8302
        %8356 = vmatpush1.bf16.msra.mxu0 %v8301
        %8357 = vmatprep.subr.bf16.mxu0 %v8300
        %8358 = vmatpush1.bf16.msra.mxu0 %v8299
        %8359 = vmatprep.subr.bf16.mxu0 %v8298
        %8360 = vmatpush1.bf16.msra.mxu0 %v8297
        %8361 = vmatprep.subr.bf16.mxu0 %v8296
        %8362 = vmatpush1.bf16.msra.mxu0 %v8295
        %8363 = vmatprep.subr.bf16.mxu0 %v8294
        %8364 = vmatpush1.bf16.msra.mxu0 %v8293
        %8365 = vmatprep.subr.bf16.mxu0 %v8292
        %8366 = vmatpush1.bf16.msra.mxu0 %v8291
        %8367 = vmatprep.subr.bf16.mxu0 %v8290
        %8368 = vmatpush1.bf16.msra.mxu0 %v8289
        %8369 = vmatprep.subr.bf16.mxu0 %v8320
        %8370 = vmatpush2.bf16.msra.mxu0 %v8319
        %8371 = vmatprep.subr.bf16.mxu0 %v8318
        %8372 = vmatpush2.bf16.msra.mxu0 %v8317
        %8373 = vmatprep.subr.bf16.mxu0 %v8316
        %8374 = vmatpush2.bf16.msra.mxu0 %v8315
        %8375 = vmatprep.subr.bf16.mxu0 %v8314
        %8376 = vmatpush2.bf16.msra.mxu0 %v8313
        %8377 = vmatprep.subr.bf16.mxu0 %v8312
        %8378 = vmatpush2.bf16.msra.mxu0 %v8311
        %8379 = vmatprep.subr.bf16.mxu0 %v8310
        %8380 = vmatpush2.bf16.msra.mxu0 %v8309
        %8381 = vmatprep.subr.bf16.mxu0 %v8308
        %8382 = vmatpush2.bf16.msra.mxu0 %v8307
        %8383 = vmatprep.subr.bf16.mxu0 %v8306
        %8384 = vmatpush2.bf16.msra.mxu0 %v8305
        %8385 = vmatprep.mubr.bf16.mxu0 %v6252
        %8386 = vmatmul.mubr.bf16.gmra.mxu0 %v6251
        %v8387 = vpop.f32.mrf.mxu0
        %v8388 = vadd.f32 0.0, %v8387
        %v8389 = vpop.f32.mrf.mxu0
        %v8390 = vadd.f32 0.0, %v8389
        %v8391 = vpop.f32.mrf.mxu0
        %v8392 = vpop.f32.mrf.mxu0
        %8393 = vdwg.mxu0
        %v8394 = vadd.f32 %v8158, %v8388
        %v8395 = vadd.f32 %v8159, %v8390
        %v8396 = vld [vmem:[%s854] sm:$0xff]
        %v8397 = vld [vmem:[%s854 + $0x8] sm:$0xff]
        %v8398 = vpack.c.bf16 %v8396, %v8396
        %v8399 = vpack.c.bf16 %v8397, %v8397
        %v8400 = vld [vmem:[%s21] sm:$0xf]
        %v8401 = vld [vmem:[%s21 + $0x4] sm:$0xf]
        %v8402 = vld [vmem:[%s21 + $0x8] sm:$0xf]
        %v8403 = vld [vmem:[%s21 + $0xc] sm:$0xf]
        %v8404 = vld [vmem:[%s21 + $0x10] sm:$0xf]
        %v8405 = vld [vmem:[%s21 + $0x14] sm:$0xf]
        %v8406 = vld [vmem:[%s21 + $0x18] sm:$0xf]
        %v8407 = vld [vmem:[%s21 + $0x1c] sm:$0xf]
        %v8408 = vld [vmem:[%s21 + $0x20] sm:$0xf]
        %v8418 = vunpack.c.l.b16 %v8400
        %v8419 = vunpack.c.l.b16 %v8401
        %v8420 = vunpack.c.l.b16 %v8402
        %v8421 = vunpack.c.l.b16 %v8403
        %v8422 = vunpack.c.l.b16 %v8404
        %v8423 = vunpack.c.l.b16 %v8405
        %v8424 = vunpack.c.l.b16 %v8406
        %v8425 = vunpack.c.l.b16 %v8407
        %v8426 = vunpack.c.l.b16 %v8408
        %v8427 = vpack.c.b16 %v8419, %v8418
        %v8428 = vpack.c.b16 %v8421, %v8420
        %v8429 = vpack.c.b16 %v8423, %v8422
        %v8430 = vpack.c.b16 %v8425, %v8424
        %v8431 = vpack.c.b16 %v8426, %v8426
        %v8433 = vsel %vm926, %v8427, 0
        %v8436 = vsel %vm926, %v8428, 0
        %v8439 = vsel %vm926, %v8429, 0
        %v8442 = vsel %vm926, %v8430, 0
        %v8445 = vsel %vm926, %v8431, 0
        %v8448 = vsel %vm954, %v8398, 0
        %v8451 = vsel %vm954, %v8399, 0
        %8453 = vmatprep.subr.bf16.mxu0 0
        %8454 = vmatpush1.bf16.msra.mxu0 0
        %8455 = vmatprep.subr.bf16.mxu0 0
        %8456 = vmatpush1.bf16.msra.mxu0 0
        %8457 = vmatprep.subr.bf16.mxu0 0
        %8458 = vmatpush1.bf16.msra.mxu0 0
        %8459 = vmatprep.subr.bf16.mxu0 0
        %8460 = vmatpush1.bf16.msra.mxu0 0
        %8461 = vmatprep.subr.bf16.mxu0 0
        %8462 = vmatpush1.bf16.msra.mxu0 0
        %8463 = vmatprep.subr.bf16.mxu0 0
        %8464 = vmatpush1.bf16.msra.mxu0 0
        %8465 = vmatprep.subr.bf16.mxu0 0
        %8466 = vmatpush1.bf16.msra.mxu0 0
        %8467 = vmatprep.subr.bf16.mxu0 %v8451
        %8468 = vmatpush1.bf16.msra.mxu0 %v8448
        %8469 = vmatprep.subr.bf16.mxu0 0
        %8470 = vmatpush2.bf16.msra.mxu0 0
        %8471 = vmatprep.subr.bf16.mxu0 0
        %8472 = vmatpush2.bf16.msra.mxu0 0
        %8473 = vmatprep.subr.bf16.mxu0 0
        %8474 = vmatpush2.bf16.msra.mxu0 0
        %8475 = vmatprep.subr.bf16.mxu0 0
        %8476 = vmatpush2.bf16.msra.mxu0 0
        %8477 = vmatprep.subr.bf16.mxu0 0
        %8478 = vmatpush2.bf16.msra.mxu0 0
        %8479 = vmatprep.subr.bf16.mxu0 0
        %8480 = vmatpush2.bf16.msra.mxu0 0
        %8481 = vmatprep.subr.bf16.mxu0 0
        %8482 = vmatpush2.bf16.msra.mxu0 0
        %8483 = vmatprep.subr.bf16.mxu0 0
        %8484 = vmatpush2.bf16.msra.mxu0 0
        %8485 = vmatprep.mubr.bf16.mxu0 0
        %8486 = vmatmul.mubr.bf16.gmra.mxu0 %v8433
        %v8487 = vpop.f32.mrf.mxu0
        %v8488 = vadd.f32 0.0, %v8487
        %v8489 = vpop.f32.mrf.mxu0
        %v8490 = vadd.f32 0.0, %v8489
        %v8491 = vpop.f32.mrf.mxu0
        %v8492 = vadd.f32 0.0, %v8491
        %v8493 = vpop.f32.mrf.mxu0
        %v8494 = vadd.f32 0.0, %v8493
        %8495 = vmatprep.mubr.bf16.mxu0 0
        %8496 = vmatmul.mubr.bf16.gmra.mxu0 %v8436
        %v8497 = vpop.f32.mrf.mxu0
        %v8498 = vadd.f32 0.0, %v8497
        %v8499 = vpop.f32.mrf.mxu0
        %v8500 = vadd.f32 0.0, %v8499
        %v8501 = vpop.f32.mrf.mxu0
        %v8502 = vadd.f32 0.0, %v8501
        %v8503 = vpop.f32.mrf.mxu0
        %v8504 = vadd.f32 0.0, %v8503
        %8505 = vmatprep.mubr.bf16.mxu0 0
        %8506 = vmatmul.mubr.bf16.gmra.mxu0 %v8439
        %v8507 = vpop.f32.mrf.mxu0
        %v8508 = vadd.f32 0.0, %v8507
        %v8509 = vpop.f32.mrf.mxu0
        %v8510 = vadd.f32 0.0, %v8509
        %v8511 = vpop.f32.mrf.mxu0
        %v8512 = vadd.f32 0.0, %v8511
        %v8513 = vpop.f32.mrf.mxu0
        %v8514 = vadd.f32 0.0, %v8513
        %8515 = vmatprep.mubr.bf16.mxu0 0
        %8516 = vmatmul.mubr.bf16.gmra.mxu0 %v8442
        %v8517 = vpop.f32.mrf.mxu0
        %v8518 = vadd.f32 0.0, %v8517
        %v8519 = vpop.f32.mrf.mxu0
        %v8520 = vadd.f32 0.0, %v8519
        %v8521 = vpop.f32.mrf.mxu0
        %v8522 = vadd.f32 0.0, %v8521
        %v8523 = vpop.f32.mrf.mxu0
        %v8524 = vadd.f32 0.0, %v8523
        %8525 = vmatprep.mubr.bf16.mxu0 0
        %8526 = vmatmul.mubr.bf16.gmra.mxu0 %v8445
        %v8527 = vpop.f32.mrf.mxu0
        %v8528 = vadd.f32 0.0, %v8527
        %v8529 = vpop.f32.mrf.mxu0
        %v8530 = vadd.f32 0.0, %v8529
        %v8531 = vpop.f32.mrf.mxu0
        %v8532 = vpop.f32.mrf.mxu0
        %8533 = vdwg.mxu0
        %v8534 = vpack.c.bf16 %v8492, %v8488
        %v8535 = vpack.c.bf16 %v8494, %v8490
        %v8536 = vpack.c.bf16 %v8502, %v8498
        %v8537 = vpack.c.bf16 %v8504, %v8500
        %v8538 = vpack.c.bf16 %v8512, %v8508
        %v8539 = vpack.c.bf16 %v8514, %v8510
        %v8540 = vpack.c.bf16 %v8522, %v8518
        %v8541 = vpack.c.bf16 %v8524, %v8520
        %v8542 = vpack.c.bf16 %v8528, %v8528
        %v8543 = vpack.c.bf16 %v8530, %v8530
        %8544 = vmatprep.subr.bf16.mxu0 %v6636
        %8545 = vmatpush1.bf16.msra.mxu0 %v6635
        %8546 = vmatprep.subr.bf16.mxu0 %v6634
        %8547 = vmatpush1.bf16.msra.mxu0 %v6633
        %8548 = vmatprep.subr.bf16.mxu0 %v6632
        %8549 = vmatpush1.bf16.msra.mxu0 %v6631
        %8550 = vmatprep.subr.bf16.mxu0 %v6630
        %8551 = vmatpush1.bf16.msra.mxu0 %v6629
        %8552 = vmatprep.subr.bf16.mxu0 %v6628
        %8553 = vmatpush1.bf16.msra.mxu0 %v6627
        %8554 = vmatprep.subr.bf16.mxu0 %v6626
        %8555 = vmatpush1.bf16.msra.mxu0 %v6625
        %8556 = vmatprep.subr.bf16.mxu0 %v6624
        %8557 = vmatpush1.bf16.msra.mxu0 %v6623
        %8558 = vmatprep.subr.bf16.mxu0 %v6622
        %8559 = vmatpush1.bf16.msra.mxu0 %v6621
        %8560 = vmatprep.subr.bf16.mxu0 %v6652
        %8561 = vmatpush2.bf16.msra.mxu0 %v6651
        %8562 = vmatprep.subr.bf16.mxu0 %v6650
        %8563 = vmatpush2.bf16.msra.mxu0 %v6649
        %8564 = vmatprep.subr.bf16.mxu0 %v6648
        %8565 = vmatpush2.bf16.msra.mxu0 %v6647
        %8566 = vmatprep.subr.bf16.mxu0 %v6646
        %8567 = vmatpush2.bf16.msra.mxu0 %v6645
        %8568 = vmatprep.subr.bf16.mxu0 %v6644
        %8569 = vmatpush2.bf16.msra.mxu0 %v6643
        %8570 = vmatprep.subr.bf16.mxu0 %v6642
        %8571 = vmatpush2.bf16.msra.mxu0 %v6641
        %8572 = vmatprep.subr.bf16.mxu0 %v6640
        %8573 = vmatpush2.bf16.msra.mxu0 %v6639
        %8574 = vmatprep.subr.bf16.mxu0 %v6638
        %8575 = vmatpush2.bf16.msra.mxu0 %v6637
        %8576 = vmatprep.mubr.bf16.mxu0 %v8535
        %8577 = vmatmul.mubr.bf16.gmra.mxu0 %v8534
        %v8578 = vpop.f32.mrf.mxu0
        %v8579 = vadd.f32 0.0, %v8578
        %v8580 = vpop.f32.mrf.mxu0
        %v8581 = vadd.f32 0.0, %v8580
        %v8582 = vpop.f32.mrf.mxu0
        %v8583 = vpop.f32.mrf.mxu0
        %8584 = vdwg.mxu0
        %v8585 = vadd.f32 %v8394, %v8579
        %v8586 = vadd.f32 %v8395, %v8581
        %v8589 = vrot.slane %v8534, 4
        %v8590 = vrot.slane %v8535, 4
        %8593 = vmatprep.subr.bf16.mxu0 %v6435
        %8594 = vmatpush1.bf16.msra.mxu0 %v6434
        %8595 = vmatprep.subr.bf16.mxu0 %v6433
        %8596 = vmatpush1.bf16.msra.mxu0 %v6432
        %8597 = vmatprep.subr.bf16.mxu0 %v6431
        %8598 = vmatpush1.bf16.msra.mxu0 %v6430
        %8599 = vmatprep.subr.bf16.mxu0 %v6429
        %8600 = vmatpush1.bf16.msra.mxu0 %v6428
        %8601 = vmatprep.subr.bf16.mxu0 %v6427
        %8602 = vmatpush1.bf16.msra.mxu0 %v6426
        %8603 = vmatprep.subr.bf16.mxu0 %v6425
        %8604 = vmatpush1.bf16.msra.mxu0 %v6424
        %8605 = vmatprep.subr.bf16.mxu0 %v6423
        %8606 = vmatpush1.bf16.msra.mxu0 %v6422
        %8607 = vmatprep.subr.bf16.mxu0 %v6421
        %8608 = vmatpush1.bf16.msra.mxu0 %v6420
        %8609 = vmatprep.subr.bf16.mxu0 %v6451
        %8610 = vmatpush2.bf16.msra.mxu0 %v6450
        %8611 = vmatprep.subr.bf16.mxu0 %v6449
        %8612 = vmatpush2.bf16.msra.mxu0 %v6448
        %8613 = vmatprep.subr.bf16.mxu0 %v6447
        %8614 = vmatpush2.bf16.msra.mxu0 %v6446
        %8615 = vmatprep.subr.bf16.mxu0 %v6445
        %8616 = vmatpush2.bf16.msra.mxu0 %v6444
        %8617 = vmatprep.subr.bf16.mxu0 %v6443
        %8618 = vmatpush2.bf16.msra.mxu0 %v6442
        %8619 = vmatprep.subr.bf16.mxu0 %v6441
        %8620 = vmatpush2.bf16.msra.mxu0 %v6440
        %8621 = vmatprep.subr.bf16.mxu0 %v6439
        %8622 = vmatpush2.bf16.msra.mxu0 %v6438
        %8623 = vmatprep.subr.bf16.mxu0 %v6437
        %8624 = vmatpush2.bf16.msra.mxu0 %v6436
        %8625 = vmatprep.mubr.bf16.mxu0 %v8590
        %8626 = vmatmul.mubr.bf16.gmra.mxu0 %v8589
        %v8627 = vpop.f32.mrf.mxu0
        %v8628 = vadd.f32 0.0, %v8627
        %v8629 = vpop.f32.mrf.mxu0
        %v8630 = vadd.f32 0.0, %v8629
        %v8631 = vpop.f32.mrf.mxu0
        %v8632 = vpop.f32.mrf.mxu0
        %8633 = vdwg.mxu0
        %v8634 = vadd.f32 %v8585, %v8628
        %v8635 = vadd.f32 %v8586, %v8630
        %8636 = vmatprep.subr.bf16.mxu0 %v6870
        %8637 = vmatpush1.bf16.msra.mxu0 %v6869
        %8638 = vmatprep.subr.bf16.mxu0 %v6868
        %8639 = vmatpush1.bf16.msra.mxu0 %v6867
        %8640 = vmatprep.subr.bf16.mxu0 %v6866
        %8641 = vmatpush1.bf16.msra.mxu0 %v6865
        %8642 = vmatprep.subr.bf16.mxu0 %v6864
        %8643 = vmatpush1.bf16.msra.mxu0 %v6863
        %8644 = vmatprep.subr.bf16.mxu0 %v6862
        %8645 = vmatpush1.bf16.msra.mxu0 %v6861
        %8646 = vmatprep.subr.bf16.mxu0 %v6860
        %8647 = vmatpush1.bf16.msra.mxu0 %v6859
        %8648 = vmatprep.subr.bf16.mxu0 %v6858
        %8649 = vmatpush1.bf16.msra.mxu0 %v6857
        %8650 = vmatprep.subr.bf16.mxu0 %v6856
        %8651 = vmatpush1.bf16.msra.mxu0 %v6855
        %8652 = vmatprep.subr.bf16.mxu0 %v6886
        %8653 = vmatpush2.bf16.msra.mxu0 %v6885
        %8654 = vmatprep.subr.bf16.mxu0 %v6884
        %8655 = vmatpush2.bf16.msra.mxu0 %v6883
        %8656 = vmatprep.subr.bf16.mxu0 %v6882
        %8657 = vmatpush2.bf16.msra.mxu0 %v6881
        %8658 = vmatprep.subr.bf16.mxu0 %v6880
        %8659 = vmatpush2.bf16.msra.mxu0 %v6879
        %8660 = vmatprep.subr.bf16.mxu0 %v6878
        %8661 = vmatpush2.bf16.msra.mxu0 %v6877
        %8662 = vmatprep.subr.bf16.mxu0 %v6876
        %8663 = vmatpush2.bf16.msra.mxu0 %v6875
        %8664 = vmatprep.subr.bf16.mxu0 %v6874
        %8665 = vmatpush2.bf16.msra.mxu0 %v6873
        %8666 = vmatprep.subr.bf16.mxu0 %v6872
        %8667 = vmatpush2.bf16.msra.mxu0 %v6871
        %8668 = vmatprep.mubr.bf16.mxu0 %v8537
        %8669 = vmatmul.mubr.bf16.gmra.mxu0 %v8536
        %v8670 = vpop.f32.mrf.mxu0
        %v8671 = vadd.f32 0.0, %v8670
        %v8672 = vpop.f32.mrf.mxu0
        %v8673 = vadd.f32 0.0, %v8672
        %v8674 = vpop.f32.mrf.mxu0
        %v8675 = vpop.f32.mrf.mxu0
        %8676 = vdwg.mxu0
        %v8677 = vadd.f32 %v8634, %v8671
        %v8678 = vadd.f32 %v8635, %v8673
        %v8681 = vrot.slane %v8536, 4
        %v8682 = vrot.slane %v8537, 4
        %8685 = vmatprep.subr.bf16.mxu0 %v7112
        %8686 = vmatpush1.bf16.msra.mxu0 %v7111
        %8687 = vmatprep.subr.bf16.mxu0 %v7110
        %8688 = vmatpush1.bf16.msra.mxu0 %v7109
        %8689 = vmatprep.subr.bf16.mxu0 %v7108
        %8690 = vmatpush1.bf16.msra.mxu0 %v7107
        %8691 = vmatprep.subr.bf16.mxu0 %v7106
        %8692 = vmatpush1.bf16.msra.mxu0 %v7105
        %8693 = vmatprep.subr.bf16.mxu0 %v7104
        %8694 = vmatpush1.bf16.msra.mxu0 %v7103
        %8695 = vmatprep.subr.bf16.mxu0 %v7102
        %8696 = vmatpush1.bf16.msra.mxu0 %v7101
        %8697 = vmatprep.subr.bf16.mxu0 %v7100
        %8698 = vmatpush1.bf16.msra.mxu0 %v7099
        %8699 = vmatprep.subr.bf16.mxu0 %v7098
        %8700 = vmatpush1.bf16.msra.mxu0 %v7097
        %8701 = vmatprep.subr.bf16.mxu0 %v7128
        %8702 = vmatpush2.bf16.msra.mxu0 %v7127
        %8703 = vmatprep.subr.bf16.mxu0 %v7126
        %8704 = vmatpush2.bf16.msra.mxu0 %v7125
        %8705 = vmatprep.subr.bf16.mxu0 %v7124
        %8706 = vmatpush2.bf16.msra.mxu0 %v7123
        %8707 = vmatprep.subr.bf16.mxu0 %v7122
        %8708 = vmatpush2.bf16.msra.mxu0 %v7121
        %8709 = vmatprep.subr.bf16.mxu0 %v7120
        %8710 = vmatpush2.bf16.msra.mxu0 %v7119
        %8711 = vmatprep.subr.bf16.mxu0 %v7118
        %8712 = vmatpush2.bf16.msra.mxu0 %v7117
        %8713 = vmatprep.subr.bf16.mxu0 %v7116
        %8714 = vmatpush2.bf16.msra.mxu0 %v7115
        %8715 = vmatprep.subr.bf16.mxu0 %v7114
        %8716 = vmatpush2.bf16.msra.mxu0 %v7113
        %8717 = vmatprep.mubr.bf16.mxu0 %v8682
        %8718 = vmatmul.mubr.bf16.gmra.mxu0 %v8681
        %v8719 = vpop.f32.mrf.mxu0
        %v8720 = vadd.f32 0.0, %v8719
        %v8721 = vpop.f32.mrf.mxu0
        %v8722 = vadd.f32 0.0, %v8721
        %v8723 = vpop.f32.mrf.mxu0
        %v8724 = vpop.f32.mrf.mxu0
        %8725 = vdwg.mxu0
        %v8726 = vadd.f32 %v8677, %v8720
        %v8727 = vadd.f32 %v8678, %v8722
        %8728 = vmatprep.subr.bf16.mxu0 %v7348
        %8729 = vmatpush1.bf16.msra.mxu0 %v7347
        %8730 = vmatprep.subr.bf16.mxu0 %v7346
        %8731 = vmatpush1.bf16.msra.mxu0 %v7345
        %8732 = vmatprep.subr.bf16.mxu0 %v7344
        %8733 = vmatpush1.bf16.msra.mxu0 %v7343
        %8734 = vmatprep.subr.bf16.mxu0 %v7342
        %8735 = vmatpush1.bf16.msra.mxu0 %v7341
        %8736 = vmatprep.subr.bf16.mxu0 %v7340
        %8737 = vmatpush1.bf16.msra.mxu0 %v7339
        %8738 = vmatprep.subr.bf16.mxu0 %v7338
        %8739 = vmatpush1.bf16.msra.mxu0 %v7337
        %8740 = vmatprep.subr.bf16.mxu0 %v7336
        %8741 = vmatpush1.bf16.msra.mxu0 %v7335
        %8742 = vmatprep.subr.bf16.mxu0 %v7334
        %8743 = vmatpush1.bf16.msra.mxu0 %v7333
        %8744 = vmatprep.subr.bf16.mxu0 %v7364
        %8745 = vmatpush2.bf16.msra.mxu0 %v7363
        %8746 = vmatprep.subr.bf16.mxu0 %v7362
        %8747 = vmatpush2.bf16.msra.mxu0 %v7361
        %8748 = vmatprep.subr.bf16.mxu0 %v7360
        %8749 = vmatpush2.bf16.msra.mxu0 %v7359
        %8750 = vmatprep.subr.bf16.mxu0 %v7358
        %8751 = vmatpush2.bf16.msra.mxu0 %v7357
        %8752 = vmatprep.subr.bf16.mxu0 %v7356
        %8753 = vmatpush2.bf16.msra.mxu0 %v7355
        %8754 = vmatprep.subr.bf16.mxu0 %v7354
        %8755 = vmatpush2.bf16.msra.mxu0 %v7353
        %8756 = vmatprep.subr.bf16.mxu0 %v7352
        %8757 = vmatpush2.bf16.msra.mxu0 %v7351
        %8758 = vmatprep.subr.bf16.mxu0 %v7350
        %8759 = vmatpush2.bf16.msra.mxu0 %v7349
        %8760 = vmatprep.mubr.bf16.mxu0 %v8539
        %8761 = vmatmul.mubr.bf16.gmra.mxu0 %v8538
        %v8762 = vpop.f32.mrf.mxu0
        %v8763 = vadd.f32 0.0, %v8762
        %v8764 = vpop.f32.mrf.mxu0
        %v8765 = vadd.f32 0.0, %v8764
        %v8766 = vpop.f32.mrf.mxu0
        %v8767 = vpop.f32.mrf.mxu0
        %8768 = vdwg.mxu0
        %v8769 = vadd.f32 %v8726, %v8763
        %v8770 = vadd.f32 %v8727, %v8765
        %v8773 = vrot.slane %v8538, 4
        %v8774 = vrot.slane %v8539, 4
        %8777 = vmatprep.subr.bf16.mxu0 %v7590
        %8778 = vmatpush1.bf16.msra.mxu0 %v7589
        %8779 = vmatprep.subr.bf16.mxu0 %v7588
        %8780 = vmatpush1.bf16.msra.mxu0 %v7587
        %8781 = vmatprep.subr.bf16.mxu0 %v7586
        %8782 = vmatpush1.bf16.msra.mxu0 %v7585
        %8783 = vmatprep.subr.bf16.mxu0 %v7584
        %8784 = vmatpush1.bf16.msra.mxu0 %v7583
        %8785 = vmatprep.subr.bf16.mxu0 %v7582
        %8786 = vmatpush1.bf16.msra.mxu0 %v7581
        %8787 = vmatprep.subr.bf16.mxu0 %v7580
        %8788 = vmatpush1.bf16.msra.mxu0 %v7579
        %8789 = vmatprep.subr.bf16.mxu0 %v7578
        %8790 = vmatpush1.bf16.msra.mxu0 %v7577
        %8791 = vmatprep.subr.bf16.mxu0 %v7576
        %8792 = vmatpush1.bf16.msra.mxu0 %v7575
        %8793 = vmatprep.subr.bf16.mxu0 %v7606
        %8794 = vmatpush2.bf16.msra.mxu0 %v7605
        %8795 = vmatprep.subr.bf16.mxu0 %v7604
        %8796 = vmatpush2.bf16.msra.mxu0 %v7603
        %8797 = vmatprep.subr.bf16.mxu0 %v7602
        %8798 = vmatpush2.bf16.msra.mxu0 %v7601
        %8799 = vmatprep.subr.bf16.mxu0 %v7600
        %8800 = vmatpush2.bf16.msra.mxu0 %v7599
        %8801 = vmatprep.subr.bf16.mxu0 %v7598
        %8802 = vmatpush2.bf16.msra.mxu0 %v7597
        %8803 = vmatprep.subr.bf16.mxu0 %v7596
        %8804 = vmatpush2.bf16.msra.mxu0 %v7595
        %8805 = vmatprep.subr.bf16.mxu0 %v7594
        %8806 = vmatpush2.bf16.msra.mxu0 %v7593
        %8807 = vmatprep.subr.bf16.mxu0 %v7592
        %8808 = vmatpush2.bf16.msra.mxu0 %v7591
        %8809 = vmatprep.mubr.bf16.mxu0 %v8774
        %8810 = vmatmul.mubr.bf16.gmra.mxu0 %v8773
        %v8811 = vpop.f32.mrf.mxu0
        %v8812 = vadd.f32 0.0, %v8811
        %v8813 = vpop.f32.mrf.mxu0
        %v8814 = vadd.f32 0.0, %v8813
        %v8815 = vpop.f32.mrf.mxu0
        %v8816 = vpop.f32.mrf.mxu0
        %8817 = vdwg.mxu0
        %v8818 = vadd.f32 %v8769, %v8812
        %v8819 = vadd.f32 %v8770, %v8814
        %8820 = vmatprep.subr.bf16.mxu0 %v7826
        %8821 = vmatpush1.bf16.msra.mxu0 %v7825
        %8822 = vmatprep.subr.bf16.mxu0 %v7824
        %8823 = vmatpush1.bf16.msra.mxu0 %v7823
        %8824 = vmatprep.subr.bf16.mxu0 %v7822
        %8825 = vmatpush1.bf16.msra.mxu0 %v7821
        %8826 = vmatprep.subr.bf16.mxu0 %v7820
        %8827 = vmatpush1.bf16.msra.mxu0 %v7819
        %8828 = vmatprep.subr.bf16.mxu0 %v7818
        %8829 = vmatpush1.bf16.msra.mxu0 %v7817
        %8830 = vmatprep.subr.bf16.mxu0 %v7816
        %8831 = vmatpush1.bf16.msra.mxu0 %v7815
        %8832 = vmatprep.subr.bf16.mxu0 %v7814
        %8833 = vmatpush1.bf16.msra.mxu0 %v7813
        %8834 = vmatprep.subr.bf16.mxu0 %v7812
        %8835 = vmatpush1.bf16.msra.mxu0 %v7811
        %8836 = vmatprep.subr.bf16.mxu0 %v7842
        %8837 = vmatpush2.bf16.msra.mxu0 %v7841
        %8838 = vmatprep.subr.bf16.mxu0 %v7840
        %8839 = vmatpush2.bf16.msra.mxu0 %v7839
        %8840 = vmatprep.subr.bf16.mxu0 %v7838
        %8841 = vmatpush2.bf16.msra.mxu0 %v7837
        %8842 = vmatprep.subr.bf16.mxu0 %v7836
        %8843 = vmatpush2.bf16.msra.mxu0 %v7835
        %8844 = vmatprep.subr.bf16.mxu0 %v7834
        %8845 = vmatpush2.bf16.msra.mxu0 %v7833
        %8846 = vmatprep.subr.bf16.mxu0 %v7832
        %8847 = vmatpush2.bf16.msra.mxu0 %v7831
        %8848 = vmatprep.subr.bf16.mxu0 %v7830
        %8849 = vmatpush2.bf16.msra.mxu0 %v7829
        %8850 = vmatprep.subr.bf16.mxu0 %v7828
        %8851 = vmatpush2.bf16.msra.mxu0 %v7827
        %8852 = vmatprep.mubr.bf16.mxu0 %v8541
        %8853 = vmatmul.mubr.bf16.gmra.mxu0 %v8540
        %v8854 = vpop.f32.mrf.mxu0
        %v8855 = vadd.f32 0.0, %v8854
        %v8856 = vpop.f32.mrf.mxu0
        %v8857 = vadd.f32 0.0, %v8856
        %v8858 = vpop.f32.mrf.mxu0
        %v8859 = vpop.f32.mrf.mxu0
        %8860 = vdwg.mxu0
        %v8861 = vadd.f32 %v8818, %v8855
        %v8862 = vadd.f32 %v8819, %v8857
        %v8865 = vrot.slane %v8540, 4
        %v8866 = vrot.slane %v8541, 4
        %8869 = vmatprep.subr.bf16.mxu0 %v8068
        %8870 = vmatpush1.bf16.msra.mxu0 %v8067
        %8871 = vmatprep.subr.bf16.mxu0 %v8066
        %8872 = vmatpush1.bf16.msra.mxu0 %v8065
        %8873 = vmatprep.subr.bf16.mxu0 %v8064
        %8874 = vmatpush1.bf16.msra.mxu0 %v8063
        %8875 = vmatprep.subr.bf16.mxu0 %v8062
        %8876 = vmatpush1.bf16.msra.mxu0 %v8061
        %8877 = vmatprep.subr.bf16.mxu0 %v8060
        %8878 = vmatpush1.bf16.msra.mxu0 %v8059
        %8879 = vmatprep.subr.bf16.mxu0 %v8058
        %8880 = vmatpush1.bf16.msra.mxu0 %v8057
        %8881 = vmatprep.subr.bf16.mxu0 %v8056
        %8882 = vmatpush1.bf16.msra.mxu0 %v8055
        %8883 = vmatprep.subr.bf16.mxu0 %v8054
        %8884 = vmatpush1.bf16.msra.mxu0 %v8053
        %8885 = vmatprep.subr.bf16.mxu0 %v8084
        %8886 = vmatpush2.bf16.msra.mxu0 %v8083
        %8887 = vmatprep.subr.bf16.mxu0 %v8082
        %8888 = vmatpush2.bf16.msra.mxu0 %v8081
        %8889 = vmatprep.subr.bf16.mxu0 %v8080
        %8890 = vmatpush2.bf16.msra.mxu0 %v8079
        %8891 = vmatprep.subr.bf16.mxu0 %v8078
        %8892 = vmatpush2.bf16.msra.mxu0 %v8077
        %8893 = vmatprep.subr.bf16.mxu0 %v8076
        %8894 = vmatpush2.bf16.msra.mxu0 %v8075
        %8895 = vmatprep.subr.bf16.mxu0 %v8074
        %8896 = vmatpush2.bf16.msra.mxu0 %v8073
        %8897 = vmatprep.subr.bf16.mxu0 %v8072
        %8898 = vmatpush2.bf16.msra.mxu0 %v8071
        %8899 = vmatprep.subr.bf16.mxu0 %v8070
        %8900 = vmatpush2.bf16.msra.mxu0 %v8069
        %8901 = vmatprep.mubr.bf16.mxu0 %v8866
        %8902 = vmatmul.mubr.bf16.gmra.mxu0 %v8865
        %v8903 = vpop.f32.mrf.mxu0
        %v8904 = vadd.f32 0.0, %v8903
        %v8905 = vpop.f32.mrf.mxu0
        %v8906 = vadd.f32 0.0, %v8905
        %v8907 = vpop.f32.mrf.mxu0
        %v8908 = vpop.f32.mrf.mxu0
        %8909 = vdwg.mxu0
        %v8910 = vadd.f32 %v8861, %v8904
        %v8911 = vadd.f32 %v8862, %v8906
        %8912 = vmatprep.subr.bf16.mxu0 %v8304
        %8913 = vmatpush1.bf16.msra.mxu0 %v8303
        %8914 = vmatprep.subr.bf16.mxu0 %v8302
        %8915 = vmatpush1.bf16.msra.mxu0 %v8301
        %8916 = vmatprep.subr.bf16.mxu0 %v8300
        %8917 = vmatpush1.bf16.msra.mxu0 %v8299
        %8918 = vmatprep.subr.bf16.mxu0 %v8298
        %8919 = vmatpush1.bf16.msra.mxu0 %v8297
        %8920 = vmatprep.subr.bf16.mxu0 %v8296
        %8921 = vmatpush1.bf16.msra.mxu0 %v8295
        %8922 = vmatprep.subr.bf16.mxu0 %v8294
        %8923 = vmatpush1.bf16.msra.mxu0 %v8293
        %8924 = vmatprep.subr.bf16.mxu0 %v8292
        %8925 = vmatpush1.bf16.msra.mxu0 %v8291
        %8926 = vmatprep.subr.bf16.mxu0 %v8290
        %8927 = vmatpush1.bf16.msra.mxu0 %v8289
        %8928 = vmatprep.subr.bf16.mxu0 %v8320
        %8929 = vmatpush2.bf16.msra.mxu0 %v8319
        %8930 = vmatprep.subr.bf16.mxu0 %v8318
        %8931 = vmatpush2.bf16.msra.mxu0 %v8317
        %8932 = vmatprep.subr.bf16.mxu0 %v8316
        %8933 = vmatpush2.bf16.msra.mxu0 %v8315
        %8934 = vmatprep.subr.bf16.mxu0 %v8314
        %8935 = vmatpush2.bf16.msra.mxu0 %v8313
        %8936 = vmatprep.subr.bf16.mxu0 %v8312
        %8937 = vmatpush2.bf16.msra.mxu0 %v8311
        %8938 = vmatprep.subr.bf16.mxu0 %v8310
        %8939 = vmatpush2.bf16.msra.mxu0 %v8309
        %8940 = vmatprep.subr.bf16.mxu0 %v8308
        %8941 = vmatpush2.bf16.msra.mxu0 %v8307
        %8942 = vmatprep.subr.bf16.mxu0 %v8306
        %8943 = vmatpush2.bf16.msra.mxu0 %v8305
        %8944 = vmatprep.mubr.bf16.mxu0 %v8543
        %8945 = vmatmul.mubr.bf16.gmra.mxu0 %v8542
        %v8946 = vpop.f32.mrf.mxu0
        %v8947 = vadd.f32 0.0, %v8946
        %v8948 = vpop.f32.mrf.mxu0
        %v8949 = vadd.f32 0.0, %v8948
        %v8950 = vpop.f32.mrf.mxu0
        %v8951 = vpop.f32.mrf.mxu0
        %8952 = vdwg.mxu0
        %v8953 = vadd.f32 %v8910, %v8947
        %v8954 = vadd.f32 %v8911, %v8949
        %v8955 = vld [vmem:[%s22] sm:$0xff]
        %8957 = vset.pattern.permute.xlu0 0
        %8958 = vperm.xlu0 %8957, %v8955
        %v8959 = vpop.permute.xlu0 %8958
        %v8961 = vadd.f32 %v8953, %v8959
        %v8962 = vadd.f32 %v8954, %v8959
        %v8963 = vmul.f32 %v8961, 0.01
        %v8964 = vmul.f32 %v8962, 0.01
        %v8965 = vmax.f32 %v8961, %v8963
        %v8966 = vmax.f32 %v8962, %v8964
        %v8967 = vpack.c.bf16 %v8965, %v8965
        %v8968 = vpack.c.bf16 %v8966, %v8966
        %v8969 = vld [vmem:[%s23] sm:$0xf]
        %v8970 = vld [vmem:[%s23 + $0x4] sm:$0xf]
        %v8971 = vld [vmem:[%s23 + $0x8] sm:$0xf]
        %v8972 = vld [vmem:[%s23 + $0xc] sm:$0xf]
        %v8973 = vld [vmem:[%s23 + $0x10] sm:$0xf]
        %v8974 = vld [vmem:[%s23 + $0x14] sm:$0xf]
        %v8975 = vld [vmem:[%s23 + $0x18] sm:$0xf]
        %v8976 = vld [vmem:[%s23 + $0x1c] sm:$0xf]
        %v8977 = vld [vmem:[%s23 + $0x20] sm:$0xf]
        %v8987 = vunpack.c.l.b16 %v8969
        %v8988 = vunpack.c.l.b16 %v8970
        %v8989 = vunpack.c.l.b16 %v8971
        %v8990 = vunpack.c.l.b16 %v8972
        %v8991 = vunpack.c.l.b16 %v8973
        %v8992 = vunpack.c.l.b16 %v8974
        %v8993 = vunpack.c.l.b16 %v8975
        %v8994 = vunpack.c.l.b16 %v8976
        %v8995 = vunpack.c.l.b16 %v8977
        %v8996 = vpack.c.b16 %v8988, %v8987
        %v8997 = vpack.c.b16 %v8990, %v8989
        %v8998 = vpack.c.b16 %v8992, %v8991
        %v8999 = vpack.c.b16 %v8994, %v8993
        %v9000 = vpack.c.b16 %v8995, %v8995
        %v9002 = vsel %vm926, %v8996, 0
        %v9005 = vsel %vm926, %v8997, 0
        %v9008 = vsel %vm926, %v8998, 0
        %v9011 = vsel %vm926, %v8999, 0
        %v9014 = vsel %vm926, %v9000, 0
        %v9017 = vsel %vm954, %v8967, 0
        %v9020 = vsel %vm954, %v8968, 0
        %9022 = vmatprep.subr.bf16.mxu0 0
        %9023 = vmatpush1.bf16.msra.mxu0 0
        %9024 = vmatprep.subr.bf16.mxu0 0
        %9025 = vmatpush1.bf16.msra.mxu0 0
        %9026 = vmatprep.subr.bf16.mxu0 0
        %9027 = vmatpush1.bf16.msra.mxu0 0
        %9028 = vmatprep.subr.bf16.mxu0 0
        %9029 = vmatpush1.bf16.msra.mxu0 0
        %9030 = vmatprep.subr.bf16.mxu0 0
        %9031 = vmatpush1.bf16.msra.mxu0 0
        %9032 = vmatprep.subr.bf16.mxu0 0
        %9033 = vmatpush1.bf16.msra.mxu0 0
        %9034 = vmatprep.subr.bf16.mxu0 0
        %9035 = vmatpush1.bf16.msra.mxu0 0
        %9036 = vmatprep.subr.bf16.mxu0 %v9020
        %9037 = vmatpush1.bf16.msra.mxu0 %v9017
        %9038 = vmatprep.subr.bf16.mxu0 0
        %9039 = vmatpush2.bf16.msra.mxu0 0
        %9040 = vmatprep.subr.bf16.mxu0 0
        %9041 = vmatpush2.bf16.msra.mxu0 0
        %9042 = vmatprep.subr.bf16.mxu0 0
        %9043 = vmatpush2.bf16.msra.mxu0 0
        %9044 = vmatprep.subr.bf16.mxu0 0
        %9045 = vmatpush2.bf16.msra.mxu0 0
        %9046 = vmatprep.subr.bf16.mxu0 0
        %9047 = vmatpush2.bf16.msra.mxu0 0
        %9048 = vmatprep.subr.bf16.mxu0 0
        %9049 = vmatpush2.bf16.msra.mxu0 0
        %9050 = vmatprep.subr.bf16.mxu0 0
        %9051 = vmatpush2.bf16.msra.mxu0 0
        %9052 = vmatprep.subr.bf16.mxu0 0
        %9053 = vmatpush2.bf16.msra.mxu0 0
        %9054 = vmatprep.mubr.bf16.mxu0 0
        %9055 = vmatmul.mubr.bf16.gmra.mxu0 %v9002
        %v9056 = vpop.f32.mrf.mxu0
        %v9057 = vadd.f32 0.0, %v9056
        %v9058 = vpop.f32.mrf.mxu0
        %v9059 = vadd.f32 0.0, %v9058
        %v9060 = vpop.f32.mrf.mxu0
        %v9061 = vadd.f32 0.0, %v9060
        %v9062 = vpop.f32.mrf.mxu0
        %v9063 = vadd.f32 0.0, %v9062
        %9064 = vmatprep.mubr.bf16.mxu0 0
        %9065 = vmatmul.mubr.bf16.gmra.mxu0 %v9005
        %v9066 = vpop.f32.mrf.mxu0
        %v9067 = vadd.f32 0.0, %v9066
        %v9068 = vpop.f32.mrf.mxu0
        %v9069 = vadd.f32 0.0, %v9068
        %v9070 = vpop.f32.mrf.mxu0
        %v9071 = vadd.f32 0.0, %v9070
        %v9072 = vpop.f32.mrf.mxu0
        %v9073 = vadd.f32 0.0, %v9072
        %9074 = vmatprep.mubr.bf16.mxu0 0
        %9075 = vmatmul.mubr.bf16.gmra.mxu0 %v9008
        %v9076 = vpop.f32.mrf.mxu0
        %v9077 = vadd.f32 0.0, %v9076
        %v9078 = vpop.f32.mrf.mxu0
        %v9079 = vadd.f32 0.0, %v9078
        %v9080 = vpop.f32.mrf.mxu0
        %v9081 = vadd.f32 0.0, %v9080
        %v9082 = vpop.f32.mrf.mxu0
        %v9083 = vadd.f32 0.0, %v9082
        %9084 = vmatprep.mubr.bf16.mxu0 0
        %9085 = vmatmul.mubr.bf16.gmra.mxu0 %v9011
        %v9086 = vpop.f32.mrf.mxu0
        %v9087 = vadd.f32 0.0, %v9086
        %v9088 = vpop.f32.mrf.mxu0
        %v9089 = vadd.f32 0.0, %v9088
        %v9090 = vpop.f32.mrf.mxu0
        %v9091 = vadd.f32 0.0, %v9090
        %v9092 = vpop.f32.mrf.mxu0
        %v9093 = vadd.f32 0.0, %v9092
        %9094 = vmatprep.mubr.bf16.mxu0 0
        %9095 = vmatmul.mubr.bf16.gmra.mxu0 %v9014
        %v9096 = vpop.f32.mrf.mxu0
        %v9097 = vadd.f32 0.0, %v9096
        %v9098 = vpop.f32.mrf.mxu0
        %v9099 = vadd.f32 0.0, %v9098
        %v9100 = vpop.f32.mrf.mxu0
        %v9101 = vpop.f32.mrf.mxu0
        %9102 = vdwg.mxu0
        %v9103 = vpack.c.bf16 %v9061, %v9057
        %v9104 = vpack.c.bf16 %v9063, %v9059
        %v9105 = vpack.c.bf16 %v9071, %v9067
        %v9106 = vpack.c.bf16 %v9073, %v9069
        %v9107 = vpack.c.bf16 %v9081, %v9077
        %v9108 = vpack.c.bf16 %v9083, %v9079
        %v9109 = vpack.c.bf16 %v9091, %v9087
        %v9110 = vpack.c.bf16 %v9093, %v9089
        %v9111 = vpack.c.bf16 %v9097, %v9097
        %v9112 = vpack.c.bf16 %v9099, %v9099
        %v9115 = vrot.slane %v9103, 4
        %v9116 = vrot.slane %v9104, 4
        %9119 = vmatprep.subr.bf16.mxu0 %v6435
        %9120 = vmatpush1.bf16.msra.mxu0 %v6434
        %9121 = vmatprep.subr.bf16.mxu0 %v6433
        %9122 = vmatpush1.bf16.msra.mxu0 %v6432
        %9123 = vmatprep.subr.bf16.mxu0 %v6431
        %9124 = vmatpush1.bf16.msra.mxu0 %v6430
        %9125 = vmatprep.subr.bf16.mxu0 %v6429
        %9126 = vmatpush1.bf16.msra.mxu0 %v6428
        %9127 = vmatprep.subr.bf16.mxu0 %v6427
        %9128 = vmatpush1.bf16.msra.mxu0 %v6426
        %9129 = vmatprep.subr.bf16.mxu0 %v6425
        %9130 = vmatpush1.bf16.msra.mxu0 %v6424
        %9131 = vmatprep.subr.bf16.mxu0 %v6423
        %9132 = vmatpush1.bf16.msra.mxu0 %v6422
        %9133 = vmatprep.subr.bf16.mxu0 %v6421
        %9134 = vmatpush1.bf16.msra.mxu0 %v6420
        %9135 = vmatprep.subr.bf16.mxu0 %v6451
        %9136 = vmatpush2.bf16.msra.mxu0 %v6450
        %9137 = vmatprep.subr.bf16.mxu0 %v6449
        %9138 = vmatpush2.bf16.msra.mxu0 %v6448
        %9139 = vmatprep.subr.bf16.mxu0 %v6447
        %9140 = vmatpush2.bf16.msra.mxu0 %v6446
        %9141 = vmatprep.subr.bf16.mxu0 %v6445
        %9142 = vmatpush2.bf16.msra.mxu0 %v6444
        %9143 = vmatprep.subr.bf16.mxu0 %v6443
        %9144 = vmatpush2.bf16.msra.mxu0 %v6442
        %9145 = vmatprep.subr.bf16.mxu0 %v6441
        %9146 = vmatpush2.bf16.msra.mxu0 %v6440
        %9147 = vmatprep.subr.bf16.mxu0 %v6439
        %9148 = vmatpush2.bf16.msra.mxu0 %v6438
        %9149 = vmatprep.subr.bf16.mxu0 %v6437
        %9150 = vmatpush2.bf16.msra.mxu0 %v6436
        %9151 = vmatprep.mubr.bf16.mxu0 %v9116
        %9152 = vmatmul.mubr.bf16.gmra.mxu0 %v9115
        %v9153 = vpop.f32.mrf.mxu0
        %v9154 = vadd.f32 0.0, %v9153
        %v9155 = vpop.f32.mrf.mxu0
        %v9156 = vadd.f32 0.0, %v9155
        %v9157 = vpop.f32.mrf.mxu0
        %v9158 = vpop.f32.mrf.mxu0
        %9159 = vdwg.mxu0
        %9160 = vmatprep.subr.bf16.mxu0 %v6636
        %9161 = vmatpush1.bf16.msra.mxu0 %v6635
        %9162 = vmatprep.subr.bf16.mxu0 %v6634
        %9163 = vmatpush1.bf16.msra.mxu0 %v6633
        %9164 = vmatprep.subr.bf16.mxu0 %v6632
        %9165 = vmatpush1.bf16.msra.mxu0 %v6631
        %9166 = vmatprep.subr.bf16.mxu0 %v6630
        %9167 = vmatpush1.bf16.msra.mxu0 %v6629
        %9168 = vmatprep.subr.bf16.mxu0 %v6628
        %9169 = vmatpush1.bf16.msra.mxu0 %v6627
        %9170 = vmatprep.subr.bf16.mxu0 %v6626
        %9171 = vmatpush1.bf16.msra.mxu0 %v6625
        %9172 = vmatprep.subr.bf16.mxu0 %v6624
        %9173 = vmatpush1.bf16.msra.mxu0 %v6623
        %9174 = vmatprep.subr.bf16.mxu0 %v6622
        %9175 = vmatpush1.bf16.msra.mxu0 %v6621
        %9176 = vmatprep.subr.bf16.mxu0 %v6652
        %9177 = vmatpush2.bf16.msra.mxu0 %v6651
        %9178 = vmatprep.subr.bf16.mxu0 %v6650
        %9179 = vmatpush2.bf16.msra.mxu0 %v6649
        %9180 = vmatprep.subr.bf16.mxu0 %v6648
        %9181 = vmatpush2.bf16.msra.mxu0 %v6647
        %9182 = vmatprep.subr.bf16.mxu0 %v6646
        %9183 = vmatpush2.bf16.msra.mxu0 %v6645
        %9184 = vmatprep.subr.bf16.mxu0 %v6644
        %9185 = vmatpush2.bf16.msra.mxu0 %v6643
        %9186 = vmatprep.subr.bf16.mxu0 %v6642
        %9187 = vmatpush2.bf16.msra.mxu0 %v6641
        %9188 = vmatprep.subr.bf16.mxu0 %v6640
        %9189 = vmatpush2.bf16.msra.mxu0 %v6639
        %9190 = vmatprep.subr.bf16.mxu0 %v6638
        %9191 = vmatpush2.bf16.msra.mxu0 %v6637
        %9192 = vmatprep.mubr.bf16.mxu0 %v9104
        %9193 = vmatmul.mubr.bf16.gmra.mxu0 %v9103
        %v9194 = vpop.f32.mrf.mxu0
        %v9195 = vadd.f32 %v9154, %v9194
        %v9196 = vpop.f32.mrf.mxu0
        %v9197 = vadd.f32 %v9156, %v9196
        %v9198 = vpop.f32.mrf.mxu0
        %v9199 = vpop.f32.mrf.mxu0
        %9200 = vdwg.mxu0
        %9201 = vmatprep.subr.bf16.mxu0 %v6870
        %9202 = vmatpush1.bf16.msra.mxu0 %v6869
        %9203 = vmatprep.subr.bf16.mxu0 %v6868
        %9204 = vmatpush1.bf16.msra.mxu0 %v6867
        %9205 = vmatprep.subr.bf16.mxu0 %v6866
        %9206 = vmatpush1.bf16.msra.mxu0 %v6865
        %9207 = vmatprep.subr.bf16.mxu0 %v6864
        %9208 = vmatpush1.bf16.msra.mxu0 %v6863
        %9209 = vmatprep.subr.bf16.mxu0 %v6862
        %9210 = vmatpush1.bf16.msra.mxu0 %v6861
        %9211 = vmatprep.subr.bf16.mxu0 %v6860
        %9212 = vmatpush1.bf16.msra.mxu0 %v6859
        %9213 = vmatprep.subr.bf16.mxu0 %v6858
        %9214 = vmatpush1.bf16.msra.mxu0 %v6857
        %9215 = vmatprep.subr.bf16.mxu0 %v6856
        %9216 = vmatpush1.bf16.msra.mxu0 %v6855
        %9217 = vmatprep.subr.bf16.mxu0 %v6886
        %9218 = vmatpush2.bf16.msra.mxu0 %v6885
        %9219 = vmatprep.subr.bf16.mxu0 %v6884
        %9220 = vmatpush2.bf16.msra.mxu0 %v6883
        %9221 = vmatprep.subr.bf16.mxu0 %v6882
        %9222 = vmatpush2.bf16.msra.mxu0 %v6881
        %9223 = vmatprep.subr.bf16.mxu0 %v6880
        %9224 = vmatpush2.bf16.msra.mxu0 %v6879
        %9225 = vmatprep.subr.bf16.mxu0 %v6878
        %9226 = vmatpush2.bf16.msra.mxu0 %v6877
        %9227 = vmatprep.subr.bf16.mxu0 %v6876
        %9228 = vmatpush2.bf16.msra.mxu0 %v6875
        %9229 = vmatprep.subr.bf16.mxu0 %v6874
        %9230 = vmatpush2.bf16.msra.mxu0 %v6873
        %9231 = vmatprep.subr.bf16.mxu0 %v6872
        %9232 = vmatpush2.bf16.msra.mxu0 %v6871
        %9233 = vmatprep.mubr.bf16.mxu0 %v9106
        %9234 = vmatmul.mubr.bf16.gmra.mxu0 %v9105
        %v9235 = vpop.f32.mrf.mxu0
        %v9236 = vadd.f32 0.0, %v9235
        %v9237 = vpop.f32.mrf.mxu0
        %v9238 = vadd.f32 0.0, %v9237
        %v9239 = vpop.f32.mrf.mxu0
        %v9240 = vpop.f32.mrf.mxu0
        %9241 = vdwg.mxu0
        %v9242 = vadd.f32 %v9195, %v9236
        %v9243 = vadd.f32 %v9197, %v9238
        %v9246 = vrot.slane %v9105, 4
        %v9247 = vrot.slane %v9106, 4
        %9250 = vmatprep.subr.bf16.mxu0 %v7112
        %9251 = vmatpush1.bf16.msra.mxu0 %v7111
        %9252 = vmatprep.subr.bf16.mxu0 %v7110
        %9253 = vmatpush1.bf16.msra.mxu0 %v7109
        %9254 = vmatprep.subr.bf16.mxu0 %v7108
        %9255 = vmatpush1.bf16.msra.mxu0 %v7107
        %9256 = vmatprep.subr.bf16.mxu0 %v7106
        %9257 = vmatpush1.bf16.msra.mxu0 %v7105
        %9258 = vmatprep.subr.bf16.mxu0 %v7104
        %9259 = vmatpush1.bf16.msra.mxu0 %v7103
        %9260 = vmatprep.subr.bf16.mxu0 %v7102
        %9261 = vmatpush1.bf16.msra.mxu0 %v7101
        %9262 = vmatprep.subr.bf16.mxu0 %v7100
        %9263 = vmatpush1.bf16.msra.mxu0 %v7099
        %9264 = vmatprep.subr.bf16.mxu0 %v7098
        %9265 = vmatpush1.bf16.msra.mxu0 %v7097
        %9266 = vmatprep.subr.bf16.mxu0 %v7128
        %9267 = vmatpush2.bf16.msra.mxu0 %v7127
        %9268 = vmatprep.subr.bf16.mxu0 %v7126
        %9269 = vmatpush2.bf16.msra.mxu0 %v7125
        %9270 = vmatprep.subr.bf16.mxu0 %v7124
        %9271 = vmatpush2.bf16.msra.mxu0 %v7123
        %9272 = vmatprep.subr.bf16.mxu0 %v7122
        %9273 = vmatpush2.bf16.msra.mxu0 %v7121
        %9274 = vmatprep.subr.bf16.mxu0 %v7120
        %9275 = vmatpush2.bf16.msra.mxu0 %v7119
        %9276 = vmatprep.subr.bf16.mxu0 %v7118
        %9277 = vmatpush2.bf16.msra.mxu0 %v7117
        %9278 = vmatprep.subr.bf16.mxu0 %v7116
        %9279 = vmatpush2.bf16.msra.mxu0 %v7115
        %9280 = vmatprep.subr.bf16.mxu0 %v7114
        %9281 = vmatpush2.bf16.msra.mxu0 %v7113
        %9282 = vmatprep.mubr.bf16.mxu0 %v9247
        %9283 = vmatmul.mubr.bf16.gmra.mxu0 %v9246
        %v9284 = vpop.f32.mrf.mxu0
        %v9285 = vadd.f32 0.0, %v9284
        %v9286 = vpop.f32.mrf.mxu0
        %v9287 = vadd.f32 0.0, %v9286
        %v9288 = vpop.f32.mrf.mxu0
        %v9289 = vpop.f32.mrf.mxu0
        %9290 = vdwg.mxu0
        %v9291 = vadd.f32 %v9242, %v9285
        %v9292 = vadd.f32 %v9243, %v9287
        %9293 = vmatprep.subr.bf16.mxu0 %v7348
        %9294 = vmatpush1.bf16.msra.mxu0 %v7347
        %9295 = vmatprep.subr.bf16.mxu0 %v7346
        %9296 = vmatpush1.bf16.msra.mxu0 %v7345
        %9297 = vmatprep.subr.bf16.mxu0 %v7344
        %9298 = vmatpush1.bf16.msra.mxu0 %v7343
        %9299 = vmatprep.subr.bf16.mxu0 %v7342
        %9300 = vmatpush1.bf16.msra.mxu0 %v7341
        %9301 = vmatprep.subr.bf16.mxu0 %v7340
        %9302 = vmatpush1.bf16.msra.mxu0 %v7339
        %9303 = vmatprep.subr.bf16.mxu0 %v7338
        %9304 = vmatpush1.bf16.msra.mxu0 %v7337
        %9305 = vmatprep.subr.bf16.mxu0 %v7336
        %9306 = vmatpush1.bf16.msra.mxu0 %v7335
        %9307 = vmatprep.subr.bf16.mxu0 %v7334
        %9308 = vmatpush1.bf16.msra.mxu0 %v7333
        %9309 = vmatprep.subr.bf16.mxu0 %v7364
        %9310 = vmatpush2.bf16.msra.mxu0 %v7363
        %9311 = vmatprep.subr.bf16.mxu0 %v7362
        %9312 = vmatpush2.bf16.msra.mxu0 %v7361
        %9313 = vmatprep.subr.bf16.mxu0 %v7360
        %9314 = vmatpush2.bf16.msra.mxu0 %v7359
        %9315 = vmatprep.subr.bf16.mxu0 %v7358
        %9316 = vmatpush2.bf16.msra.mxu0 %v7357
        %9317 = vmatprep.subr.bf16.mxu0 %v7356
        %9318 = vmatpush2.bf16.msra.mxu0 %v7355
        %9319 = vmatprep.subr.bf16.mxu0 %v7354
        %9320 = vmatpush2.bf16.msra.mxu0 %v7353
        %9321 = vmatprep.subr.bf16.mxu0 %v7352
        %9322 = vmatpush2.bf16.msra.mxu0 %v7351
        %9323 = vmatprep.subr.bf16.mxu0 %v7350
        %9324 = vmatpush2.bf16.msra.mxu0 %v7349
        %9325 = vmatprep.mubr.bf16.mxu0 %v9108
        %9326 = vmatmul.mubr.bf16.gmra.mxu0 %v9107
        %v9327 = vpop.f32.mrf.mxu0
        %v9328 = vadd.f32 0.0, %v9327
        %v9329 = vpop.f32.mrf.mxu0
        %v9330 = vadd.f32 0.0, %v9329
        %v9331 = vpop.f32.mrf.mxu0
        %v9332 = vpop.f32.mrf.mxu0
        %9333 = vdwg.mxu0
        %v9334 = vadd.f32 %v9291, %v9328
        %v9335 = vadd.f32 %v9292, %v9330
        %v9338 = vrot.slane %v9107, 4
        %v9339 = vrot.slane %v9108, 4
        %9342 = vmatprep.subr.bf16.mxu0 %v7590
        %9343 = vmatpush1.bf16.msra.mxu0 %v7589
        %9344 = vmatprep.subr.bf16.mxu0 %v7588
        %9345 = vmatpush1.bf16.msra.mxu0 %v7587
        %9346 = vmatprep.subr.bf16.mxu0 %v7586
        %9347 = vmatpush1.bf16.msra.mxu0 %v7585
        %9348 = vmatprep.subr.bf16.mxu0 %v7584
        %9349 = vmatpush1.bf16.msra.mxu0 %v7583
        %9350 = vmatprep.subr.bf16.mxu0 %v7582
        %9351 = vmatpush1.bf16.msra.mxu0 %v7581
        %9352 = vmatprep.subr.bf16.mxu0 %v7580
        %9353 = vmatpush1.bf16.msra.mxu0 %v7579
        %9354 = vmatprep.subr.bf16.mxu0 %v7578
        %9355 = vmatpush1.bf16.msra.mxu0 %v7577
        %9356 = vmatprep.subr.bf16.mxu0 %v7576
        %9357 = vmatpush1.bf16.msra.mxu0 %v7575
        %9358 = vmatprep.subr.bf16.mxu0 %v7606
        %9359 = vmatpush2.bf16.msra.mxu0 %v7605
        %9360 = vmatprep.subr.bf16.mxu0 %v7604
        %9361 = vmatpush2.bf16.msra.mxu0 %v7603
        %9362 = vmatprep.subr.bf16.mxu0 %v7602
        %9363 = vmatpush2.bf16.msra.mxu0 %v7601
        %9364 = vmatprep.subr.bf16.mxu0 %v7600
        %9365 = vmatpush2.bf16.msra.mxu0 %v7599
        %9366 = vmatprep.subr.bf16.mxu0 %v7598
        %9367 = vmatpush2.bf16.msra.mxu0 %v7597
        %9368 = vmatprep.subr.bf16.mxu0 %v7596
        %9369 = vmatpush2.bf16.msra.mxu0 %v7595
        %9370 = vmatprep.subr.bf16.mxu0 %v7594
        %9371 = vmatpush2.bf16.msra.mxu0 %v7593
        %9372 = vmatprep.subr.bf16.mxu0 %v7592
        %9373 = vmatpush2.bf16.msra.mxu0 %v7591
        %9374 = vmatprep.mubr.bf16.mxu0 %v9339
        %9375 = vmatmul.mubr.bf16.gmra.mxu0 %v9338
        %v9376 = vpop.f32.mrf.mxu0
        %v9377 = vadd.f32 0.0, %v9376
        %v9378 = vpop.f32.mrf.mxu0
        %v9379 = vadd.f32 0.0, %v9378
        %v9380 = vpop.f32.mrf.mxu0
        %v9381 = vpop.f32.mrf.mxu0
        %9382 = vdwg.mxu0
        %v9383 = vadd.f32 %v9334, %v9377
        %v9384 = vadd.f32 %v9335, %v9379
        %9385 = vmatprep.subr.bf16.mxu0 %v7826
        %9386 = vmatpush1.bf16.msra.mxu0 %v7825
        %9387 = vmatprep.subr.bf16.mxu0 %v7824
        %9388 = vmatpush1.bf16.msra.mxu0 %v7823
        %9389 = vmatprep.subr.bf16.mxu0 %v7822
        %9390 = vmatpush1.bf16.msra.mxu0 %v7821
        %9391 = vmatprep.subr.bf16.mxu0 %v7820
        %9392 = vmatpush1.bf16.msra.mxu0 %v7819
        %9393 = vmatprep.subr.bf16.mxu0 %v7818
        %9394 = vmatpush1.bf16.msra.mxu0 %v7817
        %9395 = vmatprep.subr.bf16.mxu0 %v7816
        %9396 = vmatpush1.bf16.msra.mxu0 %v7815
        %9397 = vmatprep.subr.bf16.mxu0 %v7814
        %9398 = vmatpush1.bf16.msra.mxu0 %v7813
        %9399 = vmatprep.subr.bf16.mxu0 %v7812
        %9400 = vmatpush1.bf16.msra.mxu0 %v7811
        %9401 = vmatprep.subr.bf16.mxu0 %v7842
        %9402 = vmatpush2.bf16.msra.mxu0 %v7841
        %9403 = vmatprep.subr.bf16.mxu0 %v7840
        %9404 = vmatpush2.bf16.msra.mxu0 %v7839
        %9405 = vmatprep.subr.bf16.mxu0 %v7838
        %9406 = vmatpush2.bf16.msra.mxu0 %v7837
        %9407 = vmatprep.subr.bf16.mxu0 %v7836
        %9408 = vmatpush2.bf16.msra.mxu0 %v7835
        %9409 = vmatprep.subr.bf16.mxu0 %v7834
        %9410 = vmatpush2.bf16.msra.mxu0 %v7833
        %9411 = vmatprep.subr.bf16.mxu0 %v7832
        %9412 = vmatpush2.bf16.msra.mxu0 %v7831
        %9413 = vmatprep.subr.bf16.mxu0 %v7830
        %9414 = vmatpush2.bf16.msra.mxu0 %v7829
        %9415 = vmatprep.subr.bf16.mxu0 %v7828
        %9416 = vmatpush2.bf16.msra.mxu0 %v7827
        %9417 = vmatprep.mubr.bf16.mxu0 %v9110
        %9418 = vmatmul.mubr.bf16.gmra.mxu0 %v9109
        %v9419 = vpop.f32.mrf.mxu0
        %v9420 = vadd.f32 0.0, %v9419
        %v9421 = vpop.f32.mrf.mxu0
        %v9422 = vadd.f32 0.0, %v9421
        %v9423 = vpop.f32.mrf.mxu0
        %v9424 = vpop.f32.mrf.mxu0
        %9425 = vdwg.mxu0
        %v9426 = vadd.f32 %v9383, %v9420
        %v9427 = vadd.f32 %v9384, %v9422
        %v9430 = vrot.slane %v9109, 4
        %v9431 = vrot.slane %v9110, 4
        %9434 = vmatprep.subr.bf16.mxu0 %v8068
        %9435 = vmatpush1.bf16.msra.mxu0 %v8067
        %9436 = vmatprep.subr.bf16.mxu0 %v8066
        %9437 = vmatpush1.bf16.msra.mxu0 %v8065
        %9438 = vmatprep.subr.bf16.mxu0 %v8064
        %9439 = vmatpush1.bf16.msra.mxu0 %v8063
        %9440 = vmatprep.subr.bf16.mxu0 %v8062
        %9441 = vmatpush1.bf16.msra.mxu0 %v8061
        %9442 = vmatprep.subr.bf16.mxu0 %v8060
        %9443 = vmatpush1.bf16.msra.mxu0 %v8059
        %9444 = vmatprep.subr.bf16.mxu0 %v8058
        %9445 = vmatpush1.bf16.msra.mxu0 %v8057
        %9446 = vmatprep.subr.bf16.mxu0 %v8056
        %9447 = vmatpush1.bf16.msra.mxu0 %v8055
        %9448 = vmatprep.subr.bf16.mxu0 %v8054
        %9449 = vmatpush1.bf16.msra.mxu0 %v8053
        %9450 = vmatprep.subr.bf16.mxu0 %v8084
        %9451 = vmatpush2.bf16.msra.mxu0 %v8083
        %9452 = vmatprep.subr.bf16.mxu0 %v8082
        %9453 = vmatpush2.bf16.msra.mxu0 %v8081
        %9454 = vmatprep.subr.bf16.mxu0 %v8080
        %9455 = vmatpush2.bf16.msra.mxu0 %v8079
        %9456 = vmatprep.subr.bf16.mxu0 %v8078
        %9457 = vmatpush2.bf16.msra.mxu0 %v8077
        %9458 = vmatprep.subr.bf16.mxu0 %v8076
        %9459 = vmatpush2.bf16.msra.mxu0 %v8075
        %9460 = vmatprep.subr.bf16.mxu0 %v8074
        %9461 = vmatpush2.bf16.msra.mxu0 %v8073
        %9462 = vmatprep.subr.bf16.mxu0 %v8072
        %9463 = vmatpush2.bf16.msra.mxu0 %v8071
        %9464 = vmatprep.subr.bf16.mxu0 %v8070
        %9465 = vmatpush2.bf16.msra.mxu0 %v8069
        %9466 = vmatprep.mubr.bf16.mxu0 %v9431
        %9467 = vmatmul.mubr.bf16.gmra.mxu0 %v9430
        %v9468 = vpop.f32.mrf.mxu0
        %v9469 = vadd.f32 0.0, %v9468
        %v9470 = vpop.f32.mrf.mxu0
        %v9471 = vadd.f32 0.0, %v9470
        %v9472 = vpop.f32.mrf.mxu0
        %v9473 = vpop.f32.mrf.mxu0
        %9474 = vdwg.mxu0
        %v9475 = vadd.f32 %v9426, %v9469
        %v9476 = vadd.f32 %v9427, %v9471
        %9477 = vmatprep.subr.bf16.mxu0 %v8304
        %9478 = vmatpush1.bf16.msra.mxu0 %v8303
        %9479 = vmatprep.subr.bf16.mxu0 %v8302
        %9480 = vmatpush1.bf16.msra.mxu0 %v8301
        %9481 = vmatprep.subr.bf16.mxu0 %v8300
        %9482 = vmatpush1.bf16.msra.mxu0 %v8299
        %9483 = vmatprep.subr.bf16.mxu0 %v8298
        %9484 = vmatpush1.bf16.msra.mxu0 %v8297
        %9485 = vmatprep.subr.bf16.mxu0 %v8296
        %9486 = vmatpush1.bf16.msra.mxu0 %v8295
        %9487 = vmatprep.subr.bf16.mxu0 %v8294
        %9488 = vmatpush1.bf16.msra.mxu0 %v8293
        %9489 = vmatprep.subr.bf16.mxu0 %v8292
        %9490 = vmatpush1.bf16.msra.mxu0 %v8291
        %9491 = vmatprep.subr.bf16.mxu0 %v8290
        %9492 = vmatpush1.bf16.msra.mxu0 %v8289
        %9493 = vmatprep.subr.bf16.mxu0 %v8320
        %9494 = vmatpush2.bf16.msra.mxu0 %v8319
        %9495 = vmatprep.subr.bf16.mxu0 %v8318
        %9496 = vmatpush2.bf16.msra.mxu0 %v8317
        %9497 = vmatprep.subr.bf16.mxu0 %v8316
        %9498 = vmatpush2.bf16.msra.mxu0 %v8315
        %9499 = vmatprep.subr.bf16.mxu0 %v8314
        %9500 = vmatpush2.bf16.msra.mxu0 %v8313
        %9501 = vmatprep.subr.bf16.mxu0 %v8312
        %9502 = vmatpush2.bf16.msra.mxu0 %v8311
        %9503 = vmatprep.subr.bf16.mxu0 %v8310
        %9504 = vmatpush2.bf16.msra.mxu0 %v8309
        %9505 = vmatprep.subr.bf16.mxu0 %v8308
        %9506 = vmatpush2.bf16.msra.mxu0 %v8307
        %9507 = vmatprep.subr.bf16.mxu0 %v8306
        %9508 = vmatpush2.bf16.msra.mxu0 %v8305
        %9509 = vmatprep.mubr.bf16.mxu0 %v9112
        %9510 = vmatmul.mubr.bf16.gmra.mxu0 %v9111
        %v9511 = vpop.f32.mrf.mxu0
        %v9512 = vadd.f32 0.0, %v9511
        %v9513 = vpop.f32.mrf.mxu0
        %v9514 = vadd.f32 0.0, %v9513
        %v9515 = vpop.f32.mrf.mxu0
        %v9516 = vpop.f32.mrf.mxu0
        %9517 = vdwg.mxu0
        %v9518 = vadd.f32 %v9475, %v9512
        %v9519 = vadd.f32 %v9476, %v9514
        %v9520 = vld [vmem:[%s24] sm:$0xff]
        %9522 = vset.pattern.permute.xlu0 0
        %9523 = vperm.xlu0 %9522, %v9520
        %v9524 = vpop.permute.xlu0 %9523
        %v9526 = vadd.f32 %v9518, %v9524
        %v9527 = vadd.f32 %v9519, %v9524
        %v9528 = vmul.f32 %v9526, 0.01
        %v9529 = vmul.f32 %v9527, 0.01
        %v9530 = vmax.f32 %v9526, %v9528
        %v9531 = vmax.f32 %v9527, %v9529
        %9532 = vst [vmem:[%s859] sm:$0xff] %v9530
        %9533 = vst [vmem:[%s859 + $0x8] sm:$0xff] %v9531
        %p9534 = scmp.lt.s32.totalorder %s38, 1
        %s9535 = scalar_select %p9534, %s38, 1
        %s9536 = smul.addr %s9535, 2
        %s9537 = smul.addr %s9536, 8
        %s9538 = scalar_lea.vmem %s25, %s9537
        // Predicated region
        $region133: #{forward.1} parent=119 // pred_check
          %p9539 = pneg %p601
        $region134: #{forward.1} parent=119 // pred_check_branch
          %9541 = sbr.rel (%p9539) target = $region136
        $region135: #{forward.1} parent=119 // pred_region
          _
        $region136: #{forward.1} parent=119 // pred_fallthru
          _
      $region120: #{forward.1} parent=5 // pred_fallthru
        _
      %p9542 = scmp.le.s32.totalorder 2, %s33
      // Predicated region
      $region137: #{forward.1} parent=5 // pred_check
        %p9543 = pneg %p9542
      $region138: #{forward.1} parent=5 // pred_check_branch
        %9545 = sbr.rel (%p9543) target = $region140
      $region139: #{forward.1} parent=5 // pred_region
        %s9546 = ssub.s32 %s33, 2
        // Predicated region
        $region141: #{forward.1} parent=139 // pred_check
          %p9547 = pneg %p607
        $region142: #{forward.1} parent=139 // pred_check_branch
          %9549 = sbr.rel (%p9547) target = $region144
        $region143: #{forward.1} parent=139 // pred_region
          %p9550 = scmp.lt.s32.totalorder %s39, 1
          %s9551 = scalar_select %p9550, %s39, 1
          %s9552 = smul.addr %s9551, 2
          %s9553 = smul.addr %s9552, 8
          %s9554 = scalar_lea.vmem %s25, %s9553
        $region144: #{forward.1} parent=139 // pred_fallthru
          _
      $region140: #{forward.1} parent=5 // pred_fallthru
        _
    $region6: #{forward.1} parent=1 // loop_footer
      %s37 = sadd.s32 1, %s33
    $region7: #{forward.1} parent=1 // loop_footer_branch
      %32 = sbr.rel target = $region3
    $region8: #{forward.1} parent=1 // loop_exit
      _
    %9555 = vsyncpa [#allocation3], 1
    %s9556 = scalar_lea.sflag [#allocation3], 1
    %9557 = vsyncpa %s9556, 1
    %9558 = vsyncpa [#allocation5], 1

</llo_original>
